<compile_context>
chip_gen: v7x
topology: tpu7x:2x2x1
jax: 0.10.0
libtpu: 0.0.40
codegen_flags: <defaults>
</compile_context>

<pallas_src>
import functools

import jax
import jax.numpy as jnp
from jax.experimental import pallas as pl
from jax.experimental.pallas import tpu as pltpu


# Scoped-VMEM cap: well under v7x's 64 MiB physical VMEM, plenty for the
# row-tiled blocks used here, above the small v5e/v6e defaults.
_VMEM_LIMIT_BYTES = 48 * 1024 * 1024


def _pick_tile_h(H):
    """Row-tile height (must divide H). Small tiles keep per-step VMEM modest
    (mandatory on v7x) and give the grid enough steps to pipeline/megacore."""
    for cand in (8, 16, 32, 4, 2):
        if H % cand == 0:
            return cand
    return H


def _row_slabs(xp, tile_h, th_in, n_t):
    # (N, Hp, Wp, C) -> (N, n_t, th_in, Wp, C): overlapping (halo'd) row slabs,
    # so each grid step gets a small, non-overlapping block (BlockSpec-friendly).
    return jnp.stack(
        [xp[:, t * tile_h: t * tile_h + th_in] for t in range(n_t)], axis=1)


# --------------------------------------------------------------------------
# conv1: im2col (wrapper) + single dense MXU matmul per row tile.
# --------------------------------------------------------------------------
def _conv1_matmul_kernel(p_ref, w_ref, b_ref, o_ref, *, TH, W):
    """p_ref: (1, TH, W, K) im2col patches; w_ref: (K, Cout); b_ref: (1, Cout);
    o_ref: (1, TH, W, Cout)."""
    K = p_ref.shape[-1]
    Cout = o_ref.shape[-1]
    p = p_ref[...].reshape(TH * W, K)
    y = jnp.dot(p, w_ref[...], preferred_element_type=jnp.float32)
    y = jnp.maximum(y + b_ref[...], 0.0)
    o_ref[...] = y.reshape(1, TH, W, Cout).astype(o_ref.dtype)


def _conv1_im2col(x, w_hwio, b, tile_h):
    N, H, W, Cin = x.shape
    KH, KW, _, Cout = w_hwio.shape
    ph, pw = KH // 2, KW // 2
    xp = jnp.pad(x, ((0, 0), (ph, ph), (pw, pw), (0, 0)))
    cols = [xp[:, kh:kh + H, kw:kw + W, :]
            for kh in range(KH) for kw in range(KW)]
    patches = jnp.concatenate(cols, axis=-1)          # (N, H, W, KH*KW*Cin)
    K = KH * KW * Cin
    w_mat = w_hwio.reshape(K, Cout)
    b_row = b.reshape(1, Cout)

    n_t = H // tile_h
    kernel = functools.partial(_conv1_matmul_kernel, TH=tile_h, W=W)
    return pl.pallas_call(
        kernel,
        out_shape=jax.ShapeDtypeStruct((N, H, W, Cout), jnp.float32),
        grid_spec=pltpu.PrefetchScalarGridSpec(
            num_scalar_prefetch=0,
            grid=(N, n_t),
            in_specs=[
                pl.BlockSpec((1, tile_h, W, K), lambda n, t: (n, t, 0, 0)),
                pl.BlockSpec((K, Cout), lambda n, t: (0, 0)),
                pl.BlockSpec((1, Cout), lambda n, t: (0, 0)),
            ],
            out_specs=pl.BlockSpec((1, tile_h, W, Cout),
                                   lambda n, t: (n, t, 0, 0)),
        ),
        compiler_params=pltpu.CompilerParams(
            dimension_semantics=("parallel", "parallel"),
            vmem_limit_bytes=_VMEM_LIMIT_BYTES),
    )(patches, w_mat, b_row)


# --------------------------------------------------------------------------
# conv2: 'same' conv with KW*Cin folded into the matmul contraction (K=320).
# --------------------------------------------------------------------------
def _conv_kwfold_kernel(x_ref, w_ref, b_ref, o_ref, acc_ref,
                        *, KH, KW, TH, W, relu):
    """x_ref: (1, 1, TH+KH-1, W+KW-1, Cin) halo'd row slab;
    w_ref: (KH, KW*Cin, Cout); b_ref: (1, Cout); o_ref: (1, TH, W, Cout);
    acc_ref: VMEM scratch (TH*W, Cout)."""
    Cin = x_ref.shape[-1]
    Cout = o_ref.shape[-1]
    acc_ref[...] = jnp.zeros_like(acc_ref)
    for kh in range(KH):
        # One im2col concat per kh (KW slices), then one K=KW*Cin MXU matmul
        # instead of KW small K=Cin matmuls.
        parts = [x_ref[0, 0, kh:kh + TH, kw:kw + W, :] for kw in range(KW)]
        patch = jnp.concatenate(parts, axis=-1).reshape(TH * W, KW * Cin)
        acc_ref[...] += jnp.dot(patch, w_ref[kh],
                                preferred_element_type=jnp.float32)
    y = acc_ref[...] + b_ref[...]
    if relu:
        y = jnp.maximum(y, 0.0)
    o_ref[...] = y.reshape(1, TH, W, Cout).astype(o_ref.dtype)


def _conv_kwfold(x, w_hwio, b, tile_h, *, relu):
    N, H, W, Cin = x.shape
    KH, KW, _, Cout = w_hwio.shape
    ph, pw = KH // 2, KW // 2
    xp = jnp.pad(x, ((0, 0), (ph, ph), (pw, pw), (0, 0)))
    n_t = H // tile_h
    th_in = tile_h + KH - 1
    wp = W + KW - 1
    slabs = _row_slabs(xp, tile_h, th_in, n_t)        # (N, n_t, th_in, wp, Cin)
    w_fold = w_hwio.reshape(KH, KW * Cin, Cout)
    b_row = b.reshape(1, Cout)

    kernel = functools.partial(_conv_kwfold_kernel, KH=KH, KW=KW,
                               TH=tile_h, W=W, relu=relu)
    return pl.pallas_call(
        kernel,
        out_shape=jax.ShapeDtypeStruct((N, H, W, Cout), jnp.float32),
        grid_spec=pltpu.PrefetchScalarGridSpec(
            num_scalar_prefetch=0,
            grid=(N, n_t),
            in_specs=[
                pl.BlockSpec((1, 1, th_in, wp, Cin),
                             lambda n, t: (n, t, 0, 0, 0)),
                pl.BlockSpec((KH, KW * Cin, Cout), lambda n, t: (0, 0, 0)),
                pl.BlockSpec((1, Cout), lambda n, t: (0, 0)),
            ],
            out_specs=pl.BlockSpec((1, tile_h, W, Cout),
                                   lambda n, t: (n, t, 0, 0)),
            scratch_shapes=[pltpu.VMEM((tile_h * W, Cout), jnp.float32)],
        ),
        compiler_params=pltpu.CompilerParams(
            dimension_semantics=("parallel", "parallel"),
            vmem_limit_bytes=_VMEM_LIMIT_BYTES),
    )(slabs, w_fold, b_row)


# --------------------------------------------------------------------------
# conv3: tiny Cout (= num_channels) -> VPU multiply + lane reduce, lane-dense
# (Cout, TH, W) output written directly in NCHW.
# --------------------------------------------------------------------------
def _conv_small_cout_kernel(x_ref, w_ref, b_ref, o_ref, *, KH, KW, TH, W):
    """x_ref: (1, 1, TH+KH-1, W+KW-1, Cin); w_ref: (Cout, KH, KW, Cin);
    b_ref: (1, Cout, 1, 1); o_ref: (1, Cout, TH, W)."""
    Cout = o_ref.shape[1]
    per_co = []
    for co in range(Cout):
        acc = jnp.zeros((TH, W), jnp.float32)
        for kh in range(KH):
            for kw in range(KW):
                win = x_ref[0, 0, kh:kh + TH, kw:kw + W, :]   # (TH, W, Cin)
                acc = acc + jnp.sum(win * w_ref[co, kh, kw, :], axis=-1)
        per_co.append(acc)
    y = jnp.stack(per_co, axis=0)[None] + b_ref[...]          # (1, Cout, TH, W)
    o_ref[...] = y.astype(o_ref.dtype)


def _conv_small_cout_nchw(x, w_ohwi, b, tile_h):
    N, H, W, Cin = x.shape
    Cout, KH, KW, _ = w_ohwi.shape
    ph, pw = KH // 2, KW // 2
    xp = jnp.pad(x, ((0, 0), (ph, ph), (pw, pw), (0, 0)))
    n_t = H // tile_h
    th_in = tile_h + KH - 1
    wp = W + KW - 1
    slabs = _row_slabs(xp, tile_h, th_in, n_t)
    b4 = b.reshape(1, Cout, 1, 1)

    kernel = functools.partial(_conv_small_cout_kernel, KH=KH, KW=KW,
                               TH=tile_h, W=W)
    return pl.pallas_call(
        kernel,
        out_shape=jax.ShapeDtypeStruct((N, Cout, H, W), jnp.float32),
        grid_spec=pltpu.PrefetchScalarGridSpec(
            num_scalar_prefetch=0,
            grid=(N, n_t),
            in_specs=[
                pl.BlockSpec((1, 1, th_in, wp, Cin),
                             lambda n, t: (n, t, 0, 0, 0)),
                pl.BlockSpec((Cout, KH, KW, Cin), lambda n, t: (0, 0, 0, 0)),
                pl.BlockSpec((1, Cout, 1, 1), lambda n, t: (0, 0, 0, 0)),
            ],
            out_specs=pl.BlockSpec((1, Cout, tile_h, W),
                                   lambda n, t: (n, 0, t, 0)),
        ),
        compiler_params=pltpu.CompilerParams(
            dimension_semantics=("parallel", "parallel"),
            vmem_limit_bytes=_VMEM_LIMIT_BYTES),
    )(slabs, w_ohwi, b4)


# --------------------------------------------------------------------------
# Model wrapper / params / reference.
# --------------------------------------------------------------------------
def _oihw_to_hwio(w):
    return jnp.transpose(w, (2, 3, 1, 0))   # (Cout,Cin,KH,KW) -> (KH,KW,Cin,Cout)


def _oihw_to_ohwi(w):
    return jnp.transpose(w, (0, 2, 3, 1))   # (Cout,Cin,KH,KW) -> (Cout,KH,KW,Cin)


@jax.jit
def srcnn_forward(x_nchw, params):
    """SRCNN forward: relu(conv1) -> relu(conv2) -> conv3. NCHW in, NCHW out."""
    (w1, b1), (w2, b2), (w3, b3) = params
    x = jnp.transpose(x_nchw, (0, 2, 3, 1)).astype(jnp.float32)   # NHWC
    tile_h = _pick_tile_h(x.shape[1])
    # TODO(synk): next-tier opts per review: bf16 matmul inputs (f32 accum) and
    # fusing conv2+conv3 in one kernel to keep the 32-ch intermediate in VMEM.
    y1 = _conv1_im2col(x, _oihw_to_hwio(w1), b1, tile_h)              # (N,H,W,64)
    y2 = _conv_kwfold(y1, _oihw_to_hwio(w2), b2, tile_h, relu=True)   # (N,H,W,32)
    y3 = _conv_small_cout_nchw(y2, _oihw_to_ohwi(w3), b3, tile_h)     # (N,C,H,W)
    return y3


def init_srcnn_params(num_channels=1, seed=0):
    """Deterministic synthetic params (PyTorch Conv2d shapes: (Cout,Cin,KH,KW))."""
    key = jax.random.PRNGKey(seed)
    ks = jax.random.split(key, 6)

    def mk(k_w, k_b, cout, cin, kh, kw):
        fan_in = cin * kh * kw
        scale = 1.0 / jnp.sqrt(jnp.float32(fan_in))
        w = jax.random.normal(k_w, (cout, cin, kh, kw), jnp.float32) * scale
        b = jax.random.normal(k_b, (cout,), jnp.float32) * scale
        return w, b

    w1, b1 = mk(ks[0], ks[1], 64, num_channels, 9, 9)
    w2, b2 = mk(ks[2], ks[3], 32, 64, 5, 5)
    w3, b3 = mk(ks[4], ks[5], num_channels, 32, 5, 5)
    return (w1, b1), (w2, b2), (w3, b3)


def _reference_forward(x_nchw, params):
    """Pure-JAX reference (lax.conv) for correctness checking."""
    (w1, b1), (w2, b2), (w3, b3) = params

    def conv(x, w, b, relu):
        y = jax.lax.conv_general_dilated(
            x, w, window_strides=(1, 1), padding="SAME",
            dimension_numbers=("NCHW", "OIHW", "NCHW"))
        y = y + b.reshape(1, -1, 1, 1)
        return jnp.maximum(y, 0.0) if relu else y

    x = conv(x_nchw, w1, b1, True)
    x = conv(x, w2, b2, True)
    x = conv(x, w3, b3, False)
    return x


if __name__ == "__main__":
    num_channels = 1
    N, H, W = 2, 16, 16   # tile_h=8 -> 2 row tiles per image: exercises halos

    key = jax.random.PRNGKey(0)
    x = jax.random.normal(key, (N, num_channels, H, W), jnp.float32)

    params = init_srcnn_params(num_channels=num_channels, seed=0)

    out = srcnn_forward(x, params)
    out = jax.block_until_ready(out)

    ref = _reference_forward(x, params)
    assert out.shape == (N, num_channels, H, W)
    assert jnp.allclose(out, ref, atol=5e-4, rtol=5e-4), "mismatch vs reference"

    print("KERNEL_OK")
</pallas_src>

<mosaic_0001>
module attributes {stable_mosaic.version = 11 : i64} {
  func.func @_conv1_matmul_kernel(%arg0: i32, %arg1: i32, %arg2: memref<1x8x16x81xf32, #tpu.memory_space<vmem>>, %arg3: memref<81x64xf32, #tpu.memory_space<vmem>>, %arg4: memref<1x64xf32, #tpu.memory_space<vmem>>, %arg5: memref<1x8x16x64xf32, #tpu.memory_space<vmem>>) attributes {dimension_semantics = [#tpu.dimension_semantics<parallel>, #tpu.dimension_semantics<parallel>], iteration_bounds = array<i64: 2, 2>, scalar_prefetch = 0 : i64, scratch_operands = 0 : i64, tpu.core_type = #tpu.core_type<tc>, window_params = [{transform_indices = @transform_0, window_bounds = array<i64: 1, 8, 16, 81>}, {pipeline_mode = #tpu.pipeline_mode<synchronous>, transform_indices = @transform_1, window_bounds = array<i64: 81, 64>}, {pipeline_mode = #tpu.pipeline_mode<synchronous>, transform_indices = @transform_2, window_bounds = array<i64: 1, 64>}, {transform_indices = @transform_3, window_bounds = array<i64: 1, 8, 16, 64>}]} {
    %c0 = arith.constant 0 : index
    %c0_0 = arith.constant 0 : index
    %c0_1 = arith.constant 0 : index
    %c0_2 = arith.constant 0 : index
    %0 = vector.load %arg2[%c0, %c0_0, %c0_1, %c0_2] : memref<1x8x16x81xf32, #tpu.memory_space<vmem>>, vector<1x8x16x81xf32>
    %1 = vector.shape_cast %0 : vector<1x8x16x81xf32> to vector<128x81xf32>
    %c0_3 = arith.constant 0 : index
    %c0_4 = arith.constant 0 : index
    %2 = vector.load %arg3[%c0_3, %c0_4] : memref<81x64xf32, #tpu.memory_space<vmem>>, vector<81x64xf32>
    %cst = arith.constant dense<0.000000e+00> : vector<128x64xf32>
    %3 = tpu.matmul %1, %2, %cst {dimension_numbers = #tpu.dot_dimension_numbers<[1], [0], [0], [1], [0, 0, 1, 1], [], []>} : vector<128x81xf32>, vector<81x64xf32>, vector<128x64xf32> -> vector<128x64xf32>
    %c0_5 = arith.constant 0 : index
    %c0_6 = arith.constant 0 : index
    %4 = vector.load %arg4[%c0_5, %c0_6] : memref<1x64xf32, #tpu.memory_space<vmem>>, vector<1x64xf32>
    %5 = vector.broadcast %4 : vector<1x64xf32> to vector<128x64xf32>
    %6 = arith.addf %3, %5 : vector<128x64xf32>
    %cst_7 = arith.constant 0.000000e+00 : f32
    %7 = vector.broadcast %cst_7 : f32 to vector<128x64xf32>
    %8 = arith.maximumf %6, %7 : vector<128x64xf32>
    %9 = vector.shape_cast %8 : vector<128x64xf32> to vector<1x8x16x64xf32>
    %c0_8 = arith.constant 0 : index
    %c0_9 = arith.constant 0 : index
    %c0_10 = arith.constant 0 : index
    %c0_11 = arith.constant 0 : index
    %10 = vector.load %arg5[%c0_8, %c0_9, %c0_10, %c0_11] : memref<1x8x16x64xf32, #tpu.memory_space<vmem>>, vector<1x8x16x64xf32>
    tpu.vector_store %arg5[%c0_8, %c0_9, %c0_10, %c0_11], %9 {strides = array<i32>} : memref<1x8x16x64xf32, #tpu.memory_space<vmem>>, vector<1x8x16x64xf32>,
    return
  }
  func.func @transform_0(%arg0: i32, %arg1: i32) -> (i32, i32, i32, i32) {
    %c0_i32 = arith.constant 0 : i32
    %c0_i32_0 = arith.constant 0 : i32
    %c0_i32_1 = arith.constant 0 : i32
    return %arg0, %arg1, %c0_i32, %c0_i32_0 : i32, i32, i32, i32
  }
  func.func @transform_1(%arg0: i32, %arg1: i32) -> (i32, i32) {
    %c0_i32 = arith.constant 0 : i32
    %c0_i32_0 = arith.constant 0 : i32
    %c0_i32_1 = arith.constant 0 : i32
    return %c0_i32, %c0_i32_0 : i32, i32
  }
  func.func @transform_2(%arg0: i32, %arg1: i32) -> (i32, i32) {
    %c0_i32 = arith.constant 0 : i32
    %c0_i32_0 = arith.constant 0 : i32
    %c0_i32_1 = arith.constant 0 : i32
    return %c0_i32, %c0_i32_0 : i32, i32
  }
  func.func @transform_3(%arg0: i32, %arg1: i32) -> (i32, i32, i32, i32) {
    %c0_i32 = arith.constant 0 : i32
    %c0_i32_0 = arith.constant 0 : i32
    %c0_i32_1 = arith.constant 0 : i32
    return %arg0, %arg1, %c0_i32, %c0_i32_0 : i32, i32, i32, i32
  }
}

module attributes {stable_mosaic.version = 11 : i64} {
  func.func @_conv_kwfold_kernel(%arg0: i32, %arg1: i32, %arg2: memref<1x1x12x20x64xf32, #tpu.memory_space<vmem>>, %arg3: memref<5x320x32xf32, #tpu.memory_space<vmem>>, %arg4: memref<1x32xf32, #tpu.memory_space<vmem>>, %arg5: memref<1x8x16x32xf32, #tpu.memory_space<vmem>>, %arg6: memref<128x32xf32, #tpu.memory_space<vmem>>) attributes {dimension_semantics = [#tpu.dimension_semantics<parallel>, #tpu.dimension_semantics<parallel>], iteration_bounds = array<i64: 2, 2>, scalar_prefetch = 0 : i64, scratch_operands = 1 : i64, tpu.core_type = #tpu.core_type<tc>, window_params = [{transform_indices = @transform_0, window_bounds = array<i64: 1, 1, 12, 20, 64>}, {pipeline_mode = #tpu.pipeline_mode<synchronous>, transform_indices = @transform_1, window_bounds = array<i64: 5, 320, 32>}, {pipeline_mode = #tpu.pipeline_mode<synchronous>, transform_indices = @transform_2, window_bounds = array<i64: 1, 32>}, {transform_indices = @transform_3, window_bounds = array<i64: 1, 8, 16, 32>}]} {
    %cst = arith.constant 0.000000e+00 : f32
    %0 = vector.broadcast %cst : f32 to vector<128x32xf32>
    %c0 = arith.constant 0 : index
    %c0_0 = arith.constant 0 : index
    %1 = vector.load %arg6[%c0, %c0_0] : memref<128x32xf32, #tpu.memory_space<vmem>>, vector<128x32xf32>
    tpu.vector_store %arg6[%c0, %c0_0], %0 {strides = array<i32>} : memref<128x32xf32, #tpu.memory_space<vmem>>, vector<128x32xf32>,
    %c0_1 = arith.constant 0 : index
    %c0_2 = arith.constant 0 : index
    %c0_3 = arith.constant 0 : index
    %c0_4 = arith.constant 0 : index
    %c0_5 = arith.constant 0 : index
    %2 = vector.load %arg2[%c0_1, %c0_2, %c0_3, %c0_4, %c0_5] : memref<1x1x12x20x64xf32, #tpu.memory_space<vmem>>, vector<1x1x8x16x64xf32>
    %3 = vector.shape_cast %2 : vector<1x1x8x16x64xf32> to vector<8x16x64xf32>
    %c0_6 = arith.constant 0 : index
    %c0_7 = arith.constant 0 : index
    %c0_8 = arith.constant 0 : index
    %c1 = arith.constant 1 : index
    %c0_9 = arith.constant 0 : index
    %4 = vector.load %arg2[%c0_6, %c0_7, %c0_8, %c1, %c0_9] : memref<1x1x12x20x64xf32, #tpu.memory_space<vmem>>, vector<1x1x8x16x64xf32>
    %5 = vector.shape_cast %4 : vector<1x1x8x16x64xf32> to vector<8x16x64xf32>
    %c0_10 = arith.constant 0 : index
    %c0_11 = arith.constant 0 : index
    %c0_12 = arith.constant 0 : index
    %c2 = arith.constant 2 : index
    %c0_13 = arith.constant 0 : index
    %6 = vector.load %arg2[%c0_10, %c0_11, %c0_12, %c2, %c0_13] : memref<1x1x12x20x64xf32, #tpu.memory_space<vmem>>, vector<1x1x8x16x64xf32>
    %7 = vector.shape_cast %6 : vector<1x1x8x16x64xf32> to vector<8x16x64xf32>
    %c0_14 = arith.constant 0 : index
    %c0_15 = arith.constant 0 : index
    %c0_16 = arith.constant 0 : index
    %c3 = arith.constant 3 : index
    %c0_17 = arith.constant 0 : index
    %8 = vector.load %arg2[%c0_14, %c0_15, %c0_16, %c3, %c0_17] : memref<1x1x12x20x64xf32, #tpu.memory_space<vmem>>, vector<1x1x8x16x64xf32>
    %9 = vector.shape_cast %8 : vector<1x1x8x16x64xf32> to vector<8x16x64xf32>
    %c0_18 = arith.constant 0 : index
    %c0_19 = arith.constant 0 : index
    %c0_20 = arith.constant 0 : index
    %c4 = arith.constant 4 : index
    %c0_21 = arith.constant 0 : index
    %10 = vector.load %arg2[%c0_18, %c0_19, %c0_20, %c4, %c0_21] : memref<1x1x12x20x64xf32, #tpu.memory_space<vmem>>, vector<1x1x8x16x64xf32>
    %11 = vector.shape_cast %10 : vector<1x1x8x16x64xf32> to vector<8x16x64xf32>
    %12 = tpu.concatenate %3, %5, %7, %9, %11 in 2 : vector<8x16x64xf32>, vector<8x16x64xf32>, vector<8x16x64xf32>, vector<8x16x64xf32>, vector<8x16x64xf32> -> vector<8x16x320xf32>
    %13 = vector.shape_cast %12 : vector<8x16x320xf32> to vector<128x320xf32>
    %c0_22 = arith.constant 0 : index
    %c0_23 = arith.constant 0 : index
    %14 = vector.load %arg6[%c0_22, %c0_23] : memref<128x32xf32, #tpu.memory_space<vmem>>, vector<128x32xf32>
    %c0_24 = arith.constant 0 : index
    %c0_25 = arith.constant 0 : index
    %c0_26 = arith.constant 0 : index
    %15 = vector.load %arg3[%c0_24, %c0_25, %c0_26] : memref<5x320x32xf32, #tpu.memory_space<vmem>>, vector<1x320x32xf32>
    %16 = vector.shape_cast %15 : vector<1x320x32xf32> to vector<320x32xf32>
    %cst_27 = arith.constant dense<0.000000e+00> : vector<128x32xf32>
    %17 = tpu.matmul %13, %16, %cst_27 {dimension_numbers = #tpu.dot_dimension_numbers<[1], [0], [0], [1], [0, 0, 1, 1], [], []>} : vector<128x320xf32>, vector<320x32xf32>, vector<128x32xf32> -> vector<128x32xf32>
    %18 = arith.addf %14, %17 : vector<128x32xf32>
    %c0_28 = arith.constant 0 : index
    %c0_29 = arith.constant 0 : index
    %19 = vector.load %arg6[%c0_28, %c0_29] : memref<128x32xf32, #tpu.memory_space<vmem>>, vector<128x32xf32>
    tpu.vector_store %arg6[%c0_28, %c0_29], %18 {strides = array<i32>} : memref<128x32xf32, #tpu.memory_space<vmem>>, vector<128x32xf32>,
    %c0_30 = arith.constant 0 : index
    %c0_31 = arith.constant 0 : index
    %c1_32 = arith.constant 1 : index
    %c0_33 = arith.constant 0 : index
    %c0_34 = arith.constant 0 : index
    %20 = vector.load %arg2[%c0_30, %c0_31, %c1_32, %c0_33, %c0_34] : memref<1x1x12x20x64xf32, #tpu.memory_space<vmem>>, vector<1x1x8x16x64xf32>
    %21 = vector.shape_cast %20 : vector<1x1x8x16x64xf32> to vector<8x16x64xf32>
    %c0_35 = arith.constant 0 : index
    %c0_36 = arith.constant 0 : index
    %c1_37 = arith.constant 1 : index
    %c1_38 = arith.constant 1 : index
    %c0_39 = arith.constant 0 : index
    %22 = vector.load %arg2[%c0_35, %c0_36, %c1_37, %c1_38, %c0_39] : memref<1x1x12x20x64xf32, #tpu.memory_space<vmem>>, vector<1x1x8x16x64xf32>
    %23 = vector.shape_cast %22 : vector<1x1x8x16x64xf32> to vector<8x16x64xf32>
    %c0_40 = arith.constant 0 : index
    %c0_41 = arith.constant 0 : index
    %c1_42 = arith.constant 1 : index
    %c2_43 = arith.constant 2 : index
    %c0_44 = arith.constant 0 : index
    %24 = vector.load %arg2[%c0_40, %c0_41, %c1_42, %c2_43, %c0_44] : memref<1x1x12x20x64xf32, #tpu.memory_space<vmem>>, vector<1x1x8x16x64xf32>
    %25 = vector.shape_cast %24 : vector<1x1x8x16x64xf32> to vector<8x16x64xf32>
    %c0_45 = arith.constant 0 : index
    %c0_46 = arith.constant 0 : index
    %c1_47 = arith.constant 1 : index
    %c3_48 = arith.constant 3 : index
    %c0_49 = arith.constant 0 : index
    %26 = vector.load %arg2[%c0_45, %c0_46, %c1_47, %c3_48, %c0_49] : memref<1x1x12x20x64xf32, #tpu.memory_space<vmem>>, vector<1x1x8x16x64xf32>
    %27 = vector.shape_cast %26 : vector<1x1x8x16x64xf32> to vector<8x16x64xf32>
    %c0_50 = arith.constant 0 : index
    %c0_51 = arith.constant 0 : index
    %c1_52 = arith.constant 1 : index
    %c4_53 = arith.constant 4 : index
    %c0_54 = arith.constant 0 : index
    %28 = vector.load %arg2[%c0_50, %c0_51, %c1_52, %c4_53, %c0_54] : memref<1x1x12x20x64xf32, #tpu.memory_space<vmem>>, vector<1x1x8x16x64xf32>
    %29 = vector.shape_cast %28 : vector<1x1x8x16x64xf32> to vector<8x16x64xf32>
    %30 = tpu.concatenate %21, %23, %25, %27, %29 in 2 : vector<8x16x64xf32>, vector<8x16x64xf32>, vector<8x16x64xf32>, vector<8x16x64xf32>, vector<8x16x64xf32> -> vector<8x16x320xf32>
    %31 = vector.shape_cast %30 : vector<8x16x320xf32> to vector<128x320xf32>
    %c0_55 = arith.constant 0 : index
    %c0_56 = arith.constant 0 : index
    %32 = vector.load %arg6[%c0_55, %c0_56] : memref<128x32xf32, #tpu.memory_space<vmem>>, vector<128x32xf32>
    %c1_57 = arith.constant 1 : index
    %c0_58 = arith.constant 0 : index
    %c0_59 = arith.constant 0 : index
    %33 = vector.load %arg3[%c1_57, %c0_58, %c0_59] : memref<5x320x32xf32, #tpu.memory_space<vmem>>, vector<1x320x32xf32>
    %34 = vector.shape_cast %33 : vector<1x320x32xf32> to vector<320x32xf32>
    %cst_60 = arith.constant dense<0.000000e+00> : vector<128x32xf32>
    %35 = tpu.matmul %31, %34, %cst_60 {dimension_numbers = #tpu.dot_dimension_numbers<[1], [0], [0], [1], [0, 0, 1, 1], [], []>} : vector<128x320xf32>, vector<320x32xf32>, vector<128x32xf32> -> vector<128x32xf32>
    %36 = arith.addf %32, %35 : vector<128x32xf32>
    %c0_61 = arith.constant 0 : index
    %c0_62 = arith.constant 0 : index
    %37 = vector.load %arg6[%c0_61, %c0_62] : memref<128x32xf32, #tpu.memory_space<vmem>>, vector<128x32xf32>
    tpu.vector_store %arg6[%c0_61, %c0_62], %36 {strides = array<i32>} : memref<128x32xf32, #tpu.memory_space<vmem>>, vector<128x32xf32>,
    %c0_63 = arith.constant 0 : index
    %c0_64 = arith.constant 0 : index
    %c2_65 = arith.constant 2 : index
    %c0_66 = arith.constant 0 : index
    %c0_67 = arith.constant 0 : index
    %38 = vector.load %arg2[%c0_63, %c0_64, %c2_65, %c0_66, %c0_67] : memref<1x1x12x20x64xf32, #tpu.memory_space<vmem>>, vector<1x1x8x16x64xf32>
    %39 = vector.shape_cast %38 : vector<1x1x8x16x64xf32> to vector<8x16x64xf32>
    %c0_68 = arith.constant 0 : index
    %c0_69 = arith.constant 0 : index
    %c2_70 = arith.constant 2 : index
    %c1_71 = arith.constant 1 : index
    %c0_72 = arith.constant 0 : index
    %40 = vector.load %arg2[%c0_68, %c0_69, %c2_70, %c1_71, %c0_72] : memref<1x1x12x20x64xf32, #tpu.memory_space<vmem>>, vector<1x1x8x16x64xf32>
    %41 = vector.shape_cast %40 : vector<1x1x8x16x64xf32> to vector<8x16x64xf32>
    %c0_73 = arith.constant 0 : index
    %c0_74 = arith.constant 0 : index
    %c2_75 = arith.constant 2 : index
    %c2_76 = arith.constant 2 : index
    %c0_77 = arith.constant 0 : index
    %42 = vector.load %arg2[%c0_73, %c0_74, %c2_75, %c2_76, %c0_77] : memref<1x1x12x20x64xf32, #tpu.memory_space<vmem>>, vector<1x1x8x16x64xf32>
    %43 = vector.shape_cast %42 : vector<1x1x8x16x64xf32> to vector<8x16x64xf32>
    %c0_78 = arith.constant 0 : index
    %c0_79 = arith.constant 0 : index
    %c2_80 = arith.constant 2 : index
    %c3_81 = arith.constant 3 : index
    %c0_82 = arith.constant 0 : index
    %44 = vector.load %arg2[%c0_78, %c0_79, %c2_80, %c3_81, %c0_82] : memref<1x1x12x20x64xf32, #tpu.memory_space<vmem>>, vector<1x1x8x16x64xf32>
    %45 = vector.shape_cast %44 : vector<1x1x8x16x64xf32> to vector<8x16x64xf32>
    %c0_83 = arith.constant 0 : index
    %c0_84 = arith.constant 0 : index
    %c2_85 = arith.constant 2 : index
    %c4_86 = arith.constant 4 : index
    %c0_87 = arith.constant 0 : index
    %46 = vector.load %arg2[%c0_83, %c0_84, %c2_85, %c4_86, %c0_87] : memref<1x1x12x20x64xf32, #tpu.memory_space<vmem>>, vector<1x1x8x16x64xf32>
    %47 = vector.shape_cast %46 : vector<1x1x8x16x64xf32> to vector<8x16x64xf32>
    %48 = tpu.concatenate %39, %41, %43, %45, %47 in 2 : vector<8x16x64xf32>, vector<8x16x64xf32>, vector<8x16x64xf32>, vector<8x16x64xf32>, vector<8x16x64xf32> -> vector<8x16x320xf32>
    %49 = vector.shape_cast %48 : vector<8x16x320xf32> to vector<128x320xf32>
    %c0_88 = arith.constant 0 : index
    %c0_89 = arith.constant 0 : index
    %50 = vector.load %arg6[%c0_88, %c0_89] : memref<128x32xf32, #tpu.memory_space<vmem>>, vector<128x32xf32>
    %c2_90 = arith.constant 2 : index
    %c0_91 = arith.constant 0 : index
    %c0_92 = arith.constant 0 : index
    %51 = vector.load %arg3[%c2_90, %c0_91, %c0_92] : memref<5x320x32xf32, #tpu.memory_space<vmem>>, vector<1x320x32xf32>
    %52 = vector.shape_cast %51 : vector<1x320x32xf32> to vector<320x32xf32>
    %cst_93 = arith.constant dense<0.000000e+00> : vector<128x32xf32>
    %53 = tpu.matmul %49, %52, %cst_93 {dimension_numbers = #tpu.dot_dimension_numbers<[1], [0], [0], [1], [0, 0, 1, 1], [], []>} : vector<128x320xf32>, vector<320x32xf32>, vector<128x32xf32> -> vector<128x32xf32>
    %54 = arith.addf %50, %53 : vector<128x32xf32>
    %c0_94 = arith.constant 0 : index
    %c0_95 = arith.constant 0 : index
    %55 = vector.load %arg6[%c0_94, %c0_95] : memref<128x32xf32, #tpu.memory_space<vmem>>, vector<128x32xf32>
    tpu.vector_store %arg6[%c0_94, %c0_95], %54 {strides = array<i32>} : memref<128x32xf32, #tpu.memory_space<vmem>>, vector<128x32xf32>,
    %c0_96 = arith.constant 0 : index
    %c0_97 = arith.constant 0 : index
    %c3_98 = arith.constant 3 : index
    %c0_99 = arith.constant 0 : index
    %c0_100 = arith.constant 0 : index
    %56 = vector.load %arg2[%c0_96, %c0_97, %c3_98, %c0_99, %c0_100] : memref<1x1x12x20x64xf32, #tpu.memory_space<vmem>>, vector<1x1x8x16x64xf32>
    %57 = vector.shape_cast %56 : vector<1x1x8x16x64xf32> to vector<8x16x64xf32>
    %c0_101 = arith.constant 0 : index
    %c0_102 = arith.constant 0 : index
    %c3_103 = arith.constant 3 : index
    %c1_104 = arith.constant 1 : index
    %c0_105 = arith.constant 0 : index
    %58 = vector.load %arg2[%c0_101, %c0_102, %c3_103, %c1_104, %c0_105] : memref<1x1x12x20x64xf32, #tpu.memory_space<vmem>>, vector<1x1x8x16x64xf32>
    %59 = vector.shape_cast %58 : vector<1x1x8x16x64xf32> to vector<8x16x64xf32>
    %c0_106 = arith.constant 0 : index
    %c0_107 = arith.constant 0 : index
    %c3_108 = arith.constant 3 : index
    %c2_109 = arith.constant 2 : index
    %c0_110 = arith.constant 0 : index
    %60 = vector.load %arg2[%c0_106, %c0_107, %c3_108, %c2_109, %c0_110] : memref<1x1x12x20x64xf32, #tpu.memory_space<vmem>>, vector<1x1x8x16x64xf32>
    %61 = vector.shape_cast %60 : vector<1x1x8x16x64xf32> to vector<8x16x64xf32>
    %c0_111 = arith.constant 0 : index
    %c0_112 = arith.constant 0 : index
    %c3_113 = arith.constant 3 : index
    %c3_114 = arith.constant 3 : index
    %c0_115 = arith.constant 0 : index
    %62 = vector.load %arg2[%c0_111, %c0_112, %c3_113, %c3_114, %c0_115] : memref<1x1x12x20x64xf32, #tpu.memory_space<vmem>>, vector<1x1x8x16x64xf32>
    %63 = vector.shape_cast %62 : vector<1x1x8x16x64xf32> to vector<8x16x64xf32>
    %c0_116 = arith.constant 0 : index
    %c0_117 = arith.constant 0 : index
    %c3_118 = arith.constant 3 : index
    %c4_119 = arith.constant 4 : index
    %c0_120 = arith.constant 0 : index
    %64 = vector.load %arg2[%c0_116, %c0_117, %c3_118, %c4_119, %c0_120] : memref<1x1x12x20x64xf32, #tpu.memory_space<vmem>>, vector<1x1x8x16x64xf32>
    %65 = vector.shape_cast %64 : vector<1x1x8x16x64xf32> to vector<8x16x64xf32>
    %66 = tpu.concatenate %57, %59, %61, %63, %65 in 2 : vector<8x16x64xf32>, vector<8x16x64xf32>, vector<8x16x64xf32>, vector<8x16x64xf32>, vector<8x16x64xf32> -> vector<8x16x320xf32>
    %67 = vector.shape_cast %66 : vector<8x16x320xf32> to vector<128x320xf32>
    %c0_121 = arith.constant 0 : index
    %c0_122 = arith.constant 0 : index
    %68 = vector.load %arg6[%c0_121, %c0_122] : memref<128x32xf32, #tpu.memory_space<vmem>>, vector<128x32xf32>
    %c3_123 = arith.constant 3 : index
    %c0_124 = arith.constant 0 : index
    %c0_125 = arith.constant 0 : index
    %69 = vector.load %arg3[%c3_123, %c0_124, %c0_125] : memref<5x320x32xf32, #tpu.memory_space<vmem>>, vector<1x320x32xf32>
    %70 = vector.shape_cast %69 : vector<1x320x32xf32> to vector<320x32xf32>
    %cst_126 = arith.constant dense<0.000000e+00> : vector<128x32xf32>
    %71 = tpu.matmul %67, %70, %cst_126 {dimension_numbers = #tpu.dot_dimension_numbers<[1], [0], [0], [1], [0, 0, 1, 1], [], []>} : vector<128x320xf32>, vector<320x32xf32>, vector<128x32xf32> -> vector<128x32xf32>
    %72 = arith.addf %68, %71 : vector<128x32xf32>
    %c0_127 = arith.constant 0 : index
    %c0_128 = arith.constant 0 : index
    %73 = vector.load %arg6[%c0_127, %c0_128] : memref<128x32xf32, #tpu.memory_space<vmem>>, vector<128x32xf32>
    tpu.vector_store %arg6[%c0_127, %c0_128], %72 {strides = array<i32>} : memref<128x32xf32, #tpu.memory_space<vmem>>, vector<128x32xf32>,
    %c0_129 = arith.constant 0 : index
    %c0_130 = arith.constant 0 : index
    %c4_131 = arith.constant 4 : index
    %c0_132 = arith.constant 0 : index
    %c0_133 = arith.constant 0 : index
    %74 = vector.load %arg2[%c0_129, %c0_130, %c4_131, %c0_132, %c0_133] : memref<1x1x12x20x64xf32, #tpu.memory_space<vmem>>, vector<1x1x8x16x64xf32>
    %75 = vector.shape_cast %74 : vector<1x1x8x16x64xf32> to vector<8x16x64xf32>
    %c0_134 = arith.constant 0 : index
    %c0_135 = arith.constant 0 : index
    %c4_136 = arith.constant 4 : index
    %c1_137 = arith.constant 1 : index
    %c0_138 = arith.constant 0 : index
    %76 = vector.load %arg2[%c0_134, %c0_135, %c4_136, %c1_137, %c0_138] : memref<1x1x12x20x64xf32, #tpu.memory_space<vmem>>, vector<1x1x8x16x64xf32>
    %77 = vector.shape_cast %76 : vector<1x1x8x16x64xf32> to vector<8x16x64xf32>
    %c0_139 = arith.constant 0 : index
    %c0_140 = arith.constant 0 : index
    %c4_141 = arith.constant 4 : index
    %c2_142 = arith.constant 2 : index
    %c0_143 = arith.constant 0 : index
    %78 = vector.load %arg2[%c0_139, %c0_140, %c4_141, %c2_142, %c0_143] : memref<1x1x12x20x64xf32, #tpu.memory_space<vmem>>, vector<1x1x8x16x64xf32>
    %79 = vector.shape_cast %78 : vector<1x1x8x16x64xf32> to vector<8x16x64xf32>
    %c0_144 = arith.constant 0 : index
    %c0_145 = arith.constant 0 : index
    %c4_146 = arith.constant 4 : index
    %c3_147 = arith.constant 3 : index
    %c0_148 = arith.constant 0 : index
    %80 = vector.load %arg2[%c0_144, %c0_145, %c4_146, %c3_147, %c0_148] : memref<1x1x12x20x64xf32, #tpu.memory_space<vmem>>, vector<1x1x8x16x64xf32>
    %81 = vector.shape_cast %80 : vector<1x1x8x16x64xf32> to vector<8x16x64xf32>
    %c0_149 = arith.constant 0 : index
    %c0_150 = arith.constant 0 : index
    %c4_151 = arith.constant 4 : index
    %c4_152 = arith.constant 4 : index
    %c0_153 = arith.constant 0 : index
    %82 = vector.load %arg2[%c0_149, %c0_150, %c4_151, %c4_152, %c0_153] : memref<1x1x12x20x64xf32, #tpu.memory_space<vmem>>, vector<1x1x8x16x64xf32>
    %83 = vector.shape_cast %82 : vector<1x1x8x16x64xf32> to vector<8x16x64xf32>
    %84 = tpu.concatenate %75, %77, %79, %81, %83 in 2 : vector<8x16x64xf32>, vector<8x16x64xf32>, vector<8x16x64xf32>, vector<8x16x64xf32>, vector<8x16x64xf32> -> vector<8x16x320xf32>
    %85 = vector.shape_cast %84 : vector<8x16x320xf32> to vector<128x320xf32>
    %c0_154 = arith.constant 0 : index
    %c0_155 = arith.constant 0 : index
    %86 = vector.load %arg6[%c0_154, %c0_155] : memref<128x32xf32, #tpu.memory_space<vmem>>, vector<128x32xf32>
    %c4_156 = arith.constant 4 : index
    %c0_157 = arith.constant 0 : index
    %c0_158 = arith.constant 0 : index
    %87 = vector.load %arg3[%c4_156, %c0_157, %c0_158] : memref<5x320x32xf32, #tpu.memory_space<vmem>>, vector<1x320x32xf32>
    %88 = vector.shape_cast %87 : vector<1x320x32xf32> to vector<320x32xf32>
    %cst_159 = arith.constant dense<0.000000e+00> : vector<128x32xf32>
    %89 = tpu.matmul %85, %88, %cst_159 {dimension_numbers = #tpu.dot_dimension_numbers<[1], [0], [0], [1], [0, 0, 1, 1], [], []>} : vector<128x320xf32>, vector<320x32xf32>, vector<128x32xf32> -> vector<128x32xf32>
    %90 = arith.addf %86, %89 : vector<128x32xf32>
    %c0_160 = arith.constant 0 : index
    %c0_161 = arith.constant 0 : index
    %91 = vector.load %arg6[%c0_160, %c0_161] : memref<128x32xf32, #tpu.memory_space<vmem>>, vector<128x32xf32>
    tpu.vector_store %arg6[%c0_160, %c0_161], %90 {strides = array<i32>} : memref<128x32xf32, #tpu.memory_space<vmem>>, vector<128x32xf32>,
    %c0_162 = arith.constant 0 : index
    %c0_163 = arith.constant 0 : index
    %92 = vector.load %arg6[%c0_162, %c0_163] : memref<128x32xf32, #tpu.memory_space<vmem>>, vector<128x32xf32>
    %c0_164 = arith.constant 0 : index
    %c0_165 = arith.constant 0 : index
    %93 = vector.load %arg4[%c0_164, %c0_165] : memref<1x32xf32, #tpu.memory_space<vmem>>, vector<1x32xf32>
    %94 = vector.broadcast %93 : vector<1x32xf32> to vector<128x32xf32>
    %95 = arith.addf %92, %94 : vector<128x32xf32>
    %cst_166 = arith.constant 0.000000e+00 : f32
    %96 = vector.broadcast %cst_166 : f32 to vector<128x32xf32>
    %97 = arith.maximumf %95, %96 : vector<128x32xf32>
    %98 = vector.shape_cast %97 : vector<128x32xf32> to vector<1x8x16x32xf32>
    %c0_167 = arith.constant 0 : index
    %c0_168 = arith.constant 0 : index
    %c0_169 = arith.constant 0 : index
    %c0_170 = arith.constant 0 : index
    %99 = vector.load %arg5[%c0_167, %c0_168, %c0_169, %c0_170] : memref<1x8x16x32xf32, #tpu.memory_space<vmem>>, vector<1x8x16x32xf32>
    tpu.vector_store %arg5[%c0_167, %c0_168, %c0_169, %c0_170], %98 {strides = array<i32>} : memref<1x8x16x32xf32, #tpu.memory_space<vmem>>, vector<1x8x16x32xf32>,
    return
  }
  func.func @transform_0(%arg0: i32, %arg1: i32) -> (i32, i32, i32, i32, i32) {
    %c0_i32 = arith.constant 0 : i32
    %c0_i32_0 = arith.constant 0 : i32
    %c0_i32_1 = arith.constant 0 : i32
    %c0_i32_2 = arith.constant 0 : i32
    return %arg0, %arg1, %c0_i32, %c0_i32_0, %c0_i32_1 : i32, i32, i32, i32, i32
  }
  func.func @transform_1(%arg0: i32, %arg1: i32) -> (i32, i32, i32) {
    %c0_i32 = arith.constant 0 : i32
    %c0_i32_0 = arith.constant 0 : i32
    %c0_i32_1 = arith.constant 0 : i32
    %c0_i32_2 = arith.constant 0 : i32
    return %c0_i32, %c0_i32_0, %c0_i32_1 : i32, i32, i32
  }
  func.func @transform_2(%arg0: i32, %arg1: i32) -> (i32, i32) {
    %c0_i32 = arith.constant 0 : i32
    %c0_i32_0 = arith.constant 0 : i32
    %c0_i32_1 = arith.constant 0 : i32
    return %c0_i32, %c0_i32_0 : i32, i32
  }
  func.func @transform_3(%arg0: i32, %arg1: i32) -> (i32, i32, i32, i32) {
    %c0_i32 = arith.constant 0 : i32
    %c0_i32_0 = arith.constant 0 : i32
    %c0_i32_1 = arith.constant 0 : i32
    return %arg0, %arg1, %c0_i32, %c0_i32_0 : i32, i32, i32, i32
  }
}

module attributes {stable_mosaic.version = 11 : i64} {
  func.func @_conv_small_cout_kernel(%arg0: i32, %arg1: i32, %arg2: memref<1x1x12x20x32xf32, #tpu.memory_space<vmem>>, %arg3: memref<1x5x5x32xf32, #tpu.memory_space<vmem>>, %arg4: memref<1x1x1x1xf32, #tpu.memory_space<vmem>>, %arg5: memref<1x1x8x16xf32, #tpu.memory_space<vmem>>) attributes {dimension_semantics = [#tpu.dimension_semantics<parallel>, #tpu.dimension_semantics<parallel>], iteration_bounds = array<i64: 2, 2>, scalar_prefetch = 0 : i64, scratch_operands = 0 : i64, tpu.core_type = #tpu.core_type<tc>, window_params = [{transform_indices = @transform_0, window_bounds = array<i64: 1, 1, 12, 20, 32>}, {pipeline_mode = #tpu.pipeline_mode<synchronous>, transform_indices = @transform_1, window_bounds = array<i64: 1, 5, 5, 32>}, {pipeline_mode = #tpu.pipeline_mode<synchronous>, transform_indices = @transform_2, window_bounds = array<i64: 1, 1, 1, 1>}, {transform_indices = @transform_3, window_bounds = array<i64: 1, 1, 8, 16>}]} {
    %cst = arith.constant 0.000000e+00 : f32
    %0 = vector.broadcast %cst : f32 to vector<8x16xf32>
    %c0 = arith.constant 0 : index
    %c0_0 = arith.constant 0 : index
    %c0_1 = arith.constant 0 : index
    %c0_2 = arith.constant 0 : index
    %c0_3 = arith.constant 0 : index
    %1 = vector.load %arg2[%c0, %c0_0, %c0_1, %c0_2, %c0_3] : memref<1x1x12x20x32xf32, #tpu.memory_space<vmem>>, vector<1x1x8x16x32xf32>
    %2 = vector.shape_cast %1 : vector<1x1x8x16x32xf32> to vector<8x16x32xf32>
    %c0_4 = arith.constant 0 : index
    %c0_5 = arith.constant 0 : index
    %c0_6 = arith.constant 0 : index
    %c0_7 = arith.constant 0 : index
    %3 = vector.load %arg3[%c0_4, %c0_5, %c0_6, %c0_7] : memref<1x5x5x32xf32, #tpu.memory_space<vmem>>, vector<1x1x1x32xf32>
    %4 = vector.shape_cast %3 : vector<1x1x1x32xf32> to vector<32xf32>
    %5 = vector.shape_cast %4 : vector<32xf32> to vector<1x1x32xf32>
    %6 = vector.broadcast %5 : vector<1x1x32xf32> to vector<8x16x32xf32>
    %7 = arith.mulf %2, %6 : vector<8x16x32xf32>
    %cst_8 = arith.constant dense<0.000000e+00> : vector<8x16xf32>
    %8 = vector.multi_reduction <add>, %7, %cst_8 [2] : vector<8x16x32xf32> to vector<8x16xf32>
    %9 = arith.addf %0, %8 : vector<8x16xf32>
    %c0_9 = arith.constant 0 : index
    %c0_10 = arith.constant 0 : index
    %c0_11 = arith.constant 0 : index
    %c1 = arith.constant 1 : index
    %c0_12 = arith.constant 0 : index
    %10 = vector.load %arg2[%c0_9, %c0_10, %c0_11, %c1, %c0_12] : memref<1x1x12x20x32xf32, #tpu.memory_space<vmem>>, vector<1x1x8x16x32xf32>
    %11 = vector.shape_cast %10 : vector<1x1x8x16x32xf32> to vector<8x16x32xf32>
    %c0_13 = arith.constant 0 : index
    %c0_14 = arith.constant 0 : index
    %c1_15 = arith.constant 1 : index
    %c0_16 = arith.constant 0 : index
    %12 = vector.load %arg3[%c0_13, %c0_14, %c1_15, %c0_16] : memref<1x5x5x32xf32, #tpu.memory_space<vmem>>, vector<1x1x1x32xf32>
    %13 = vector.shape_cast %12 : vector<1x1x1x32xf32> to vector<32xf32>
    %14 = vector.shape_cast %13 : vector<32xf32> to vector<1x1x32xf32>
    %15 = vector.broadcast %14 : vector<1x1x32xf32> to vector<8x16x32xf32>
    %16 = arith.mulf %11, %15 : vector<8x16x32xf32>
    %cst_17 = arith.constant dense<0.000000e+00> : vector<8x16xf32>
    %17 = vector.multi_reduction <add>, %16, %cst_17 [2] : vector<8x16x32xf32> to vector<8x16xf32>
    %18 = arith.addf %9, %17 : vector<8x16xf32>
    %c0_18 = arith.constant 0 : index
    %c0_19 = arith.constant 0 : index
    %c0_20 = arith.constant 0 : index
    %c2 = arith.constant 2 : index
    %c0_21 = arith.constant 0 : index
    %19 = vector.load %arg2[%c0_18, %c0_19, %c0_20, %c2, %c0_21] : memref<1x1x12x20x32xf32, #tpu.memory_space<vmem>>, vector<1x1x8x16x32xf32>
    %20 = vector.shape_cast %19 : vector<1x1x8x16x32xf32> to vector<8x16x32xf32>
    %c0_22 = arith.constant 0 : index
    %c0_23 = arith.constant 0 : index
    %c2_24 = arith.constant 2 : index
    %c0_25 = arith.constant 0 : index
    %21 = vector.load %arg3[%c0_22, %c0_23, %c2_24, %c0_25] : memref<1x5x5x32xf32, #tpu.memory_space<vmem>>, vector<1x1x1x32xf32>
    %22 = vector.shape_cast %21 : vector<1x1x1x32xf32> to vector<32xf32>
    %23 = vector.shape_cast %22 : vector<32xf32> to vector<1x1x32xf32>
    %24 = vector.broadcast %23 : vector<1x1x32xf32> to vector<8x16x32xf32>
    %25 = arith.mulf %20, %24 : vector<8x16x32xf32>
    %cst_26 = arith.constant dense<0.000000e+00> : vector<8x16xf32>
    %26 = vector.multi_reduction <add>, %25, %cst_26 [2] : vector<8x16x32xf32> to vector<8x16xf32>
    %27 = arith.addf %18, %26 : vector<8x16xf32>
    %c0_27 = arith.constant 0 : index
    %c0_28 = arith.constant 0 : index
    %c0_29 = arith.constant 0 : index
    %c3 = arith.constant 3 : index
    %c0_30 = arith.constant 0 : index
    %28 = vector.load %arg2[%c0_27, %c0_28, %c0_29, %c3, %c0_30] : memref<1x1x12x20x32xf32, #tpu.memory_space<vmem>>, vector<1x1x8x16x32xf32>
    %29 = vector.shape_cast %28 : vector<1x1x8x16x32xf32> to vector<8x16x32xf32>
    %c0_31 = arith.constant 0 : index
    %c0_32 = arith.constant 0 : index
    %c3_33 = arith.constant 3 : index
    %c0_34 = arith.constant 0 : index
    %30 = vector.load %arg3[%c0_31, %c0_32, %c3_33, %c0_34] : memref<1x5x5x32xf32, #tpu.memory_space<vmem>>, vector<1x1x1x32xf32>
    %31 = vector.shape_cast %30 : vector<1x1x1x32xf32> to vector<32xf32>
    %32 = vector.shape_cast %31 : vector<32xf32> to vector<1x1x32xf32>
    %33 = vector.broadcast %32 : vector<1x1x32xf32> to vector<8x16x32xf32>
    %34 = arith.mulf %29, %33 : vector<8x16x32xf32>
    %cst_35 = arith.constant dense<0.000000e+00> : vector<8x16xf32>
    %35 = vector.multi_reduction <add>, %34, %cst_35 [2] : vector<8x16x32xf32> to vector<8x16xf32>
    %36 = arith.addf %27, %35 : vector<8x16xf32>
    %c0_36 = arith.constant 0 : index
    %c0_37 = arith.constant 0 : index
    %c0_38 = arith.constant 0 : index
    %c4 = arith.constant 4 : index
    %c0_39 = arith.constant 0 : index
    %37 = vector.load %arg2[%c0_36, %c0_37, %c0_38, %c4, %c0_39] : memref<1x1x12x20x32xf32, #tpu.memory_space<vmem>>, vector<1x1x8x16x32xf32>
    %38 = vector.shape_cast %37 : vector<1x1x8x16x32xf32> to vector<8x16x32xf32>
    %c0_40 = arith.constant 0 : index
    %c0_41 = arith.constant 0 : index
    %c4_42 = arith.constant 4 : index
    %c0_43 = arith.constant 0 : index
    %39 = vector.load %arg3[%c0_40, %c0_41, %c4_42, %c0_43] : memref<1x5x5x32xf32, #tpu.memory_space<vmem>>, vector<1x1x1x32xf32>
    %40 = vector.shape_cast %39 : vector<1x1x1x32xf32> to vector<32xf32>
    %41 = vector.shape_cast %40 : vector<32xf32> to vector<1x1x32xf32>
    %42 = vector.broadcast %41 : vector<1x1x32xf32> to vector<8x16x32xf32>
    %43 = arith.mulf %38, %42 : vector<8x16x32xf32>
    %cst_44 = arith.constant dense<0.000000e+00> : vector<8x16xf32>
    %44 = vector.multi_reduction <add>, %43, %cst_44 [2] : vector<8x16x32xf32> to vector<8x16xf32>
    %45 = arith.addf %36, %44 : vector<8x16xf32>
    %c0_45 = arith.constant 0 : index
    %c0_46 = arith.constant 0 : index
    %c1_47 = arith.constant 1 : index
    %c0_48 = arith.constant 0 : index
    %c0_49 = arith.constant 0 : index
    %46 = vector.load %arg2[%c0_45, %c0_46, %c1_47, %c0_48, %c0_49] : memref<1x1x12x20x32xf32, #tpu.memory_space<vmem>>, vector<1x1x8x16x32xf32>
    %47 = vector.shape_cast %46 : vector<1x1x8x16x32xf32> to vector<8x16x32xf32>
    %c0_50 = arith.constant 0 : index
    %c1_51 = arith.constant 1 : index
    %c0_52 = arith.constant 0 : index
    %c0_53 = arith.constant 0 : index
    %48 = vector.load %arg3[%c0_50, %c1_51, %c0_52, %c0_53] : memref<1x5x5x32xf32, #tpu.memory_space<vmem>>, vector<1x1x1x32xf32>
    %49 = vector.shape_cast %48 : vector<1x1x1x32xf32> to vector<32xf32>
    %50 = vector.shape_cast %49 : vector<32xf32> to vector<1x1x32xf32>
    %51 = vector.broadcast %50 : vector<1x1x32xf32> to vector<8x16x32xf32>
    %52 = arith.mulf %47, %51 : vector<8x16x32xf32>
    %cst_54 = arith.constant dense<0.000000e+00> : vector<8x16xf32>
    %53 = vector.multi_reduction <add>, %52, %cst_54 [2] : vector<8x16x32xf32> to vector<8x16xf32>
    %54 = arith.addf %45, %53 : vector<8x16xf32>
    %c0_55 = arith.constant 0 : index
    %c0_56 = arith.constant 0 : index
    %c1_57 = arith.constant 1 : index
    %c1_58 = arith.constant 1 : index
    %c0_59 = arith.constant 0 : index
    %55 = vector.load %arg2[%c0_55, %c0_56, %c1_57, %c1_58, %c0_59] : memref<1x1x12x20x32xf32, #tpu.memory_space<vmem>>, vector<1x1x8x16x32xf32>
    %56 = vector.shape_cast %55 : vector<1x1x8x16x32xf32> to vector<8x16x32xf32>
    %c0_60 = arith.constant 0 : index
    %c1_61 = arith.constant 1 : index
    %c1_62 = arith.constant 1 : index
    %c0_63 = arith.constant 0 : index
    %57 = vector.load %arg3[%c0_60, %c1_61, %c1_62, %c0_63] : memref<1x5x5x32xf32, #tpu.memory_space<vmem>>, vector<1x1x1x32xf32>
    %58 = vector.shape_cast %57 : vector<1x1x1x32xf32> to vector<32xf32>
    %59 = vector.shape_cast %58 : vector<32xf32> to vector<1x1x32xf32>
    %60 = vector.broadcast %59 : vector<1x1x32xf32> to vector<8x16x32xf32>
    %61 = arith.mulf %56, %60 : vector<8x16x32xf32>
    %cst_64 = arith.constant dense<0.000000e+00> : vector<8x16xf32>
    %62 = vector.multi_reduction <add>, %61, %cst_64 [2] : vector<8x16x32xf32> to vector<8x16xf32>
    %63 = arith.addf %54, %62 : vector<8x16xf32>
    %c0_65 = arith.constant 0 : index
    %c0_66 = arith.constant 0 : index
    %c1_67 = arith.constant 1 : index
    %c2_68 = arith.constant 2 : index
    %c0_69 = arith.constant 0 : index
    %64 = vector.load %arg2[%c0_65, %c0_66, %c1_67, %c2_68, %c0_69] : memref<1x1x12x20x32xf32, #tpu.memory_space<vmem>>, vector<1x1x8x16x32xf32>
    %65 = vector.shape_cast %64 : vector<1x1x8x16x32xf32> to vector<8x16x32xf32>
    %c0_70 = arith.constant 0 : index
    %c1_71 = arith.constant 1 : index
    %c2_72 = arith.constant 2 : index
    %c0_73 = arith.constant 0 : index
    %66 = vector.load %arg3[%c0_70, %c1_71, %c2_72, %c0_73] : memref<1x5x5x32xf32, #tpu.memory_space<vmem>>, vector<1x1x1x32xf32>
    %67 = vector.shape_cast %66 : vector<1x1x1x32xf32> to vector<32xf32>
    %68 = vector.shape_cast %67 : vector<32xf32> to vector<1x1x32xf32>
    %69 = vector.broadcast %68 : vector<1x1x32xf32> to vector<8x16x32xf32>
    %70 = arith.mulf %65, %69 : vector<8x16x32xf32>
    %cst_74 = arith.constant dense<0.000000e+00> : vector<8x16xf32>
    %71 = vector.multi_reduction <add>, %70, %cst_74 [2] : vector<8x16x32xf32> to vector<8x16xf32>
    %72 = arith.addf %63, %71 : vector<8x16xf32>
    %c0_75 = arith.constant 0 : index
    %c0_76 = arith.constant 0 : index
    %c1_77 = arith.constant 1 : index
    %c3_78 = arith.constant 3 : index
    %c0_79 = arith.constant 0 : index
    %73 = vector.load %arg2[%c0_75, %c0_76, %c1_77, %c3_78, %c0_79] : memref<1x1x12x20x32xf32, #tpu.memory_space<vmem>>, vector<1x1x8x16x32xf32>
    %74 = vector.shape_cast %73 : vector<1x1x8x16x32xf32> to vector<8x16x32xf32>
    %c0_80 = arith.constant 0 : index
    %c1_81 = arith.constant 1 : index
    %c3_82 = arith.constant 3 : index
    %c0_83 = arith.constant 0 : index
    %75 = vector.load %arg3[%c0_80, %c1_81, %c3_82, %c0_83] : memref<1x5x5x32xf32, #tpu.memory_space<vmem>>, vector<1x1x1x32xf32>
    %76 = vector.shape_cast %75 : vector<1x1x1x32xf32> to vector<32xf32>
    %77 = vector.shape_cast %76 : vector<32xf32> to vector<1x1x32xf32>
    %78 = vector.broadcast %77 : vector<1x1x32xf32> to vector<8x16x32xf32>
    %79 = arith.mulf %74, %78 : vector<8x16x32xf32>
    %cst_84 = arith.constant dense<0.000000e+00> : vector<8x16xf32>
    %80 = vector.multi_reduction <add>, %79, %cst_84 [2] : vector<8x16x32xf32> to vector<8x16xf32>
    %81 = arith.addf %72, %80 : vector<8x16xf32>
    %c0_85 = arith.constant 0 : index
    %c0_86 = arith.constant 0 : index
    %c1_87 = arith.constant 1 : index
    %c4_88 = arith.constant 4 : index
    %c0_89 = arith.constant 0 : index
    %82 = vector.load %arg2[%c0_85, %c0_86, %c1_87, %c4_88, %c0_89] : memref<1x1x12x20x32xf32, #tpu.memory_space<vmem>>, vector<1x1x8x16x32xf32>
    %83 = vector.shape_cast %82 : vector<1x1x8x16x32xf32> to vector<8x16x32xf32>
    %c0_90 = arith.constant 0 : index
    %c1_91 = arith.constant 1 : index
    %c4_92 = arith.constant 4 : index
    %c0_93 = arith.constant 0 : index
    %84 = vector.load %arg3[%c0_90, %c1_91, %c4_92, %c0_93] : memref<1x5x5x32xf32, #tpu.memory_space<vmem>>, vector<1x1x1x32xf32>
    %85 = vector.shape_cast %84 : vector<1x1x1x32xf32> to vector<32xf32>
    %86 = vector.shape_cast %85 : vector<32xf32> to vector<1x1x32xf32>
    %87 = vector.broadcast %86 : vector<1x1x32xf32> to vector<8x16x32xf32>
    %88 = arith.mulf %83, %87 : vector<8x16x32xf32>
    %cst_94 = arith.constant dense<0.000000e+00> : vector<8x16xf32>
    %89 = vector.multi_reduction <add>, %88, %cst_94 [2] : vector<8x16x32xf32> to vector<8x16xf32>
    %90 = arith.addf %81, %89 : vector<8x16xf32>
    %c0_95 = arith.constant 0 : index
    %c0_96 = arith.constant 0 : index
    %c2_97 = arith.constant 2 : index
    %c0_98 = arith.constant 0 : index
    %c0_99 = arith.constant 0 : index
    %91 = vector.load %arg2[%c0_95, %c0_96, %c2_97, %c0_98, %c0_99] : memref<1x1x12x20x32xf32, #tpu.memory_space<vmem>>, vector<1x1x8x16x32xf32>
    %92 = vector.shape_cast %91 : vector<1x1x8x16x32xf32> to vector<8x16x32xf32>
    %c0_100 = arith.constant 0 : index
    %c2_101 = arith.constant 2 : index
    %c0_102 = arith.constant 0 : index
    %c0_103 = arith.constant 0 : index
    %93 = vector.load %arg3[%c0_100, %c2_101, %c0_102, %c0_103] : memref<1x5x5x32xf32, #tpu.memory_space<vmem>>, vector<1x1x1x32xf32>
    %94 = vector.shape_cast %93 : vector<1x1x1x32xf32> to vector<32xf32>
    %95 = vector.shape_cast %94 : vector<32xf32> to vector<1x1x32xf32>
    %96 = vector.broadcast %95 : vector<1x1x32xf32> to vector<8x16x32xf32>
    %97 = arith.mulf %92, %96 : vector<8x16x32xf32>
    %cst_104 = arith.constant dense<0.000000e+00> : vector<8x16xf32>
    %98 = vector.multi_reduction <add>, %97, %cst_104 [2] : vector<8x16x32xf32> to vector<8x16xf32>
    %99 = arith.addf %90, %98 : vector<8x16xf32>
    %c0_105 = arith.constant 0 : index
    %c0_106 = arith.constant 0 : index
    %c2_107 = arith.constant 2 : index
    %c1_108 = arith.constant 1 : index
    %c0_109 = arith.constant 0 : index
    %100 = vector.load %arg2[%c0_105, %c0_106, %c2_107, %c1_108, %c0_109] : memref<1x1x12x20x32xf32, #tpu.memory_space<vmem>>, vector<1x1x8x16x32xf32>
    %101 = vector.shape_cast %100 : vector<1x1x8x16x32xf32> to vector<8x16x32xf32>
    %c0_110 = arith.constant 0 : index
    %c2_111 = arith.constant 2 : index
    %c1_112 = arith.constant 1 : index
    %c0_113 = arith.constant 0 : index
    %102 = vector.load %arg3[%c0_110, %c2_111, %c1_112, %c0_113] : memref<1x5x5x32xf32, #tpu.memory_space<vmem>>, vector<1x1x1x32xf32>
    %103 = vector.shape_cast %102 : vector<1x1x1x32xf32> to vector<32xf32>
    %104 = vector.shape_cast %103 : vector<32xf32> to vector<1x1x32xf32>
    %105 = vector.broadcast %104 : vector<1x1x32xf32> to vector<8x16x32xf32>
    %106 = arith.mulf %101, %105 : vector<8x16x32xf32>
    %cst_114 = arith.constant dense<0.000000e+00> : vector<8x16xf32>
    %107 = vector.multi_reduction <add>, %106, %cst_114 [2] : vector<8x16x32xf32> to vector<8x16xf32>
    %108 = arith.addf %99, %107 : vector<8x16xf32>
    %c0_115 = arith.constant 0 : index
    %c0_116 = arith.constant 0 : index
    %c2_117 = arith.constant 2 : index
    %c2_118 = arith.constant 2 : index
    %c0_119 = arith.constant 0 : index
    %109 = vector.load %arg2[%c0_115, %c0_116, %c2_117, %c2_118, %c0_119] : memref<1x1x12x20x32xf32, #tpu.memory_space<vmem>>, vector<1x1x8x16x32xf32>
    %110 = vector.shape_cast %109 : vector<1x1x8x16x32xf32> to vector<8x16x32xf32>
    %c0_120 = arith.constant 0 : index
    %c2_121 = arith.constant 2 : index
    %c2_122 = arith.constant 2 : index
    %c0_123 = arith.constant 0 : index
    %111 = vector.load %arg3[%c0_120, %c2_121, %c2_122, %c0_123] : memref<1x5x5x32xf32, #tpu.memory_space<vmem>>, vector<1x1x1x32xf32>
    %112 = vector.shape_cast %111 : vector<1x1x1x32xf32> to vector<32xf32>
    %113 = vector.shape_cast %112 : vector<32xf32> to vector<1x1x32xf32>
    %114 = vector.broadcast %113 : vector<1x1x32xf32> to vector<8x16x32xf32>
    %115 = arith.mulf %110, %114 : vector<8x16x32xf32>
    %cst_124 = arith.constant dense<0.000000e+00> : vector<8x16xf32>
    %116 = vector.multi_reduction <add>, %115, %cst_124 [2] : vector<8x16x32xf32> to vector<8x16xf32>
    %117 = arith.addf %108, %116 : vector<8x16xf32>
    %c0_125 = arith.constant 0 : index
    %c0_126 = arith.constant 0 : index
    %c2_127 = arith.constant 2 : index
    %c3_128 = arith.constant 3 : index
    %c0_129 = arith.constant 0 : index
    %118 = vector.load %arg2[%c0_125, %c0_126, %c2_127, %c3_128, %c0_129] : memref<1x1x12x20x32xf32, #tpu.memory_space<vmem>>, vector<1x1x8x16x32xf32>
    %119 = vector.shape_cast %118 : vector<1x1x8x16x32xf32> to vector<8x16x32xf32>
    %c0_130 = arith.constant 0 : index
    %c2_131 = arith.constant 2 : index
    %c3_132 = arith.constant 3 : index
    %c0_133 = arith.constant 0 : index
    %120 = vector.load %arg3[%c0_130, %c2_131, %c3_132, %c0_133] : memref<1x5x5x32xf32, #tpu.memory_space<vmem>>, vector<1x1x1x32xf32>
    %121 = vector.shape_cast %120 : vector<1x1x1x32xf32> to vector<32xf32>
    %122 = vector.shape_cast %121 : vector<32xf32> to vector<1x1x32xf32>
    %123 = vector.broadcast %122 : vector<1x1x32xf32> to vector<8x16x32xf32>
    %124 = arith.mulf %119, %123 : vector<8x16x32xf32>
    %cst_134 = arith.constant dense<0.000000e+00> : vector<8x16xf32>
    %125 = vector.multi_reduction <add>, %124, %cst_134 [2] : vector<8x16x32xf32> to vector<8x16xf32>
    %126 = arith.addf %117, %125 : vector<8x16xf32>
    %c0_135 = arith.constant 0 : index
    %c0_136 = arith.constant 0 : index
    %c2_137 = arith.constant 2 : index
    %c4_138 = arith.constant 4 : index
    %c0_139 = arith.constant 0 : index
    %127 = vector.load %arg2[%c0_135, %c0_136, %c2_137, %c4_138, %c0_139] : memref<1x1x12x20x32xf32, #tpu.memory_space<vmem>>, vector<1x1x8x16x32xf32>
    %128 = vector.shape_cast %127 : vector<1x1x8x16x32xf32> to vector<8x16x32xf32>
    %c0_140 = arith.constant 0 : index
    %c2_141 = arith.constant 2 : index
    %c4_142 = arith.constant 4 : index
    %c0_143 = arith.constant 0 : index
    %129 = vector.load %arg3[%c0_140, %c2_141, %c4_142, %c0_143] : memref<1x5x5x32xf32, #tpu.memory_space<vmem>>, vector<1x1x1x32xf32>
    %130 = vector.shape_cast %129 : vector<1x1x1x32xf32> to vector<32xf32>
    %131 = vector.shape_cast %130 : vector<32xf32> to vector<1x1x32xf32>
    %132 = vector.broadcast %131 : vector<1x1x32xf32> to vector<8x16x32xf32>
    %133 = arith.mulf %128, %132 : vector<8x16x32xf32>
    %cst_144 = arith.constant dense<0.000000e+00> : vector<8x16xf32>
    %134 = vector.multi_reduction <add>, %133, %cst_144 [2] : vector<8x16x32xf32> to vector<8x16xf32>
    %135 = arith.addf %126, %134 : vector<8x16xf32>
    %c0_145 = arith.constant 0 : index
    %c0_146 = arith.constant 0 : index
    %c3_147 = arith.constant 3 : index
    %c0_148 = arith.constant 0 : index
    %c0_149 = arith.constant 0 : index
    %136 = vector.load %arg2[%c0_145, %c0_146, %c3_147, %c0_148, %c0_149] : memref<1x1x12x20x32xf32, #tpu.memory_space<vmem>>, vector<1x1x8x16x32xf32>
    %137 = vector.shape_cast %136 : vector<1x1x8x16x32xf32> to vector<8x16x32xf32>
    %c0_150 = arith.constant 0 : index
    %c3_151 = arith.constant 3 : index
    %c0_152 = arith.constant 0 : index
    %c0_153 = arith.constant 0 : index
    %138 = vector.load %arg3[%c0_150, %c3_151, %c0_152, %c0_153] : memref<1x5x5x32xf32, #tpu.memory_space<vmem>>, vector<1x1x1x32xf32>
    %139 = vector.shape_cast %138 : vector<1x1x1x32xf32> to vector<32xf32>
    %140 = vector.shape_cast %139 : vector<32xf32> to vector<1x1x32xf32>
    %141 = vector.broadcast %140 : vector<1x1x32xf32> to vector<8x16x32xf32>
    %142 = arith.mulf %137, %141 : vector<8x16x32xf32>
    %cst_154 = arith.constant dense<0.000000e+00> : vector<8x16xf32>
    %143 = vector.multi_reduction <add>, %142, %cst_154 [2] : vector<8x16x32xf32> to vector<8x16xf32>
    %144 = arith.addf %135, %143 : vector<8x16xf32>
    %c0_155 = arith.constant 0 : index
    %c0_156 = arith.constant 0 : index
    %c3_157 = arith.constant 3 : index
    %c1_158 = arith.constant 1 : index
    %c0_159 = arith.constant 0 : index
    %145 = vector.load %arg2[%c0_155, %c0_156, %c3_157, %c1_158, %c0_159] : memref<1x1x12x20x32xf32, #tpu.memory_space<vmem>>, vector<1x1x8x16x32xf32>
    %146 = vector.shape_cast %145 : vector<1x1x8x16x32xf32> to vector<8x16x32xf32>
    %c0_160 = arith.constant 0 : index
    %c3_161 = arith.constant 3 : index
    %c1_162 = arith.constant 1 : index
    %c0_163 = arith.constant 0 : index
    %147 = vector.load %arg3[%c0_160, %c3_161, %c1_162, %c0_163] : memref<1x5x5x32xf32, #tpu.memory_space<vmem>>, vector<1x1x1x32xf32>
    %148 = vector.shape_cast %147 : vector<1x1x1x32xf32> to vector<32xf32>
    %149 = vector.shape_cast %148 : vector<32xf32> to vector<1x1x32xf32>
    %150 = vector.broadcast %149 : vector<1x1x32xf32> to vector<8x16x32xf32>
    %151 = arith.mulf %146, %150 : vector<8x16x32xf32>
    %cst_164 = arith.constant dense<0.000000e+00> : vector<8x16xf32>
    %152 = vector.multi_reduction <add>, %151, %cst_164 [2] : vector<8x16x32xf32> to vector<8x16xf32>
    %153 = arith.addf %144, %152 : vector<8x16xf32>
    %c0_165 = arith.constant 0 : index
    %c0_166 = arith.constant 0 : index
    %c3_167 = arith.constant 3 : index
    %c2_168 = arith.constant 2 : index
    %c0_169 = arith.constant 0 : index
    %154 = vector.load %arg2[%c0_165, %c0_166, %c3_167, %c2_168, %c0_169] : memref<1x1x12x20x32xf32, #tpu.memory_space<vmem>>, vector<1x1x8x16x32xf32>
    %155 = vector.shape_cast %154 : vector<1x1x8x16x32xf32> to vector<8x16x32xf32>
    %c0_170 = arith.constant 0 : index
    %c3_171 = arith.constant 3 : index
    %c2_172 = arith.constant 2 : index
    %c0_173 = arith.constant 0 : index
    %156 = vector.load %arg3[%c0_170, %c3_171, %c2_172, %c0_173] : memref<1x5x5x32xf32, #tpu.memory_space<vmem>>, vector<1x1x1x32xf32>
    %157 = vector.shape_cast %156 : vector<1x1x1x32xf32> to vector<32xf32>
    %158 = vector.shape_cast %157 : vector<32xf32> to vector<1x1x32xf32>
    %159 = vector.broadcast %158 : vector<1x1x32xf32> to vector<8x16x32xf32>
    %160 = arith.mulf %155, %159 : vector<8x16x32xf32>
    %cst_174 = arith.constant dense<0.000000e+00> : vector<8x16xf32>
    %161 = vector.multi_reduction <add>, %160, %cst_174 [2] : vector<8x16x32xf32> to vector<8x16xf32>
    %162 = arith.addf %153, %161 : vector<8x16xf32>
    %c0_175 = arith.constant 0 : index
    %c0_176 = arith.constant 0 : index
    %c3_177 = arith.constant 3 : index
    %c3_178 = arith.constant 3 : index
    %c0_179 = arith.constant 0 : index
    %163 = vector.load %arg2[%c0_175, %c0_176, %c3_177, %c3_178, %c0_179] : memref<1x1x12x20x32xf32, #tpu.memory_space<vmem>>, vector<1x1x8x16x32xf32>
    %164 = vector.shape_cast %163 : vector<1x1x8x16x32xf32> to vector<8x16x32xf32>
    %c0_180 = arith.constant 0 : index
    %c3_181 = arith.constant 3 : index
    %c3_182 = arith.constant 3 : index
    %c0_183 = arith.constant 0 : index
    %165 = vector.load %arg3[%c0_180, %c3_181, %c3_182, %c0_183] : memref<1x5x5x32xf32, #tpu.memory_space<vmem>>, vector<1x1x1x32xf32>
    %166 = vector.shape_cast %165 : vector<1x1x1x32xf32> to vector<32xf32>
    %167 = vector.shape_cast %166 : vector<32xf32> to vector<1x1x32xf32>
    %168 = vector.broadcast %167 : vector<1x1x32xf32> to vector<8x16x32xf32>
    %169 = arith.mulf %164, %168 : vector<8x16x32xf32>
    %cst_184 = arith.constant dense<0.000000e+00> : vector<8x16xf32>
    %170 = vector.multi_reduction <add>, %169, %cst_184 [2] : vector<8x16x32xf32> to vector<8x16xf32>
    %171 = arith.addf %162, %170 : vector<8x16xf32>
    %c0_185 = arith.constant 0 : index
    %c0_186 = arith.constant 0 : index
    %c3_187 = arith.constant 3 : index
    %c4_188 = arith.constant 4 : index
    %c0_189 = arith.constant 0 : index
    %172 = vector.load %arg2[%c0_185, %c0_186, %c3_187, %c4_188, %c0_189] : memref<1x1x12x20x32xf32, #tpu.memory_space<vmem>>, vector<1x1x8x16x32xf32>
    %173 = vector.shape_cast %172 : vector<1x1x8x16x32xf32> to vector<8x16x32xf32>
    %c0_190 = arith.constant 0 : index
    %c3_191 = arith.constant 3 : index
    %c4_192 = arith.constant 4 : index
    %c0_193 = arith.constant 0 : index
    %174 = vector.load %arg3[%c0_190, %c3_191, %c4_192, %c0_193] : memref<1x5x5x32xf32, #tpu.memory_space<vmem>>, vector<1x1x1x32xf32>
    %175 = vector.shape_cast %174 : vector<1x1x1x32xf32> to vector<32xf32>
    %176 = vector.shape_cast %175 : vector<32xf32> to vector<1x1x32xf32>
    %177 = vector.broadcast %176 : vector<1x1x32xf32> to vector<8x16x32xf32>
    %178 = arith.mulf %173, %177 : vector<8x16x32xf32>
    %cst_194 = arith.constant dense<0.000000e+00> : vector<8x16xf32>
    %179 = vector.multi_reduction <add>, %178, %cst_194 [2] : vector<8x16x32xf32> to vector<8x16xf32>
    %180 = arith.addf %171, %179 : vector<8x16xf32>
    %c0_195 = arith.constant 0 : index
    %c0_196 = arith.constant 0 : index
    %c4_197 = arith.constant 4 : index
    %c0_198 = arith.constant 0 : index
    %c0_199 = arith.constant 0 : index
    %181 = vector.load %arg2[%c0_195, %c0_196, %c4_197, %c0_198, %c0_199] : memref<1x1x12x20x32xf32, #tpu.memory_space<vmem>>, vector<1x1x8x16x32xf32>
    %182 = vector.shape_cast %181 : vector<1x1x8x16x32xf32> to vector<8x16x32xf32>
    %c0_200 = arith.constant 0 : index
    %c4_201 = arith.constant 4 : index
    %c0_202 = arith.constant 0 : index
    %c0_203 = arith.constant 0 : index
    %183 = vector.load %arg3[%c0_200, %c4_201, %c0_202, %c0_203] : memref<1x5x5x32xf32, #tpu.memory_space<vmem>>, vector<1x1x1x32xf32>
    %184 = vector.shape_cast %183 : vector<1x1x1x32xf32> to vector<32xf32>
    %185 = vector.shape_cast %184 : vector<32xf32> to vector<1x1x32xf32>
    %186 = vector.broadcast %185 : vector<1x1x32xf32> to vector<8x16x32xf32>
    %187 = arith.mulf %182, %186 : vector<8x16x32xf32>
    %cst_204 = arith.constant dense<0.000000e+00> : vector<8x16xf32>
    %188 = vector.multi_reduction <add>, %187, %cst_204 [2] : vector<8x16x32xf32> to vector<8x16xf32>
    %189 = arith.addf %180, %188 : vector<8x16xf32>
    %c0_205 = arith.constant 0 : index
    %c0_206 = arith.constant 0 : index
    %c4_207 = arith.constant 4 : index
    %c1_208 = arith.constant 1 : index
    %c0_209 = arith.constant 0 : index
    %190 = vector.load %arg2[%c0_205, %c0_206, %c4_207, %c1_208, %c0_209] : memref<1x1x12x20x32xf32, #tpu.memory_space<vmem>>, vector<1x1x8x16x32xf32>
    %191 = vector.shape_cast %190 : vector<1x1x8x16x32xf32> to vector<8x16x32xf32>
    %c0_210 = arith.constant 0 : index
    %c4_211 = arith.constant 4 : index
    %c1_212 = arith.constant 1 : index
    %c0_213 = arith.constant 0 : index
    %192 = vector.load %arg3[%c0_210, %c4_211, %c1_212, %c0_213] : memref<1x5x5x32xf32, #tpu.memory_space<vmem>>, vector<1x1x1x32xf32>
    %193 = vector.shape_cast %192 : vector<1x1x1x32xf32> to vector<32xf32>
    %194 = vector.shape_cast %193 : vector<32xf32> to vector<1x1x32xf32>
    %195 = vector.broadcast %194 : vector<1x1x32xf32> to vector<8x16x32xf32>
    %196 = arith.mulf %191, %195 : vector<8x16x32xf32>
    %cst_214 = arith.constant dense<0.000000e+00> : vector<8x16xf32>
    %197 = vector.multi_reduction <add>, %196, %cst_214 [2] : vector<8x16x32xf32> to vector<8x16xf32>
    %198 = arith.addf %189, %197 : vector<8x16xf32>
    %c0_215 = arith.constant 0 : index
    %c0_216 = arith.constant 0 : index
    %c4_217 = arith.constant 4 : index
    %c2_218 = arith.constant 2 : index
    %c0_219 = arith.constant 0 : index
    %199 = vector.load %arg2[%c0_215, %c0_216, %c4_217, %c2_218, %c0_219] : memref<1x1x12x20x32xf32, #tpu.memory_space<vmem>>, vector<1x1x8x16x32xf32>
    %200 = vector.shape_cast %199 : vector<1x1x8x16x32xf32> to vector<8x16x32xf32>
    %c0_220 = arith.constant 0 : index
    %c4_221 = arith.constant 4 : index
    %c2_222 = arith.constant 2 : index
    %c0_223 = arith.constant 0 : index
    %201 = vector.load %arg3[%c0_220, %c4_221, %c2_222, %c0_223] : memref<1x5x5x32xf32, #tpu.memory_space<vmem>>, vector<1x1x1x32xf32>
    %202 = vector.shape_cast %201 : vector<1x1x1x32xf32> to vector<32xf32>
    %203 = vector.shape_cast %202 : vector<32xf32> to vector<1x1x32xf32>
    %204 = vector.broadcast %203 : vector<1x1x32xf32> to vector<8x16x32xf32>
    %205 = arith.mulf %200, %204 : vector<8x16x32xf32>
    %cst_224 = arith.constant dense<0.000000e+00> : vector<8x16xf32>
    %206 = vector.multi_reduction <add>, %205, %cst_224 [2] : vector<8x16x32xf32> to vector<8x16xf32>
    %207 = arith.addf %198, %206 : vector<8x16xf32>
    %c0_225 = arith.constant 0 : index
    %c0_226 = arith.constant 0 : index
    %c4_227 = arith.constant 4 : index
    %c3_228 = arith.constant 3 : index
    %c0_229 = arith.constant 0 : index
    %208 = vector.load %arg2[%c0_225, %c0_226, %c4_227, %c3_228, %c0_229] : memref<1x1x12x20x32xf32, #tpu.memory_space<vmem>>, vector<1x1x8x16x32xf32>
    %209 = vector.shape_cast %208 : vector<1x1x8x16x32xf32> to vector<8x16x32xf32>
    %c0_230 = arith.constant 0 : index
    %c4_231 = arith.constant 4 : index
    %c3_232 = arith.constant 3 : index
    %c0_233 = arith.constant 0 : index
    %210 = vector.load %arg3[%c0_230, %c4_231, %c3_232, %c0_233] : memref<1x5x5x32xf32, #tpu.memory_space<vmem>>, vector<1x1x1x32xf32>
    %211 = vector.shape_cast %210 : vector<1x1x1x32xf32> to vector<32xf32>
    %212 = vector.shape_cast %211 : vector<32xf32> to vector<1x1x32xf32>
    %213 = vector.broadcast %212 : vector<1x1x32xf32> to vector<8x16x32xf32>
    %214 = arith.mulf %209, %213 : vector<8x16x32xf32>
    %cst_234 = arith.constant dense<0.000000e+00> : vector<8x16xf32>
    %215 = vector.multi_reduction <add>, %214, %cst_234 [2] : vector<8x16x32xf32> to vector<8x16xf32>
    %216 = arith.addf %207, %215 : vector<8x16xf32>
    %c0_235 = arith.constant 0 : index
    %c0_236 = arith.constant 0 : index
    %c4_237 = arith.constant 4 : index
    %c4_238 = arith.constant 4 : index
    %c0_239 = arith.constant 0 : index
    %217 = vector.load %arg2[%c0_235, %c0_236, %c4_237, %c4_238, %c0_239] : memref<1x1x12x20x32xf32, #tpu.memory_space<vmem>>, vector<1x1x8x16x32xf32>
    %218 = vector.shape_cast %217 : vector<1x1x8x16x32xf32> to vector<8x16x32xf32>
    %c0_240 = arith.constant 0 : index
    %c4_241 = arith.constant 4 : index
    %c4_242 = arith.constant 4 : index
    %c0_243 = arith.constant 0 : index
    %219 = vector.load %arg3[%c0_240, %c4_241, %c4_242, %c0_243] : memref<1x5x5x32xf32, #tpu.memory_space<vmem>>, vector<1x1x1x32xf32>
    %220 = vector.shape_cast %219 : vector<1x1x1x32xf32> to vector<32xf32>
    %221 = vector.shape_cast %220 : vector<32xf32> to vector<1x1x32xf32>
    %222 = vector.broadcast %221 : vector<1x1x32xf32> to vector<8x16x32xf32>
    %223 = arith.mulf %218, %222 : vector<8x16x32xf32>
    %cst_244 = arith.constant dense<0.000000e+00> : vector<8x16xf32>
    %224 = vector.multi_reduction <add>, %223, %cst_244 [2] : vector<8x16x32xf32> to vector<8x16xf32>
    %225 = arith.addf %216, %224 : vector<8x16xf32>
    %226 = vector.shape_cast %225 : vector<8x16xf32> to vector<1x8x16xf32>
    %227 = vector.shape_cast %226 : vector<1x8x16xf32> to vector<1x1x8x16xf32>
    %c0_245 = arith.constant 0 : index
    %c0_246 = arith.constant 0 : index
    %c0_247 = arith.constant 0 : index
    %c0_248 = arith.constant 0 : index
    %228 = vector.load %arg4[%c0_245, %c0_246, %c0_247, %c0_248] : memref<1x1x1x1xf32, #tpu.memory_space<vmem>>, vector<1x1x1x1xf32>
    %229 = vector.broadcast %228 : vector<1x1x1x1xf32> to vector<1x1x8x16xf32>
    %230 = arith.addf %227, %229 : vector<1x1x8x16xf32>
    %c0_249 = arith.constant 0 : index
    %c0_250 = arith.constant 0 : index
    %c0_251 = arith.constant 0 : index
    %c0_252 = arith.constant 0 : index
    %231 = vector.load %arg5[%c0_249, %c0_250, %c0_251, %c0_252] : memref<1x1x8x16xf32, #tpu.memory_space<vmem>>, vector<1x1x8x16xf32>
    tpu.vector_store %arg5[%c0_249, %c0_250, %c0_251, %c0_252], %230 {strides = array<i32>} : memref<1x1x8x16xf32, #tpu.memory_space<vmem>>, vector<1x1x8x16xf32>,
    return
  }
  func.func @transform_0(%arg0: i32, %arg1: i32) -> (i32, i32, i32, i32, i32) {
    %c0_i32 = arith.constant 0 : i32
    %c0_i32_0 = arith.constant 0 : i32
    %c0_i32_1 = arith.constant 0 : i32
    %c0_i32_2 = arith.constant 0 : i32
    return %arg0, %arg1, %c0_i32, %c0_i32_0, %c0_i32_1 : i32, i32, i32, i32, i32
  }
  func.func @transform_1(%arg0: i32, %arg1: i32) -> (i32, i32, i32, i32) {
    %c0_i32 = arith.constant 0 : i32
    %c0_i32_0 = arith.constant 0 : i32
    %c0_i32_1 = arith.constant 0 : i32
    %c0_i32_2 = arith.constant 0 : i32
    %c0_i32_3 = arith.constant 0 : i32
    return %c0_i32, %c0_i32_0, %c0_i32_1, %c0_i32_2 : i32, i32, i32, i32
  }
  func.func @transform_2(%arg0: i32, %arg1: i32) -> (i32, i32, i32, i32) {
    %c0_i32 = arith.constant 0 : i32
    %c0_i32_0 = arith.constant 0 : i32
    %c0_i32_1 = arith.constant 0 : i32
    %c0_i32_2 = arith.constant 0 : i32
    %c0_i32_3 = arith.constant 0 : i32
    return %c0_i32, %c0_i32_0, %c0_i32_1, %c0_i32_2 : i32, i32, i32, i32
  }
  func.func @transform_3(%arg0: i32, %arg1: i32) -> (i32, i32, i32, i32) {
    %c0_i32 = arith.constant 0 : i32
    %c0_i32_0 = arith.constant 0 : i32
    %c0_i32_1 = arith.constant 0 : i32
    return %arg0, %c0_i32, %arg1, %c0_i32_0 : i32, i32, i32, i32
  }
}

</mosaic_0001>

<llo_original>
// kernel: srcnn_forward.3
$region0: #{srcnn_forward.3}
  #allocation0 [shape = 'u32[]', space=smem, size = 0x4, offset = 0x4, fixed_abs, tag = 'smem constant byte address 0x4 - core index']
  #allocation1 [shape = 'u32[144,128]{1,0:T(1,128)}', space=vmem, size = 0x12000, scoped, tag = 'internal scratch']
  %s0 = inlined_call_operand.vmem [shape: f32[2,16,16,81], index: 0, kind: input, shape index: {}]
  %s1 = inlined_call_operand.vmem [shape: f32[81,64], index: 1, kind: input, shape index: {}]
  %s2 = inlined_call_operand.vmem [shape: f32[1,64], index: 2, kind: input, shape index: {}]
  %s3 = inlined_call_operand.vmem [shape: f32[2,16,16,64], index: 3, kind: output, shape index: {}]
  %s4 = sld [smem:[#allocation0]]
  $region45: #{srcnn_forward.3} parent=0
    _
  %s6 = ssub.s32 1, %s4
  %s7 = scalar_select 0, %s6, %s4
  loop: start=0, step=1, limit=6
  $region2: #{srcnn_forward.3} parent=0 // loop_pre_header
    _
  $region3: #{srcnn_forward.3} parent=0 // loop_header
    %s9 = sphi 0, %s13
    %p10 = scmp.ge.s32.totalorder %s9, 6
    %s16 = sphi 0, %s28
    %s17 = sphi 0, %s24
    %s18 = sphi 0, %s16
    %s19 = sphi 0, %s17
    %s20 = sphi 0, %s18
    %s21 = sphi 0, %s19
    %s33 = sphi 0, %s35
    %s36 = sphi 0, %s33
    %s37 = sphi 0, %s36
    %s53 = sphi 0, %s37
    %s57 = sphi 0, %s57
    %s59 = sphi 0, %s57
    %s60 = sphi 0, %s59
    %s74 = sphi 0, %s60
    %s78 = sphi 0, %s78
    %s80 = sphi 0, %s78
    %s81 = sphi 0, %s80
    %s95 = sphi 0, %s81
    %s103 = sphi 0, %s105
    %s106 = sphi 0, %s103
    %s107 = sphi 0, %s106
    %s123 = sphi 0, %s107
  $region4: #{srcnn_forward.3} parent=0 // loop_header_branch
    %12 = sbr.rel (%p10) target = $region8
  $region5: #{srcnn_forward.3} parent=0 // loop_body
    %s14 = ssub.s32 %s9, 1
    %s15 = ssub.s32 %s9, 2
    %s22 = sadd.s32 1, %s17
    %p23 = scmp.ge.s32.totalorder %s22, 2
    %s24 = scalar_select %p23, 0, %s22
    %s25 = sadd.s32 1, %s16
    %s26 = scalar_select %p23, %s25, %s16
    %p27 = scmp.ge.s32.totalorder %s26, 2
    %s28 = scalar_select %p27, 0, %s26
    %s29 = ssub.s32 %s16, %s28
    %s30 = ssub.s32 %s17, %s24
    %s31 = sor.u32 %s29, %s30
    %p32 = scmp.eq.s32.totalorder %s31, 0
    %s34 = sadd.s32 %s33, 1
    %s35 = scalar_select %p32, %s33, %s34
    %p38 = pneg %p32
    %p39 = scmp.eq.s32.totalorder %s9, 3
    %p40 = por %p38, %p39
    %p41 = scmp.ne.s32.totalorder %s33, %s36
    %p42 = scmp.eq.s32.totalorder %s9, 0
    %p43 = por %p41, %p42
    %p44 = scmp.ne.s32.totalorder %s33, %s36
    %p45 = scmp.eq.s32.totalorder %s14, 3
    %p46 = por %p44, %p45
    %p47 = scmp.ne.s32.totalorder %s36, %s37
    %p48 = scmp.eq.s32.totalorder %s14, 0
    %p49 = por %p47, %p48
    %p50 = scmp.ne.s32.totalorder %s36, %s37
    %p51 = scmp.eq.s32.totalorder %s15, 3
    %p52 = por %p50, %p51
    %p54 = scmp.ne.s32.totalorder %s37, %s53
    %p55 = scmp.eq.s32.totalorder %s15, 0
    %p56 = por %p54, %p55
    %s58 = sadd.s32 %s57, 1
    %p61 = scmp.eq.s32.totalorder %s9, 3
    %p62 = scmp.ne.s32.totalorder %s57, %s59
    %p63 = scmp.eq.s32.totalorder %s9, 0
    %p64 = por %p62, %p63
    %p65 = scmp.ne.s32.totalorder %s57, %s59
    %p66 = scmp.eq.s32.totalorder %s14, 3
    %p67 = por %p65, %p66
    %p68 = scmp.ne.s32.totalorder %s59, %s60
    %p69 = scmp.eq.s32.totalorder %s14, 0
    %p70 = por %p68, %p69
    %p71 = scmp.ne.s32.totalorder %s59, %s60
    %p72 = scmp.eq.s32.totalorder %s15, 3
    %p73 = por %p71, %p72
    %p75 = scmp.ne.s32.totalorder %s60, %s74
    %p76 = scmp.eq.s32.totalorder %s15, 0
    %p77 = por %p75, %p76
    %s79 = sadd.s32 %s78, 1
    %p82 = scmp.eq.s32.totalorder %s9, 3
    %p83 = scmp.ne.s32.totalorder %s78, %s80
    %p84 = scmp.eq.s32.totalorder %s9, 0
    %p85 = por %p83, %p84
    %p86 = scmp.ne.s32.totalorder %s78, %s80
    %p87 = scmp.eq.s32.totalorder %s14, 3
    %p88 = por %p86, %p87
    %p89 = scmp.ne.s32.totalorder %s80, %s81
    %p90 = scmp.eq.s32.totalorder %s14, 0
    %p91 = por %p89, %p90
    %p92 = scmp.ne.s32.totalorder %s80, %s81
    %p93 = scmp.eq.s32.totalorder %s15, 3
    %p94 = por %p92, %p93
    %p96 = scmp.ne.s32.totalorder %s81, %s95
    %p97 = scmp.eq.s32.totalorder %s15, 0
    %p98 = por %p96, %p97
    %s99 = ssub.s32 %s16, %s28
    %s100 = ssub.s32 %s17, %s24
    %s101 = sor.u32 %s99, %s100
    %p102 = scmp.eq.s32.totalorder %s101, 0
    %s104 = sadd.s32 %s103, 1
    %s105 = scalar_select %p102, %s103, %s104
    %p108 = pneg %p102
    %p109 = scmp.eq.s32.totalorder %s9, 3
    %p110 = por %p108, %p109
    %p111 = scmp.ne.s32.totalorder %s103, %s106
    %p112 = scmp.eq.s32.totalorder %s9, 0
    %p113 = por %p111, %p112
    %p114 = scmp.ne.s32.totalorder %s103, %s106
    %p115 = scmp.eq.s32.totalorder %s14, 3
    %p116 = por %p114, %p115
    %p117 = scmp.ne.s32.totalorder %s106, %s107
    %p118 = scmp.eq.s32.totalorder %s14, 0
    %p119 = por %p117, %p118
    %p120 = scmp.ne.s32.totalorder %s106, %s107
    %p121 = scmp.eq.s32.totalorder %s15, 3
    %p122 = por %p120, %p121
    %p124 = scmp.ne.s32.totalorder %s107, %s123
    %p125 = scmp.eq.s32.totalorder %s15, 0
    %p126 = por %p124, %p125
    %p127 = scmp.le.s32.totalorder 1, %s9
    %p128 = scmp.lt.s32.totalorder %s9, 5
    %p129 = pnand %p127, %p128
    %p130 = pneg %p129
    // Predicated region
    $region9: #{srcnn_forward.3} parent=5 // pred_check
      _
    $region10: #{srcnn_forward.3} parent=5 // pred_check_branch
      %132 = sbr.rel (%p129) target = $region12
    $region11: #{srcnn_forward.3} parent=5 // pred_region
      %s133 = ssub.s32 %s9, 1
      // Predicated region
      $region13: #{srcnn_forward.3} parent=11 // pred_check
        %p134 = pneg %p70
      $region14: #{srcnn_forward.3} parent=11 // pred_check_branch
        %136 = sbr.rel (%p134) target = $region16
      $region15: #{srcnn_forward.3} parent=11 // pred_region
        _
      $region16: #{srcnn_forward.3} parent=11 // pred_fallthru
        _
      // Predicated region
      $region17: #{srcnn_forward.3} parent=11 // pred_check
        %p137 = pneg %p91
      $region18: #{srcnn_forward.3} parent=11 // pred_check_branch
        %139 = sbr.rel (%p137) target = $region20
      $region19: #{srcnn_forward.3} parent=11 // pred_region
        _
      $region20: #{srcnn_forward.3} parent=11 // pred_fallthru
        _
    $region12: #{srcnn_forward.3} parent=5 // pred_fallthru
      _
    %p140 = scmp.lt.s32.totalorder %s9, 4
    // Predicated region
    $region21: #{srcnn_forward.3} parent=5 // pred_check
      %p141 = pneg %p140
    $region22: #{srcnn_forward.3} parent=5 // pred_check_branch
      %143 = sbr.rel (%p141) target = $region24
    $region23: #{srcnn_forward.3} parent=5 // pred_region
      // Predicated region
      $region25: #{srcnn_forward.3} parent=23 // pred_check
        %p144 = pneg %p43
      $region26: #{srcnn_forward.3} parent=23 // pred_check_branch
        %146 = sbr.rel (%p144) target = $region28
      $region27: #{srcnn_forward.3} parent=23 // pred_region
        %s147 = smul.u32 8, %s17
        %p148 = scmp.lt.s32.totalorder %s16, 1
        %s149 = scalar_select %p148, %s16, 1
        %p150 = scmp.lt.s32.totalorder %s147, 15
        %s151 = scalar_select %p150, %s147, 15
        %s152 = smul.addr %s151, 2
        %s153 = smul.addr %s149, 32
        %s154 = sadd.s32 %s152, %s153
        %s155 = smul.addr %s154, 8
        %s156 = scalar_lea.vmem %s0, %s155
        %s157 = smul.u32 8, %s17
      $region28: #{srcnn_forward.3} parent=23 // pred_fallthru
        _
    $region24: #{srcnn_forward.3} parent=5 // pred_fallthru
      _
    %p158 = scmp.le.s32.totalorder 1, %s9
    %p159 = scmp.lt.s32.totalorder %s9, 5
    %p160 = pnand %p158, %p159
    %p161 = pneg %p160
    // Predicated region
    $region29: #{srcnn_forward.3} parent=5 // pred_check
      _
    $region30: #{srcnn_forward.3} parent=5 // pred_check_branch
      %163 = sbr.rel (%p160) target = $region32
    $region31: #{srcnn_forward.3} parent=5 // pred_region
      %s164 = ssub.s32 %s9, 1
      %s165 = smul.u32 8, %s19
      %p166 = scmp.lt.s32.totalorder %s18, 1
      %s167 = scalar_select %p166, %s18, 1
      %p168 = scmp.lt.s32.totalorder %s165, 15
      %s169 = scalar_select %p168, %s165, 15
      %s170 = smul.addr %s169, 2
      %s171 = smul.addr %s167, 32
      %s172 = sadd.s32 %s170, %s171
      %s173 = smul.addr %s172, 8
      %s174 = scalar_lea.vmem %s0, %s173
      %p175 = pneg %p49
      %p176 = pneg %p46
      %p177 = pneg %p70
      %p178 = pneg %p67
      %p179 = pneg %p91
      %p180 = pneg %p88
      %p181 = pneg %p119
      %p182 = pneg %p116
      %s183 = smul.u32 8, %s19
      %p184 = scmp.lt.s32.totalorder %s18, 1
      %s185 = scalar_select %p184, %s18, 1
      %p186 = scmp.lt.s32.totalorder %s183, 15
      %s187 = scalar_select %p186, %s183, 15
      %s188 = smul.addr %s187, 2
      %s189 = smul.addr %s185, 32
      %s190 = sadd.s32 %s188, %s189
      %s191 = smul.addr %s190, 8
      %s192 = scalar_lea.vmem %s3, %s191
      %s193 = smul.u32 8, %s19
      %p194 = scmp.lt.s32.totalorder %s18, 1
      %s195 = scalar_select %p194, %s18, 1
      %p196 = scmp.lt.s32.totalorder %s193, 15
      %s197 = scalar_select %p196, %s193, 15
      %s198 = smul.addr %s197, 2
      %s199 = smul.addr %s195, 32
      %s200 = sadd.s32 %s198, %s199
      %s201 = smul.addr %s200, 8
      %s202 = scalar_lea.vmem %s0, %s201
      %s203 = smul.u32 8, %s19
      %s204 = smul.u32 8, %s19
      %p205 = scmp.lt.s32.totalorder %s18, 1
      %s206 = scalar_select %p205, %s18, 1
      %p207 = scmp.lt.s32.totalorder %s204, 15
      %s208 = scalar_select %p207, %s204, 15
      %s209 = smul.addr %s208, 2
      %s210 = smul.addr %s206, 32
      %s211 = sadd.s32 %s209, %s210
      %s212 = smul.addr %s211, 8
      %s213 = scalar_lea.vmem %s3, %s212
      %s214 = smul.u32 8, %s19
      %v215 = vld [vmem:[%s202] sm:$0xff]
      %v216 = vld [vmem:[%s202 + $0x8] sm:$0xff]
      %v217 = vld [vmem:[%s202 + $0x10] sm:$0xff]
      %v218 = vld [vmem:[%s202 + $0x18] sm:$0xff]
      %v219 = vld [vmem:[%s202 + $0x20] sm:$0xff]
      %v220 = vld [vmem:[%s202 + $0x28] sm:$0xff]
      %v221 = vld [vmem:[%s202 + $0x30] sm:$0xff]
      %v222 = vld [vmem:[%s202 + $0x38] sm:$0xff]
      %v223 = vld [vmem:[%s202 + $0x40] sm:$0xff]
      %v224 = vld [vmem:[%s202 + $0x48] sm:$0xff]
      %v225 = vld [vmem:[%s202 + $0x50] sm:$0xff]
      %v226 = vld [vmem:[%s202 + $0x58] sm:$0xff]
      %v227 = vld [vmem:[%s202 + $0x60] sm:$0xff]
      %v228 = vld [vmem:[%s202 + $0x68] sm:$0xff]
      %v229 = vld [vmem:[%s202 + $0x70] sm:$0xff]
      %v230 = vld [vmem:[%s202 + $0x78] sm:$0xff]
      %v231 = vld [vmem:[%s1] sm:$0xff]
      %v232 = vld [vmem:[%s1 + $0x8] sm:$0xff]
      %v233 = vld [vmem:[%s1 + $0x10] sm:$0xff]
      %v234 = vld [vmem:[%s1 + $0x18] sm:$0xff]
      %v235 = vld [vmem:[%s1 + $0x20] sm:$0xff]
      %v236 = vld [vmem:[%s1 + $0x28] sm:$0xff]
      %v237 = vld [vmem:[%s1 + $0x30] sm:$0xff]
      %v238 = vld [vmem:[%s1 + $0x38] sm:$0xff]
      %v239 = vld [vmem:[%s1 + $0x40] sm:$0xff]
      %v240 = vld [vmem:[%s1 + $0x48] sm:$0xff]
      %v241 = vld [vmem:[%s1 + $0x50] sm:$0x1]
      %v242 = vld [vmem:[%s2] sm:$0x1]
      %v244 = vlaneseq
      %v245 = vshrl.u32 %v244, 7
      %v246 = vsub.s32 0, %v245
      %v247 = vrot.slane %v242, %v246
      %vm249 = vcmask 662528
      %v251 = vsel %vm249, %v215, 0
      %v254 = vsel %vm249, %v216, 0
      %v257 = vsel %vm249, %v217, 0
      %v260 = vsel %vm249, %v218, 0
      %v263 = vsel %vm249, %v219, 0
      %v266 = vsel %vm249, %v220, 0
      %v269 = vsel %vm249, %v221, 0
      %v272 = vsel %vm249, %v222, 0
      %v275 = vsel %vm249, %v223, 0
      %v278 = vsel %vm249, %v224, 0
      %v281 = vsel %vm249, %v225, 0
      %v284 = vsel %vm249, %v226, 0
      %v287 = vsel %vm249, %v227, 0
      %v290 = vsel %vm249, %v228, 0
      %v293 = vsel %vm249, %v229, 0
      %v296 = vsel %vm249, %v230, 0
      %vm298 = vcmask 1040384
      %v300 = vsel %vm298, %v241, 0
      %302 = vmatprep.subr.mxu0 0.0
      %303 = vmatpush1.msra.mxu0 %v231
      %304 = vmatprep.subr.mxu0 0.0
      %305 = vmatpush1.msra.mxu0 %v232
      %306 = vmatprep.subr.mxu0 0.0
      %307 = vmatpush1.msra.mxu0 %v233
      %308 = vmatprep.subr.mxu0 0.0
      %309 = vmatpush1.msra.mxu0 %v234
      %310 = vmatprep.subr.mxu0 0.0
      %311 = vmatpush1.msra.mxu0 %v235
      %312 = vmatprep.subr.mxu0 0.0
      %313 = vmatpush1.msra.mxu0 %v236
      %314 = vmatprep.subr.mxu0 0.0
      %315 = vmatpush1.msra.mxu0 %v237
      %316 = vmatprep.subr.mxu0 0.0
      %317 = vmatpush1.msra.mxu0 %v238
      %318 = vmatprep.subr.mxu0 0.0
      %319 = vmatpush1.msra.mxu0 %v239
      %320 = vmatprep.subr.mxu0 0.0
      %321 = vmatpush1.msra.mxu0 %v240
      %322 = vmatprep.subr.mxu0 0.0
      %323 = vmatpush1.msra.mxu0 %v300
      %324 = vmatprep.subr.mxu0 0.0
      %325 = vmatpush1.msra.mxu0 0.0
      %326 = vmatprep.subr.mxu0 0.0
      %327 = vmatpush1.msra.mxu0 0.0
      %328 = vmatprep.subr.mxu0 0.0
      %329 = vmatpush1.msra.mxu0 0.0
      %330 = vmatprep.subr.mxu0 0.0
      %331 = vmatpush1.msra.mxu0 0.0
      %332 = vmatprep.subr.mxu0 0.0
      %333 = vmatpush1.msra.mxu0 0.0
      %334 = vmatprep.subr.mxu0 0.0
      %335 = vmatpush1.msra.mxu0 0.0
      %336 = vmatprep.subr.mxu0 0.0
      %337 = vmatpush1.msra.mxu0 0.0
      %338 = vmatprep.subr.mxu0 0.0
      %339 = vmatpush1.msra.mxu0 0.0
      %340 = vmatprep.subr.mxu0 0.0
      %341 = vmatpush1.msra.mxu0 0.0
      %342 = vmatprep.subr.mxu0 0.0
      %343 = vmatpush1.msra.mxu0 0.0
      %344 = vmatprep.subr.mxu0 0.0
      %345 = vmatpush1.msra.mxu0 0.0
      %346 = vmatprep.subr.mxu0 0.0
      %347 = vmatpush1.msra.mxu0 0.0
      %348 = vmatprep.subr.mxu0 0.0
      %349 = vmatpush1.msra.mxu0 0.0
      %350 = vmatprep.subr.mxu0 0.0
      %351 = vmatpush1.msra.mxu0 0.0
      %352 = vmatprep.subr.mxu0 0.0
      %353 = vmatpush1.msra.mxu0 0.0
      %354 = vmatprep.subr.mxu0 0.0
      %355 = vmatpush1.msra.mxu0 0.0
      %356 = vmatprep.subr.mxu0 0.0
      %357 = vmatpush1.msra.mxu0 0.0
      %358 = vmatprep.subr.mxu0 0.0
      %359 = vmatpush1.msra.mxu0 0.0
      %360 = vmatprep.subr.mxu0 0.0
      %361 = vmatpush1.msra.mxu0 0.0
      %362 = vmatprep.subr.mxu0 0.0
      %363 = vmatpush1.msra.mxu0 0.0
      %364 = vmatprep.subr.mxu0 0.0
      %365 = vmatpush1.msra.mxu0 0.0
      %366 = vmatprep.mubr.f32.mxu0 0.0
      %367 = vmatmul.mubr.f32.gmra.mrb[0].mxu0 %v251
      %v368 = vpop.f32.mrb[0].mxu0
      %v369 = vadd.f32 %v247, %v368
      %v370 = vpop.f32.mrb[0].mxu0
      %371 = vmatprep.mubr.f32.mxu0 0.0
      %372 = vmatmul.mubr.f32.gmra.mrb[0].mxu0 %v254
      %v373 = vpop.f32.mrb[0].mxu0
      %v374 = vadd.f32 %v247, %v373
      %v375 = vpop.f32.mrb[0].mxu0
      %376 = vmatprep.mubr.f32.mxu0 0.0
      %377 = vmatmul.mubr.f32.gmra.mrb[0].mxu0 %v257
      %v378 = vpop.f32.mrb[0].mxu0
      %v379 = vadd.f32 %v247, %v378
      %v380 = vpop.f32.mrb[0].mxu0
      %381 = vmatprep.mubr.f32.mxu0 0.0
      %382 = vmatmul.mubr.f32.gmra.mrb[0].mxu0 %v260
      %v383 = vpop.f32.mrb[0].mxu0
      %v384 = vadd.f32 %v247, %v383
      %v385 = vpop.f32.mrb[0].mxu0
      %386 = vmatprep.mubr.f32.mxu0 0.0
      %387 = vmatmul.mubr.f32.gmra.mrb[0].mxu0 %v263
      %v388 = vpop.f32.mrb[0].mxu0
      %v389 = vadd.f32 %v247, %v388
      %v390 = vpop.f32.mrb[0].mxu0
      %391 = vmatprep.mubr.f32.mxu0 0.0
      %392 = vmatmul.mubr.f32.gmra.mrb[0].mxu0 %v266
      %v393 = vpop.f32.mrb[0].mxu0
      %v394 = vadd.f32 %v247, %v393
      %v395 = vpop.f32.mrb[0].mxu0
      %396 = vmatprep.mubr.f32.mxu0 0.0
      %397 = vmatmul.mubr.f32.gmra.mrb[0].mxu0 %v269
      %v398 = vpop.f32.mrb[0].mxu0
      %v399 = vadd.f32 %v247, %v398
      %v400 = vpop.f32.mrb[0].mxu0
      %401 = vmatprep.mubr.f32.mxu0 0.0
      %402 = vmatmul.mubr.f32.gmra.mrb[0].mxu0 %v272
      %v403 = vpop.f32.mrb[0].mxu0
      %v404 = vadd.f32 %v247, %v403
      %v405 = vpop.f32.mrb[0].mxu0
      %406 = vmatprep.mubr.f32.mxu0 0.0
      %407 = vmatmul.mubr.f32.gmra.mrb[0].mxu0 %v275
      %v408 = vpop.f32.mrb[0].mxu0
      %v409 = vadd.f32 %v247, %v408
      %v410 = vpop.f32.mrb[0].mxu0
      %411 = vmatprep.mubr.f32.mxu0 0.0
      %412 = vmatmul.mubr.f32.gmra.mrb[0].mxu0 %v278
      %v413 = vpop.f32.mrb[0].mxu0
      %v414 = vadd.f32 %v247, %v413
      %v415 = vpop.f32.mrb[0].mxu0
      %416 = vmatprep.mubr.f32.mxu0 0.0
      %417 = vmatmul.mubr.f32.gmra.mrb[0].mxu0 %v281
      %v418 = vpop.f32.mrb[0].mxu0
      %v419 = vadd.f32 %v247, %v418
      %v420 = vpop.f32.mrb[0].mxu0
      %421 = vmatprep.mubr.f32.mxu0 0.0
      %422 = vmatmul.mubr.f32.gmra.mrb[0].mxu0 %v284
      %v423 = vpop.f32.mrb[0].mxu0
      %v424 = vadd.f32 %v247, %v423
      %v425 = vpop.f32.mrb[0].mxu0
      %426 = vmatprep.mubr.f32.mxu0 0.0
      %427 = vmatmul.mubr.f32.gmra.mrb[0].mxu0 %v287
      %v428 = vpop.f32.mrb[0].mxu0
      %v429 = vadd.f32 %v247, %v428
      %v430 = vpop.f32.mrb[0].mxu0
      %431 = vmatprep.mubr.f32.mxu0 0.0
      %432 = vmatmul.mubr.f32.gmra.mrb[0].mxu0 %v290
      %v433 = vpop.f32.mrb[0].mxu0
      %v434 = vadd.f32 %v247, %v433
      %v435 = vpop.f32.mrb[0].mxu0
      %436 = vmatprep.mubr.f32.mxu0 0.0
      %437 = vmatmul.mubr.f32.gmra.mrb[0].mxu0 %v293
      %v438 = vpop.f32.mrb[0].mxu0
      %v439 = vadd.f32 %v247, %v438
      %v440 = vpop.f32.mrb[0].mxu0
      %441 = vmatprep.mubr.f32.mxu0 0.0
      %442 = vmatmul.mubr.f32.gmra.mrb[0].mxu0 %v296
      %v443 = vpop.f32.mrb[0].mxu0
      %v444 = vadd.f32 %v247, %v443
      %v445 = vpop.f32.mrb[0].mxu0
      %446 = vdwg.mxu0
      %v447 = vmax.f32 %v369, 0.0
      %v448 = vmax.f32 %v374, 0.0
      %v449 = vmax.f32 %v379, 0.0
      %v450 = vmax.f32 %v384, 0.0
      %v451 = vmax.f32 %v389, 0.0
      %v452 = vmax.f32 %v394, 0.0
      %v453 = vmax.f32 %v399, 0.0
      %v454 = vmax.f32 %v404, 0.0
      %v455 = vmax.f32 %v409, 0.0
      %v456 = vmax.f32 %v414, 0.0
      %v457 = vmax.f32 %v419, 0.0
      %v458 = vmax.f32 %v424, 0.0
      %v459 = vmax.f32 %v429, 0.0
      %v460 = vmax.f32 %v434, 0.0
      %v461 = vmax.f32 %v439, 0.0
      %v462 = vmax.f32 %v444, 0.0
      %vm463 = vcmask 523264
      %464 = vst.msk [vmem:[%s213] sm:$0xff] %vm463, %v447
      %465 = vst.msk [vmem:[%s213 + $0x8] sm:$0xff] %vm463, %v448
      %466 = vst.msk [vmem:[%s213 + $0x10] sm:$0xff] %vm463, %v449
      %467 = vst.msk [vmem:[%s213 + $0x18] sm:$0xff] %vm463, %v450
      %468 = vst.msk [vmem:[%s213 + $0x20] sm:$0xff] %vm463, %v451
      %469 = vst.msk [vmem:[%s213 + $0x28] sm:$0xff] %vm463, %v452
      %470 = vst.msk [vmem:[%s213 + $0x30] sm:$0xff] %vm463, %v453
      %471 = vst.msk [vmem:[%s213 + $0x38] sm:$0xff] %vm463, %v454
      %472 = vst.msk [vmem:[%s213 + $0x40] sm:$0xff] %vm463, %v455
      %473 = vst.msk [vmem:[%s213 + $0x48] sm:$0xff] %vm463, %v456
      %474 = vst.msk [vmem:[%s213 + $0x50] sm:$0xff] %vm463, %v457
      %475 = vst.msk [vmem:[%s213 + $0x58] sm:$0xff] %vm463, %v458
      %476 = vst.msk [vmem:[%s213 + $0x60] sm:$0xff] %vm463, %v459
      %477 = vst.msk [vmem:[%s213 + $0x68] sm:$0xff] %vm463, %v460
      %478 = vst.msk [vmem:[%s213 + $0x70] sm:$0xff] %vm463, %v461
      %479 = vst.msk [vmem:[%s213 + $0x78] sm:$0xff] %vm463, %v462
      %s480 = smul.u32 8, %s19
      %p481 = scmp.lt.s32.totalorder %s18, 1
      %s482 = scalar_select %p481, %s18, 1
      %p483 = scmp.lt.s32.totalorder %s480, 15
      %s484 = scalar_select %p483, %s480, 15
      %s485 = smul.addr %s484, 2
      %s486 = smul.addr %s482, 32
      %s487 = sadd.s32 %s485, %s486
      %s488 = smul.addr %s487, 8
      %s489 = scalar_lea.vmem %s3, %s488
      // Predicated region
      $region33: #{srcnn_forward.3} parent=31 // pred_check
        %p490 = pneg %p116
      $region34: #{srcnn_forward.3} parent=31 // pred_check_branch
        %492 = sbr.rel (%p490) target = $region36
      $region35: #{srcnn_forward.3} parent=31 // pred_region
        %s493 = smul.u32 8, %s19
      $region36: #{srcnn_forward.3} parent=31 // pred_fallthru
        _
    $region32: #{srcnn_forward.3} parent=5 // pred_fallthru
      _
    %p494 = scmp.le.s32.totalorder 2, %s9
    // Predicated region
    $region37: #{srcnn_forward.3} parent=5 // pred_check
      %p495 = pneg %p494
    $region38: #{srcnn_forward.3} parent=5 // pred_check_branch
      %497 = sbr.rel (%p495) target = $region40
    $region39: #{srcnn_forward.3} parent=5 // pred_region
      %s498 = ssub.s32 %s9, 2
      // Predicated region
      $region41: #{srcnn_forward.3} parent=39 // pred_check
        %p499 = pneg %p122
      $region42: #{srcnn_forward.3} parent=39 // pred_check_branch
        %501 = sbr.rel (%p499) target = $region44
      $region43: #{srcnn_forward.3} parent=39 // pred_region
        %s502 = smul.u32 8, %s21
        %p503 = scmp.lt.s32.totalorder %s20, 1
        %s504 = scalar_select %p503, %s20, 1
        %p505 = scmp.lt.s32.totalorder %s502, 15
        %s506 = scalar_select %p505, %s502, 15
        %s507 = smul.addr %s506, 2
        %s508 = smul.addr %s504, 32
        %s509 = sadd.s32 %s507, %s508
        %s510 = smul.addr %s509, 8
        %s511 = scalar_lea.vmem %s3, %s510
      $region44: #{srcnn_forward.3} parent=39 // pred_fallthru
        _
    $region40: #{srcnn_forward.3} parent=5 // pred_fallthru
      _
  $region6: #{srcnn_forward.3} parent=0 // loop_footer
    %s13 = sadd.s32 1, %s9
  $region7: #{srcnn_forward.3} parent=0 // loop_footer_branch
    %8 = sbr.rel target = $region3
  $region8: #{srcnn_forward.3} parent=0 // loop_exit
    _

// kernel: srcnn_forward.4
$region0: #{srcnn_forward.4}
  #allocation0 [shape = 'u32[]', space=smem, size = 0x4, offset = 0x4, fixed_abs, tag = 'smem constant byte address 0x4 - core index']
  #allocation1 [shape = 'u32[144,128]{1,0:T(1,128)}', space=vmem, size = 0x12000, scoped, tag = 'internal scratch']
  #allocation2 [shape = 'f32[128,32]{1,0:T(8,128)}', space=vmem, size = 0x10000, scoped, tag = 'scratch operand']
  %s0 = inlined_call_operand.vmem [shape: f32[2,2,12,20,64], index: 0, kind: input, shape index: {}]
  %s1 = inlined_call_operand.vmem [shape: f32[5,320,32], index: 1, kind: input, shape index: {}]
  %s2 = inlined_call_operand.vmem [shape: f32[1,32], index: 2, kind: input, shape index: {}]
  %s3 = inlined_call_operand.vmem [shape: f32[2,16,16,32], index: 3, kind: output, shape index: {}]
  %s4 = sld [smem:[#allocation0]]
  $region45: #{srcnn_forward.4} parent=0
    _
  %s6 = ssub.s32 1, %s4
  %s7 = scalar_select 0, %s6, %s4
  loop: start=0, step=1, limit=6
  $region2: #{srcnn_forward.4} parent=0 // loop_pre_header
    _
  $region3: #{srcnn_forward.4} parent=0 // loop_header
    %s9 = sphi 0, %s13
    %p10 = scmp.ge.s32.totalorder %s9, 6
    %s16 = sphi 0, %s28
    %s17 = sphi 0, %s24
    %s18 = sphi 0, %s16
    %s19 = sphi 0, %s17
    %s20 = sphi 0, %s18
    %s21 = sphi 0, %s19
    %s33 = sphi 0, %s35
    %s36 = sphi 0, %s33
    %s37 = sphi 0, %s36
    %s53 = sphi 0, %s37
    %s57 = sphi 0, %s57
    %s59 = sphi 0, %s57
    %s60 = sphi 0, %s59
    %s74 = sphi 0, %s60
    %s78 = sphi 0, %s78
    %s80 = sphi 0, %s78
    %s81 = sphi 0, %s80
    %s95 = sphi 0, %s81
    %s103 = sphi 0, %s105
    %s106 = sphi 0, %s103
    %s107 = sphi 0, %s106
    %s123 = sphi 0, %s107
  $region4: #{srcnn_forward.4} parent=0 // loop_header_branch
    %12 = sbr.rel (%p10) target = $region8
  $region5: #{srcnn_forward.4} parent=0 // loop_body
    %s14 = ssub.s32 %s9, 1
    %s15 = ssub.s32 %s9, 2
    %s22 = sadd.s32 1, %s17
    %p23 = scmp.ge.s32.totalorder %s22, 2
    %s24 = scalar_select %p23, 0, %s22
    %s25 = sadd.s32 1, %s16
    %s26 = scalar_select %p23, %s25, %s16
    %p27 = scmp.ge.s32.totalorder %s26, 2
    %s28 = scalar_select %p27, 0, %s26
    %s29 = ssub.s32 %s16, %s28
    %s30 = ssub.s32 %s17, %s24
    %s31 = sor.u32 %s29, %s30
    %p32 = scmp.eq.s32.totalorder %s31, 0
    %s34 = sadd.s32 %s33, 1
    %s35 = scalar_select %p32, %s33, %s34
    %p38 = pneg %p32
    %p39 = scmp.eq.s32.totalorder %s9, 3
    %p40 = por %p38, %p39
    %p41 = scmp.ne.s32.totalorder %s33, %s36
    %p42 = scmp.eq.s32.totalorder %s9, 0
    %p43 = por %p41, %p42
    %p44 = scmp.ne.s32.totalorder %s33, %s36
    %p45 = scmp.eq.s32.totalorder %s14, 3
    %p46 = por %p44, %p45
    %p47 = scmp.ne.s32.totalorder %s36, %s37
    %p48 = scmp.eq.s32.totalorder %s14, 0
    %p49 = por %p47, %p48
    %p50 = scmp.ne.s32.totalorder %s36, %s37
    %p51 = scmp.eq.s32.totalorder %s15, 3
    %p52 = por %p50, %p51
    %p54 = scmp.ne.s32.totalorder %s37, %s53
    %p55 = scmp.eq.s32.totalorder %s15, 0
    %p56 = por %p54, %p55
    %s58 = sadd.s32 %s57, 1
    %p61 = scmp.eq.s32.totalorder %s9, 3
    %p62 = scmp.ne.s32.totalorder %s57, %s59
    %p63 = scmp.eq.s32.totalorder %s9, 0
    %p64 = por %p62, %p63
    %p65 = scmp.ne.s32.totalorder %s57, %s59
    %p66 = scmp.eq.s32.totalorder %s14, 3
    %p67 = por %p65, %p66
    %p68 = scmp.ne.s32.totalorder %s59, %s60
    %p69 = scmp.eq.s32.totalorder %s14, 0
    %p70 = por %p68, %p69
    %p71 = scmp.ne.s32.totalorder %s59, %s60
    %p72 = scmp.eq.s32.totalorder %s15, 3
    %p73 = por %p71, %p72
    %p75 = scmp.ne.s32.totalorder %s60, %s74
    %p76 = scmp.eq.s32.totalorder %s15, 0
    %p77 = por %p75, %p76
    %s79 = sadd.s32 %s78, 1
    %p82 = scmp.eq.s32.totalorder %s9, 3
    %p83 = scmp.ne.s32.totalorder %s78, %s80
    %p84 = scmp.eq.s32.totalorder %s9, 0
    %p85 = por %p83, %p84
    %p86 = scmp.ne.s32.totalorder %s78, %s80
    %p87 = scmp.eq.s32.totalorder %s14, 3
    %p88 = por %p86, %p87
    %p89 = scmp.ne.s32.totalorder %s80, %s81
    %p90 = scmp.eq.s32.totalorder %s14, 0
    %p91 = por %p89, %p90
    %p92 = scmp.ne.s32.totalorder %s80, %s81
    %p93 = scmp.eq.s32.totalorder %s15, 3
    %p94 = por %p92, %p93
    %p96 = scmp.ne.s32.totalorder %s81, %s95
    %p97 = scmp.eq.s32.totalorder %s15, 0
    %p98 = por %p96, %p97
    %s99 = ssub.s32 %s16, %s28
    %s100 = ssub.s32 %s17, %s24
    %s101 = sor.u32 %s99, %s100
    %p102 = scmp.eq.s32.totalorder %s101, 0
    %s104 = sadd.s32 %s103, 1
    %s105 = scalar_select %p102, %s103, %s104
    %p108 = pneg %p102
    %p109 = scmp.eq.s32.totalorder %s9, 3
    %p110 = por %p108, %p109
    %p111 = scmp.ne.s32.totalorder %s103, %s106
    %p112 = scmp.eq.s32.totalorder %s9, 0
    %p113 = por %p111, %p112
    %p114 = scmp.ne.s32.totalorder %s103, %s106
    %p115 = scmp.eq.s32.totalorder %s14, 3
    %p116 = por %p114, %p115
    %p117 = scmp.ne.s32.totalorder %s106, %s107
    %p118 = scmp.eq.s32.totalorder %s14, 0
    %p119 = por %p117, %p118
    %p120 = scmp.ne.s32.totalorder %s106, %s107
    %p121 = scmp.eq.s32.totalorder %s15, 3
    %p122 = por %p120, %p121
    %p124 = scmp.ne.s32.totalorder %s107, %s123
    %p125 = scmp.eq.s32.totalorder %s15, 0
    %p126 = por %p124, %p125
    %p127 = scmp.le.s32.totalorder 1, %s9
    %p128 = scmp.lt.s32.totalorder %s9, 5
    %p129 = pnand %p127, %p128
    %p130 = pneg %p129
    // Predicated region
    $region9: #{srcnn_forward.4} parent=5 // pred_check
      _
    $region10: #{srcnn_forward.4} parent=5 // pred_check_branch
      %132 = sbr.rel (%p129) target = $region12
    $region11: #{srcnn_forward.4} parent=5 // pred_region
      %s133 = ssub.s32 %s9, 1
      // Predicated region
      $region13: #{srcnn_forward.4} parent=11 // pred_check
        %p134 = pneg %p70
      $region14: #{srcnn_forward.4} parent=11 // pred_check_branch
        %136 = sbr.rel (%p134) target = $region16
      $region15: #{srcnn_forward.4} parent=11 // pred_region
        _
      $region16: #{srcnn_forward.4} parent=11 // pred_fallthru
        _
      // Predicated region
      $region17: #{srcnn_forward.4} parent=11 // pred_check
        %p137 = pneg %p91
      $region18: #{srcnn_forward.4} parent=11 // pred_check_branch
        %139 = sbr.rel (%p137) target = $region20
      $region19: #{srcnn_forward.4} parent=11 // pred_region
        _
      $region20: #{srcnn_forward.4} parent=11 // pred_fallthru
        _
    $region12: #{srcnn_forward.4} parent=5 // pred_fallthru
      _
    %p140 = scmp.lt.s32.totalorder %s9, 4
    // Predicated region
    $region21: #{srcnn_forward.4} parent=5 // pred_check
      %p141 = pneg %p140
    $region22: #{srcnn_forward.4} parent=5 // pred_check_branch
      %143 = sbr.rel (%p141) target = $region24
    $region23: #{srcnn_forward.4} parent=5 // pred_region
      // Predicated region
      $region25: #{srcnn_forward.4} parent=23 // pred_check
        %p144 = pneg %p43
      $region26: #{srcnn_forward.4} parent=23 // pred_check_branch
        %146 = sbr.rel (%p144) target = $region28
      $region27: #{srcnn_forward.4} parent=23 // pred_region
        %p147 = scmp.lt.s32.totalorder %s16, 1
        %s148 = scalar_select %p147, %s16, 1
        %p149 = scmp.lt.s32.totalorder %s17, 1
        %s150 = scalar_select %p149, %s17, 1
        %s151 = smul.addr %s150, 36
        %s152 = smul.addr %s148, 72
        %s153 = sadd.s32 %s151, %s152
        %s154 = smul.addr %s153, 8
        %s155 = scalar_lea.vmem %s0, %s154
      $region28: #{srcnn_forward.4} parent=23 // pred_fallthru
        _
    $region24: #{srcnn_forward.4} parent=5 // pred_fallthru
      _
    %p156 = scmp.le.s32.totalorder 1, %s9
    %p157 = scmp.lt.s32.totalorder %s9, 5
    %p158 = pnand %p156, %p157
    %p159 = pneg %p158
    // Predicated region
    $region29: #{srcnn_forward.4} parent=5 // pred_check
      _
    $region30: #{srcnn_forward.4} parent=5 // pred_check_branch
      %161 = sbr.rel (%p158) target = $region32
    $region31: #{srcnn_forward.4} parent=5 // pred_region
      %s162 = ssub.s32 %s9, 1
      %p163 = scmp.lt.s32.totalorder %s18, 1
      %s164 = scalar_select %p163, %s18, 1
      %p165 = scmp.lt.s32.totalorder %s19, 1
      %s166 = scalar_select %p165, %s19, 1
      %s167 = smul.addr %s166, 36
      %s168 = smul.addr %s164, 72
      %s169 = sadd.s32 %s167, %s168
      %s170 = smul.addr %s169, 8
      %s171 = scalar_lea.vmem %s0, %s170
      %p172 = pneg %p49
      %p173 = pneg %p46
      %p174 = pneg %p70
      %p175 = pneg %p67
      %p176 = pneg %p91
      %p177 = pneg %p88
      %p178 = pneg %p119
      %p179 = pneg %p116
      %s180 = smul.u32 8, %s19
      %p181 = scmp.lt.s32.totalorder %s18, 1
      %s182 = scalar_select %p181, %s18, 1
      %p183 = scmp.lt.s32.totalorder %s180, 15
      %s184 = scalar_select %p183, %s180, 15
      %s185 = smul.addr %s184, 2
      %s186 = smul.addr %s182, 32
      %s187 = sadd.s32 %s185, %s186
      %s188 = smul.addr %s187, 8
      %s189 = scalar_lea.vmem %s3, %s188
      %p190 = scmp.lt.s32.totalorder %s18, 1
      %s191 = scalar_select %p190, %s18, 1
      %p192 = scmp.lt.s32.totalorder %s19, 1
      %s193 = scalar_select %p192, %s19, 1
      %s194 = smul.addr %s193, 36
      %s195 = smul.addr %s191, 72
      %s196 = sadd.s32 %s194, %s195
      %s197 = smul.addr %s196, 8
      %s198 = scalar_lea.vmem %s0, %s197
      %s199 = smul.u32 8, %s19
      %p200 = scmp.lt.s32.totalorder %s18, 1
      %s201 = scalar_select %p200, %s18, 1
      %p202 = scmp.lt.s32.totalorder %s199, 15
      %s203 = scalar_select %p202, %s199, 15
      %s204 = smul.addr %s203, 2
      %s205 = smul.addr %s201, 32
      %s206 = sadd.s32 %s204, %s205
      %s207 = smul.addr %s206, 8
      %s208 = scalar_lea.vmem %s3, %s207
      %s209 = smul.u32 8, %s19
      %vm210 = vcmask 261120
      %211 = vst.msk [vmem:[#allocation2] sm:$0xff] %vm210, 0.0
      %212 = vst.msk [vmem:[#allocation2 + $0x8] sm:$0xff] %vm210, 0.0
      %213 = vst.msk [vmem:[#allocation2 + $0x10] sm:$0xff] %vm210, 0.0
      %214 = vst.msk [vmem:[#allocation2 + $0x18] sm:$0xff] %vm210, 0.0
      %215 = vst.msk [vmem:[#allocation2 + $0x20] sm:$0xff] %vm210, 0.0
      %216 = vst.msk [vmem:[#allocation2 + $0x28] sm:$0xff] %vm210, 0.0
      %217 = vst.msk [vmem:[#allocation2 + $0x30] sm:$0xff] %vm210, 0.0
      %218 = vst.msk [vmem:[#allocation2 + $0x38] sm:$0xff] %vm210, 0.0
      %219 = vst.msk [vmem:[#allocation2 + $0x40] sm:$0xff] %vm210, 0.0
      %220 = vst.msk [vmem:[#allocation2 + $0x48] sm:$0xff] %vm210, 0.0
      %221 = vst.msk [vmem:[#allocation2 + $0x50] sm:$0xff] %vm210, 0.0
      %222 = vst.msk [vmem:[#allocation2 + $0x58] sm:$0xff] %vm210, 0.0
      %223 = vst.msk [vmem:[#allocation2 + $0x60] sm:$0xff] %vm210, 0.0
      %224 = vst.msk [vmem:[#allocation2 + $0x68] sm:$0xff] %vm210, 0.0
      %225 = vst.msk [vmem:[#allocation2 + $0x70] sm:$0xff] %vm210, 0.0
      %226 = vst.msk [vmem:[#allocation2 + $0x78] sm:$0xff] %vm210, 0.0
      %v227 = vld [vmem:[%s198] sm:$0xff]
      %v228 = vld [vmem:[%s198 + $0x8] sm:$0xff]
      %v229 = vld [vmem:[%s198 + $0x18] sm:$0xff]
      %v230 = vld [vmem:[%s198 + $0x20] sm:$0xff]
      %v231 = vld [vmem:[%s198 + $0x30] sm:$0xff]
      %v232 = vld [vmem:[%s198 + $0x38] sm:$0xff]
      %v233 = vld [vmem:[%s198 + $0x48] sm:$0xff]
      %v234 = vld [vmem:[%s198 + $0x50] sm:$0xff]
      %v235 = vld [vmem:[%s198 + $0x60] sm:$0xff]
      %v236 = vld [vmem:[%s198 + $0x68] sm:$0xff]
      %v237 = vld [vmem:[%s198 + $0x78] sm:$0xff]
      %v238 = vld [vmem:[%s198 + $0x80] sm:$0xff]
      %v239 = vld [vmem:[%s198 + $0x90] sm:$0xff]
      %v240 = vld [vmem:[%s198 + $0x98] sm:$0xff]
      %v241 = vld [vmem:[%s198 + $0xa8] sm:$0xff]
      %v242 = vld [vmem:[%s198 + $0xb0] sm:$0xff]
      %v243 = vld [vmem:[%s198 + $0x1] sm:$0xff]
      %v244 = vld [vmem:[%s198 + $0x9] sm:$0xff]
      %v245 = vld [vmem:[%s198 + $0x19] sm:$0xff]
      %v246 = vld [vmem:[%s198 + $0x21] sm:$0xff]
      %v247 = vld [vmem:[%s198 + $0x31] sm:$0xff]
      %v248 = vld [vmem:[%s198 + $0x39] sm:$0xff]
      %v249 = vld [vmem:[%s198 + $0x49] sm:$0xff]
      %v250 = vld [vmem:[%s198 + $0x51] sm:$0xff]
      %v251 = vld [vmem:[%s198 + $0x61] sm:$0xff]
      %v252 = vld [vmem:[%s198 + $0x69] sm:$0xff]
      %v253 = vld [vmem:[%s198 + $0x79] sm:$0xff]
      %v254 = vld [vmem:[%s198 + $0x81] sm:$0xff]
      %v255 = vld [vmem:[%s198 + $0x91] sm:$0xff]
      %v256 = vld [vmem:[%s198 + $0x99] sm:$0xff]
      %v257 = vld [vmem:[%s198 + $0xa9] sm:$0xff]
      %v258 = vld [vmem:[%s198 + $0xb1] sm:$0xff]
      %v259 = vld [vmem:[%s198 + $0x2] sm:$0xff]
      %v260 = vld [vmem:[%s198 + $0xa] sm:$0xff]
      %v261 = vld [vmem:[%s198 + $0x1a] sm:$0xff]
      %v262 = vld [vmem:[%s198 + $0x22] sm:$0xff]
      %v263 = vld [vmem:[%s198 + $0x32] sm:$0xff]
      %v264 = vld [vmem:[%s198 + $0x3a] sm:$0xff]
      %v265 = vld [vmem:[%s198 + $0x4a] sm:$0xff]
      %v266 = vld [vmem:[%s198 + $0x52] sm:$0xff]
      %v267 = vld [vmem:[%s198 + $0x62] sm:$0xff]
      %v268 = vld [vmem:[%s198 + $0x6a] sm:$0xff]
      %v269 = vld [vmem:[%s198 + $0x7a] sm:$0xff]
      %v270 = vld [vmem:[%s198 + $0x82] sm:$0xff]
      %v271 = vld [vmem:[%s198 + $0x92] sm:$0xff]
      %v272 = vld [vmem:[%s198 + $0x9a] sm:$0xff]
      %v273 = vld [vmem:[%s198 + $0xaa] sm:$0xff]
      %v274 = vld [vmem:[%s198 + $0xb2] sm:$0xff]
      %v275 = vld [vmem:[%s198 + $0x3] sm:$0xff]
      %v276 = vld [vmem:[%s198 + $0xb] sm:$0xff]
      %v277 = vld [vmem:[%s198 + $0x1b] sm:$0xff]
      %v278 = vld [vmem:[%s198 + $0x23] sm:$0xff]
      %v279 = vld [vmem:[%s198 + $0x33] sm:$0xff]
      %v280 = vld [vmem:[%s198 + $0x3b] sm:$0xff]
      %v281 = vld [vmem:[%s198 + $0x4b] sm:$0xff]
      %v282 = vld [vmem:[%s198 + $0x53] sm:$0xff]
      %v283 = vld [vmem:[%s198 + $0x63] sm:$0xff]
      %v284 = vld [vmem:[%s198 + $0x6b] sm:$0xff]
      %v285 = vld [vmem:[%s198 + $0x7b] sm:$0xff]
      %v286 = vld [vmem:[%s198 + $0x83] sm:$0xff]
      %v287 = vld [vmem:[%s198 + $0x93] sm:$0xff]
      %v288 = vld [vmem:[%s198 + $0x9b] sm:$0xff]
      %v289 = vld [vmem:[%s198 + $0xab] sm:$0xff]
      %v290 = vld [vmem:[%s198 + $0xb3] sm:$0xff]
      %v291 = vld [vmem:[%s198 + $0x4] sm:$0xff]
      %v292 = vld [vmem:[%s198 + $0xc] sm:$0xff]
      %v293 = vld [vmem:[%s198 + $0x1c] sm:$0xff]
      %v294 = vld [vmem:[%s198 + $0x24] sm:$0xff]
      %v295 = vld [vmem:[%s198 + $0x34] sm:$0xff]
      %v296 = vld [vmem:[%s198 + $0x3c] sm:$0xff]
      %v297 = vld [vmem:[%s198 + $0x4c] sm:$0xff]
      %v298 = vld [vmem:[%s198 + $0x54] sm:$0xff]
      %v299 = vld [vmem:[%s198 + $0x64] sm:$0xff]
      %v300 = vld [vmem:[%s198 + $0x6c] sm:$0xff]
      %v301 = vld [vmem:[%s198 + $0x7c] sm:$0xff]
      %v302 = vld [vmem:[%s198 + $0x84] sm:$0xff]
      %v303 = vld [vmem:[%s198 + $0x94] sm:$0xff]
      %v304 = vld [vmem:[%s198 + $0x9c] sm:$0xff]
      %v305 = vld [vmem:[%s198 + $0xac] sm:$0xff]
      %v306 = vld [vmem:[%s198 + $0xb4] sm:$0xff]
      %323 = vrot.lane.b32.xlu0 %v243, 64
      %v324 = vpop.permute.xlu0 %323
      %325 = vrot.lane.b32.xlu0 %v244, 64
      %v326 = vpop.permute.xlu0 %325
      %327 = vrot.lane.b32.xlu0 %v245, 64
      %v328 = vpop.permute.xlu0 %327
      %329 = vrot.lane.b32.xlu0 %v246, 64
      %v330 = vpop.permute.xlu0 %329
      %331 = vrot.lane.b32.xlu0 %v247, 64
      %v332 = vpop.permute.xlu0 %331
      %333 = vrot.lane.b32.xlu0 %v248, 64
      %v334 = vpop.permute.xlu0 %333
      %335 = vrot.lane.b32.xlu0 %v249, 64
      %v336 = vpop.permute.xlu0 %335
      %337 = vrot.lane.b32.xlu0 %v250, 64
      %v338 = vpop.permute.xlu0 %337
      %339 = vrot.lane.b32.xlu0 %v251, 64
      %v340 = vpop.permute.xlu0 %339
      %341 = vrot.lane.b32.xlu0 %v252, 64
      %v342 = vpop.permute.xlu0 %341
      %343 = vrot.lane.b32.xlu0 %v253, 64
      %v344 = vpop.permute.xlu0 %343
      %345 = vrot.lane.b32.xlu0 %v254, 64
      %v346 = vpop.permute.xlu0 %345
      %347 = vrot.lane.b32.xlu0 %v255, 64
      %v348 = vpop.permute.xlu0 %347
      %349 = vrot.lane.b32.xlu0 %v256, 64
      %v350 = vpop.permute.xlu0 %349
      %351 = vrot.lane.b32.xlu0 %v257, 64
      %v352 = vpop.permute.xlu0 %351
      %353 = vrot.lane.b32.xlu0 %v258, 64
      %v354 = vpop.permute.xlu0 %353
      %387 = vrot.lane.b32.xlu0 %v275, 64
      %v388 = vpop.permute.xlu0 %387
      %389 = vrot.lane.b32.xlu0 %v276, 64
      %v390 = vpop.permute.xlu0 %389
      %391 = vrot.lane.b32.xlu0 %v277, 64
      %v392 = vpop.permute.xlu0 %391
      %393 = vrot.lane.b32.xlu0 %v278, 64
      %v394 = vpop.permute.xlu0 %393
      %395 = vrot.lane.b32.xlu0 %v279, 64
      %v396 = vpop.permute.xlu0 %395
      %397 = vrot.lane.b32.xlu0 %v280, 64
      %v398 = vpop.permute.xlu0 %397
      %399 = vrot.lane.b32.xlu0 %v281, 64
      %v400 = vpop.permute.xlu0 %399
      %401 = vrot.lane.b32.xlu0 %v282, 64
      %v402 = vpop.permute.xlu0 %401
      %403 = vrot.lane.b32.xlu0 %v283, 64
      %v404 = vpop.permute.xlu0 %403
      %405 = vrot.lane.b32.xlu0 %v284, 64
      %v406 = vpop.permute.xlu0 %405
      %407 = vrot.lane.b32.xlu0 %v285, 64
      %v408 = vpop.permute.xlu0 %407
      %409 = vrot.lane.b32.xlu0 %v286, 64
      %v410 = vpop.permute.xlu0 %409
      %411 = vrot.lane.b32.xlu0 %v287, 64
      %v412 = vpop.permute.xlu0 %411
      %413 = vrot.lane.b32.xlu0 %v288, 64
      %v414 = vpop.permute.xlu0 %413
      %415 = vrot.lane.b32.xlu0 %v289, 64
      %v416 = vpop.permute.xlu0 %415
      %417 = vrot.lane.b32.xlu0 %v290, 64
      %v418 = vpop.permute.xlu0 %417
      %vm435 = vcmask 523264
      %v436 = vsel %vm435, %v227, %v324
      %v437 = vsel %vm435, %v228, %v326
      %v438 = vsel %vm435, %v229, %v328
      %v439 = vsel %vm435, %v230, %v330
      %v440 = vsel %vm435, %v231, %v332
      %v441 = vsel %vm435, %v232, %v334
      %v442 = vsel %vm435, %v233, %v336
      %v443 = vsel %vm435, %v234, %v338
      %v444 = vsel %vm435, %v235, %v340
      %v445 = vsel %vm435, %v236, %v342
      %v446 = vsel %vm435, %v237, %v344
      %v447 = vsel %vm435, %v238, %v346
      %v448 = vsel %vm435, %v239, %v348
      %v449 = vsel %vm435, %v240, %v350
      %v450 = vsel %vm435, %v241, %v352
      %v451 = vsel %vm435, %v242, %v354
      %v452 = vsel %vm435, %v259, %v388
      %v453 = vsel %vm435, %v260, %v390
      %v454 = vsel %vm435, %v261, %v392
      %v455 = vsel %vm435, %v262, %v394
      %v456 = vsel %vm435, %v263, %v396
      %v457 = vsel %vm435, %v264, %v398
      %v458 = vsel %vm435, %v265, %v400
      %v459 = vsel %vm435, %v266, %v402
      %v460 = vsel %vm435, %v267, %v404
      %v461 = vsel %vm435, %v268, %v406
      %v462 = vsel %vm435, %v269, %v408
      %v463 = vsel %vm435, %v270, %v410
      %v464 = vsel %vm435, %v271, %v412
      %v465 = vsel %vm435, %v272, %v414
      %v466 = vsel %vm435, %v273, %v416
      %v467 = vsel %vm435, %v274, %v418
      %v468 = vld [vmem:[#allocation2] sm:$0xff]
      %v469 = vld [vmem:[#allocation2 + $0x8] sm:$0xff]
      %v470 = vld [vmem:[#allocation2 + $0x10] sm:$0xff]
      %v471 = vld [vmem:[#allocation2 + $0x18] sm:$0xff]
      %v472 = vld [vmem:[#allocation2 + $0x20] sm:$0xff]
      %v473 = vld [vmem:[#allocation2 + $0x28] sm:$0xff]
      %v474 = vld [vmem:[#allocation2 + $0x30] sm:$0xff]
      %v475 = vld [vmem:[#allocation2 + $0x38] sm:$0xff]
      %v476 = vld [vmem:[#allocation2 + $0x40] sm:$0xff]
      %v477 = vld [vmem:[#allocation2 + $0x48] sm:$0xff]
      %v478 = vld [vmem:[#allocation2 + $0x50] sm:$0xff]
      %v479 = vld [vmem:[#allocation2 + $0x58] sm:$0xff]
      %v480 = vld [vmem:[#allocation2 + $0x60] sm:$0xff]
      %v481 = vld [vmem:[#allocation2 + $0x68] sm:$0xff]
      %v482 = vld [vmem:[#allocation2 + $0x70] sm:$0xff]
      %v483 = vld [vmem:[#allocation2 + $0x78] sm:$0xff]
      %v484 = vld [vmem:[%s1] sm:$0xff]
      %v485 = vld [vmem:[%s1 + $0x8] sm:$0xff]
      %v486 = vld [vmem:[%s1 + $0x10] sm:$0xff]
      %v487 = vld [vmem:[%s1 + $0x18] sm:$0xff]
      %v488 = vld [vmem:[%s1 + $0x20] sm:$0xff]
      %v489 = vld [vmem:[%s1 + $0x28] sm:$0xff]
      %v490 = vld [vmem:[%s1 + $0x30] sm:$0xff]
      %v491 = vld [vmem:[%s1 + $0x38] sm:$0xff]
      %v492 = vld [vmem:[%s1 + $0x40] sm:$0xff]
      %v493 = vld [vmem:[%s1 + $0x48] sm:$0xff]
      %v494 = vld [vmem:[%s1 + $0x50] sm:$0xff]
      %v495 = vld [vmem:[%s1 + $0x58] sm:$0xff]
      %v496 = vld [vmem:[%s1 + $0x60] sm:$0xff]
      %v497 = vld [vmem:[%s1 + $0x68] sm:$0xff]
      %v498 = vld [vmem:[%s1 + $0x70] sm:$0xff]
      %v499 = vld [vmem:[%s1 + $0x78] sm:$0xff]
      %v500 = vld [vmem:[%s1 + $0x80] sm:$0xff]
      %v501 = vld [vmem:[%s1 + $0x88] sm:$0xff]
      %v502 = vld [vmem:[%s1 + $0x90] sm:$0xff]
      %v503 = vld [vmem:[%s1 + $0x98] sm:$0xff]
      %v504 = vld [vmem:[%s1 + $0xa0] sm:$0xff]
      %v505 = vld [vmem:[%s1 + $0xa8] sm:$0xff]
      %v506 = vld [vmem:[%s1 + $0xb0] sm:$0xff]
      %v507 = vld [vmem:[%s1 + $0xb8] sm:$0xff]
      %v508 = vld [vmem:[%s1 + $0xc0] sm:$0xff]
      %v509 = vld [vmem:[%s1 + $0xc8] sm:$0xff]
      %v510 = vld [vmem:[%s1 + $0xd0] sm:$0xff]
      %v511 = vld [vmem:[%s1 + $0xd8] sm:$0xff]
      %v512 = vld [vmem:[%s1 + $0xe0] sm:$0xff]
      %v513 = vld [vmem:[%s1 + $0xe8] sm:$0xff]
      %v514 = vld [vmem:[%s1 + $0xf0] sm:$0xff]
      %v515 = vld [vmem:[%s1 + $0xf8] sm:$0xff]
      %v516 = vld [vmem:[%s1 + $0x100] sm:$0xff]
      %v517 = vld [vmem:[%s1 + $0x108] sm:$0xff]
      %v518 = vld [vmem:[%s1 + $0x110] sm:$0xff]
      %v519 = vld [vmem:[%s1 + $0x118] sm:$0xff]
      %v520 = vld [vmem:[%s1 + $0x120] sm:$0xff]
      %v521 = vld [vmem:[%s1 + $0x128] sm:$0xff]
      %v522 = vld [vmem:[%s1 + $0x130] sm:$0xff]
      %v523 = vld [vmem:[%s1 + $0x138] sm:$0xff]
      %v525 = vsel %vm435, %v291, 0
      %v528 = vsel %vm435, %v292, 0
      %v531 = vsel %vm435, %v293, 0
      %v534 = vsel %vm435, %v294, 0
      %v537 = vsel %vm435, %v295, 0
      %v540 = vsel %vm435, %v296, 0
      %v543 = vsel %vm435, %v297, 0
      %v546 = vsel %vm435, %v298, 0
      %v549 = vsel %vm435, %v299, 0
      %v552 = vsel %vm435, %v300, 0
      %v555 = vsel %vm435, %v301, 0
      %v558 = vsel %vm435, %v302, 0
      %v561 = vsel %vm435, %v303, 0
      %v564 = vsel %vm435, %v304, 0
      %v567 = vsel %vm435, %v305, 0
      %v570 = vsel %vm435, %v306, 0
      %572 = vmatprep.subr.mxu0 0.0
      %573 = vmatpush1.msra.mxu0 %v484
      %574 = vmatprep.subr.mxu0 0.0
      %575 = vmatpush1.msra.mxu0 %v485
      %576 = vmatprep.subr.mxu0 0.0
      %577 = vmatpush1.msra.mxu0 %v486
      %578 = vmatprep.subr.mxu0 0.0
      %579 = vmatpush1.msra.mxu0 %v487
      %580 = vmatprep.subr.mxu0 0.0
      %581 = vmatpush1.msra.mxu0 %v488
      %582 = vmatprep.subr.mxu0 0.0
      %583 = vmatpush1.msra.mxu0 %v489
      %584 = vmatprep.subr.mxu0 0.0
      %585 = vmatpush1.msra.mxu0 %v490
      %586 = vmatprep.subr.mxu0 0.0
      %587 = vmatpush1.msra.mxu0 %v491
      %588 = vmatprep.subr.mxu0 0.0
      %589 = vmatpush1.msra.mxu0 %v492
      %590 = vmatprep.subr.mxu0 0.0
      %591 = vmatpush1.msra.mxu0 %v493
      %592 = vmatprep.subr.mxu0 0.0
      %593 = vmatpush1.msra.mxu0 %v494
      %594 = vmatprep.subr.mxu0 0.0
      %595 = vmatpush1.msra.mxu0 %v495
      %596 = vmatprep.subr.mxu0 0.0
      %597 = vmatpush1.msra.mxu0 %v496
      %598 = vmatprep.subr.mxu0 0.0
      %599 = vmatpush1.msra.mxu0 %v497
      %600 = vmatprep.subr.mxu0 0.0
      %601 = vmatpush1.msra.mxu0 %v498
      %602 = vmatprep.subr.mxu0 0.0
      %603 = vmatpush1.msra.mxu0 %v499
      %604 = vmatprep.subr.mxu0 0.0
      %605 = vmatpush1.msra.mxu0 %v500
      %606 = vmatprep.subr.mxu0 0.0
      %607 = vmatpush1.msra.mxu0 %v501
      %608 = vmatprep.subr.mxu0 0.0
      %609 = vmatpush1.msra.mxu0 %v502
      %610 = vmatprep.subr.mxu0 0.0
      %611 = vmatpush1.msra.mxu0 %v503
      %612 = vmatprep.subr.mxu0 0.0
      %613 = vmatpush1.msra.mxu0 %v504
      %614 = vmatprep.subr.mxu0 0.0
      %615 = vmatpush1.msra.mxu0 %v505
      %616 = vmatprep.subr.mxu0 0.0
      %617 = vmatpush1.msra.mxu0 %v506
      %618 = vmatprep.subr.mxu0 0.0
      %619 = vmatpush1.msra.mxu0 %v507
      %620 = vmatprep.subr.mxu0 0.0
      %621 = vmatpush1.msra.mxu0 %v508
      %622 = vmatprep.subr.mxu0 0.0
      %623 = vmatpush1.msra.mxu0 %v509
      %624 = vmatprep.subr.mxu0 0.0
      %625 = vmatpush1.msra.mxu0 %v510
      %626 = vmatprep.subr.mxu0 0.0
      %627 = vmatpush1.msra.mxu0 %v511
      %628 = vmatprep.subr.mxu0 0.0
      %629 = vmatpush1.msra.mxu0 %v512
      %630 = vmatprep.subr.mxu0 0.0
      %631 = vmatpush1.msra.mxu0 %v513
      %632 = vmatprep.subr.mxu0 0.0
      %633 = vmatpush1.msra.mxu0 %v514
      %634 = vmatprep.subr.mxu0 0.0
      %635 = vmatpush1.msra.mxu0 %v515
      %636 = vmatprep.mubr.f32.mxu0 %v452
      %637 = vmatmul.mubr.f32.gmra.mrb[0].mxu0 %v436
      %v638 = vpop.f32.mrb[0].mxu0
      %v639 = vadd.f32 0.0, %v638
      %v640 = vpop.f32.mrb[0].mxu0
      %641 = vmatprep.mubr.f32.mxu0 %v453
      %642 = vmatmul.mubr.f32.gmra.mrb[0].mxu0 %v437
      %v643 = vpop.f32.mrb[0].mxu0
      %v644 = vadd.f32 0.0, %v643
      %v645 = vpop.f32.mrb[0].mxu0
      %646 = vmatprep.mubr.f32.mxu0 %v454
      %647 = vmatmul.mubr.f32.gmra.mrb[0].mxu0 %v438
      %v648 = vpop.f32.mrb[0].mxu0
      %v649 = vadd.f32 0.0, %v648
      %v650 = vpop.f32.mrb[0].mxu0
      %651 = vmatprep.mubr.f32.mxu0 %v455
      %652 = vmatmul.mubr.f32.gmra.mrb[0].mxu0 %v439
      %v653 = vpop.f32.mrb[0].mxu0
      %v654 = vadd.f32 0.0, %v653
      %v655 = vpop.f32.mrb[0].mxu0
      %656 = vmatprep.mubr.f32.mxu0 %v456
      %657 = vmatmul.mubr.f32.gmra.mrb[0].mxu0 %v440
      %v658 = vpop.f32.mrb[0].mxu0
      %v659 = vadd.f32 0.0, %v658
      %v660 = vpop.f32.mrb[0].mxu0
      %661 = vmatprep.mubr.f32.mxu0 %v457
      %662 = vmatmul.mubr.f32.gmra.mrb[0].mxu0 %v441
      %v663 = vpop.f32.mrb[0].mxu0
      %v664 = vadd.f32 0.0, %v663
      %v665 = vpop.f32.mrb[0].mxu0
      %666 = vmatprep.mubr.f32.mxu0 %v458
      %667 = vmatmul.mubr.f32.gmra.mrb[0].mxu0 %v442
      %v668 = vpop.f32.mrb[0].mxu0
      %v669 = vadd.f32 0.0, %v668
      %v670 = vpop.f32.mrb[0].mxu0
      %671 = vmatprep.mubr.f32.mxu0 %v459
      %672 = vmatmul.mubr.f32.gmra.mrb[0].mxu0 %v443
      %v673 = vpop.f32.mrb[0].mxu0
      %v674 = vadd.f32 0.0, %v673
      %v675 = vpop.f32.mrb[0].mxu0
      %676 = vmatprep.mubr.f32.mxu0 %v460
      %677 = vmatmul.mubr.f32.gmra.mrb[0].mxu0 %v444
      %v678 = vpop.f32.mrb[0].mxu0
      %v679 = vadd.f32 0.0, %v678
      %v680 = vpop.f32.mrb[0].mxu0
      %681 = vmatprep.mubr.f32.mxu0 %v461
      %682 = vmatmul.mubr.f32.gmra.mrb[0].mxu0 %v445
      %v683 = vpop.f32.mrb[0].mxu0
      %v684 = vadd.f32 0.0, %v683
      %v685 = vpop.f32.mrb[0].mxu0
      %686 = vmatprep.mubr.f32.mxu0 %v462
      %687 = vmatmul.mubr.f32.gmra.mrb[0].mxu0 %v446
      %v688 = vpop.f32.mrb[0].mxu0
      %v689 = vadd.f32 0.0, %v688
      %v690 = vpop.f32.mrb[0].mxu0
      %691 = vmatprep.mubr.f32.mxu0 %v463
      %692 = vmatmul.mubr.f32.gmra.mrb[0].mxu0 %v447
      %v693 = vpop.f32.mrb[0].mxu0
      %v694 = vadd.f32 0.0, %v693
      %v695 = vpop.f32.mrb[0].mxu0
      %696 = vmatprep.mubr.f32.mxu0 %v464
      %697 = vmatmul.mubr.f32.gmra.mrb[0].mxu0 %v448
      %v698 = vpop.f32.mrb[0].mxu0
      %v699 = vadd.f32 0.0, %v698
      %v700 = vpop.f32.mrb[0].mxu0
      %701 = vmatprep.mubr.f32.mxu0 %v465
      %702 = vmatmul.mubr.f32.gmra.mrb[0].mxu0 %v449
      %v703 = vpop.f32.mrb[0].mxu0
      %v704 = vadd.f32 0.0, %v703
      %v705 = vpop.f32.mrb[0].mxu0
      %706 = vmatprep.mubr.f32.mxu0 %v466
      %707 = vmatmul.mubr.f32.gmra.mrb[0].mxu0 %v450
      %v708 = vpop.f32.mrb[0].mxu0
      %v709 = vadd.f32 0.0, %v708
      %v710 = vpop.f32.mrb[0].mxu0
      %711 = vmatprep.mubr.f32.mxu0 %v467
      %712 = vmatmul.mubr.f32.gmra.mrb[0].mxu0 %v451
      %v713 = vpop.f32.mrb[0].mxu0
      %v714 = vadd.f32 0.0, %v713
      %v715 = vpop.f32.mrb[0].mxu0
      %716 = vdwg.mxu0
      %717 = vmatprep.subr.mxu0 0.0
      %718 = vmatpush1.msra.mxu0 %v516
      %719 = vmatprep.subr.mxu0 0.0
      %720 = vmatpush1.msra.mxu0 %v517
      %721 = vmatprep.subr.mxu0 0.0
      %722 = vmatpush1.msra.mxu0 %v518
      %723 = vmatprep.subr.mxu0 0.0
      %724 = vmatpush1.msra.mxu0 %v519
      %725 = vmatprep.subr.mxu0 0.0
      %726 = vmatpush1.msra.mxu0 %v520
      %727 = vmatprep.subr.mxu0 0.0
      %728 = vmatpush1.msra.mxu0 %v521
      %729 = vmatprep.subr.mxu0 0.0
      %730 = vmatpush1.msra.mxu0 %v522
      %731 = vmatprep.subr.mxu0 0.0
      %732 = vmatpush1.msra.mxu0 %v523
      %733 = vmatprep.subr.mxu0 0.0
      %734 = vmatpush1.msra.mxu0 0.0
      %735 = vmatprep.subr.mxu0 0.0
      %736 = vmatpush1.msra.mxu0 0.0
      %737 = vmatprep.subr.mxu0 0.0
      %738 = vmatpush1.msra.mxu0 0.0
      %739 = vmatprep.subr.mxu0 0.0
      %740 = vmatpush1.msra.mxu0 0.0
      %741 = vmatprep.subr.mxu0 0.0
      %742 = vmatpush1.msra.mxu0 0.0
      %743 = vmatprep.subr.mxu0 0.0
      %744 = vmatpush1.msra.mxu0 0.0
      %745 = vmatprep.subr.mxu0 0.0
      %746 = vmatpush1.msra.mxu0 0.0
      %747 = vmatprep.subr.mxu0 0.0
      %748 = vmatpush1.msra.mxu0 0.0
      %749 = vmatprep.subr.mxu0 0.0
      %750 = vmatpush1.msra.mxu0 0.0
      %751 = vmatprep.subr.mxu0 0.0
      %752 = vmatpush1.msra.mxu0 0.0
      %753 = vmatprep.subr.mxu0 0.0
      %754 = vmatpush1.msra.mxu0 0.0
      %755 = vmatprep.subr.mxu0 0.0
      %756 = vmatpush1.msra.mxu0 0.0
      %757 = vmatprep.subr.mxu0 0.0
      %758 = vmatpush1.msra.mxu0 0.0
      %759 = vmatprep.subr.mxu0 0.0
      %760 = vmatpush1.msra.mxu0 0.0
      %761 = vmatprep.subr.mxu0 0.0
      %762 = vmatpush1.msra.mxu0 0.0
      %763 = vmatprep.subr.mxu0 0.0
      %764 = vmatpush1.msra.mxu0 0.0
      %765 = vmatprep.subr.mxu0 0.0
      %766 = vmatpush1.msra.mxu0 0.0
      %767 = vmatprep.subr.mxu0 0.0
      %768 = vmatpush1.msra.mxu0 0.0
      %769 = vmatprep.subr.mxu0 0.0
      %770 = vmatpush1.msra.mxu0 0.0
      %771 = vmatprep.subr.mxu0 0.0
      %772 = vmatpush1.msra.mxu0 0.0
      %773 = vmatprep.subr.mxu0 0.0
      %774 = vmatpush1.msra.mxu0 0.0
      %775 = vmatprep.subr.mxu0 0.0
      %776 = vmatpush1.msra.mxu0 0.0
      %777 = vmatprep.subr.mxu0 0.0
      %778 = vmatpush1.msra.mxu0 0.0
      %779 = vmatprep.subr.mxu0 0.0
      %780 = vmatpush1.msra.mxu0 0.0
      %781 = vmatprep.mubr.f32.mxu0 0.0
      %782 = vmatmul.mubr.f32.gmra.mrb[0].mxu0 %v525
      %v783 = vpop.f32.mrb[0].mxu0
      %v784 = vadd.f32 %v639, %v783
      %v785 = vpop.f32.mrb[0].mxu0
      %786 = vmatprep.mubr.f32.mxu0 0.0
      %787 = vmatmul.mubr.f32.gmra.mrb[0].mxu0 %v528
      %v788 = vpop.f32.mrb[0].mxu0
      %v789 = vadd.f32 %v644, %v788
      %v790 = vpop.f32.mrb[0].mxu0
      %791 = vmatprep.mubr.f32.mxu0 0.0
      %792 = vmatmul.mubr.f32.gmra.mrb[0].mxu0 %v531
      %v793 = vpop.f32.mrb[0].mxu0
      %v794 = vadd.f32 %v649, %v793
      %v795 = vpop.f32.mrb[0].mxu0
      %796 = vmatprep.mubr.f32.mxu0 0.0
      %797 = vmatmul.mubr.f32.gmra.mrb[0].mxu0 %v534
      %v798 = vpop.f32.mrb[0].mxu0
      %v799 = vadd.f32 %v654, %v798
      %v800 = vpop.f32.mrb[0].mxu0
      %801 = vmatprep.mubr.f32.mxu0 0.0
      %802 = vmatmul.mubr.f32.gmra.mrb[0].mxu0 %v537
      %v803 = vpop.f32.mrb[0].mxu0
      %v804 = vadd.f32 %v659, %v803
      %v805 = vpop.f32.mrb[0].mxu0
      %806 = vmatprep.mubr.f32.mxu0 0.0
      %807 = vmatmul.mubr.f32.gmra.mrb[0].mxu0 %v540
      %v808 = vpop.f32.mrb[0].mxu0
      %v809 = vadd.f32 %v664, %v808
      %v810 = vpop.f32.mrb[0].mxu0
      %811 = vmatprep.mubr.f32.mxu0 0.0
      %812 = vmatmul.mubr.f32.gmra.mrb[0].mxu0 %v543
      %v813 = vpop.f32.mrb[0].mxu0
      %v814 = vadd.f32 %v669, %v813
      %v815 = vpop.f32.mrb[0].mxu0
      %816 = vmatprep.mubr.f32.mxu0 0.0
      %817 = vmatmul.mubr.f32.gmra.mrb[0].mxu0 %v546
      %v818 = vpop.f32.mrb[0].mxu0
      %v819 = vadd.f32 %v674, %v818
      %v820 = vpop.f32.mrb[0].mxu0
      %821 = vmatprep.mubr.f32.mxu0 0.0
      %822 = vmatmul.mubr.f32.gmra.mrb[0].mxu0 %v549
      %v823 = vpop.f32.mrb[0].mxu0
      %v824 = vadd.f32 %v679, %v823
      %v825 = vpop.f32.mrb[0].mxu0
      %826 = vmatprep.mubr.f32.mxu0 0.0
      %827 = vmatmul.mubr.f32.gmra.mrb[0].mxu0 %v552
      %v828 = vpop.f32.mrb[0].mxu0
      %v829 = vadd.f32 %v684, %v828
      %v830 = vpop.f32.mrb[0].mxu0
      %831 = vmatprep.mubr.f32.mxu0 0.0
      %832 = vmatmul.mubr.f32.gmra.mrb[0].mxu0 %v555
      %v833 = vpop.f32.mrb[0].mxu0
      %v834 = vadd.f32 %v689, %v833
      %v835 = vpop.f32.mrb[0].mxu0
      %836 = vmatprep.mubr.f32.mxu0 0.0
      %837 = vmatmul.mubr.f32.gmra.mrb[0].mxu0 %v558
      %v838 = vpop.f32.mrb[0].mxu0
      %v839 = vadd.f32 %v694, %v838
      %v840 = vpop.f32.mrb[0].mxu0
      %841 = vmatprep.mubr.f32.mxu0 0.0
      %842 = vmatmul.mubr.f32.gmra.mrb[0].mxu0 %v561
      %v843 = vpop.f32.mrb[0].mxu0
      %v844 = vadd.f32 %v699, %v843
      %v845 = vpop.f32.mrb[0].mxu0
      %846 = vmatprep.mubr.f32.mxu0 0.0
      %847 = vmatmul.mubr.f32.gmra.mrb[0].mxu0 %v564
      %v848 = vpop.f32.mrb[0].mxu0
      %v849 = vadd.f32 %v704, %v848
      %v850 = vpop.f32.mrb[0].mxu0
      %851 = vmatprep.mubr.f32.mxu0 0.0
      %852 = vmatmul.mubr.f32.gmra.mrb[0].mxu0 %v567
      %v853 = vpop.f32.mrb[0].mxu0
      %v854 = vadd.f32 %v709, %v853
      %v855 = vpop.f32.mrb[0].mxu0
      %856 = vmatprep.mubr.f32.mxu0 0.0
      %857 = vmatmul.mubr.f32.gmra.mrb[0].mxu0 %v570
      %v858 = vpop.f32.mrb[0].mxu0
      %v859 = vadd.f32 %v714, %v858
      %v860 = vpop.f32.mrb[0].mxu0
      %861 = vdwg.mxu0
      %v862 = vadd.f32 %v468, %v784
      %v863 = vadd.f32 %v469, %v789
      %v864 = vadd.f32 %v470, %v794
      %v865 = vadd.f32 %v471, %v799
      %v866 = vadd.f32 %v472, %v804
      %v867 = vadd.f32 %v473, %v809
      %v868 = vadd.f32 %v474, %v814
      %v869 = vadd.f32 %v475, %v819
      %v870 = vadd.f32 %v476, %v824
      %v871 = vadd.f32 %v477, %v829
      %v872 = vadd.f32 %v478, %v834
      %v873 = vadd.f32 %v479, %v839
      %v874 = vadd.f32 %v480, %v844
      %v875 = vadd.f32 %v481, %v849
      %v876 = vadd.f32 %v482, %v854
      %v877 = vadd.f32 %v483, %v859
      %878 = vst.msk [vmem:[#allocation2] sm:$0xff] %vm210, %v862
      %879 = vst.msk [vmem:[#allocation2 + $0x8] sm:$0xff] %vm210, %v863
      %880 = vst.msk [vmem:[#allocation2 + $0x10] sm:$0xff] %vm210, %v864
      %881 = vst.msk [vmem:[#allocation2 + $0x18] sm:$0xff] %vm210, %v865
      %882 = vst.msk [vmem:[#allocation2 + $0x20] sm:$0xff] %vm210, %v866
      %883 = vst.msk [vmem:[#allocation2 + $0x28] sm:$0xff] %vm210, %v867
      %884 = vst.msk [vmem:[#allocation2 + $0x30] sm:$0xff] %vm210, %v868
      %885 = vst.msk [vmem:[#allocation2 + $0x38] sm:$0xff] %vm210, %v869
      %886 = vst.msk [vmem:[#allocation2 + $0x40] sm:$0xff] %vm210, %v870
      %887 = vst.msk [vmem:[#allocation2 + $0x48] sm:$0xff] %vm210, %v871
      %888 = vst.msk [vmem:[#allocation2 + $0x50] sm:$0xff] %vm210, %v872
      %889 = vst.msk [vmem:[#allocation2 + $0x58] sm:$0xff] %vm210, %v873
      %890 = vst.msk [vmem:[#allocation2 + $0x60] sm:$0xff] %vm210, %v874
      %891 = vst.msk [vmem:[#allocation2 + $0x68] sm:$0xff] %vm210, %v875
      %892 = vst.msk [vmem:[#allocation2 + $0x70] sm:$0xff] %vm210, %v876
      %893 = vst.msk [vmem:[#allocation2 + $0x78] sm:$0xff] %vm210, %v877
      %s894 = scalar_lea.vmem %s198, 24
      %v895 = vld [vmem:[%s894] sm:$0xff]
      %v896 = vld [vmem:[%s894 + $0x8] sm:$0xff]
      %v897 = vld [vmem:[%s894 + $0x18] sm:$0xff]
      %v898 = vld [vmem:[%s894 + $0x20] sm:$0xff]
      %v899 = vld [vmem:[%s894 + $0x30] sm:$0xff]
      %v900 = vld [vmem:[%s894 + $0x38] sm:$0xff]
      %v901 = vld [vmem:[%s894 + $0x48] sm:$0xff]
      %v902 = vld [vmem:[%s894 + $0x50] sm:$0xff]
      %v903 = vld [vmem:[%s894 + $0x60] sm:$0xff]
      %v904 = vld [vmem:[%s894 + $0x68] sm:$0xff]
      %v905 = vld [vmem:[%s894 + $0x78] sm:$0xff]
      %v906 = vld [vmem:[%s894 + $0x80] sm:$0xff]
      %v907 = vld [vmem:[%s894 + $0x90] sm:$0xff]
      %v908 = vld [vmem:[%s894 + $0x98] sm:$0xff]
      %v909 = vld [vmem:[%s894 + $0xa8] sm:$0xff]
      %v910 = vld [vmem:[%s894 + $0xb0] sm:$0xff]
      %v911 = vld [vmem:[%s894 + $0x1] sm:$0xff]
      %v912 = vld [vmem:[%s894 + $0x9] sm:$0xff]
      %v913 = vld [vmem:[%s894 + $0x19] sm:$0xff]
      %v914 = vld [vmem:[%s894 + $0x21] sm:$0xff]
      %v915 = vld [vmem:[%s894 + $0x31] sm:$0xff]
      %v916 = vld [vmem:[%s894 + $0x39] sm:$0xff]
      %v917 = vld [vmem:[%s894 + $0x49] sm:$0xff]
      %v918 = vld [vmem:[%s894 + $0x51] sm:$0xff]
      %v919 = vld [vmem:[%s894 + $0x61] sm:$0xff]
      %v920 = vld [vmem:[%s894 + $0x69] sm:$0xff]
      %v921 = vld [vmem:[%s894 + $0x79] sm:$0xff]
      %v922 = vld [vmem:[%s894 + $0x81] sm:$0xff]
      %v923 = vld [vmem:[%s894 + $0x91] sm:$0xff]
      %v924 = vld [vmem:[%s894 + $0x99] sm:$0xff]
      %v925 = vld [vmem:[%s894 + $0xa9] sm:$0xff]
      %v926 = vld [vmem:[%s894 + $0xb1] sm:$0xff]
      %v927 = vld [vmem:[%s894 + $0x2] sm:$0xff]
      %v928 = vld [vmem:[%s894 + $0xa] sm:$0xff]
      %v929 = vld [vmem:[%s894 + $0x1a] sm:$0xff]
      %v930 = vld [vmem:[%s894 + $0x22] sm:$0xff]
      %v931 = vld [vmem:[%s894 + $0x32] sm:$0xff]
      %v932 = vld [vmem:[%s894 + $0x3a] sm:$0xff]
      %v933 = vld [vmem:[%s894 + $0x4a] sm:$0xff]
      %v934 = vld [vmem:[%s894 + $0x52] sm:$0xff]
      %v935 = vld [vmem:[%s894 + $0x62] sm:$0xff]
      %v936 = vld [vmem:[%s894 + $0x6a] sm:$0xff]
      %v937 = vld [vmem:[%s894 + $0x7a] sm:$0xff]
      %v938 = vld [vmem:[%s894 + $0x82] sm:$0xff]
      %v939 = vld [vmem:[%s894 + $0x92] sm:$0xff]
      %v940 = vld [vmem:[%s894 + $0x9a] sm:$0xff]
      %v941 = vld [vmem:[%s894 + $0xaa] sm:$0xff]
      %v942 = vld [vmem:[%s894 + $0xb2] sm:$0xff]
      %v943 = vld [vmem:[%s894 + $0x3] sm:$0xff]
      %v944 = vld [vmem:[%s894 + $0xb] sm:$0xff]
      %v945 = vld [vmem:[%s894 + $0x1b] sm:$0xff]
      %v946 = vld [vmem:[%s894 + $0x23] sm:$0xff]
      %v947 = vld [vmem:[%s894 + $0x33] sm:$0xff]
      %v948 = vld [vmem:[%s894 + $0x3b] sm:$0xff]
      %v949 = vld [vmem:[%s894 + $0x4b] sm:$0xff]
      %v950 = vld [vmem:[%s894 + $0x53] sm:$0xff]
      %v951 = vld [vmem:[%s894 + $0x63] sm:$0xff]
      %v952 = vld [vmem:[%s894 + $0x6b] sm:$0xff]
      %v953 = vld [vmem:[%s894 + $0x7b] sm:$0xff]
      %v954 = vld [vmem:[%s894 + $0x83] sm:$0xff]
      %v955 = vld [vmem:[%s894 + $0x93] sm:$0xff]
      %v956 = vld [vmem:[%s894 + $0x9b] sm:$0xff]
      %v957 = vld [vmem:[%s894 + $0xab] sm:$0xff]
      %v958 = vld [vmem:[%s894 + $0xb3] sm:$0xff]
      %v959 = vld [vmem:[%s894 + $0x4] sm:$0xff]
      %v960 = vld [vmem:[%s894 + $0xc] sm:$0xff]
      %v961 = vld [vmem:[%s894 + $0x1c] sm:$0xff]
      %v962 = vld [vmem:[%s894 + $0x24] sm:$0xff]
      %v963 = vld [vmem:[%s894 + $0x34] sm:$0xff]
      %v964 = vld [vmem:[%s894 + $0x3c] sm:$0xff]
      %v965 = vld [vmem:[%s894 + $0x4c] sm:$0xff]
      %v966 = vld [vmem:[%s894 + $0x54] sm:$0xff]
      %v967 = vld [vmem:[%s894 + $0x64] sm:$0xff]
      %v968 = vld [vmem:[%s894 + $0x6c] sm:$0xff]
      %v969 = vld [vmem:[%s894 + $0x7c] sm:$0xff]
      %v970 = vld [vmem:[%s894 + $0x84] sm:$0xff]
      %v971 = vld [vmem:[%s894 + $0x94] sm:$0xff]
      %v972 = vld [vmem:[%s894 + $0x9c] sm:$0xff]
      %v973 = vld [vmem:[%s894 + $0xac] sm:$0xff]
      %v974 = vld [vmem:[%s894 + $0xb4] sm:$0xff]
      %991 = vrot.lane.b32.xlu0 %v911, 64
      %v992 = vpop.permute.xlu0 %991
      %993 = vrot.lane.b32.xlu0 %v912, 64
      %v994 = vpop.permute.xlu0 %993
      %995 = vrot.lane.b32.xlu0 %v913, 64
      %v996 = vpop.permute.xlu0 %995
      %997 = vrot.lane.b32.xlu0 %v914, 64
      %v998 = vpop.permute.xlu0 %997
      %999 = vrot.lane.b32.xlu0 %v915, 64
      %v1000 = vpop.permute.xlu0 %999
      %1001 = vrot.lane.b32.xlu0 %v916, 64
      %v1002 = vpop.permute.xlu0 %1001
      %1003 = vrot.lane.b32.xlu0 %v917, 64
      %v1004 = vpop.permute.xlu0 %1003
      %1005 = vrot.lane.b32.xlu0 %v918, 64
      %v1006 = vpop.permute.xlu0 %1005
      %1007 = vrot.lane.b32.xlu0 %v919, 64
      %v1008 = vpop.permute.xlu0 %1007
      %1009 = vrot.lane.b32.xlu0 %v920, 64
      %v1010 = vpop.permute.xlu0 %1009
      %1011 = vrot.lane.b32.xlu0 %v921, 64
      %v1012 = vpop.permute.xlu0 %1011
      %1013 = vrot.lane.b32.xlu0 %v922, 64
      %v1014 = vpop.permute.xlu0 %1013
      %1015 = vrot.lane.b32.xlu0 %v923, 64
      %v1016 = vpop.permute.xlu0 %1015
      %1017 = vrot.lane.b32.xlu0 %v924, 64
      %v1018 = vpop.permute.xlu0 %1017
      %1019 = vrot.lane.b32.xlu0 %v925, 64
      %v1020 = vpop.permute.xlu0 %1019
      %1021 = vrot.lane.b32.xlu0 %v926, 64
      %v1022 = vpop.permute.xlu0 %1021
      %1055 = vrot.lane.b32.xlu0 %v943, 64
      %v1056 = vpop.permute.xlu0 %1055
      %1057 = vrot.lane.b32.xlu0 %v944, 64
      %v1058 = vpop.permute.xlu0 %1057
      %1059 = vrot.lane.b32.xlu0 %v945, 64
      %v1060 = vpop.permute.xlu0 %1059
      %1061 = vrot.lane.b32.xlu0 %v946, 64
      %v1062 = vpop.permute.xlu0 %1061
      %1063 = vrot.lane.b32.xlu0 %v947, 64
      %v1064 = vpop.permute.xlu0 %1063
      %1065 = vrot.lane.b32.xlu0 %v948, 64
      %v1066 = vpop.permute.xlu0 %1065
      %1067 = vrot.lane.b32.xlu0 %v949, 64
      %v1068 = vpop.permute.xlu0 %1067
      %1069 = vrot.lane.b32.xlu0 %v950, 64
      %v1070 = vpop.permute.xlu0 %1069
      %1071 = vrot.lane.b32.xlu0 %v951, 64
      %v1072 = vpop.permute.xlu0 %1071
      %1073 = vrot.lane.b32.xlu0 %v952, 64
      %v1074 = vpop.permute.xlu0 %1073
      %1075 = vrot.lane.b32.xlu0 %v953, 64
      %v1076 = vpop.permute.xlu0 %1075
      %1077 = vrot.lane.b32.xlu0 %v954, 64
      %v1078 = vpop.permute.xlu0 %1077
      %1079 = vrot.lane.b32.xlu0 %v955, 64
      %v1080 = vpop.permute.xlu0 %1079
      %1081 = vrot.lane.b32.xlu0 %v956, 64
      %v1082 = vpop.permute.xlu0 %1081
      %1083 = vrot.lane.b32.xlu0 %v957, 64
      %v1084 = vpop.permute.xlu0 %1083
      %1085 = vrot.lane.b32.xlu0 %v958, 64
      %v1086 = vpop.permute.xlu0 %1085
      %v1103 = vsel %vm435, %v895, %v992
      %v1104 = vsel %vm435, %v896, %v994
      %v1105 = vsel %vm435, %v897, %v996
      %v1106 = vsel %vm435, %v898, %v998
      %v1107 = vsel %vm435, %v899, %v1000
      %v1108 = vsel %vm435, %v900, %v1002
      %v1109 = vsel %vm435, %v901, %v1004
      %v1110 = vsel %vm435, %v902, %v1006
      %v1111 = vsel %vm435, %v903, %v1008
      %v1112 = vsel %vm435, %v904, %v1010
      %v1113 = vsel %vm435, %v905, %v1012
      %v1114 = vsel %vm435, %v906, %v1014
      %v1115 = vsel %vm435, %v907, %v1016
      %v1116 = vsel %vm435, %v908, %v1018
      %v1117 = vsel %vm435, %v909, %v1020
      %v1118 = vsel %vm435, %v910, %v1022
      %v1119 = vsel %vm435, %v927, %v1056
      %v1120 = vsel %vm435, %v928, %v1058
      %v1121 = vsel %vm435, %v929, %v1060
      %v1122 = vsel %vm435, %v930, %v1062
      %v1123 = vsel %vm435, %v931, %v1064
      %v1124 = vsel %vm435, %v932, %v1066
      %v1125 = vsel %vm435, %v933, %v1068
      %v1126 = vsel %vm435, %v934, %v1070
      %v1127 = vsel %vm435, %v935, %v1072
      %v1128 = vsel %vm435, %v936, %v1074
      %v1129 = vsel %vm435, %v937, %v1076
      %v1130 = vsel %vm435, %v938, %v1078
      %v1131 = vsel %vm435, %v939, %v1080
      %v1132 = vsel %vm435, %v940, %v1082
      %v1133 = vsel %vm435, %v941, %v1084
      %v1134 = vsel %vm435, %v942, %v1086
      %v1135 = vld [vmem:[#allocation2] sm:$0xff]
      %v1136 = vld [vmem:[#allocation2 + $0x8] sm:$0xff]
      %v1137 = vld [vmem:[#allocation2 + $0x10] sm:$0xff]
      %v1138 = vld [vmem:[#allocation2 + $0x18] sm:$0xff]
      %v1139 = vld [vmem:[#allocation2 + $0x20] sm:$0xff]
      %v1140 = vld [vmem:[#allocation2 + $0x28] sm:$0xff]
      %v1141 = vld [vmem:[#allocation2 + $0x30] sm:$0xff]
      %v1142 = vld [vmem:[#allocation2 + $0x38] sm:$0xff]
      %v1143 = vld [vmem:[#allocation2 + $0x40] sm:$0xff]
      %v1144 = vld [vmem:[#allocation2 + $0x48] sm:$0xff]
      %v1145 = vld [vmem:[#allocation2 + $0x50] sm:$0xff]
      %v1146 = vld [vmem:[#allocation2 + $0x58] sm:$0xff]
      %v1147 = vld [vmem:[#allocation2 + $0x60] sm:$0xff]
      %v1148 = vld [vmem:[#allocation2 + $0x68] sm:$0xff]
      %v1149 = vld [vmem:[#allocation2 + $0x70] sm:$0xff]
      %v1150 = vld [vmem:[#allocation2 + $0x78] sm:$0xff]
      %s1151 = scalar_lea.vmem %s1, 320
      %v1152 = vld [vmem:[%s1151] sm:$0xff]
      %v1153 = vld [vmem:[%s1151 + $0x8] sm:$0xff]
      %v1154 = vld [vmem:[%s1151 + $0x10] sm:$0xff]
      %v1155 = vld [vmem:[%s1151 + $0x18] sm:$0xff]
      %v1156 = vld [vmem:[%s1151 + $0x20] sm:$0xff]
      %v1157 = vld [vmem:[%s1151 + $0x28] sm:$0xff]
      %v1158 = vld [vmem:[%s1151 + $0x30] sm:$0xff]
      %v1159 = vld [vmem:[%s1151 + $0x38] sm:$0xff]
      %v1160 = vld [vmem:[%s1151 + $0x40] sm:$0xff]
      %v1161 = vld [vmem:[%s1151 + $0x48] sm:$0xff]
      %v1162 = vld [vmem:[%s1151 + $0x50] sm:$0xff]
      %v1163 = vld [vmem:[%s1151 + $0x58] sm:$0xff]
      %v1164 = vld [vmem:[%s1151 + $0x60] sm:$0xff]
      %v1165 = vld [vmem:[%s1151 + $0x68] sm:$0xff]
      %v1166 = vld [vmem:[%s1151 + $0x70] sm:$0xff]
      %v1167 = vld [vmem:[%s1151 + $0x78] sm:$0xff]
      %v1168 = vld [vmem:[%s1151 + $0x80] sm:$0xff]
      %v1169 = vld [vmem:[%s1151 + $0x88] sm:$0xff]
      %v1170 = vld [vmem:[%s1151 + $0x90] sm:$0xff]
      %v1171 = vld [vmem:[%s1151 + $0x98] sm:$0xff]
      %v1172 = vld [vmem:[%s1151 + $0xa0] sm:$0xff]
      %v1173 = vld [vmem:[%s1151 + $0xa8] sm:$0xff]
      %v1174 = vld [vmem:[%s1151 + $0xb0] sm:$0xff]
      %v1175 = vld [vmem:[%s1151 + $0xb8] sm:$0xff]
      %v1176 = vld [vmem:[%s1151 + $0xc0] sm:$0xff]
      %v1177 = vld [vmem:[%s1151 + $0xc8] sm:$0xff]
      %v1178 = vld [vmem:[%s1151 + $0xd0] sm:$0xff]
      %v1179 = vld [vmem:[%s1151 + $0xd8] sm:$0xff]
      %v1180 = vld [vmem:[%s1151 + $0xe0] sm:$0xff]
      %v1181 = vld [vmem:[%s1151 + $0xe8] sm:$0xff]
      %v1182 = vld [vmem:[%s1151 + $0xf0] sm:$0xff]
      %v1183 = vld [vmem:[%s1151 + $0xf8] sm:$0xff]
      %v1184 = vld [vmem:[%s1151 + $0x100] sm:$0xff]
      %v1185 = vld [vmem:[%s1151 + $0x108] sm:$0xff]
      %v1186 = vld [vmem:[%s1151 + $0x110] sm:$0xff]
      %v1187 = vld [vmem:[%s1151 + $0x118] sm:$0xff]
      %v1188 = vld [vmem:[%s1151 + $0x120] sm:$0xff]
      %v1189 = vld [vmem:[%s1151 + $0x128] sm:$0xff]
      %v1190 = vld [vmem:[%s1151 + $0x130] sm:$0xff]
      %v1191 = vld [vmem:[%s1151 + $0x138] sm:$0xff]
      %v1193 = vsel %vm435, %v959, 0
      %v1196 = vsel %vm435, %v960, 0
      %v1199 = vsel %vm435, %v961, 0
      %v1202 = vsel %vm435, %v962, 0
      %v1205 = vsel %vm435, %v963, 0
      %v1208 = vsel %vm435, %v964, 0
      %v1211 = vsel %vm435, %v965, 0
      %v1214 = vsel %vm435, %v966, 0
      %v1217 = vsel %vm435, %v967, 0
      %v1220 = vsel %vm435, %v968, 0
      %v1223 = vsel %vm435, %v969, 0
      %v1226 = vsel %vm435, %v970, 0
      %v1229 = vsel %vm435, %v971, 0
      %v1232 = vsel %vm435, %v972, 0
      %v1235 = vsel %vm435, %v973, 0
      %v1238 = vsel %vm435, %v974, 0
      %1240 = vmatprep.subr.mxu0 0.0
      %1241 = vmatpush1.msra.mxu0 %v1152
      %1242 = vmatprep.subr.mxu0 0.0
      %1243 = vmatpush1.msra.mxu0 %v1153
      %1244 = vmatprep.subr.mxu0 0.0
      %1245 = vmatpush1.msra.mxu0 %v1154
      %1246 = vmatprep.subr.mxu0 0.0
      %1247 = vmatpush1.msra.mxu0 %v1155
      %1248 = vmatprep.subr.mxu0 0.0
      %1249 = vmatpush1.msra.mxu0 %v1156
      %1250 = vmatprep.subr.mxu0 0.0
      %1251 = vmatpush1.msra.mxu0 %v1157
      %1252 = vmatprep.subr.mxu0 0.0
      %1253 = vmatpush1.msra.mxu0 %v1158
      %1254 = vmatprep.subr.mxu0 0.0
      %1255 = vmatpush1.msra.mxu0 %v1159
      %1256 = vmatprep.subr.mxu0 0.0
      %1257 = vmatpush1.msra.mxu0 %v1160
      %1258 = vmatprep.subr.mxu0 0.0
      %1259 = vmatpush1.msra.mxu0 %v1161
      %1260 = vmatprep.subr.mxu0 0.0
      %1261 = vmatpush1.msra.mxu0 %v1162
      %1262 = vmatprep.subr.mxu0 0.0
      %1263 = vmatpush1.msra.mxu0 %v1163
      %1264 = vmatprep.subr.mxu0 0.0
      %1265 = vmatpush1.msra.mxu0 %v1164
      %1266 = vmatprep.subr.mxu0 0.0
      %1267 = vmatpush1.msra.mxu0 %v1165
      %1268 = vmatprep.subr.mxu0 0.0
      %1269 = vmatpush1.msra.mxu0 %v1166
      %1270 = vmatprep.subr.mxu0 0.0
      %1271 = vmatpush1.msra.mxu0 %v1167
      %1272 = vmatprep.subr.mxu0 0.0
      %1273 = vmatpush1.msra.mxu0 %v1168
      %1274 = vmatprep.subr.mxu0 0.0
      %1275 = vmatpush1.msra.mxu0 %v1169
      %1276 = vmatprep.subr.mxu0 0.0
      %1277 = vmatpush1.msra.mxu0 %v1170
      %1278 = vmatprep.subr.mxu0 0.0
      %1279 = vmatpush1.msra.mxu0 %v1171
      %1280 = vmatprep.subr.mxu0 0.0
      %1281 = vmatpush1.msra.mxu0 %v1172
      %1282 = vmatprep.subr.mxu0 0.0
      %1283 = vmatpush1.msra.mxu0 %v1173
      %1284 = vmatprep.subr.mxu0 0.0
      %1285 = vmatpush1.msra.mxu0 %v1174
      %1286 = vmatprep.subr.mxu0 0.0
      %1287 = vmatpush1.msra.mxu0 %v1175
      %1288 = vmatprep.subr.mxu0 0.0
      %1289 = vmatpush1.msra.mxu0 %v1176
      %1290 = vmatprep.subr.mxu0 0.0
      %1291 = vmatpush1.msra.mxu0 %v1177
      %1292 = vmatprep.subr.mxu0 0.0
      %1293 = vmatpush1.msra.mxu0 %v1178
      %1294 = vmatprep.subr.mxu0 0.0
      %1295 = vmatpush1.msra.mxu0 %v1179
      %1296 = vmatprep.subr.mxu0 0.0
      %1297 = vmatpush1.msra.mxu0 %v1180
      %1298 = vmatprep.subr.mxu0 0.0
      %1299 = vmatpush1.msra.mxu0 %v1181
      %1300 = vmatprep.subr.mxu0 0.0
      %1301 = vmatpush1.msra.mxu0 %v1182
      %1302 = vmatprep.subr.mxu0 0.0
      %1303 = vmatpush1.msra.mxu0 %v1183
      %1304 = vmatprep.mubr.f32.mxu0 %v1119
      %1305 = vmatmul.mubr.f32.gmra.mrb[0].mxu0 %v1103
      %v1306 = vpop.f32.mrb[0].mxu0
      %v1307 = vadd.f32 0.0, %v1306
      %v1308 = vpop.f32.mrb[0].mxu0
      %1309 = vmatprep.mubr.f32.mxu0 %v1120
      %1310 = vmatmul.mubr.f32.gmra.mrb[0].mxu0 %v1104
      %v1311 = vpop.f32.mrb[0].mxu0
      %v1312 = vadd.f32 0.0, %v1311
      %v1313 = vpop.f32.mrb[0].mxu0
      %1314 = vmatprep.mubr.f32.mxu0 %v1121
      %1315 = vmatmul.mubr.f32.gmra.mrb[0].mxu0 %v1105
      %v1316 = vpop.f32.mrb[0].mxu0
      %v1317 = vadd.f32 0.0, %v1316
      %v1318 = vpop.f32.mrb[0].mxu0
      %1319 = vmatprep.mubr.f32.mxu0 %v1122
      %1320 = vmatmul.mubr.f32.gmra.mrb[0].mxu0 %v1106
      %v1321 = vpop.f32.mrb[0].mxu0
      %v1322 = vadd.f32 0.0, %v1321
      %v1323 = vpop.f32.mrb[0].mxu0
      %1324 = vmatprep.mubr.f32.mxu0 %v1123
      %1325 = vmatmul.mubr.f32.gmra.mrb[0].mxu0 %v1107
      %v1326 = vpop.f32.mrb[0].mxu0
      %v1327 = vadd.f32 0.0, %v1326
      %v1328 = vpop.f32.mrb[0].mxu0
      %1329 = vmatprep.mubr.f32.mxu0 %v1124
      %1330 = vmatmul.mubr.f32.gmra.mrb[0].mxu0 %v1108
      %v1331 = vpop.f32.mrb[0].mxu0
      %v1332 = vadd.f32 0.0, %v1331
      %v1333 = vpop.f32.mrb[0].mxu0
      %1334 = vmatprep.mubr.f32.mxu0 %v1125
      %1335 = vmatmul.mubr.f32.gmra.mrb[0].mxu0 %v1109
      %v1336 = vpop.f32.mrb[0].mxu0
      %v1337 = vadd.f32 0.0, %v1336
      %v1338 = vpop.f32.mrb[0].mxu0
      %1339 = vmatprep.mubr.f32.mxu0 %v1126
      %1340 = vmatmul.mubr.f32.gmra.mrb[0].mxu0 %v1110
      %v1341 = vpop.f32.mrb[0].mxu0
      %v1342 = vadd.f32 0.0, %v1341
      %v1343 = vpop.f32.mrb[0].mxu0
      %1344 = vmatprep.mubr.f32.mxu0 %v1127
      %1345 = vmatmul.mubr.f32.gmra.mrb[0].mxu0 %v1111
      %v1346 = vpop.f32.mrb[0].mxu0
      %v1347 = vadd.f32 0.0, %v1346
      %v1348 = vpop.f32.mrb[0].mxu0
      %1349 = vmatprep.mubr.f32.mxu0 %v1128
      %1350 = vmatmul.mubr.f32.gmra.mrb[0].mxu0 %v1112
      %v1351 = vpop.f32.mrb[0].mxu0
      %v1352 = vadd.f32 0.0, %v1351
      %v1353 = vpop.f32.mrb[0].mxu0
      %1354 = vmatprep.mubr.f32.mxu0 %v1129
      %1355 = vmatmul.mubr.f32.gmra.mrb[0].mxu0 %v1113
      %v1356 = vpop.f32.mrb[0].mxu0
      %v1357 = vadd.f32 0.0, %v1356
      %v1358 = vpop.f32.mrb[0].mxu0
      %1359 = vmatprep.mubr.f32.mxu0 %v1130
      %1360 = vmatmul.mubr.f32.gmra.mrb[0].mxu0 %v1114
      %v1361 = vpop.f32.mrb[0].mxu0
      %v1362 = vadd.f32 0.0, %v1361
      %v1363 = vpop.f32.mrb[0].mxu0
      %1364 = vmatprep.mubr.f32.mxu0 %v1131
      %1365 = vmatmul.mubr.f32.gmra.mrb[0].mxu0 %v1115
      %v1366 = vpop.f32.mrb[0].mxu0
      %v1367 = vadd.f32 0.0, %v1366
      %v1368 = vpop.f32.mrb[0].mxu0
      %1369 = vmatprep.mubr.f32.mxu0 %v1132
      %1370 = vmatmul.mubr.f32.gmra.mrb[0].mxu0 %v1116
      %v1371 = vpop.f32.mrb[0].mxu0
      %v1372 = vadd.f32 0.0, %v1371
      %v1373 = vpop.f32.mrb[0].mxu0
      %1374 = vmatprep.mubr.f32.mxu0 %v1133
      %1375 = vmatmul.mubr.f32.gmra.mrb[0].mxu0 %v1117
      %v1376 = vpop.f32.mrb[0].mxu0
      %v1377 = vadd.f32 0.0, %v1376
      %v1378 = vpop.f32.mrb[0].mxu0
      %1379 = vmatprep.mubr.f32.mxu0 %v1134
      %1380 = vmatmul.mubr.f32.gmra.mrb[0].mxu0 %v1118
      %v1381 = vpop.f32.mrb[0].mxu0
      %v1382 = vadd.f32 0.0, %v1381
      %v1383 = vpop.f32.mrb[0].mxu0
      %1384 = vdwg.mxu0
      %1385 = vmatprep.subr.mxu0 0.0
      %1386 = vmatpush1.msra.mxu0 %v1184
      %1387 = vmatprep.subr.mxu0 0.0
      %1388 = vmatpush1.msra.mxu0 %v1185
      %1389 = vmatprep.subr.mxu0 0.0
      %1390 = vmatpush1.msra.mxu0 %v1186
      %1391 = vmatprep.subr.mxu0 0.0
      %1392 = vmatpush1.msra.mxu0 %v1187
      %1393 = vmatprep.subr.mxu0 0.0
      %1394 = vmatpush1.msra.mxu0 %v1188
      %1395 = vmatprep.subr.mxu0 0.0
      %1396 = vmatpush1.msra.mxu0 %v1189
      %1397 = vmatprep.subr.mxu0 0.0
      %1398 = vmatpush1.msra.mxu0 %v1190
      %1399 = vmatprep.subr.mxu0 0.0
      %1400 = vmatpush1.msra.mxu0 %v1191
      %1401 = vmatprep.subr.mxu0 0.0
      %1402 = vmatpush1.msra.mxu0 0.0
      %1403 = vmatprep.subr.mxu0 0.0
      %1404 = vmatpush1.msra.mxu0 0.0
      %1405 = vmatprep.subr.mxu0 0.0
      %1406 = vmatpush1.msra.mxu0 0.0
      %1407 = vmatprep.subr.mxu0 0.0
      %1408 = vmatpush1.msra.mxu0 0.0
      %1409 = vmatprep.subr.mxu0 0.0
      %1410 = vmatpush1.msra.mxu0 0.0
      %1411 = vmatprep.subr.mxu0 0.0
      %1412 = vmatpush1.msra.mxu0 0.0
      %1413 = vmatprep.subr.mxu0 0.0
      %1414 = vmatpush1.msra.mxu0 0.0
      %1415 = vmatprep.subr.mxu0 0.0
      %1416 = vmatpush1.msra.mxu0 0.0
      %1417 = vmatprep.subr.mxu0 0.0
      %1418 = vmatpush1.msra.mxu0 0.0
      %1419 = vmatprep.subr.mxu0 0.0
      %1420 = vmatpush1.msra.mxu0 0.0
      %1421 = vmatprep.subr.mxu0 0.0
      %1422 = vmatpush1.msra.mxu0 0.0
      %1423 = vmatprep.subr.mxu0 0.0
      %1424 = vmatpush1.msra.mxu0 0.0
      %1425 = vmatprep.subr.mxu0 0.0
      %1426 = vmatpush1.msra.mxu0 0.0
      %1427 = vmatprep.subr.mxu0 0.0
      %1428 = vmatpush1.msra.mxu0 0.0
      %1429 = vmatprep.subr.mxu0 0.0
      %1430 = vmatpush1.msra.mxu0 0.0
      %1431 = vmatprep.subr.mxu0 0.0
      %1432 = vmatpush1.msra.mxu0 0.0
      %1433 = vmatprep.subr.mxu0 0.0
      %1434 = vmatpush1.msra.mxu0 0.0
      %1435 = vmatprep.subr.mxu0 0.0
      %1436 = vmatpush1.msra.mxu0 0.0
      %1437 = vmatprep.subr.mxu0 0.0
      %1438 = vmatpush1.msra.mxu0 0.0
      %1439 = vmatprep.subr.mxu0 0.0
      %1440 = vmatpush1.msra.mxu0 0.0
      %1441 = vmatprep.subr.mxu0 0.0
      %1442 = vmatpush1.msra.mxu0 0.0
      %1443 = vmatprep.subr.mxu0 0.0
      %1444 = vmatpush1.msra.mxu0 0.0
      %1445 = vmatprep.subr.mxu0 0.0
      %1446 = vmatpush1.msra.mxu0 0.0
      %1447 = vmatprep.subr.mxu0 0.0
      %1448 = vmatpush1.msra.mxu0 0.0
      %1449 = vmatprep.mubr.f32.mxu0 0.0
      %1450 = vmatmul.mubr.f32.gmra.mrb[0].mxu0 %v1193
      %v1451 = vpop.f32.mrb[0].mxu0
      %v1452 = vadd.f32 %v1307, %v1451
      %v1453 = vpop.f32.mrb[0].mxu0
      %1454 = vmatprep.mubr.f32.mxu0 0.0
      %1455 = vmatmul.mubr.f32.gmra.mrb[0].mxu0 %v1196
      %v1456 = vpop.f32.mrb[0].mxu0
      %v1457 = vadd.f32 %v1312, %v1456
      %v1458 = vpop.f32.mrb[0].mxu0
      %1459 = vmatprep.mubr.f32.mxu0 0.0
      %1460 = vmatmul.mubr.f32.gmra.mrb[0].mxu0 %v1199
      %v1461 = vpop.f32.mrb[0].mxu0
      %v1462 = vadd.f32 %v1317, %v1461
      %v1463 = vpop.f32.mrb[0].mxu0
      %1464 = vmatprep.mubr.f32.mxu0 0.0
      %1465 = vmatmul.mubr.f32.gmra.mrb[0].mxu0 %v1202
      %v1466 = vpop.f32.mrb[0].mxu0
      %v1467 = vadd.f32 %v1322, %v1466
      %v1468 = vpop.f32.mrb[0].mxu0
      %1469 = vmatprep.mubr.f32.mxu0 0.0
      %1470 = vmatmul.mubr.f32.gmra.mrb[0].mxu0 %v1205
      %v1471 = vpop.f32.mrb[0].mxu0
      %v1472 = vadd.f32 %v1327, %v1471
      %v1473 = vpop.f32.mrb[0].mxu0
      %1474 = vmatprep.mubr.f32.mxu0 0.0
      %1475 = vmatmul.mubr.f32.gmra.mrb[0].mxu0 %v1208
      %v1476 = vpop.f32.mrb[0].mxu0
      %v1477 = vadd.f32 %v1332, %v1476
      %v1478 = vpop.f32.mrb[0].mxu0
      %1479 = vmatprep.mubr.f32.mxu0 0.0
      %1480 = vmatmul.mubr.f32.gmra.mrb[0].mxu0 %v1211
      %v1481 = vpop.f32.mrb[0].mxu0
      %v1482 = vadd.f32 %v1337, %v1481
      %v1483 = vpop.f32.mrb[0].mxu0
      %1484 = vmatprep.mubr.f32.mxu0 0.0
      %1485 = vmatmul.mubr.f32.gmra.mrb[0].mxu0 %v1214
      %v1486 = vpop.f32.mrb[0].mxu0
      %v1487 = vadd.f32 %v1342, %v1486
      %v1488 = vpop.f32.mrb[0].mxu0
      %1489 = vmatprep.mubr.f32.mxu0 0.0
      %1490 = vmatmul.mubr.f32.gmra.mrb[0].mxu0 %v1217
      %v1491 = vpop.f32.mrb[0].mxu0
      %v1492 = vadd.f32 %v1347, %v1491
      %v1493 = vpop.f32.mrb[0].mxu0
      %1494 = vmatprep.mubr.f32.mxu0 0.0
      %1495 = vmatmul.mubr.f32.gmra.mrb[0].mxu0 %v1220
      %v1496 = vpop.f32.mrb[0].mxu0
      %v1497 = vadd.f32 %v1352, %v1496
      %v1498 = vpop.f32.mrb[0].mxu0
      %1499 = vmatprep.mubr.f32.mxu0 0.0
      %1500 = vmatmul.mubr.f32.gmra.mrb[0].mxu0 %v1223
      %v1501 = vpop.f32.mrb[0].mxu0
      %v1502 = vadd.f32 %v1357, %v1501
      %v1503 = vpop.f32.mrb[0].mxu0
      %1504 = vmatprep.mubr.f32.mxu0 0.0
      %1505 = vmatmul.mubr.f32.gmra.mrb[0].mxu0 %v1226
      %v1506 = vpop.f32.mrb[0].mxu0
      %v1507 = vadd.f32 %v1362, %v1506
      %v1508 = vpop.f32.mrb[0].mxu0
      %1509 = vmatprep.mubr.f32.mxu0 0.0
      %1510 = vmatmul.mubr.f32.gmra.mrb[0].mxu0 %v1229
      %v1511 = vpop.f32.mrb[0].mxu0
      %v1512 = vadd.f32 %v1367, %v1511
      %v1513 = vpop.f32.mrb[0].mxu0
      %1514 = vmatprep.mubr.f32.mxu0 0.0
      %1515 = vmatmul.mubr.f32.gmra.mrb[0].mxu0 %v1232
      %v1516 = vpop.f32.mrb[0].mxu0
      %v1517 = vadd.f32 %v1372, %v1516
      %v1518 = vpop.f32.mrb[0].mxu0
      %1519 = vmatprep.mubr.f32.mxu0 0.0
      %1520 = vmatmul.mubr.f32.gmra.mrb[0].mxu0 %v1235
      %v1521 = vpop.f32.mrb[0].mxu0
      %v1522 = vadd.f32 %v1377, %v1521
      %v1523 = vpop.f32.mrb[0].mxu0
      %1524 = vmatprep.mubr.f32.mxu0 0.0
      %1525 = vmatmul.mubr.f32.gmra.mrb[0].mxu0 %v1238
      %v1526 = vpop.f32.mrb[0].mxu0
      %v1527 = vadd.f32 %v1382, %v1526
      %v1528 = vpop.f32.mrb[0].mxu0
      %1529 = vdwg.mxu0
      %v1530 = vadd.f32 %v1135, %v1452
      %v1531 = vadd.f32 %v1136, %v1457
      %v1532 = vadd.f32 %v1137, %v1462
      %v1533 = vadd.f32 %v1138, %v1467
      %v1534 = vadd.f32 %v1139, %v1472
      %v1535 = vadd.f32 %v1140, %v1477
      %v1536 = vadd.f32 %v1141, %v1482
      %v1537 = vadd.f32 %v1142, %v1487
      %v1538 = vadd.f32 %v1143, %v1492
      %v1539 = vadd.f32 %v1144, %v1497
      %v1540 = vadd.f32 %v1145, %v1502
      %v1541 = vadd.f32 %v1146, %v1507
      %v1542 = vadd.f32 %v1147, %v1512
      %v1543 = vadd.f32 %v1148, %v1517
      %v1544 = vadd.f32 %v1149, %v1522
      %v1545 = vadd.f32 %v1150, %v1527
      %1546 = vst.msk [vmem:[#allocation2] sm:$0xff] %vm210, %v1530
      %1547 = vst.msk [vmem:[#allocation2 + $0x8] sm:$0xff] %vm210, %v1531
      %1548 = vst.msk [vmem:[#allocation2 + $0x10] sm:$0xff] %vm210, %v1532
      %1549 = vst.msk [vmem:[#allocation2 + $0x18] sm:$0xff] %vm210, %v1533
      %1550 = vst.msk [vmem:[#allocation2 + $0x20] sm:$0xff] %vm210, %v1534
      %1551 = vst.msk [vmem:[#allocation2 + $0x28] sm:$0xff] %vm210, %v1535
      %1552 = vst.msk [vmem:[#allocation2 + $0x30] sm:$0xff] %vm210, %v1536
      %1553 = vst.msk [vmem:[#allocation2 + $0x38] sm:$0xff] %vm210, %v1537
      %1554 = vst.msk [vmem:[#allocation2 + $0x40] sm:$0xff] %vm210, %v1538
      %1555 = vst.msk [vmem:[#allocation2 + $0x48] sm:$0xff] %vm210, %v1539
      %1556 = vst.msk [vmem:[#allocation2 + $0x50] sm:$0xff] %vm210, %v1540
      %1557 = vst.msk [vmem:[#allocation2 + $0x58] sm:$0xff] %vm210, %v1541
      %1558 = vst.msk [vmem:[#allocation2 + $0x60] sm:$0xff] %vm210, %v1542
      %1559 = vst.msk [vmem:[#allocation2 + $0x68] sm:$0xff] %vm210, %v1543
      %1560 = vst.msk [vmem:[#allocation2 + $0x70] sm:$0xff] %vm210, %v1544
      %1561 = vst.msk [vmem:[#allocation2 + $0x78] sm:$0xff] %vm210, %v1545
      %s1562 = scalar_lea.vmem %s198, 48
      %v1563 = vld [vmem:[%s1562] sm:$0xff]
      %v1564 = vld [vmem:[%s1562 + $0x8] sm:$0xff]
      %v1565 = vld [vmem:[%s1562 + $0x18] sm:$0xff]
      %v1566 = vld [vmem:[%s1562 + $0x20] sm:$0xff]
      %v1567 = vld [vmem:[%s1562 + $0x30] sm:$0xff]
      %v1568 = vld [vmem:[%s1562 + $0x38] sm:$0xff]
      %v1569 = vld [vmem:[%s1562 + $0x48] sm:$0xff]
      %v1570 = vld [vmem:[%s1562 + $0x50] sm:$0xff]
      %v1571 = vld [vmem:[%s1562 + $0x60] sm:$0xff]
      %v1572 = vld [vmem:[%s1562 + $0x68] sm:$0xff]
      %v1573 = vld [vmem:[%s1562 + $0x78] sm:$0xff]
      %v1574 = vld [vmem:[%s1562 + $0x80] sm:$0xff]
      %v1575 = vld [vmem:[%s1562 + $0x90] sm:$0xff]
      %v1576 = vld [vmem:[%s1562 + $0x98] sm:$0xff]
      %v1577 = vld [vmem:[%s1562 + $0xa8] sm:$0xff]
      %v1578 = vld [vmem:[%s1562 + $0xb0] sm:$0xff]
      %v1579 = vld [vmem:[%s1562 + $0x1] sm:$0xff]
      %v1580 = vld [vmem:[%s1562 + $0x9] sm:$0xff]
      %v1581 = vld [vmem:[%s1562 + $0x19] sm:$0xff]
      %v1582 = vld [vmem:[%s1562 + $0x21] sm:$0xff]
      %v1583 = vld [vmem:[%s1562 + $0x31] sm:$0xff]
      %v1584 = vld [vmem:[%s1562 + $0x39] sm:$0xff]
      %v1585 = vld [vmem:[%s1562 + $0x49] sm:$0xff]
      %v1586 = vld [vmem:[%s1562 + $0x51] sm:$0xff]
      %v1587 = vld [vmem:[%s1562 + $0x61] sm:$0xff]
      %v1588 = vld [vmem:[%s1562 + $0x69] sm:$0xff]
      %v1589 = vld [vmem:[%s1562 + $0x79] sm:$0xff]
      %v1590 = vld [vmem:[%s1562 + $0x81] sm:$0xff]
      %v1591 = vld [vmem:[%s1562 + $0x91] sm:$0xff]
      %v1592 = vld [vmem:[%s1562 + $0x99] sm:$0xff]
      %v1593 = vld [vmem:[%s1562 + $0xa9] sm:$0xff]
      %v1594 = vld [vmem:[%s1562 + $0xb1] sm:$0xff]
      %v1595 = vld [vmem:[%s1562 + $0x2] sm:$0xff]
      %v1596 = vld [vmem:[%s1562 + $0xa] sm:$0xff]
      %v1597 = vld [vmem:[%s1562 + $0x1a] sm:$0xff]
      %v1598 = vld [vmem:[%s1562 + $0x22] sm:$0xff]
      %v1599 = vld [vmem:[%s1562 + $0x32] sm:$0xff]
      %v1600 = vld [vmem:[%s1562 + $0x3a] sm:$0xff]
      %v1601 = vld [vmem:[%s1562 + $0x4a] sm:$0xff]
      %v1602 = vld [vmem:[%s1562 + $0x52] sm:$0xff]
      %v1603 = vld [vmem:[%s1562 + $0x62] sm:$0xff]
      %v1604 = vld [vmem:[%s1562 + $0x6a] sm:$0xff]
      %v1605 = vld [vmem:[%s1562 + $0x7a] sm:$0xff]
      %v1606 = vld [vmem:[%s1562 + $0x82] sm:$0xff]
      %v1607 = vld [vmem:[%s1562 + $0x92] sm:$0xff]
      %v1608 = vld [vmem:[%s1562 + $0x9a] sm:$0xff]
      %v1609 = vld [vmem:[%s1562 + $0xaa] sm:$0xff]
      %v1610 = vld [vmem:[%s1562 + $0xb2] sm:$0xff]
      %v1611 = vld [vmem:[%s1562 + $0x3] sm:$0xff]
      %v1612 = vld [vmem:[%s1562 + $0xb] sm:$0xff]
      %v1613 = vld [vmem:[%s1562 + $0x1b] sm:$0xff]
      %v1614 = vld [vmem:[%s1562 + $0x23] sm:$0xff]
      %v1615 = vld [vmem:[%s1562 + $0x33] sm:$0xff]
      %v1616 = vld [vmem:[%s1562 + $0x3b] sm:$0xff]
      %v1617 = vld [vmem:[%s1562 + $0x4b] sm:$0xff]
      %v1618 = vld [vmem:[%s1562 + $0x53] sm:$0xff]
      %v1619 = vld [vmem:[%s1562 + $0x63] sm:$0xff]
      %v1620 = vld [vmem:[%s1562 + $0x6b] sm:$0xff]
      %v1621 = vld [vmem:[%s1562 + $0x7b] sm:$0xff]
      %v1622 = vld [vmem:[%s1562 + $0x83] sm:$0xff]
      %v1623 = vld [vmem:[%s1562 + $0x93] sm:$0xff]
      %v1624 = vld [vmem:[%s1562 + $0x9b] sm:$0xff]
      %v1625 = vld [vmem:[%s1562 + $0xab] sm:$0xff]
      %v1626 = vld [vmem:[%s1562 + $0xb3] sm:$0xff]
      %v1627 = vld [vmem:[%s1562 + $0x4] sm:$0xff]
      %v1628 = vld [vmem:[%s1562 + $0xc] sm:$0xff]
      %v1629 = vld [vmem:[%s1562 + $0x1c] sm:$0xff]
      %v1630 = vld [vmem:[%s1562 + $0x24] sm:$0xff]
      %v1631 = vld [vmem:[%s1562 + $0x34] sm:$0xff]
      %v1632 = vld [vmem:[%s1562 + $0x3c] sm:$0xff]
      %v1633 = vld [vmem:[%s1562 + $0x4c] sm:$0xff]
      %v1634 = vld [vmem:[%s1562 + $0x54] sm:$0xff]
      %v1635 = vld [vmem:[%s1562 + $0x64] sm:$0xff]
      %v1636 = vld [vmem:[%s1562 + $0x6c] sm:$0xff]
      %v1637 = vld [vmem:[%s1562 + $0x7c] sm:$0xff]
      %v1638 = vld [vmem:[%s1562 + $0x84] sm:$0xff]
      %v1639 = vld [vmem:[%s1562 + $0x94] sm:$0xff]
      %v1640 = vld [vmem:[%s1562 + $0x9c] sm:$0xff]
      %v1641 = vld [vmem:[%s1562 + $0xac] sm:$0xff]
      %v1642 = vld [vmem:[%s1562 + $0xb4] sm:$0xff]
      %1659 = vrot.lane.b32.xlu0 %v1579, 64
      %v1660 = vpop.permute.xlu0 %1659
      %1661 = vrot.lane.b32.xlu0 %v1580, 64
      %v1662 = vpop.permute.xlu0 %1661
      %1663 = vrot.lane.b32.xlu0 %v1581, 64
      %v1664 = vpop.permute.xlu0 %1663
      %1665 = vrot.lane.b32.xlu0 %v1582, 64
      %v1666 = vpop.permute.xlu0 %1665
      %1667 = vrot.lane.b32.xlu0 %v1583, 64
      %v1668 = vpop.permute.xlu0 %1667
      %1669 = vrot.lane.b32.xlu0 %v1584, 64
      %v1670 = vpop.permute.xlu0 %1669
      %1671 = vrot.lane.b32.xlu0 %v1585, 64
      %v1672 = vpop.permute.xlu0 %1671
      %1673 = vrot.lane.b32.xlu0 %v1586, 64
      %v1674 = vpop.permute.xlu0 %1673
      %1675 = vrot.lane.b32.xlu0 %v1587, 64
      %v1676 = vpop.permute.xlu0 %1675
      %1677 = vrot.lane.b32.xlu0 %v1588, 64
      %v1678 = vpop.permute.xlu0 %1677
      %1679 = vrot.lane.b32.xlu0 %v1589, 64
      %v1680 = vpop.permute.xlu0 %1679
      %1681 = vrot.lane.b32.xlu0 %v1590, 64
      %v1682 = vpop.permute.xlu0 %1681
      %1683 = vrot.lane.b32.xlu0 %v1591, 64
      %v1684 = vpop.permute.xlu0 %1683
      %1685 = vrot.lane.b32.xlu0 %v1592, 64
      %v1686 = vpop.permute.xlu0 %1685
      %1687 = vrot.lane.b32.xlu0 %v1593, 64
      %v1688 = vpop.permute.xlu0 %1687
      %1689 = vrot.lane.b32.xlu0 %v1594, 64
      %v1690 = vpop.permute.xlu0 %1689
      %1723 = vrot.lane.b32.xlu0 %v1611, 64
      %v1724 = vpop.permute.xlu0 %1723
      %1725 = vrot.lane.b32.xlu0 %v1612, 64
      %v1726 = vpop.permute.xlu0 %1725
      %1727 = vrot.lane.b32.xlu0 %v1613, 64
      %v1728 = vpop.permute.xlu0 %1727
      %1729 = vrot.lane.b32.xlu0 %v1614, 64
      %v1730 = vpop.permute.xlu0 %1729
      %1731 = vrot.lane.b32.xlu0 %v1615, 64
      %v1732 = vpop.permute.xlu0 %1731
      %1733 = vrot.lane.b32.xlu0 %v1616, 64
      %v1734 = vpop.permute.xlu0 %1733
      %1735 = vrot.lane.b32.xlu0 %v1617, 64
      %v1736 = vpop.permute.xlu0 %1735
      %1737 = vrot.lane.b32.xlu0 %v1618, 64
      %v1738 = vpop.permute.xlu0 %1737
      %1739 = vrot.lane.b32.xlu0 %v1619, 64
      %v1740 = vpop.permute.xlu0 %1739
      %1741 = vrot.lane.b32.xlu0 %v1620, 64
      %v1742 = vpop.permute.xlu0 %1741
      %1743 = vrot.lane.b32.xlu0 %v1621, 64
      %v1744 = vpop.permute.xlu0 %1743
      %1745 = vrot.lane.b32.xlu0 %v1622, 64
      %v1746 = vpop.permute.xlu0 %1745
      %1747 = vrot.lane.b32.xlu0 %v1623, 64
      %v1748 = vpop.permute.xlu0 %1747
      %1749 = vrot.lane.b32.xlu0 %v1624, 64
      %v1750 = vpop.permute.xlu0 %1749
      %1751 = vrot.lane.b32.xlu0 %v1625, 64
      %v1752 = vpop.permute.xlu0 %1751
      %1753 = vrot.lane.b32.xlu0 %v1626, 64
      %v1754 = vpop.permute.xlu0 %1753
      %v1771 = vsel %vm435, %v1563, %v1660
      %v1772 = vsel %vm435, %v1564, %v1662
      %v1773 = vsel %vm435, %v1565, %v1664
      %v1774 = vsel %vm435, %v1566, %v1666
      %v1775 = vsel %vm435, %v1567, %v1668
      %v1776 = vsel %vm435, %v1568, %v1670
      %v1777 = vsel %vm435, %v1569, %v1672
      %v1778 = vsel %vm435, %v1570, %v1674
      %v1779 = vsel %vm435, %v1571, %v1676
      %v1780 = vsel %vm435, %v1572, %v1678
      %v1781 = vsel %vm435, %v1573, %v1680
      %v1782 = vsel %vm435, %v1574, %v1682
      %v1783 = vsel %vm435, %v1575, %v1684
      %v1784 = vsel %vm435, %v1576, %v1686
      %v1785 = vsel %vm435, %v1577, %v1688
      %v1786 = vsel %vm435, %v1578, %v1690
      %v1787 = vsel %vm435, %v1595, %v1724
      %v1788 = vsel %vm435, %v1596, %v1726
      %v1789 = vsel %vm435, %v1597, %v1728
      %v1790 = vsel %vm435, %v1598, %v1730
      %v1791 = vsel %vm435, %v1599, %v1732
      %v1792 = vsel %vm435, %v1600, %v1734
      %v1793 = vsel %vm435, %v1601, %v1736
      %v1794 = vsel %vm435, %v1602, %v1738
      %v1795 = vsel %vm435, %v1603, %v1740
      %v1796 = vsel %vm435, %v1604, %v1742
      %v1797 = vsel %vm435, %v1605, %v1744
      %v1798 = vsel %vm435, %v1606, %v1746
      %v1799 = vsel %vm435, %v1607, %v1748
      %v1800 = vsel %vm435, %v1608, %v1750
      %v1801 = vsel %vm435, %v1609, %v1752
      %v1802 = vsel %vm435, %v1610, %v1754
      %v1803 = vld [vmem:[#allocation2] sm:$0xff]
      %v1804 = vld [vmem:[#allocation2 + $0x8] sm:$0xff]
      %v1805 = vld [vmem:[#allocation2 + $0x10] sm:$0xff]
      %v1806 = vld [vmem:[#allocation2 + $0x18] sm:$0xff]
      %v1807 = vld [vmem:[#allocation2 + $0x20] sm:$0xff]
      %v1808 = vld [vmem:[#allocation2 + $0x28] sm:$0xff]
      %v1809 = vld [vmem:[#allocation2 + $0x30] sm:$0xff]
      %v1810 = vld [vmem:[#allocation2 + $0x38] sm:$0xff]
      %v1811 = vld [vmem:[#allocation2 + $0x40] sm:$0xff]
      %v1812 = vld [vmem:[#allocation2 + $0x48] sm:$0xff]
      %v1813 = vld [vmem:[#allocation2 + $0x50] sm:$0xff]
      %v1814 = vld [vmem:[#allocation2 + $0x58] sm:$0xff]
      %v1815 = vld [vmem:[#allocation2 + $0x60] sm:$0xff]
      %v1816 = vld [vmem:[#allocation2 + $0x68] sm:$0xff]
      %v1817 = vld [vmem:[#allocation2 + $0x70] sm:$0xff]
      %v1818 = vld [vmem:[#allocation2 + $0x78] sm:$0xff]
      %s1819 = scalar_lea.vmem %s1, 640
      %v1820 = vld [vmem:[%s1819] sm:$0xff]
      %v1821 = vld [vmem:[%s1819 + $0x8] sm:$0xff]
      %v1822 = vld [vmem:[%s1819 + $0x10] sm:$0xff]
      %v1823 = vld [vmem:[%s1819 + $0x18] sm:$0xff]
      %v1824 = vld [vmem:[%s1819 + $0x20] sm:$0xff]
      %v1825 = vld [vmem:[%s1819 + $0x28] sm:$0xff]
      %v1826 = vld [vmem:[%s1819 + $0x30] sm:$0xff]
      %v1827 = vld [vmem:[%s1819 + $0x38] sm:$0xff]
      %v1828 = vld [vmem:[%s1819 + $0x40] sm:$0xff]
      %v1829 = vld [vmem:[%s1819 + $0x48] sm:$0xff]
      %v1830 = vld [vmem:[%s1819 + $0x50] sm:$0xff]
      %v1831 = vld [vmem:[%s1819 + $0x58] sm:$0xff]
      %v1832 = vld [vmem:[%s1819 + $0x60] sm:$0xff]
      %v1833 = vld [vmem:[%s1819 + $0x68] sm:$0xff]
      %v1834 = vld [vmem:[%s1819 + $0x70] sm:$0xff]
      %v1835 = vld [vmem:[%s1819 + $0x78] sm:$0xff]
      %v1836 = vld [vmem:[%s1819 + $0x80] sm:$0xff]
      %v1837 = vld [vmem:[%s1819 + $0x88] sm:$0xff]
      %v1838 = vld [vmem:[%s1819 + $0x90] sm:$0xff]
      %v1839 = vld [vmem:[%s1819 + $0x98] sm:$0xff]
      %v1840 = vld [vmem:[%s1819 + $0xa0] sm:$0xff]
      %v1841 = vld [vmem:[%s1819 + $0xa8] sm:$0xff]
      %v1842 = vld [vmem:[%s1819 + $0xb0] sm:$0xff]
      %v1843 = vld [vmem:[%s1819 + $0xb8] sm:$0xff]
      %v1844 = vld [vmem:[%s1819 + $0xc0] sm:$0xff]
      %v1845 = vld [vmem:[%s1819 + $0xc8] sm:$0xff]
      %v1846 = vld [vmem:[%s1819 + $0xd0] sm:$0xff]
      %v1847 = vld [vmem:[%s1819 + $0xd8] sm:$0xff]
      %v1848 = vld [vmem:[%s1819 + $0xe0] sm:$0xff]
      %v1849 = vld [vmem:[%s1819 + $0xe8] sm:$0xff]
      %v1850 = vld [vmem:[%s1819 + $0xf0] sm:$0xff]
      %v1851 = vld [vmem:[%s1819 + $0xf8] sm:$0xff]
      %v1852 = vld [vmem:[%s1819 + $0x100] sm:$0xff]
      %v1853 = vld [vmem:[%s1819 + $0x108] sm:$0xff]
      %v1854 = vld [vmem:[%s1819 + $0x110] sm:$0xff]
      %v1855 = vld [vmem:[%s1819 + $0x118] sm:$0xff]
      %v1856 = vld [vmem:[%s1819 + $0x120] sm:$0xff]
      %v1857 = vld [vmem:[%s1819 + $0x128] sm:$0xff]
      %v1858 = vld [vmem:[%s1819 + $0x130] sm:$0xff]
      %v1859 = vld [vmem:[%s1819 + $0x138] sm:$0xff]
      %v1861 = vsel %vm435, %v1627, 0
      %v1864 = vsel %vm435, %v1628, 0
      %v1867 = vsel %vm435, %v1629, 0
      %v1870 = vsel %vm435, %v1630, 0
      %v1873 = vsel %vm435, %v1631, 0
      %v1876 = vsel %vm435, %v1632, 0
      %v1879 = vsel %vm435, %v1633, 0
      %v1882 = vsel %vm435, %v1634, 0
      %v1885 = vsel %vm435, %v1635, 0
      %v1888 = vsel %vm435, %v1636, 0
      %v1891 = vsel %vm435, %v1637, 0
      %v1894 = vsel %vm435, %v1638, 0
      %v1897 = vsel %vm435, %v1639, 0
      %v1900 = vsel %vm435, %v1640, 0
      %v1903 = vsel %vm435, %v1641, 0
      %v1906 = vsel %vm435, %v1642, 0
      %1908 = vmatprep.subr.mxu0 0.0
      %1909 = vmatpush1.msra.mxu0 %v1820
      %1910 = vmatprep.subr.mxu0 0.0
      %1911 = vmatpush1.msra.mxu0 %v1821
      %1912 = vmatprep.subr.mxu0 0.0
      %1913 = vmatpush1.msra.mxu0 %v1822
      %1914 = vmatprep.subr.mxu0 0.0
      %1915 = vmatpush1.msra.mxu0 %v1823
      %1916 = vmatprep.subr.mxu0 0.0
      %1917 = vmatpush1.msra.mxu0 %v1824
      %1918 = vmatprep.subr.mxu0 0.0
      %1919 = vmatpush1.msra.mxu0 %v1825
      %1920 = vmatprep.subr.mxu0 0.0
      %1921 = vmatpush1.msra.mxu0 %v1826
      %1922 = vmatprep.subr.mxu0 0.0
      %1923 = vmatpush1.msra.mxu0 %v1827
      %1924 = vmatprep.subr.mxu0 0.0
      %1925 = vmatpush1.msra.mxu0 %v1828
      %1926 = vmatprep.subr.mxu0 0.0
      %1927 = vmatpush1.msra.mxu0 %v1829
      %1928 = vmatprep.subr.mxu0 0.0
      %1929 = vmatpush1.msra.mxu0 %v1830
      %1930 = vmatprep.subr.mxu0 0.0
      %1931 = vmatpush1.msra.mxu0 %v1831
      %1932 = vmatprep.subr.mxu0 0.0
      %1933 = vmatpush1.msra.mxu0 %v1832
      %1934 = vmatprep.subr.mxu0 0.0
      %1935 = vmatpush1.msra.mxu0 %v1833
      %1936 = vmatprep.subr.mxu0 0.0
      %1937 = vmatpush1.msra.mxu0 %v1834
      %1938 = vmatprep.subr.mxu0 0.0
      %1939 = vmatpush1.msra.mxu0 %v1835
      %1940 = vmatprep.subr.mxu0 0.0
      %1941 = vmatpush1.msra.mxu0 %v1836
      %1942 = vmatprep.subr.mxu0 0.0
      %1943 = vmatpush1.msra.mxu0 %v1837
      %1944 = vmatprep.subr.mxu0 0.0
      %1945 = vmatpush1.msra.mxu0 %v1838
      %1946 = vmatprep.subr.mxu0 0.0
      %1947 = vmatpush1.msra.mxu0 %v1839
      %1948 = vmatprep.subr.mxu0 0.0
      %1949 = vmatpush1.msra.mxu0 %v1840
      %1950 = vmatprep.subr.mxu0 0.0
      %1951 = vmatpush1.msra.mxu0 %v1841
      %1952 = vmatprep.subr.mxu0 0.0
      %1953 = vmatpush1.msra.mxu0 %v1842
      %1954 = vmatprep.subr.mxu0 0.0
      %1955 = vmatpush1.msra.mxu0 %v1843
      %1956 = vmatprep.subr.mxu0 0.0
      %1957 = vmatpush1.msra.mxu0 %v1844
      %1958 = vmatprep.subr.mxu0 0.0
      %1959 = vmatpush1.msra.mxu0 %v1845
      %1960 = vmatprep.subr.mxu0 0.0
      %1961 = vmatpush1.msra.mxu0 %v1846
      %1962 = vmatprep.subr.mxu0 0.0
      %1963 = vmatpush1.msra.mxu0 %v1847
      %1964 = vmatprep.subr.mxu0 0.0
      %1965 = vmatpush1.msra.mxu0 %v1848
      %1966 = vmatprep.subr.mxu0 0.0
      %1967 = vmatpush1.msra.mxu0 %v1849
      %1968 = vmatprep.subr.mxu0 0.0
      %1969 = vmatpush1.msra.mxu0 %v1850
      %1970 = vmatprep.subr.mxu0 0.0
      %1971 = vmatpush1.msra.mxu0 %v1851
      %1972 = vmatprep.mubr.f32.mxu0 %v1787
      %1973 = vmatmul.mubr.f32.gmra.mrb[0].mxu0 %v1771
      %v1974 = vpop.f32.mrb[0].mxu0
      %v1975 = vadd.f32 0.0, %v1974
      %v1976 = vpop.f32.mrb[0].mxu0
      %1977 = vmatprep.mubr.f32.mxu0 %v1788
      %1978 = vmatmul.mubr.f32.gmra.mrb[0].mxu0 %v1772
      %v1979 = vpop.f32.mrb[0].mxu0
      %v1980 = vadd.f32 0.0, %v1979
      %v1981 = vpop.f32.mrb[0].mxu0
      %1982 = vmatprep.mubr.f32.mxu0 %v1789
      %1983 = vmatmul.mubr.f32.gmra.mrb[0].mxu0 %v1773
      %v1984 = vpop.f32.mrb[0].mxu0
      %v1985 = vadd.f32 0.0, %v1984
      %v1986 = vpop.f32.mrb[0].mxu0
      %1987 = vmatprep.mubr.f32.mxu0 %v1790
      %1988 = vmatmul.mubr.f32.gmra.mrb[0].mxu0 %v1774
      %v1989 = vpop.f32.mrb[0].mxu0
      %v1990 = vadd.f32 0.0, %v1989
      %v1991 = vpop.f32.mrb[0].mxu0
      %1992 = vmatprep.mubr.f32.mxu0 %v1791
      %1993 = vmatmul.mubr.f32.gmra.mrb[0].mxu0 %v1775
      %v1994 = vpop.f32.mrb[0].mxu0
      %v1995 = vadd.f32 0.0, %v1994
      %v1996 = vpop.f32.mrb[0].mxu0
      %1997 = vmatprep.mubr.f32.mxu0 %v1792
      %1998 = vmatmul.mubr.f32.gmra.mrb[0].mxu0 %v1776
      %v1999 = vpop.f32.mrb[0].mxu0
      %v2000 = vadd.f32 0.0, %v1999
      %v2001 = vpop.f32.mrb[0].mxu0
      %2002 = vmatprep.mubr.f32.mxu0 %v1793
      %2003 = vmatmul.mubr.f32.gmra.mrb[0].mxu0 %v1777
      %v2004 = vpop.f32.mrb[0].mxu0
      %v2005 = vadd.f32 0.0, %v2004
      %v2006 = vpop.f32.mrb[0].mxu0
      %2007 = vmatprep.mubr.f32.mxu0 %v1794
      %2008 = vmatmul.mubr.f32.gmra.mrb[0].mxu0 %v1778
      %v2009 = vpop.f32.mrb[0].mxu0
      %v2010 = vadd.f32 0.0, %v2009
      %v2011 = vpop.f32.mrb[0].mxu0
      %2012 = vmatprep.mubr.f32.mxu0 %v1795
      %2013 = vmatmul.mubr.f32.gmra.mrb[0].mxu0 %v1779
      %v2014 = vpop.f32.mrb[0].mxu0
      %v2015 = vadd.f32 0.0, %v2014
      %v2016 = vpop.f32.mrb[0].mxu0
      %2017 = vmatprep.mubr.f32.mxu0 %v1796
      %2018 = vmatmul.mubr.f32.gmra.mrb[0].mxu0 %v1780
      %v2019 = vpop.f32.mrb[0].mxu0
      %v2020 = vadd.f32 0.0, %v2019
      %v2021 = vpop.f32.mrb[0].mxu0
      %2022 = vmatprep.mubr.f32.mxu0 %v1797
      %2023 = vmatmul.mubr.f32.gmra.mrb[0].mxu0 %v1781
      %v2024 = vpop.f32.mrb[0].mxu0
      %v2025 = vadd.f32 0.0, %v2024
      %v2026 = vpop.f32.mrb[0].mxu0
      %2027 = vmatprep.mubr.f32.mxu0 %v1798
      %2028 = vmatmul.mubr.f32.gmra.mrb[0].mxu0 %v1782
      %v2029 = vpop.f32.mrb[0].mxu0
      %v2030 = vadd.f32 0.0, %v2029
      %v2031 = vpop.f32.mrb[0].mxu0
      %2032 = vmatprep.mubr.f32.mxu0 %v1799
      %2033 = vmatmul.mubr.f32.gmra.mrb[0].mxu0 %v1783
      %v2034 = vpop.f32.mrb[0].mxu0
      %v2035 = vadd.f32 0.0, %v2034
      %v2036 = vpop.f32.mrb[0].mxu0
      %2037 = vmatprep.mubr.f32.mxu0 %v1800
      %2038 = vmatmul.mubr.f32.gmra.mrb[0].mxu0 %v1784
      %v2039 = vpop.f32.mrb[0].mxu0
      %v2040 = vadd.f32 0.0, %v2039
      %v2041 = vpop.f32.mrb[0].mxu0
      %2042 = vmatprep.mubr.f32.mxu0 %v1801
      %2043 = vmatmul.mubr.f32.gmra.mrb[0].mxu0 %v1785
      %v2044 = vpop.f32.mrb[0].mxu0
      %v2045 = vadd.f32 0.0, %v2044
      %v2046 = vpop.f32.mrb[0].mxu0
      %2047 = vmatprep.mubr.f32.mxu0 %v1802
      %2048 = vmatmul.mubr.f32.gmra.mrb[0].mxu0 %v1786
      %v2049 = vpop.f32.mrb[0].mxu0
      %v2050 = vadd.f32 0.0, %v2049
      %v2051 = vpop.f32.mrb[0].mxu0
      %2052 = vdwg.mxu0
      %2053 = vmatprep.subr.mxu0 0.0
      %2054 = vmatpush1.msra.mxu0 %v1852
      %2055 = vmatprep.subr.mxu0 0.0
      %2056 = vmatpush1.msra.mxu0 %v1853
      %2057 = vmatprep.subr.mxu0 0.0
      %2058 = vmatpush1.msra.mxu0 %v1854
      %2059 = vmatprep.subr.mxu0 0.0
      %2060 = vmatpush1.msra.mxu0 %v1855
      %2061 = vmatprep.subr.mxu0 0.0
      %2062 = vmatpush1.msra.mxu0 %v1856
      %2063 = vmatprep.subr.mxu0 0.0
      %2064 = vmatpush1.msra.mxu0 %v1857
      %2065 = vmatprep.subr.mxu0 0.0
      %2066 = vmatpush1.msra.mxu0 %v1858
      %2067 = vmatprep.subr.mxu0 0.0
      %2068 = vmatpush1.msra.mxu0 %v1859
      %2069 = vmatprep.subr.mxu0 0.0
      %2070 = vmatpush1.msra.mxu0 0.0
      %2071 = vmatprep.subr.mxu0 0.0
      %2072 = vmatpush1.msra.mxu0 0.0
      %2073 = vmatprep.subr.mxu0 0.0
      %2074 = vmatpush1.msra.mxu0 0.0
      %2075 = vmatprep.subr.mxu0 0.0
      %2076 = vmatpush1.msra.mxu0 0.0
      %2077 = vmatprep.subr.mxu0 0.0
      %2078 = vmatpush1.msra.mxu0 0.0
      %2079 = vmatprep.subr.mxu0 0.0
      %2080 = vmatpush1.msra.mxu0 0.0
      %2081 = vmatprep.subr.mxu0 0.0
      %2082 = vmatpush1.msra.mxu0 0.0
      %2083 = vmatprep.subr.mxu0 0.0
      %2084 = vmatpush1.msra.mxu0 0.0
      %2085 = vmatprep.subr.mxu0 0.0
      %2086 = vmatpush1.msra.mxu0 0.0
      %2087 = vmatprep.subr.mxu0 0.0
      %2088 = vmatpush1.msra.mxu0 0.0
      %2089 = vmatprep.subr.mxu0 0.0
      %2090 = vmatpush1.msra.mxu0 0.0
      %2091 = vmatprep.subr.mxu0 0.0
      %2092 = vmatpush1.msra.mxu0 0.0
      %2093 = vmatprep.subr.mxu0 0.0
      %2094 = vmatpush1.msra.mxu0 0.0
      %2095 = vmatprep.subr.mxu0 0.0
      %2096 = vmatpush1.msra.mxu0 0.0
      %2097 = vmatprep.subr.mxu0 0.0
      %2098 = vmatpush1.msra.mxu0 0.0
      %2099 = vmatprep.subr.mxu0 0.0
      %2100 = vmatpush1.msra.mxu0 0.0
      %2101 = vmatprep.subr.mxu0 0.0
      %2102 = vmatpush1.msra.mxu0 0.0
      %2103 = vmatprep.subr.mxu0 0.0
      %2104 = vmatpush1.msra.mxu0 0.0
      %2105 = vmatprep.subr.mxu0 0.0
      %2106 = vmatpush1.msra.mxu0 0.0
      %2107 = vmatprep.subr.mxu0 0.0
      %2108 = vmatpush1.msra.mxu0 0.0
      %2109 = vmatprep.subr.mxu0 0.0
      %2110 = vmatpush1.msra.mxu0 0.0
      %2111 = vmatprep.subr.mxu0 0.0
      %2112 = vmatpush1.msra.mxu0 0.0
      %2113 = vmatprep.subr.mxu0 0.0
      %2114 = vmatpush1.msra.mxu0 0.0
      %2115 = vmatprep.subr.mxu0 0.0
      %2116 = vmatpush1.msra.mxu0 0.0
      %2117 = vmatprep.mubr.f32.mxu0 0.0
      %2118 = vmatmul.mubr.f32.gmra.mrb[0].mxu0 %v1861
      %v2119 = vpop.f32.mrb[0].mxu0
      %v2120 = vadd.f32 %v1975, %v2119
      %v2121 = vpop.f32.mrb[0].mxu0
      %2122 = vmatprep.mubr.f32.mxu0 0.0
      %2123 = vmatmul.mubr.f32.gmra.mrb[0].mxu0 %v1864
      %v2124 = vpop.f32.mrb[0].mxu0
      %v2125 = vadd.f32 %v1980, %v2124
      %v2126 = vpop.f32.mrb[0].mxu0
      %2127 = vmatprep.mubr.f32.mxu0 0.0
      %2128 = vmatmul.mubr.f32.gmra.mrb[0].mxu0 %v1867
      %v2129 = vpop.f32.mrb[0].mxu0
      %v2130 = vadd.f32 %v1985, %v2129
      %v2131 = vpop.f32.mrb[0].mxu0
      %2132 = vmatprep.mubr.f32.mxu0 0.0
      %2133 = vmatmul.mubr.f32.gmra.mrb[0].mxu0 %v1870
      %v2134 = vpop.f32.mrb[0].mxu0
      %v2135 = vadd.f32 %v1990, %v2134
      %v2136 = vpop.f32.mrb[0].mxu0
      %2137 = vmatprep.mubr.f32.mxu0 0.0
      %2138 = vmatmul.mubr.f32.gmra.mrb[0].mxu0 %v1873
      %v2139 = vpop.f32.mrb[0].mxu0
      %v2140 = vadd.f32 %v1995, %v2139
      %v2141 = vpop.f32.mrb[0].mxu0
      %2142 = vmatprep.mubr.f32.mxu0 0.0
      %2143 = vmatmul.mubr.f32.gmra.mrb[0].mxu0 %v1876
      %v2144 = vpop.f32.mrb[0].mxu0
      %v2145 = vadd.f32 %v2000, %v2144
      %v2146 = vpop.f32.mrb[0].mxu0
      %2147 = vmatprep.mubr.f32.mxu0 0.0
      %2148 = vmatmul.mubr.f32.gmra.mrb[0].mxu0 %v1879
      %v2149 = vpop.f32.mrb[0].mxu0
      %v2150 = vadd.f32 %v2005, %v2149
      %v2151 = vpop.f32.mrb[0].mxu0
      %2152 = vmatprep.mubr.f32.mxu0 0.0
      %2153 = vmatmul.mubr.f32.gmra.mrb[0].mxu0 %v1882
      %v2154 = vpop.f32.mrb[0].mxu0
      %v2155 = vadd.f32 %v2010, %v2154
      %v2156 = vpop.f32.mrb[0].mxu0
      %2157 = vmatprep.mubr.f32.mxu0 0.0
      %2158 = vmatmul.mubr.f32.gmra.mrb[0].mxu0 %v1885
      %v2159 = vpop.f32.mrb[0].mxu0
      %v2160 = vadd.f32 %v2015, %v2159
      %v2161 = vpop.f32.mrb[0].mxu0
      %2162 = vmatprep.mubr.f32.mxu0 0.0
      %2163 = vmatmul.mubr.f32.gmra.mrb[0].mxu0 %v1888
      %v2164 = vpop.f32.mrb[0].mxu0
      %v2165 = vadd.f32 %v2020, %v2164
      %v2166 = vpop.f32.mrb[0].mxu0
      %2167 = vmatprep.mubr.f32.mxu0 0.0
      %2168 = vmatmul.mubr.f32.gmra.mrb[0].mxu0 %v1891
      %v2169 = vpop.f32.mrb[0].mxu0
      %v2170 = vadd.f32 %v2025, %v2169
      %v2171 = vpop.f32.mrb[0].mxu0
      %2172 = vmatprep.mubr.f32.mxu0 0.0
      %2173 = vmatmul.mubr.f32.gmra.mrb[0].mxu0 %v1894
      %v2174 = vpop.f32.mrb[0].mxu0
      %v2175 = vadd.f32 %v2030, %v2174
      %v2176 = vpop.f32.mrb[0].mxu0
      %2177 = vmatprep.mubr.f32.mxu0 0.0
      %2178 = vmatmul.mubr.f32.gmra.mrb[0].mxu0 %v1897
      %v2179 = vpop.f32.mrb[0].mxu0
      %v2180 = vadd.f32 %v2035, %v2179
      %v2181 = vpop.f32.mrb[0].mxu0
      %2182 = vmatprep.mubr.f32.mxu0 0.0
      %2183 = vmatmul.mubr.f32.gmra.mrb[0].mxu0 %v1900
      %v2184 = vpop.f32.mrb[0].mxu0
      %v2185 = vadd.f32 %v2040, %v2184
      %v2186 = vpop.f32.mrb[0].mxu0
      %2187 = vmatprep.mubr.f32.mxu0 0.0
      %2188 = vmatmul.mubr.f32.gmra.mrb[0].mxu0 %v1903
      %v2189 = vpop.f32.mrb[0].mxu0
      %v2190 = vadd.f32 %v2045, %v2189
      %v2191 = vpop.f32.mrb[0].mxu0
      %2192 = vmatprep.mubr.f32.mxu0 0.0
      %2193 = vmatmul.mubr.f32.gmra.mrb[0].mxu0 %v1906
      %v2194 = vpop.f32.mrb[0].mxu0
      %v2195 = vadd.f32 %v2050, %v2194
      %v2196 = vpop.f32.mrb[0].mxu0
      %2197 = vdwg.mxu0
      %v2198 = vadd.f32 %v1803, %v2120
      %v2199 = vadd.f32 %v1804, %v2125
      %v2200 = vadd.f32 %v1805, %v2130
      %v2201 = vadd.f32 %v1806, %v2135
      %v2202 = vadd.f32 %v1807, %v2140
      %v2203 = vadd.f32 %v1808, %v2145
      %v2204 = vadd.f32 %v1809, %v2150
      %v2205 = vadd.f32 %v1810, %v2155
      %v2206 = vadd.f32 %v1811, %v2160
      %v2207 = vadd.f32 %v1812, %v2165
      %v2208 = vadd.f32 %v1813, %v2170
      %v2209 = vadd.f32 %v1814, %v2175
      %v2210 = vadd.f32 %v1815, %v2180
      %v2211 = vadd.f32 %v1816, %v2185
      %v2212 = vadd.f32 %v1817, %v2190
      %v2213 = vadd.f32 %v1818, %v2195
      %2214 = vst.msk [vmem:[#allocation2] sm:$0xff] %vm210, %v2198
      %2215 = vst.msk [vmem:[#allocation2 + $0x8] sm:$0xff] %vm210, %v2199
      %2216 = vst.msk [vmem:[#allocation2 + $0x10] sm:$0xff] %vm210, %v2200
      %2217 = vst.msk [vmem:[#allocation2 + $0x18] sm:$0xff] %vm210, %v2201
      %2218 = vst.msk [vmem:[#allocation2 + $0x20] sm:$0xff] %vm210, %v2202
      %2219 = vst.msk [vmem:[#allocation2 + $0x28] sm:$0xff] %vm210, %v2203
      %2220 = vst.msk [vmem:[#allocation2 + $0x30] sm:$0xff] %vm210, %v2204
      %2221 = vst.msk [vmem:[#allocation2 + $0x38] sm:$0xff] %vm210, %v2205
      %2222 = vst.msk [vmem:[#allocation2 + $0x40] sm:$0xff] %vm210, %v2206
      %2223 = vst.msk [vmem:[#allocation2 + $0x48] sm:$0xff] %vm210, %v2207
      %2224 = vst.msk [vmem:[#allocation2 + $0x50] sm:$0xff] %vm210, %v2208
      %2225 = vst.msk [vmem:[#allocation2 + $0x58] sm:$0xff] %vm210, %v2209
      %2226 = vst.msk [vmem:[#allocation2 + $0x60] sm:$0xff] %vm210, %v2210
      %2227 = vst.msk [vmem:[#allocation2 + $0x68] sm:$0xff] %vm210, %v2211
      %2228 = vst.msk [vmem:[#allocation2 + $0x70] sm:$0xff] %vm210, %v2212
      %2229 = vst.msk [vmem:[#allocation2 + $0x78] sm:$0xff] %vm210, %v2213
      %s2230 = scalar_lea.vmem %s198, 72
      %v2231 = vld [vmem:[%s2230] sm:$0xff]
      %v2232 = vld [vmem:[%s2230 + $0x8] sm:$0xff]
      %v2233 = vld [vmem:[%s2230 + $0x18] sm:$0xff]
      %v2234 = vld [vmem:[%s2230 + $0x20] sm:$0xff]
      %v2235 = vld [vmem:[%s2230 + $0x30] sm:$0xff]
      %v2236 = vld [vmem:[%s2230 + $0x38] sm:$0xff]
      %v2237 = vld [vmem:[%s2230 + $0x48] sm:$0xff]
      %v2238 = vld [vmem:[%s2230 + $0x50] sm:$0xff]
      %v2239 = vld [vmem:[%s2230 + $0x60] sm:$0xff]
      %v2240 = vld [vmem:[%s2230 + $0x68] sm:$0xff]
      %v2241 = vld [vmem:[%s2230 + $0x78] sm:$0xff]
      %v2242 = vld [vmem:[%s2230 + $0x80] sm:$0xff]
      %v2243 = vld [vmem:[%s2230 + $0x90] sm:$0xff]
      %v2244 = vld [vmem:[%s2230 + $0x98] sm:$0xff]
      %v2245 = vld [vmem:[%s2230 + $0xa8] sm:$0xff]
      %v2246 = vld [vmem:[%s2230 + $0xb0] sm:$0xff]
      %v2247 = vld [vmem:[%s2230 + $0x1] sm:$0xff]
      %v2248 = vld [vmem:[%s2230 + $0x9] sm:$0xff]
      %v2249 = vld [vmem:[%s2230 + $0x19] sm:$0xff]
      %v2250 = vld [vmem:[%s2230 + $0x21] sm:$0xff]
      %v2251 = vld [vmem:[%s2230 + $0x31] sm:$0xff]
      %v2252 = vld [vmem:[%s2230 + $0x39] sm:$0xff]
      %v2253 = vld [vmem:[%s2230 + $0x49] sm:$0xff]
      %v2254 = vld [vmem:[%s2230 + $0x51] sm:$0xff]
      %v2255 = vld [vmem:[%s2230 + $0x61] sm:$0xff]
      %v2256 = vld [vmem:[%s2230 + $0x69] sm:$0xff]
      %v2257 = vld [vmem:[%s2230 + $0x79] sm:$0xff]
      %v2258 = vld [vmem:[%s2230 + $0x81] sm:$0xff]
      %v2259 = vld [vmem:[%s2230 + $0x91] sm:$0xff]
      %v2260 = vld [vmem:[%s2230 + $0x99] sm:$0xff]
      %v2261 = vld [vmem:[%s2230 + $0xa9] sm:$0xff]
      %v2262 = vld [vmem:[%s2230 + $0xb1] sm:$0xff]
      %v2263 = vld [vmem:[%s2230 + $0x2] sm:$0xff]
      %v2264 = vld [vmem:[%s2230 + $0xa] sm:$0xff]
      %v2265 = vld [vmem:[%s2230 + $0x1a] sm:$0xff]
      %v2266 = vld [vmem:[%s2230 + $0x22] sm:$0xff]
      %v2267 = vld [vmem:[%s2230 + $0x32] sm:$0xff]
      %v2268 = vld [vmem:[%s2230 + $0x3a] sm:$0xff]
      %v2269 = vld [vmem:[%s2230 + $0x4a] sm:$0xff]
      %v2270 = vld [vmem:[%s2230 + $0x52] sm:$0xff]
      %v2271 = vld [vmem:[%s2230 + $0x62] sm:$0xff]
      %v2272 = vld [vmem:[%s2230 + $0x6a] sm:$0xff]
      %v2273 = vld [vmem:[%s2230 + $0x7a] sm:$0xff]
      %v2274 = vld [vmem:[%s2230 + $0x82] sm:$0xff]
      %v2275 = vld [vmem:[%s2230 + $0x92] sm:$0xff]
      %v2276 = vld [vmem:[%s2230 + $0x9a] sm:$0xff]
      %v2277 = vld [vmem:[%s2230 + $0xaa] sm:$0xff]
      %v2278 = vld [vmem:[%s2230 + $0xb2] sm:$0xff]
      %v2279 = vld [vmem:[%s2230 + $0x3] sm:$0xff]
      %v2280 = vld [vmem:[%s2230 + $0xb] sm:$0xff]
      %v2281 = vld [vmem:[%s2230 + $0x1b] sm:$0xff]
      %v2282 = vld [vmem:[%s2230 + $0x23] sm:$0xff]
      %v2283 = vld [vmem:[%s2230 + $0x33] sm:$0xff]
      %v2284 = vld [vmem:[%s2230 + $0x3b] sm:$0xff]
      %v2285 = vld [vmem:[%s2230 + $0x4b] sm:$0xff]
      %v2286 = vld [vmem:[%s2230 + $0x53] sm:$0xff]
      %v2287 = vld [vmem:[%s2230 + $0x63] sm:$0xff]
      %v2288 = vld [vmem:[%s2230 + $0x6b] sm:$0xff]
      %v2289 = vld [vmem:[%s2230 + $0x7b] sm:$0xff]
      %v2290 = vld [vmem:[%s2230 + $0x83] sm:$0xff]
      %v2291 = vld [vmem:[%s2230 + $0x93] sm:$0xff]
      %v2292 = vld [vmem:[%s2230 + $0x9b] sm:$0xff]
      %v2293 = vld [vmem:[%s2230 + $0xab] sm:$0xff]
      %v2294 = vld [vmem:[%s2230 + $0xb3] sm:$0xff]
      %v2295 = vld [vmem:[%s2230 + $0x4] sm:$0xff]
      %v2296 = vld [vmem:[%s2230 + $0xc] sm:$0xff]
      %v2297 = vld [vmem:[%s2230 + $0x1c] sm:$0xff]
      %v2298 = vld [vmem:[%s2230 + $0x24] sm:$0xff]
      %v2299 = vld [vmem:[%s2230 + $0x34] sm:$0xff]
      %v2300 = vld [vmem:[%s2230 + $0x3c] sm:$0xff]
      %v2301 = vld [vmem:[%s2230 + $0x4c] sm:$0xff]
      %v2302 = vld [vmem:[%s2230 + $0x54] sm:$0xff]
      %v2303 = vld [vmem:[%s2230 + $0x64] sm:$0xff]
      %v2304 = vld [vmem:[%s2230 + $0x6c] sm:$0xff]
      %v2305 = vld [vmem:[%s2230 + $0x7c] sm:$0xff]
      %v2306 = vld [vmem:[%s2230 + $0x84] sm:$0xff]
      %v2307 = vld [vmem:[%s2230 + $0x94] sm:$0xff]
      %v2308 = vld [vmem:[%s2230 + $0x9c] sm:$0xff]
      %v2309 = vld [vmem:[%s2230 + $0xac] sm:$0xff]
      %v2310 = vld [vmem:[%s2230 + $0xb4] sm:$0xff]
      %2327 = vrot.lane.b32.xlu0 %v2247, 64
      %v2328 = vpop.permute.xlu0 %2327
      %2329 = vrot.lane.b32.xlu0 %v2248, 64
      %v2330 = vpop.permute.xlu0 %2329
      %2331 = vrot.lane.b32.xlu0 %v2249, 64
      %v2332 = vpop.permute.xlu0 %2331
      %2333 = vrot.lane.b32.xlu0 %v2250, 64
      %v2334 = vpop.permute.xlu0 %2333
      %2335 = vrot.lane.b32.xlu0 %v2251, 64
      %v2336 = vpop.permute.xlu0 %2335
      %2337 = vrot.lane.b32.xlu0 %v2252, 64
      %v2338 = vpop.permute.xlu0 %2337
      %2339 = vrot.lane.b32.xlu0 %v2253, 64
      %v2340 = vpop.permute.xlu0 %2339
      %2341 = vrot.lane.b32.xlu0 %v2254, 64
      %v2342 = vpop.permute.xlu0 %2341
      %2343 = vrot.lane.b32.xlu0 %v2255, 64
      %v2344 = vpop.permute.xlu0 %2343
      %2345 = vrot.lane.b32.xlu0 %v2256, 64
      %v2346 = vpop.permute.xlu0 %2345
      %2347 = vrot.lane.b32.xlu0 %v2257, 64
      %v2348 = vpop.permute.xlu0 %2347
      %2349 = vrot.lane.b32.xlu0 %v2258, 64
      %v2350 = vpop.permute.xlu0 %2349
      %2351 = vrot.lane.b32.xlu0 %v2259, 64
      %v2352 = vpop.permute.xlu0 %2351
      %2353 = vrot.lane.b32.xlu0 %v2260, 64
      %v2354 = vpop.permute.xlu0 %2353
      %2355 = vrot.lane.b32.xlu0 %v2261, 64
      %v2356 = vpop.permute.xlu0 %2355
      %2357 = vrot.lane.b32.xlu0 %v2262, 64
      %v2358 = vpop.permute.xlu0 %2357
      %2391 = vrot.lane.b32.xlu0 %v2279, 64
      %v2392 = vpop.permute.xlu0 %2391
      %2393 = vrot.lane.b32.xlu0 %v2280, 64
      %v2394 = vpop.permute.xlu0 %2393
      %2395 = vrot.lane.b32.xlu0 %v2281, 64
      %v2396 = vpop.permute.xlu0 %2395
      %2397 = vrot.lane.b32.xlu0 %v2282, 64
      %v2398 = vpop.permute.xlu0 %2397
      %2399 = vrot.lane.b32.xlu0 %v2283, 64
      %v2400 = vpop.permute.xlu0 %2399
      %2401 = vrot.lane.b32.xlu0 %v2284, 64
      %v2402 = vpop.permute.xlu0 %2401
      %2403 = vrot.lane.b32.xlu0 %v2285, 64
      %v2404 = vpop.permute.xlu0 %2403
      %2405 = vrot.lane.b32.xlu0 %v2286, 64
      %v2406 = vpop.permute.xlu0 %2405
      %2407 = vrot.lane.b32.xlu0 %v2287, 64
      %v2408 = vpop.permute.xlu0 %2407
      %2409 = vrot.lane.b32.xlu0 %v2288, 64
      %v2410 = vpop.permute.xlu0 %2409
      %2411 = vrot.lane.b32.xlu0 %v2289, 64
      %v2412 = vpop.permute.xlu0 %2411
      %2413 = vrot.lane.b32.xlu0 %v2290, 64
      %v2414 = vpop.permute.xlu0 %2413
      %2415 = vrot.lane.b32.xlu0 %v2291, 64
      %v2416 = vpop.permute.xlu0 %2415
      %2417 = vrot.lane.b32.xlu0 %v2292, 64
      %v2418 = vpop.permute.xlu0 %2417
      %2419 = vrot.lane.b32.xlu0 %v2293, 64
      %v2420 = vpop.permute.xlu0 %2419
      %2421 = vrot.lane.b32.xlu0 %v2294, 64
      %v2422 = vpop.permute.xlu0 %2421
      %v2439 = vsel %vm435, %v2231, %v2328
      %v2440 = vsel %vm435, %v2232, %v2330
      %v2441 = vsel %vm435, %v2233, %v2332
      %v2442 = vsel %vm435, %v2234, %v2334
      %v2443 = vsel %vm435, %v2235, %v2336
      %v2444 = vsel %vm435, %v2236, %v2338
      %v2445 = vsel %vm435, %v2237, %v2340
      %v2446 = vsel %vm435, %v2238, %v2342
      %v2447 = vsel %vm435, %v2239, %v2344
      %v2448 = vsel %vm435, %v2240, %v2346
      %v2449 = vsel %vm435, %v2241, %v2348
      %v2450 = vsel %vm435, %v2242, %v2350
      %v2451 = vsel %vm435, %v2243, %v2352
      %v2452 = vsel %vm435, %v2244, %v2354
      %v2453 = vsel %vm435, %v2245, %v2356
      %v2454 = vsel %vm435, %v2246, %v2358
      %v2455 = vsel %vm435, %v2263, %v2392
      %v2456 = vsel %vm435, %v2264, %v2394
      %v2457 = vsel %vm435, %v2265, %v2396
      %v2458 = vsel %vm435, %v2266, %v2398
      %v2459 = vsel %vm435, %v2267, %v2400
      %v2460 = vsel %vm435, %v2268, %v2402
      %v2461 = vsel %vm435, %v2269, %v2404
      %v2462 = vsel %vm435, %v2270, %v2406
      %v2463 = vsel %vm435, %v2271, %v2408
      %v2464 = vsel %vm435, %v2272, %v2410
      %v2465 = vsel %vm435, %v2273, %v2412
      %v2466 = vsel %vm435, %v2274, %v2414
      %v2467 = vsel %vm435, %v2275, %v2416
      %v2468 = vsel %vm435, %v2276, %v2418
      %v2469 = vsel %vm435, %v2277, %v2420
      %v2470 = vsel %vm435, %v2278, %v2422
      %v2471 = vld [vmem:[#allocation2] sm:$0xff]
      %v2472 = vld [vmem:[#allocation2 + $0x8] sm:$0xff]
      %v2473 = vld [vmem:[#allocation2 + $0x10] sm:$0xff]
      %v2474 = vld [vmem:[#allocation2 + $0x18] sm:$0xff]
      %v2475 = vld [vmem:[#allocation2 + $0x20] sm:$0xff]
      %v2476 = vld [vmem:[#allocation2 + $0x28] sm:$0xff]
      %v2477 = vld [vmem:[#allocation2 + $0x30] sm:$0xff]
      %v2478 = vld [vmem:[#allocation2 + $0x38] sm:$0xff]
      %v2479 = vld [vmem:[#allocation2 + $0x40] sm:$0xff]
      %v2480 = vld [vmem:[#allocation2 + $0x48] sm:$0xff]
      %v2481 = vld [vmem:[#allocation2 + $0x50] sm:$0xff]
      %v2482 = vld [vmem:[#allocation2 + $0x58] sm:$0xff]
      %v2483 = vld [vmem:[#allocation2 + $0x60] sm:$0xff]
      %v2484 = vld [vmem:[#allocation2 + $0x68] sm:$0xff]
      %v2485 = vld [vmem:[#allocation2 + $0x70] sm:$0xff]
      %v2486 = vld [vmem:[#allocation2 + $0x78] sm:$0xff]
      %s2487 = scalar_lea.vmem %s1, 960
      %v2488 = vld [vmem:[%s2487] sm:$0xff]
      %v2489 = vld [vmem:[%s2487 + $0x8] sm:$0xff]
      %v2490 = vld [vmem:[%s2487 + $0x10] sm:$0xff]
      %v2491 = vld [vmem:[%s2487 + $0x18] sm:$0xff]
      %v2492 = vld [vmem:[%s2487 + $0x20] sm:$0xff]
      %v2493 = vld [vmem:[%s2487 + $0x28] sm:$0xff]
      %v2494 = vld [vmem:[%s2487 + $0x30] sm:$0xff]
      %v2495 = vld [vmem:[%s2487 + $0x38] sm:$0xff]
      %v2496 = vld [vmem:[%s2487 + $0x40] sm:$0xff]
      %v2497 = vld [vmem:[%s2487 + $0x48] sm:$0xff]
      %v2498 = vld [vmem:[%s2487 + $0x50] sm:$0xff]
      %v2499 = vld [vmem:[%s2487 + $0x58] sm:$0xff]
      %v2500 = vld [vmem:[%s2487 + $0x60] sm:$0xff]
      %v2501 = vld [vmem:[%s2487 + $0x68] sm:$0xff]
      %v2502 = vld [vmem:[%s2487 + $0x70] sm:$0xff]
      %v2503 = vld [vmem:[%s2487 + $0x78] sm:$0xff]
      %v2504 = vld [vmem:[%s2487 + $0x80] sm:$0xff]
      %v2505 = vld [vmem:[%s2487 + $0x88] sm:$0xff]
      %v2506 = vld [vmem:[%s2487 + $0x90] sm:$0xff]
      %v2507 = vld [vmem:[%s2487 + $0x98] sm:$0xff]
      %v2508 = vld [vmem:[%s2487 + $0xa0] sm:$0xff]
      %v2509 = vld [vmem:[%s2487 + $0xa8] sm:$0xff]
      %v2510 = vld [vmem:[%s2487 + $0xb0] sm:$0xff]
      %v2511 = vld [vmem:[%s2487 + $0xb8] sm:$0xff]
      %v2512 = vld [vmem:[%s2487 + $0xc0] sm:$0xff]
      %v2513 = vld [vmem:[%s2487 + $0xc8] sm:$0xff]
      %v2514 = vld [vmem:[%s2487 + $0xd0] sm:$0xff]
      %v2515 = vld [vmem:[%s2487 + $0xd8] sm:$0xff]
      %v2516 = vld [vmem:[%s2487 + $0xe0] sm:$0xff]
      %v2517 = vld [vmem:[%s2487 + $0xe8] sm:$0xff]
      %v2518 = vld [vmem:[%s2487 + $0xf0] sm:$0xff]
      %v2519 = vld [vmem:[%s2487 + $0xf8] sm:$0xff]
      %v2520 = vld [vmem:[%s2487 + $0x100] sm:$0xff]
      %v2521 = vld [vmem:[%s2487 + $0x108] sm:$0xff]
      %v2522 = vld [vmem:[%s2487 + $0x110] sm:$0xff]
      %v2523 = vld [vmem:[%s2487 + $0x118] sm:$0xff]
      %v2524 = vld [vmem:[%s2487 + $0x120] sm:$0xff]
      %v2525 = vld [vmem:[%s2487 + $0x128] sm:$0xff]
      %v2526 = vld [vmem:[%s2487 + $0x130] sm:$0xff]
      %v2527 = vld [vmem:[%s2487 + $0x138] sm:$0xff]
      %v2529 = vsel %vm435, %v2295, 0
      %v2532 = vsel %vm435, %v2296, 0
      %v2535 = vsel %vm435, %v2297, 0
      %v2538 = vsel %vm435, %v2298, 0
      %v2541 = vsel %vm435, %v2299, 0
      %v2544 = vsel %vm435, %v2300, 0
      %v2547 = vsel %vm435, %v2301, 0
      %v2550 = vsel %vm435, %v2302, 0
      %v2553 = vsel %vm435, %v2303, 0
      %v2556 = vsel %vm435, %v2304, 0
      %v2559 = vsel %vm435, %v2305, 0
      %v2562 = vsel %vm435, %v2306, 0
      %v2565 = vsel %vm435, %v2307, 0
      %v2568 = vsel %vm435, %v2308, 0
      %v2571 = vsel %vm435, %v2309, 0
      %v2574 = vsel %vm435, %v2310, 0
      %2576 = vmatprep.subr.mxu0 0.0
      %2577 = vmatpush1.msra.mxu0 %v2488
      %2578 = vmatprep.subr.mxu0 0.0
      %2579 = vmatpush1.msra.mxu0 %v2489
      %2580 = vmatprep.subr.mxu0 0.0
      %2581 = vmatpush1.msra.mxu0 %v2490
      %2582 = vmatprep.subr.mxu0 0.0
      %2583 = vmatpush1.msra.mxu0 %v2491
      %2584 = vmatprep.subr.mxu0 0.0
      %2585 = vmatpush1.msra.mxu0 %v2492
      %2586 = vmatprep.subr.mxu0 0.0
      %2587 = vmatpush1.msra.mxu0 %v2493
      %2588 = vmatprep.subr.mxu0 0.0
      %2589 = vmatpush1.msra.mxu0 %v2494
      %2590 = vmatprep.subr.mxu0 0.0
      %2591 = vmatpush1.msra.mxu0 %v2495
      %2592 = vmatprep.subr.mxu0 0.0
      %2593 = vmatpush1.msra.mxu0 %v2496
      %2594 = vmatprep.subr.mxu0 0.0
      %2595 = vmatpush1.msra.mxu0 %v2497
      %2596 = vmatprep.subr.mxu0 0.0
      %2597 = vmatpush1.msra.mxu0 %v2498
      %2598 = vmatprep.subr.mxu0 0.0
      %2599 = vmatpush1.msra.mxu0 %v2499
      %2600 = vmatprep.subr.mxu0 0.0
      %2601 = vmatpush1.msra.mxu0 %v2500
      %2602 = vmatprep.subr.mxu0 0.0
      %2603 = vmatpush1.msra.mxu0 %v2501
      %2604 = vmatprep.subr.mxu0 0.0
      %2605 = vmatpush1.msra.mxu0 %v2502
      %2606 = vmatprep.subr.mxu0 0.0
      %2607 = vmatpush1.msra.mxu0 %v2503
      %2608 = vmatprep.subr.mxu0 0.0
      %2609 = vmatpush1.msra.mxu0 %v2504
      %2610 = vmatprep.subr.mxu0 0.0
      %2611 = vmatpush1.msra.mxu0 %v2505
      %2612 = vmatprep.subr.mxu0 0.0
      %2613 = vmatpush1.msra.mxu0 %v2506
      %2614 = vmatprep.subr.mxu0 0.0
      %2615 = vmatpush1.msra.mxu0 %v2507
      %2616 = vmatprep.subr.mxu0 0.0
      %2617 = vmatpush1.msra.mxu0 %v2508
      %2618 = vmatprep.subr.mxu0 0.0
      %2619 = vmatpush1.msra.mxu0 %v2509
      %2620 = vmatprep.subr.mxu0 0.0
      %2621 = vmatpush1.msra.mxu0 %v2510
      %2622 = vmatprep.subr.mxu0 0.0
      %2623 = vmatpush1.msra.mxu0 %v2511
      %2624 = vmatprep.subr.mxu0 0.0
      %2625 = vmatpush1.msra.mxu0 %v2512
      %2626 = vmatprep.subr.mxu0 0.0
      %2627 = vmatpush1.msra.mxu0 %v2513
      %2628 = vmatprep.subr.mxu0 0.0
      %2629 = vmatpush1.msra.mxu0 %v2514
      %2630 = vmatprep.subr.mxu0 0.0
      %2631 = vmatpush1.msra.mxu0 %v2515
      %2632 = vmatprep.subr.mxu0 0.0
      %2633 = vmatpush1.msra.mxu0 %v2516
      %2634 = vmatprep.subr.mxu0 0.0
      %2635 = vmatpush1.msra.mxu0 %v2517
      %2636 = vmatprep.subr.mxu0 0.0
      %2637 = vmatpush1.msra.mxu0 %v2518
      %2638 = vmatprep.subr.mxu0 0.0
      %2639 = vmatpush1.msra.mxu0 %v2519
      %2640 = vmatprep.mubr.f32.mxu0 %v2455
      %2641 = vmatmul.mubr.f32.gmra.mrb[0].mxu0 %v2439
      %v2642 = vpop.f32.mrb[0].mxu0
      %v2643 = vadd.f32 0.0, %v2642
      %v2644 = vpop.f32.mrb[0].mxu0
      %2645 = vmatprep.mubr.f32.mxu0 %v2456
      %2646 = vmatmul.mubr.f32.gmra.mrb[0].mxu0 %v2440
      %v2647 = vpop.f32.mrb[0].mxu0
      %v2648 = vadd.f32 0.0, %v2647
      %v2649 = vpop.f32.mrb[0].mxu0
      %2650 = vmatprep.mubr.f32.mxu0 %v2457
      %2651 = vmatmul.mubr.f32.gmra.mrb[0].mxu0 %v2441
      %v2652 = vpop.f32.mrb[0].mxu0
      %v2653 = vadd.f32 0.0, %v2652
      %v2654 = vpop.f32.mrb[0].mxu0
      %2655 = vmatprep.mubr.f32.mxu0 %v2458
      %2656 = vmatmul.mubr.f32.gmra.mrb[0].mxu0 %v2442
      %v2657 = vpop.f32.mrb[0].mxu0
      %v2658 = vadd.f32 0.0, %v2657
      %v2659 = vpop.f32.mrb[0].mxu0
      %2660 = vmatprep.mubr.f32.mxu0 %v2459
      %2661 = vmatmul.mubr.f32.gmra.mrb[0].mxu0 %v2443
      %v2662 = vpop.f32.mrb[0].mxu0
      %v2663 = vadd.f32 0.0, %v2662
      %v2664 = vpop.f32.mrb[0].mxu0
      %2665 = vmatprep.mubr.f32.mxu0 %v2460
      %2666 = vmatmul.mubr.f32.gmra.mrb[0].mxu0 %v2444
      %v2667 = vpop.f32.mrb[0].mxu0
      %v2668 = vadd.f32 0.0, %v2667
      %v2669 = vpop.f32.mrb[0].mxu0
      %2670 = vmatprep.mubr.f32.mxu0 %v2461
      %2671 = vmatmul.mubr.f32.gmra.mrb[0].mxu0 %v2445
      %v2672 = vpop.f32.mrb[0].mxu0
      %v2673 = vadd.f32 0.0, %v2672
      %v2674 = vpop.f32.mrb[0].mxu0
      %2675 = vmatprep.mubr.f32.mxu0 %v2462
      %2676 = vmatmul.mubr.f32.gmra.mrb[0].mxu0 %v2446
      %v2677 = vpop.f32.mrb[0].mxu0
      %v2678 = vadd.f32 0.0, %v2677
      %v2679 = vpop.f32.mrb[0].mxu0
      %2680 = vmatprep.mubr.f32.mxu0 %v2463
      %2681 = vmatmul.mubr.f32.gmra.mrb[0].mxu0 %v2447
      %v2682 = vpop.f32.mrb[0].mxu0
      %v2683 = vadd.f32 0.0, %v2682
      %v2684 = vpop.f32.mrb[0].mxu0
      %2685 = vmatprep.mubr.f32.mxu0 %v2464
      %2686 = vmatmul.mubr.f32.gmra.mrb[0].mxu0 %v2448
      %v2687 = vpop.f32.mrb[0].mxu0
      %v2688 = vadd.f32 0.0, %v2687
      %v2689 = vpop.f32.mrb[0].mxu0
      %2690 = vmatprep.mubr.f32.mxu0 %v2465
      %2691 = vmatmul.mubr.f32.gmra.mrb[0].mxu0 %v2449
      %v2692 = vpop.f32.mrb[0].mxu0
      %v2693 = vadd.f32 0.0, %v2692
      %v2694 = vpop.f32.mrb[0].mxu0
      %2695 = vmatprep.mubr.f32.mxu0 %v2466
      %2696 = vmatmul.mubr.f32.gmra.mrb[0].mxu0 %v2450
      %v2697 = vpop.f32.mrb[0].mxu0
      %v2698 = vadd.f32 0.0, %v2697
      %v2699 = vpop.f32.mrb[0].mxu0
      %2700 = vmatprep.mubr.f32.mxu0 %v2467
      %2701 = vmatmul.mubr.f32.gmra.mrb[0].mxu0 %v2451
      %v2702 = vpop.f32.mrb[0].mxu0
      %v2703 = vadd.f32 0.0, %v2702
      %v2704 = vpop.f32.mrb[0].mxu0
      %2705 = vmatprep.mubr.f32.mxu0 %v2468
      %2706 = vmatmul.mubr.f32.gmra.mrb[0].mxu0 %v2452
      %v2707 = vpop.f32.mrb[0].mxu0
      %v2708 = vadd.f32 0.0, %v2707
      %v2709 = vpop.f32.mrb[0].mxu0
      %2710 = vmatprep.mubr.f32.mxu0 %v2469
      %2711 = vmatmul.mubr.f32.gmra.mrb[0].mxu0 %v2453
      %v2712 = vpop.f32.mrb[0].mxu0
      %v2713 = vadd.f32 0.0, %v2712
      %v2714 = vpop.f32.mrb[0].mxu0
      %2715 = vmatprep.mubr.f32.mxu0 %v2470
      %2716 = vmatmul.mubr.f32.gmra.mrb[0].mxu0 %v2454
      %v2717 = vpop.f32.mrb[0].mxu0
      %v2718 = vadd.f32 0.0, %v2717
      %v2719 = vpop.f32.mrb[0].mxu0
      %2720 = vdwg.mxu0
      %2721 = vmatprep.subr.mxu0 0.0
      %2722 = vmatpush1.msra.mxu0 %v2520
      %2723 = vmatprep.subr.mxu0 0.0
      %2724 = vmatpush1.msra.mxu0 %v2521
      %2725 = vmatprep.subr.mxu0 0.0
      %2726 = vmatpush1.msra.mxu0 %v2522
      %2727 = vmatprep.subr.mxu0 0.0
      %2728 = vmatpush1.msra.mxu0 %v2523
      %2729 = vmatprep.subr.mxu0 0.0
      %2730 = vmatpush1.msra.mxu0 %v2524
      %2731 = vmatprep.subr.mxu0 0.0
      %2732 = vmatpush1.msra.mxu0 %v2525
      %2733 = vmatprep.subr.mxu0 0.0
      %2734 = vmatpush1.msra.mxu0 %v2526
      %2735 = vmatprep.subr.mxu0 0.0
      %2736 = vmatpush1.msra.mxu0 %v2527
      %2737 = vmatprep.subr.mxu0 0.0
      %2738 = vmatpush1.msra.mxu0 0.0
      %2739 = vmatprep.subr.mxu0 0.0
      %2740 = vmatpush1.msra.mxu0 0.0
      %2741 = vmatprep.subr.mxu0 0.0
      %2742 = vmatpush1.msra.mxu0 0.0
      %2743 = vmatprep.subr.mxu0 0.0
      %2744 = vmatpush1.msra.mxu0 0.0
      %2745 = vmatprep.subr.mxu0 0.0
      %2746 = vmatpush1.msra.mxu0 0.0
      %2747 = vmatprep.subr.mxu0 0.0
      %2748 = vmatpush1.msra.mxu0 0.0
      %2749 = vmatprep.subr.mxu0 0.0
      %2750 = vmatpush1.msra.mxu0 0.0
      %2751 = vmatprep.subr.mxu0 0.0
      %2752 = vmatpush1.msra.mxu0 0.0
      %2753 = vmatprep.subr.mxu0 0.0
      %2754 = vmatpush1.msra.mxu0 0.0
      %2755 = vmatprep.subr.mxu0 0.0
      %2756 = vmatpush1.msra.mxu0 0.0
      %2757 = vmatprep.subr.mxu0 0.0
      %2758 = vmatpush1.msra.mxu0 0.0
      %2759 = vmatprep.subr.mxu0 0.0
      %2760 = vmatpush1.msra.mxu0 0.0
      %2761 = vmatprep.subr.mxu0 0.0
      %2762 = vmatpush1.msra.mxu0 0.0
      %2763 = vmatprep.subr.mxu0 0.0
      %2764 = vmatpush1.msra.mxu0 0.0
      %2765 = vmatprep.subr.mxu0 0.0
      %2766 = vmatpush1.msra.mxu0 0.0
      %2767 = vmatprep.subr.mxu0 0.0
      %2768 = vmatpush1.msra.mxu0 0.0
      %2769 = vmatprep.subr.mxu0 0.0
      %2770 = vmatpush1.msra.mxu0 0.0
      %2771 = vmatprep.subr.mxu0 0.0
      %2772 = vmatpush1.msra.mxu0 0.0
      %2773 = vmatprep.subr.mxu0 0.0
      %2774 = vmatpush1.msra.mxu0 0.0
      %2775 = vmatprep.subr.mxu0 0.0
      %2776 = vmatpush1.msra.mxu0 0.0
      %2777 = vmatprep.subr.mxu0 0.0
      %2778 = vmatpush1.msra.mxu0 0.0
      %2779 = vmatprep.subr.mxu0 0.0
      %2780 = vmatpush1.msra.mxu0 0.0
      %2781 = vmatprep.subr.mxu0 0.0
      %2782 = vmatpush1.msra.mxu0 0.0
      %2783 = vmatprep.subr.mxu0 0.0
      %2784 = vmatpush1.msra.mxu0 0.0
      %2785 = vmatprep.mubr.f32.mxu0 0.0
      %2786 = vmatmul.mubr.f32.gmra.mrb[0].mxu0 %v2529
      %v2787 = vpop.f32.mrb[0].mxu0
      %v2788 = vadd.f32 %v2643, %v2787
      %v2789 = vpop.f32.mrb[0].mxu0
      %2790 = vmatprep.mubr.f32.mxu0 0.0
      %2791 = vmatmul.mubr.f32.gmra.mrb[0].mxu0 %v2532
      %v2792 = vpop.f32.mrb[0].mxu0
      %v2793 = vadd.f32 %v2648, %v2792
      %v2794 = vpop.f32.mrb[0].mxu0
      %2795 = vmatprep.mubr.f32.mxu0 0.0
      %2796 = vmatmul.mubr.f32.gmra.mrb[0].mxu0 %v2535
      %v2797 = vpop.f32.mrb[0].mxu0
      %v2798 = vadd.f32 %v2653, %v2797
      %v2799 = vpop.f32.mrb[0].mxu0
      %2800 = vmatprep.mubr.f32.mxu0 0.0
      %2801 = vmatmul.mubr.f32.gmra.mrb[0].mxu0 %v2538
      %v2802 = vpop.f32.mrb[0].mxu0
      %v2803 = vadd.f32 %v2658, %v2802
      %v2804 = vpop.f32.mrb[0].mxu0
      %2805 = vmatprep.mubr.f32.mxu0 0.0
      %2806 = vmatmul.mubr.f32.gmra.mrb[0].mxu0 %v2541
      %v2807 = vpop.f32.mrb[0].mxu0
      %v2808 = vadd.f32 %v2663, %v2807
      %v2809 = vpop.f32.mrb[0].mxu0
      %2810 = vmatprep.mubr.f32.mxu0 0.0
      %2811 = vmatmul.mubr.f32.gmra.mrb[0].mxu0 %v2544
      %v2812 = vpop.f32.mrb[0].mxu0
      %v2813 = vadd.f32 %v2668, %v2812
      %v2814 = vpop.f32.mrb[0].mxu0
      %2815 = vmatprep.mubr.f32.mxu0 0.0
      %2816 = vmatmul.mubr.f32.gmra.mrb[0].mxu0 %v2547
      %v2817 = vpop.f32.mrb[0].mxu0
      %v2818 = vadd.f32 %v2673, %v2817
      %v2819 = vpop.f32.mrb[0].mxu0
      %2820 = vmatprep.mubr.f32.mxu0 0.0
      %2821 = vmatmul.mubr.f32.gmra.mrb[0].mxu0 %v2550
      %v2822 = vpop.f32.mrb[0].mxu0
      %v2823 = vadd.f32 %v2678, %v2822
      %v2824 = vpop.f32.mrb[0].mxu0
      %2825 = vmatprep.mubr.f32.mxu0 0.0
      %2826 = vmatmul.mubr.f32.gmra.mrb[0].mxu0 %v2553
      %v2827 = vpop.f32.mrb[0].mxu0
      %v2828 = vadd.f32 %v2683, %v2827
      %v2829 = vpop.f32.mrb[0].mxu0
      %2830 = vmatprep.mubr.f32.mxu0 0.0
      %2831 = vmatmul.mubr.f32.gmra.mrb[0].mxu0 %v2556
      %v2832 = vpop.f32.mrb[0].mxu0
      %v2833 = vadd.f32 %v2688, %v2832
      %v2834 = vpop.f32.mrb[0].mxu0
      %2835 = vmatprep.mubr.f32.mxu0 0.0
      %2836 = vmatmul.mubr.f32.gmra.mrb[0].mxu0 %v2559
      %v2837 = vpop.f32.mrb[0].mxu0
      %v2838 = vadd.f32 %v2693, %v2837
      %v2839 = vpop.f32.mrb[0].mxu0
      %2840 = vmatprep.mubr.f32.mxu0 0.0
      %2841 = vmatmul.mubr.f32.gmra.mrb[0].mxu0 %v2562
      %v2842 = vpop.f32.mrb[0].mxu0
      %v2843 = vadd.f32 %v2698, %v2842
      %v2844 = vpop.f32.mrb[0].mxu0
      %2845 = vmatprep.mubr.f32.mxu0 0.0
      %2846 = vmatmul.mubr.f32.gmra.mrb[0].mxu0 %v2565
      %v2847 = vpop.f32.mrb[0].mxu0
      %v2848 = vadd.f32 %v2703, %v2847
      %v2849 = vpop.f32.mrb[0].mxu0
      %2850 = vmatprep.mubr.f32.mxu0 0.0
      %2851 = vmatmul.mubr.f32.gmra.mrb[0].mxu0 %v2568
      %v2852 = vpop.f32.mrb[0].mxu0
      %v2853 = vadd.f32 %v2708, %v2852
      %v2854 = vpop.f32.mrb[0].mxu0
      %2855 = vmatprep.mubr.f32.mxu0 0.0
      %2856 = vmatmul.mubr.f32.gmra.mrb[0].mxu0 %v2571
      %v2857 = vpop.f32.mrb[0].mxu0
      %v2858 = vadd.f32 %v2713, %v2857
      %v2859 = vpop.f32.mrb[0].mxu0
      %2860 = vmatprep.mubr.f32.mxu0 0.0
      %2861 = vmatmul.mubr.f32.gmra.mrb[0].mxu0 %v2574
      %v2862 = vpop.f32.mrb[0].mxu0
      %v2863 = vadd.f32 %v2718, %v2862
      %v2864 = vpop.f32.mrb[0].mxu0
      %2865 = vdwg.mxu0
      %v2866 = vadd.f32 %v2471, %v2788
      %v2867 = vadd.f32 %v2472, %v2793
      %v2868 = vadd.f32 %v2473, %v2798
      %v2869 = vadd.f32 %v2474, %v2803
      %v2870 = vadd.f32 %v2475, %v2808
      %v2871 = vadd.f32 %v2476, %v2813
      %v2872 = vadd.f32 %v2477, %v2818
      %v2873 = vadd.f32 %v2478, %v2823
      %v2874 = vadd.f32 %v2479, %v2828
      %v2875 = vadd.f32 %v2480, %v2833
      %v2876 = vadd.f32 %v2481, %v2838
      %v2877 = vadd.f32 %v2482, %v2843
      %v2878 = vadd.f32 %v2483, %v2848
      %v2879 = vadd.f32 %v2484, %v2853
      %v2880 = vadd.f32 %v2485, %v2858
      %v2881 = vadd.f32 %v2486, %v2863
      %2882 = vst.msk [vmem:[#allocation2] sm:$0xff] %vm210, %v2866
      %2883 = vst.msk [vmem:[#allocation2 + $0x8] sm:$0xff] %vm210, %v2867
      %2884 = vst.msk [vmem:[#allocation2 + $0x10] sm:$0xff] %vm210, %v2868
      %2885 = vst.msk [vmem:[#allocation2 + $0x18] sm:$0xff] %vm210, %v2869
      %2886 = vst.msk [vmem:[#allocation2 + $0x20] sm:$0xff] %vm210, %v2870
      %2887 = vst.msk [vmem:[#allocation2 + $0x28] sm:$0xff] %vm210, %v2871
      %2888 = vst.msk [vmem:[#allocation2 + $0x30] sm:$0xff] %vm210, %v2872
      %2889 = vst.msk [vmem:[#allocation2 + $0x38] sm:$0xff] %vm210, %v2873
      %2890 = vst.msk [vmem:[#allocation2 + $0x40] sm:$0xff] %vm210, %v2874
      %2891 = vst.msk [vmem:[#allocation2 + $0x48] sm:$0xff] %vm210, %v2875
      %2892 = vst.msk [vmem:[#allocation2 + $0x50] sm:$0xff] %vm210, %v2876
      %2893 = vst.msk [vmem:[#allocation2 + $0x58] sm:$0xff] %vm210, %v2877
      %2894 = vst.msk [vmem:[#allocation2 + $0x60] sm:$0xff] %vm210, %v2878
      %2895 = vst.msk [vmem:[#allocation2 + $0x68] sm:$0xff] %vm210, %v2879
      %2896 = vst.msk [vmem:[#allocation2 + $0x70] sm:$0xff] %vm210, %v2880
      %2897 = vst.msk [vmem:[#allocation2 + $0x78] sm:$0xff] %vm210, %v2881
      %s2898 = scalar_lea.vmem %s198, 96
      %v2899 = vld [vmem:[%s2898] sm:$0xff]
      %v2900 = vld [vmem:[%s2898 + $0x8] sm:$0xff]
      %v2901 = vld [vmem:[%s2898 + $0x18] sm:$0xff]
      %v2902 = vld [vmem:[%s2898 + $0x20] sm:$0xff]
      %v2903 = vld [vmem:[%s2898 + $0x30] sm:$0xff]
      %v2904 = vld [vmem:[%s2898 + $0x38] sm:$0xff]
      %v2905 = vld [vmem:[%s2898 + $0x48] sm:$0xff]
      %v2906 = vld [vmem:[%s2898 + $0x50] sm:$0xff]
      %v2907 = vld [vmem:[%s2898 + $0x60] sm:$0xff]
      %v2908 = vld [vmem:[%s2898 + $0x68] sm:$0xff]
      %v2909 = vld [vmem:[%s2898 + $0x78] sm:$0xff]
      %v2910 = vld [vmem:[%s2898 + $0x80] sm:$0xff]
      %v2911 = vld [vmem:[%s2898 + $0x90] sm:$0xff]
      %v2912 = vld [vmem:[%s2898 + $0x98] sm:$0xff]
      %v2913 = vld [vmem:[%s2898 + $0xa8] sm:$0xff]
      %v2914 = vld [vmem:[%s2898 + $0xb0] sm:$0xff]
      %v2915 = vld [vmem:[%s2898 + $0x1] sm:$0xff]
      %v2916 = vld [vmem:[%s2898 + $0x9] sm:$0xff]
      %v2917 = vld [vmem:[%s2898 + $0x19] sm:$0xff]
      %v2918 = vld [vmem:[%s2898 + $0x21] sm:$0xff]
      %v2919 = vld [vmem:[%s2898 + $0x31] sm:$0xff]
      %v2920 = vld [vmem:[%s2898 + $0x39] sm:$0xff]
      %v2921 = vld [vmem:[%s2898 + $0x49] sm:$0xff]
      %v2922 = vld [vmem:[%s2898 + $0x51] sm:$0xff]
      %v2923 = vld [vmem:[%s2898 + $0x61] sm:$0xff]
      %v2924 = vld [vmem:[%s2898 + $0x69] sm:$0xff]
      %v2925 = vld [vmem:[%s2898 + $0x79] sm:$0xff]
      %v2926 = vld [vmem:[%s2898 + $0x81] sm:$0xff]
      %v2927 = vld [vmem:[%s2898 + $0x91] sm:$0xff]
      %v2928 = vld [vmem:[%s2898 + $0x99] sm:$0xff]
      %v2929 = vld [vmem:[%s2898 + $0xa9] sm:$0xff]
      %v2930 = vld [vmem:[%s2898 + $0xb1] sm:$0xff]
      %v2931 = vld [vmem:[%s2898 + $0x2] sm:$0xff]
      %v2932 = vld [vmem:[%s2898 + $0xa] sm:$0xff]
      %v2933 = vld [vmem:[%s2898 + $0x1a] sm:$0xff]
      %v2934 = vld [vmem:[%s2898 + $0x22] sm:$0xff]
      %v2935 = vld [vmem:[%s2898 + $0x32] sm:$0xff]
      %v2936 = vld [vmem:[%s2898 + $0x3a] sm:$0xff]
      %v2937 = vld [vmem:[%s2898 + $0x4a] sm:$0xff]
      %v2938 = vld [vmem:[%s2898 + $0x52] sm:$0xff]
      %v2939 = vld [vmem:[%s2898 + $0x62] sm:$0xff]
      %v2940 = vld [vmem:[%s2898 + $0x6a] sm:$0xff]
      %v2941 = vld [vmem:[%s2898 + $0x7a] sm:$0xff]
      %v2942 = vld [vmem:[%s2898 + $0x82] sm:$0xff]
      %v2943 = vld [vmem:[%s2898 + $0x92] sm:$0xff]
      %v2944 = vld [vmem:[%s2898 + $0x9a] sm:$0xff]
      %v2945 = vld [vmem:[%s2898 + $0xaa] sm:$0xff]
      %v2946 = vld [vmem:[%s2898 + $0xb2] sm:$0xff]
      %v2947 = vld [vmem:[%s2898 + $0x3] sm:$0xff]
      %v2948 = vld [vmem:[%s2898 + $0xb] sm:$0xff]
      %v2949 = vld [vmem:[%s2898 + $0x1b] sm:$0xff]
      %v2950 = vld [vmem:[%s2898 + $0x23] sm:$0xff]
      %v2951 = vld [vmem:[%s2898 + $0x33] sm:$0xff]
      %v2952 = vld [vmem:[%s2898 + $0x3b] sm:$0xff]
      %v2953 = vld [vmem:[%s2898 + $0x4b] sm:$0xff]
      %v2954 = vld [vmem:[%s2898 + $0x53] sm:$0xff]
      %v2955 = vld [vmem:[%s2898 + $0x63] sm:$0xff]
      %v2956 = vld [vmem:[%s2898 + $0x6b] sm:$0xff]
      %v2957 = vld [vmem:[%s2898 + $0x7b] sm:$0xff]
      %v2958 = vld [vmem:[%s2898 + $0x83] sm:$0xff]
      %v2959 = vld [vmem:[%s2898 + $0x93] sm:$0xff]
      %v2960 = vld [vmem:[%s2898 + $0x9b] sm:$0xff]
      %v2961 = vld [vmem:[%s2898 + $0xab] sm:$0xff]
      %v2962 = vld [vmem:[%s2898 + $0xb3] sm:$0xff]
      %v2963 = vld [vmem:[%s2898 + $0x4] sm:$0xff]
      %v2964 = vld [vmem:[%s2898 + $0xc] sm:$0xff]
      %v2965 = vld [vmem:[%s2898 + $0x1c] sm:$0xff]
      %v2966 = vld [vmem:[%s2898 + $0x24] sm:$0xff]
      %v2967 = vld [vmem:[%s2898 + $0x34] sm:$0xff]
      %v2968 = vld [vmem:[%s2898 + $0x3c] sm:$0xff]
      %v2969 = vld [vmem:[%s2898 + $0x4c] sm:$0xff]
      %v2970 = vld [vmem:[%s2898 + $0x54] sm:$0xff]
      %v2971 = vld [vmem:[%s2898 + $0x64] sm:$0xff]
      %v2972 = vld [vmem:[%s2898 + $0x6c] sm:$0xff]
      %v2973 = vld [vmem:[%s2898 + $0x7c] sm:$0xff]
      %v2974 = vld [vmem:[%s2898 + $0x84] sm:$0xff]
      %v2975 = vld [vmem:[%s2898 + $0x94] sm:$0xff]
      %v2976 = vld [vmem:[%s2898 + $0x9c] sm:$0xff]
      %v2977 = vld [vmem:[%s2898 + $0xac] sm:$0xff]
      %v2978 = vld [vmem:[%s2898 + $0xb4] sm:$0xff]
      %2995 = vrot.lane.b32.xlu0 %v2915, 64
      %v2996 = vpop.permute.xlu0 %2995
      %2997 = vrot.lane.b32.xlu0 %v2916, 64
      %v2998 = vpop.permute.xlu0 %2997
      %2999 = vrot.lane.b32.xlu0 %v2917, 64
      %v3000 = vpop.permute.xlu0 %2999
      %3001 = vrot.lane.b32.xlu0 %v2918, 64
      %v3002 = vpop.permute.xlu0 %3001
      %3003 = vrot.lane.b32.xlu0 %v2919, 64
      %v3004 = vpop.permute.xlu0 %3003
      %3005 = vrot.lane.b32.xlu0 %v2920, 64
      %v3006 = vpop.permute.xlu0 %3005
      %3007 = vrot.lane.b32.xlu0 %v2921, 64
      %v3008 = vpop.permute.xlu0 %3007
      %3009 = vrot.lane.b32.xlu0 %v2922, 64
      %v3010 = vpop.permute.xlu0 %3009
      %3011 = vrot.lane.b32.xlu0 %v2923, 64
      %v3012 = vpop.permute.xlu0 %3011
      %3013 = vrot.lane.b32.xlu0 %v2924, 64
      %v3014 = vpop.permute.xlu0 %3013
      %3015 = vrot.lane.b32.xlu0 %v2925, 64
      %v3016 = vpop.permute.xlu0 %3015
      %3017 = vrot.lane.b32.xlu0 %v2926, 64
      %v3018 = vpop.permute.xlu0 %3017
      %3019 = vrot.lane.b32.xlu0 %v2927, 64
      %v3020 = vpop.permute.xlu0 %3019
      %3021 = vrot.lane.b32.xlu0 %v2928, 64
      %v3022 = vpop.permute.xlu0 %3021
      %3023 = vrot.lane.b32.xlu0 %v2929, 64
      %v3024 = vpop.permute.xlu0 %3023
      %3025 = vrot.lane.b32.xlu0 %v2930, 64
      %v3026 = vpop.permute.xlu0 %3025
      %3059 = vrot.lane.b32.xlu0 %v2947, 64
      %v3060 = vpop.permute.xlu0 %3059
      %3061 = vrot.lane.b32.xlu0 %v2948, 64
      %v3062 = vpop.permute.xlu0 %3061
      %3063 = vrot.lane.b32.xlu0 %v2949, 64
      %v3064 = vpop.permute.xlu0 %3063
      %3065 = vrot.lane.b32.xlu0 %v2950, 64
      %v3066 = vpop.permute.xlu0 %3065
      %3067 = vrot.lane.b32.xlu0 %v2951, 64
      %v3068 = vpop.permute.xlu0 %3067
      %3069 = vrot.lane.b32.xlu0 %v2952, 64
      %v3070 = vpop.permute.xlu0 %3069
      %3071 = vrot.lane.b32.xlu0 %v2953, 64
      %v3072 = vpop.permute.xlu0 %3071
      %3073 = vrot.lane.b32.xlu0 %v2954, 64
      %v3074 = vpop.permute.xlu0 %3073
      %3075 = vrot.lane.b32.xlu0 %v2955, 64
      %v3076 = vpop.permute.xlu0 %3075
      %3077 = vrot.lane.b32.xlu0 %v2956, 64
      %v3078 = vpop.permute.xlu0 %3077
      %3079 = vrot.lane.b32.xlu0 %v2957, 64
      %v3080 = vpop.permute.xlu0 %3079
      %3081 = vrot.lane.b32.xlu0 %v2958, 64
      %v3082 = vpop.permute.xlu0 %3081
      %3083 = vrot.lane.b32.xlu0 %v2959, 64
      %v3084 = vpop.permute.xlu0 %3083
      %3085 = vrot.lane.b32.xlu0 %v2960, 64
      %v3086 = vpop.permute.xlu0 %3085
      %3087 = vrot.lane.b32.xlu0 %v2961, 64
      %v3088 = vpop.permute.xlu0 %3087
      %3089 = vrot.lane.b32.xlu0 %v2962, 64
      %v3090 = vpop.permute.xlu0 %3089
      %v3107 = vsel %vm435, %v2899, %v2996
      %v3108 = vsel %vm435, %v2900, %v2998
      %v3109 = vsel %vm435, %v2901, %v3000
      %v3110 = vsel %vm435, %v2902, %v3002
      %v3111 = vsel %vm435, %v2903, %v3004
      %v3112 = vsel %vm435, %v2904, %v3006
      %v3113 = vsel %vm435, %v2905, %v3008
      %v3114 = vsel %vm435, %v2906, %v3010
      %v3115 = vsel %vm435, %v2907, %v3012
      %v3116 = vsel %vm435, %v2908, %v3014
      %v3117 = vsel %vm435, %v2909, %v3016
      %v3118 = vsel %vm435, %v2910, %v3018
      %v3119 = vsel %vm435, %v2911, %v3020
      %v3120 = vsel %vm435, %v2912, %v3022
      %v3121 = vsel %vm435, %v2913, %v3024
      %v3122 = vsel %vm435, %v2914, %v3026
      %v3123 = vsel %vm435, %v2931, %v3060
      %v3124 = vsel %vm435, %v2932, %v3062
      %v3125 = vsel %vm435, %v2933, %v3064
      %v3126 = vsel %vm435, %v2934, %v3066
      %v3127 = vsel %vm435, %v2935, %v3068
      %v3128 = vsel %vm435, %v2936, %v3070
      %v3129 = vsel %vm435, %v2937, %v3072
      %v3130 = vsel %vm435, %v2938, %v3074
      %v3131 = vsel %vm435, %v2939, %v3076
      %v3132 = vsel %vm435, %v2940, %v3078
      %v3133 = vsel %vm435, %v2941, %v3080
      %v3134 = vsel %vm435, %v2942, %v3082
      %v3135 = vsel %vm435, %v2943, %v3084
      %v3136 = vsel %vm435, %v2944, %v3086
      %v3137 = vsel %vm435, %v2945, %v3088
      %v3138 = vsel %vm435, %v2946, %v3090
      %v3139 = vld [vmem:[#allocation2] sm:$0xff]
      %v3140 = vld [vmem:[#allocation2 + $0x8] sm:$0xff]
      %v3141 = vld [vmem:[#allocation2 + $0x10] sm:$0xff]
      %v3142 = vld [vmem:[#allocation2 + $0x18] sm:$0xff]
      %v3143 = vld [vmem:[#allocation2 + $0x20] sm:$0xff]
      %v3144 = vld [vmem:[#allocation2 + $0x28] sm:$0xff]
      %v3145 = vld [vmem:[#allocation2 + $0x30] sm:$0xff]
      %v3146 = vld [vmem:[#allocation2 + $0x38] sm:$0xff]
      %v3147 = vld [vmem:[#allocation2 + $0x40] sm:$0xff]
      %v3148 = vld [vmem:[#allocation2 + $0x48] sm:$0xff]
      %v3149 = vld [vmem:[#allocation2 + $0x50] sm:$0xff]
      %v3150 = vld [vmem:[#allocation2 + $0x58] sm:$0xff]
      %v3151 = vld [vmem:[#allocation2 + $0x60] sm:$0xff]
      %v3152 = vld [vmem:[#allocation2 + $0x68] sm:$0xff]
      %v3153 = vld [vmem:[#allocation2 + $0x70] sm:$0xff]
      %v3154 = vld [vmem:[#allocation2 + $0x78] sm:$0xff]
      %s3155 = scalar_lea.vmem %s1, 1280
      %v3156 = vld [vmem:[%s3155] sm:$0xff]
      %v3157 = vld [vmem:[%s3155 + $0x8] sm:$0xff]
      %v3158 = vld [vmem:[%s3155 + $0x10] sm:$0xff]
      %v3159 = vld [vmem:[%s3155 + $0x18] sm:$0xff]
      %v3160 = vld [vmem:[%s3155 + $0x20] sm:$0xff]
      %v3161 = vld [vmem:[%s3155 + $0x28] sm:$0xff]
      %v3162 = vld [vmem:[%s3155 + $0x30] sm:$0xff]
      %v3163 = vld [vmem:[%s3155 + $0x38] sm:$0xff]
      %v3164 = vld [vmem:[%s3155 + $0x40] sm:$0xff]
      %v3165 = vld [vmem:[%s3155 + $0x48] sm:$0xff]
      %v3166 = vld [vmem:[%s3155 + $0x50] sm:$0xff]
      %v3167 = vld [vmem:[%s3155 + $0x58] sm:$0xff]
      %v3168 = vld [vmem:[%s3155 + $0x60] sm:$0xff]
      %v3169 = vld [vmem:[%s3155 + $0x68] sm:$0xff]
      %v3170 = vld [vmem:[%s3155 + $0x70] sm:$0xff]
      %v3171 = vld [vmem:[%s3155 + $0x78] sm:$0xff]
      %v3172 = vld [vmem:[%s3155 + $0x80] sm:$0xff]
      %v3173 = vld [vmem:[%s3155 + $0x88] sm:$0xff]
      %v3174 = vld [vmem:[%s3155 + $0x90] sm:$0xff]
      %v3175 = vld [vmem:[%s3155 + $0x98] sm:$0xff]
      %v3176 = vld [vmem:[%s3155 + $0xa0] sm:$0xff]
      %v3177 = vld [vmem:[%s3155 + $0xa8] sm:$0xff]
      %v3178 = vld [vmem:[%s3155 + $0xb0] sm:$0xff]
      %v3179 = vld [vmem:[%s3155 + $0xb8] sm:$0xff]
      %v3180 = vld [vmem:[%s3155 + $0xc0] sm:$0xff]
      %v3181 = vld [vmem:[%s3155 + $0xc8] sm:$0xff]
      %v3182 = vld [vmem:[%s3155 + $0xd0] sm:$0xff]
      %v3183 = vld [vmem:[%s3155 + $0xd8] sm:$0xff]
      %v3184 = vld [vmem:[%s3155 + $0xe0] sm:$0xff]
      %v3185 = vld [vmem:[%s3155 + $0xe8] sm:$0xff]
      %v3186 = vld [vmem:[%s3155 + $0xf0] sm:$0xff]
      %v3187 = vld [vmem:[%s3155 + $0xf8] sm:$0xff]
      %v3188 = vld [vmem:[%s3155 + $0x100] sm:$0xff]
      %v3189 = vld [vmem:[%s3155 + $0x108] sm:$0xff]
      %v3190 = vld [vmem:[%s3155 + $0x110] sm:$0xff]
      %v3191 = vld [vmem:[%s3155 + $0x118] sm:$0xff]
      %v3192 = vld [vmem:[%s3155 + $0x120] sm:$0xff]
      %v3193 = vld [vmem:[%s3155 + $0x128] sm:$0xff]
      %v3194 = vld [vmem:[%s3155 + $0x130] sm:$0xff]
      %v3195 = vld [vmem:[%s3155 + $0x138] sm:$0xff]
      %v3197 = vsel %vm435, %v2963, 0
      %v3200 = vsel %vm435, %v2964, 0
      %v3203 = vsel %vm435, %v2965, 0
      %v3206 = vsel %vm435, %v2966, 0
      %v3209 = vsel %vm435, %v2967, 0
      %v3212 = vsel %vm435, %v2968, 0
      %v3215 = vsel %vm435, %v2969, 0
      %v3218 = vsel %vm435, %v2970, 0
      %v3221 = vsel %vm435, %v2971, 0
      %v3224 = vsel %vm435, %v2972, 0
      %v3227 = vsel %vm435, %v2973, 0
      %v3230 = vsel %vm435, %v2974, 0
      %v3233 = vsel %vm435, %v2975, 0
      %v3236 = vsel %vm435, %v2976, 0
      %v3239 = vsel %vm435, %v2977, 0
      %v3242 = vsel %vm435, %v2978, 0
      %3244 = vmatprep.subr.mxu0 0.0
      %3245 = vmatpush1.msra.mxu0 %v3156
      %3246 = vmatprep.subr.mxu0 0.0
      %3247 = vmatpush1.msra.mxu0 %v3157
      %3248 = vmatprep.subr.mxu0 0.0
      %3249 = vmatpush1.msra.mxu0 %v3158
      %3250 = vmatprep.subr.mxu0 0.0
      %3251 = vmatpush1.msra.mxu0 %v3159
      %3252 = vmatprep.subr.mxu0 0.0
      %3253 = vmatpush1.msra.mxu0 %v3160
      %3254 = vmatprep.subr.mxu0 0.0
      %3255 = vmatpush1.msra.mxu0 %v3161
      %3256 = vmatprep.subr.mxu0 0.0
      %3257 = vmatpush1.msra.mxu0 %v3162
      %3258 = vmatprep.subr.mxu0 0.0
      %3259 = vmatpush1.msra.mxu0 %v3163
      %3260 = vmatprep.subr.mxu0 0.0
      %3261 = vmatpush1.msra.mxu0 %v3164
      %3262 = vmatprep.subr.mxu0 0.0
      %3263 = vmatpush1.msra.mxu0 %v3165
      %3264 = vmatprep.subr.mxu0 0.0
      %3265 = vmatpush1.msra.mxu0 %v3166
      %3266 = vmatprep.subr.mxu0 0.0
      %3267 = vmatpush1.msra.mxu0 %v3167
      %3268 = vmatprep.subr.mxu0 0.0
      %3269 = vmatpush1.msra.mxu0 %v3168
      %3270 = vmatprep.subr.mxu0 0.0
      %3271 = vmatpush1.msra.mxu0 %v3169
      %3272 = vmatprep.subr.mxu0 0.0
      %3273 = vmatpush1.msra.mxu0 %v3170
      %3274 = vmatprep.subr.mxu0 0.0
      %3275 = vmatpush1.msra.mxu0 %v3171
      %3276 = vmatprep.subr.mxu0 0.0
      %3277 = vmatpush1.msra.mxu0 %v3172
      %3278 = vmatprep.subr.mxu0 0.0
      %3279 = vmatpush1.msra.mxu0 %v3173
      %3280 = vmatprep.subr.mxu0 0.0
      %3281 = vmatpush1.msra.mxu0 %v3174
      %3282 = vmatprep.subr.mxu0 0.0
      %3283 = vmatpush1.msra.mxu0 %v3175
      %3284 = vmatprep.subr.mxu0 0.0
      %3285 = vmatpush1.msra.mxu0 %v3176
      %3286 = vmatprep.subr.mxu0 0.0
      %3287 = vmatpush1.msra.mxu0 %v3177
      %3288 = vmatprep.subr.mxu0 0.0
      %3289 = vmatpush1.msra.mxu0 %v3178
      %3290 = vmatprep.subr.mxu0 0.0
      %3291 = vmatpush1.msra.mxu0 %v3179
      %3292 = vmatprep.subr.mxu0 0.0
      %3293 = vmatpush1.msra.mxu0 %v3180
      %3294 = vmatprep.subr.mxu0 0.0
      %3295 = vmatpush1.msra.mxu0 %v3181
      %3296 = vmatprep.subr.mxu0 0.0
      %3297 = vmatpush1.msra.mxu0 %v3182
      %3298 = vmatprep.subr.mxu0 0.0
      %3299 = vmatpush1.msra.mxu0 %v3183
      %3300 = vmatprep.subr.mxu0 0.0
      %3301 = vmatpush1.msra.mxu0 %v3184
      %3302 = vmatprep.subr.mxu0 0.0
      %3303 = vmatpush1.msra.mxu0 %v3185
      %3304 = vmatprep.subr.mxu0 0.0
      %3305 = vmatpush1.msra.mxu0 %v3186
      %3306 = vmatprep.subr.mxu0 0.0
      %3307 = vmatpush1.msra.mxu0 %v3187
      %3308 = vmatprep.mubr.f32.mxu0 %v3123
      %3309 = vmatmul.mubr.f32.gmra.mrb[0].mxu0 %v3107
      %v3310 = vpop.f32.mrb[0].mxu0
      %v3311 = vadd.f32 0.0, %v3310
      %v3312 = vpop.f32.mrb[0].mxu0
      %3313 = vmatprep.mubr.f32.mxu0 %v3124
      %3314 = vmatmul.mubr.f32.gmra.mrb[0].mxu0 %v3108
      %v3315 = vpop.f32.mrb[0].mxu0
      %v3316 = vadd.f32 0.0, %v3315
      %v3317 = vpop.f32.mrb[0].mxu0
      %3318 = vmatprep.mubr.f32.mxu0 %v3125
      %3319 = vmatmul.mubr.f32.gmra.mrb[0].mxu0 %v3109
      %v3320 = vpop.f32.mrb[0].mxu0
      %v3321 = vadd.f32 0.0, %v3320
      %v3322 = vpop.f32.mrb[0].mxu0
      %3323 = vmatprep.mubr.f32.mxu0 %v3126
      %3324 = vmatmul.mubr.f32.gmra.mrb[0].mxu0 %v3110
      %v3325 = vpop.f32.mrb[0].mxu0
      %v3326 = vadd.f32 0.0, %v3325
      %v3327 = vpop.f32.mrb[0].mxu0
      %3328 = vmatprep.mubr.f32.mxu0 %v3127
      %3329 = vmatmul.mubr.f32.gmra.mrb[0].mxu0 %v3111
      %v3330 = vpop.f32.mrb[0].mxu0
      %v3331 = vadd.f32 0.0, %v3330
      %v3332 = vpop.f32.mrb[0].mxu0
      %3333 = vmatprep.mubr.f32.mxu0 %v3128
      %3334 = vmatmul.mubr.f32.gmra.mrb[0].mxu0 %v3112
      %v3335 = vpop.f32.mrb[0].mxu0
      %v3336 = vadd.f32 0.0, %v3335
      %v3337 = vpop.f32.mrb[0].mxu0
      %3338 = vmatprep.mubr.f32.mxu0 %v3129
      %3339 = vmatmul.mubr.f32.gmra.mrb[0].mxu0 %v3113
      %v3340 = vpop.f32.mrb[0].mxu0
      %v3341 = vadd.f32 0.0, %v3340
      %v3342 = vpop.f32.mrb[0].mxu0
      %3343 = vmatprep.mubr.f32.mxu0 %v3130
      %3344 = vmatmul.mubr.f32.gmra.mrb[0].mxu0 %v3114
      %v3345 = vpop.f32.mrb[0].mxu0
      %v3346 = vadd.f32 0.0, %v3345
      %v3347 = vpop.f32.mrb[0].mxu0
      %3348 = vmatprep.mubr.f32.mxu0 %v3131
      %3349 = vmatmul.mubr.f32.gmra.mrb[0].mxu0 %v3115
      %v3350 = vpop.f32.mrb[0].mxu0
      %v3351 = vadd.f32 0.0, %v3350
      %v3352 = vpop.f32.mrb[0].mxu0
      %3353 = vmatprep.mubr.f32.mxu0 %v3132
      %3354 = vmatmul.mubr.f32.gmra.mrb[0].mxu0 %v3116
      %v3355 = vpop.f32.mrb[0].mxu0
      %v3356 = vadd.f32 0.0, %v3355
      %v3357 = vpop.f32.mrb[0].mxu0
      %3358 = vmatprep.mubr.f32.mxu0 %v3133
      %3359 = vmatmul.mubr.f32.gmra.mrb[0].mxu0 %v3117
      %v3360 = vpop.f32.mrb[0].mxu0
      %v3361 = vadd.f32 0.0, %v3360
      %v3362 = vpop.f32.mrb[0].mxu0
      %3363 = vmatprep.mubr.f32.mxu0 %v3134
      %3364 = vmatmul.mubr.f32.gmra.mrb[0].mxu0 %v3118
      %v3365 = vpop.f32.mrb[0].mxu0
      %v3366 = vadd.f32 0.0, %v3365
      %v3367 = vpop.f32.mrb[0].mxu0
      %3368 = vmatprep.mubr.f32.mxu0 %v3135
      %3369 = vmatmul.mubr.f32.gmra.mrb[0].mxu0 %v3119
      %v3370 = vpop.f32.mrb[0].mxu0
      %v3371 = vadd.f32 0.0, %v3370
      %v3372 = vpop.f32.mrb[0].mxu0
      %3373 = vmatprep.mubr.f32.mxu0 %v3136
      %3374 = vmatmul.mubr.f32.gmra.mrb[0].mxu0 %v3120
      %v3375 = vpop.f32.mrb[0].mxu0
      %v3376 = vadd.f32 0.0, %v3375
      %v3377 = vpop.f32.mrb[0].mxu0
      %3378 = vmatprep.mubr.f32.mxu0 %v3137
      %3379 = vmatmul.mubr.f32.gmra.mrb[0].mxu0 %v3121
      %v3380 = vpop.f32.mrb[0].mxu0
      %v3381 = vadd.f32 0.0, %v3380
      %v3382 = vpop.f32.mrb[0].mxu0
      %3383 = vmatprep.mubr.f32.mxu0 %v3138
      %3384 = vmatmul.mubr.f32.gmra.mrb[0].mxu0 %v3122
      %v3385 = vpop.f32.mrb[0].mxu0
      %v3386 = vadd.f32 0.0, %v3385
      %v3387 = vpop.f32.mrb[0].mxu0
      %3388 = vdwg.mxu0
      %3389 = vmatprep.subr.mxu0 0.0
      %3390 = vmatpush1.msra.mxu0 %v3188
      %3391 = vmatprep.subr.mxu0 0.0
      %3392 = vmatpush1.msra.mxu0 %v3189
      %3393 = vmatprep.subr.mxu0 0.0
      %3394 = vmatpush1.msra.mxu0 %v3190
      %3395 = vmatprep.subr.mxu0 0.0
      %3396 = vmatpush1.msra.mxu0 %v3191
      %3397 = vmatprep.subr.mxu0 0.0
      %3398 = vmatpush1.msra.mxu0 %v3192
      %3399 = vmatprep.subr.mxu0 0.0
      %3400 = vmatpush1.msra.mxu0 %v3193
      %3401 = vmatprep.subr.mxu0 0.0
      %3402 = vmatpush1.msra.mxu0 %v3194
      %3403 = vmatprep.subr.mxu0 0.0
      %3404 = vmatpush1.msra.mxu0 %v3195
      %3405 = vmatprep.subr.mxu0 0.0
      %3406 = vmatpush1.msra.mxu0 0.0
      %3407 = vmatprep.subr.mxu0 0.0
      %3408 = vmatpush1.msra.mxu0 0.0
      %3409 = vmatprep.subr.mxu0 0.0
      %3410 = vmatpush1.msra.mxu0 0.0
      %3411 = vmatprep.subr.mxu0 0.0
      %3412 = vmatpush1.msra.mxu0 0.0
      %3413 = vmatprep.subr.mxu0 0.0
      %3414 = vmatpush1.msra.mxu0 0.0
      %3415 = vmatprep.subr.mxu0 0.0
      %3416 = vmatpush1.msra.mxu0 0.0
      %3417 = vmatprep.subr.mxu0 0.0
      %3418 = vmatpush1.msra.mxu0 0.0
      %3419 = vmatprep.subr.mxu0 0.0
      %3420 = vmatpush1.msra.mxu0 0.0
      %3421 = vmatprep.subr.mxu0 0.0
      %3422 = vmatpush1.msra.mxu0 0.0
      %3423 = vmatprep.subr.mxu0 0.0
      %3424 = vmatpush1.msra.mxu0 0.0
      %3425 = vmatprep.subr.mxu0 0.0
      %3426 = vmatpush1.msra.mxu0 0.0
      %3427 = vmatprep.subr.mxu0 0.0
      %3428 = vmatpush1.msra.mxu0 0.0
      %3429 = vmatprep.subr.mxu0 0.0
      %3430 = vmatpush1.msra.mxu0 0.0
      %3431 = vmatprep.subr.mxu0 0.0
      %3432 = vmatpush1.msra.mxu0 0.0
      %3433 = vmatprep.subr.mxu0 0.0
      %3434 = vmatpush1.msra.mxu0 0.0
      %3435 = vmatprep.subr.mxu0 0.0
      %3436 = vmatpush1.msra.mxu0 0.0
      %3437 = vmatprep.subr.mxu0 0.0
      %3438 = vmatpush1.msra.mxu0 0.0
      %3439 = vmatprep.subr.mxu0 0.0
      %3440 = vmatpush1.msra.mxu0 0.0
      %3441 = vmatprep.subr.mxu0 0.0
      %3442 = vmatpush1.msra.mxu0 0.0
      %3443 = vmatprep.subr.mxu0 0.0
      %3444 = vmatpush1.msra.mxu0 0.0
      %3445 = vmatprep.subr.mxu0 0.0
      %3446 = vmatpush1.msra.mxu0 0.0
      %3447 = vmatprep.subr.mxu0 0.0
      %3448 = vmatpush1.msra.mxu0 0.0
      %3449 = vmatprep.subr.mxu0 0.0
      %3450 = vmatpush1.msra.mxu0 0.0
      %3451 = vmatprep.subr.mxu0 0.0
      %3452 = vmatpush1.msra.mxu0 0.0
      %3453 = vmatprep.mubr.f32.mxu0 0.0
      %3454 = vmatmul.mubr.f32.gmra.mrb[0].mxu0 %v3197
      %v3455 = vpop.f32.mrb[0].mxu0
      %v3456 = vadd.f32 %v3311, %v3455
      %v3457 = vpop.f32.mrb[0].mxu0
      %3458 = vmatprep.mubr.f32.mxu0 0.0
      %3459 = vmatmul.mubr.f32.gmra.mrb[0].mxu0 %v3200
      %v3460 = vpop.f32.mrb[0].mxu0
      %v3461 = vadd.f32 %v3316, %v3460
      %v3462 = vpop.f32.mrb[0].mxu0
      %3463 = vmatprep.mubr.f32.mxu0 0.0
      %3464 = vmatmul.mubr.f32.gmra.mrb[0].mxu0 %v3203
      %v3465 = vpop.f32.mrb[0].mxu0
      %v3466 = vadd.f32 %v3321, %v3465
      %v3467 = vpop.f32.mrb[0].mxu0
      %3468 = vmatprep.mubr.f32.mxu0 0.0
      %3469 = vmatmul.mubr.f32.gmra.mrb[0].mxu0 %v3206
      %v3470 = vpop.f32.mrb[0].mxu0
      %v3471 = vadd.f32 %v3326, %v3470
      %v3472 = vpop.f32.mrb[0].mxu0
      %3473 = vmatprep.mubr.f32.mxu0 0.0
      %3474 = vmatmul.mubr.f32.gmra.mrb[0].mxu0 %v3209
      %v3475 = vpop.f32.mrb[0].mxu0
      %v3476 = vadd.f32 %v3331, %v3475
      %v3477 = vpop.f32.mrb[0].mxu0
      %3478 = vmatprep.mubr.f32.mxu0 0.0
      %3479 = vmatmul.mubr.f32.gmra.mrb[0].mxu0 %v3212
      %v3480 = vpop.f32.mrb[0].mxu0
      %v3481 = vadd.f32 %v3336, %v3480
      %v3482 = vpop.f32.mrb[0].mxu0
      %3483 = vmatprep.mubr.f32.mxu0 0.0
      %3484 = vmatmul.mubr.f32.gmra.mrb[0].mxu0 %v3215
      %v3485 = vpop.f32.mrb[0].mxu0
      %v3486 = vadd.f32 %v3341, %v3485
      %v3487 = vpop.f32.mrb[0].mxu0
      %3488 = vmatprep.mubr.f32.mxu0 0.0
      %3489 = vmatmul.mubr.f32.gmra.mrb[0].mxu0 %v3218
      %v3490 = vpop.f32.mrb[0].mxu0
      %v3491 = vadd.f32 %v3346, %v3490
      %v3492 = vpop.f32.mrb[0].mxu0
      %3493 = vmatprep.mubr.f32.mxu0 0.0
      %3494 = vmatmul.mubr.f32.gmra.mrb[0].mxu0 %v3221
      %v3495 = vpop.f32.mrb[0].mxu0
      %v3496 = vadd.f32 %v3351, %v3495
      %v3497 = vpop.f32.mrb[0].mxu0
      %3498 = vmatprep.mubr.f32.mxu0 0.0
      %3499 = vmatmul.mubr.f32.gmra.mrb[0].mxu0 %v3224
      %v3500 = vpop.f32.mrb[0].mxu0
      %v3501 = vadd.f32 %v3356, %v3500
      %v3502 = vpop.f32.mrb[0].mxu0
      %3503 = vmatprep.mubr.f32.mxu0 0.0
      %3504 = vmatmul.mubr.f32.gmra.mrb[0].mxu0 %v3227
      %v3505 = vpop.f32.mrb[0].mxu0
      %v3506 = vadd.f32 %v3361, %v3505
      %v3507 = vpop.f32.mrb[0].mxu0
      %3508 = vmatprep.mubr.f32.mxu0 0.0
      %3509 = vmatmul.mubr.f32.gmra.mrb[0].mxu0 %v3230
      %v3510 = vpop.f32.mrb[0].mxu0
      %v3511 = vadd.f32 %v3366, %v3510
      %v3512 = vpop.f32.mrb[0].mxu0
      %3513 = vmatprep.mubr.f32.mxu0 0.0
      %3514 = vmatmul.mubr.f32.gmra.mrb[0].mxu0 %v3233
      %v3515 = vpop.f32.mrb[0].mxu0
      %v3516 = vadd.f32 %v3371, %v3515
      %v3517 = vpop.f32.mrb[0].mxu0
      %3518 = vmatprep.mubr.f32.mxu0 0.0
      %3519 = vmatmul.mubr.f32.gmra.mrb[0].mxu0 %v3236
      %v3520 = vpop.f32.mrb[0].mxu0
      %v3521 = vadd.f32 %v3376, %v3520
      %v3522 = vpop.f32.mrb[0].mxu0
      %3523 = vmatprep.mubr.f32.mxu0 0.0
      %3524 = vmatmul.mubr.f32.gmra.mrb[0].mxu0 %v3239
      %v3525 = vpop.f32.mrb[0].mxu0
      %v3526 = vadd.f32 %v3381, %v3525
      %v3527 = vpop.f32.mrb[0].mxu0
      %3528 = vmatprep.mubr.f32.mxu0 0.0
      %3529 = vmatmul.mubr.f32.gmra.mrb[0].mxu0 %v3242
      %v3530 = vpop.f32.mrb[0].mxu0
      %v3531 = vadd.f32 %v3386, %v3530
      %v3532 = vpop.f32.mrb[0].mxu0
      %3533 = vdwg.mxu0
      %v3534 = vadd.f32 %v3139, %v3456
      %v3535 = vadd.f32 %v3140, %v3461
      %v3536 = vadd.f32 %v3141, %v3466
      %v3537 = vadd.f32 %v3142, %v3471
      %v3538 = vadd.f32 %v3143, %v3476
      %v3539 = vadd.f32 %v3144, %v3481
      %v3540 = vadd.f32 %v3145, %v3486
      %v3541 = vadd.f32 %v3146, %v3491
      %v3542 = vadd.f32 %v3147, %v3496
      %v3543 = vadd.f32 %v3148, %v3501
      %v3544 = vadd.f32 %v3149, %v3506
      %v3545 = vadd.f32 %v3150, %v3511
      %v3546 = vadd.f32 %v3151, %v3516
      %v3547 = vadd.f32 %v3152, %v3521
      %v3548 = vadd.f32 %v3153, %v3526
      %v3549 = vadd.f32 %v3154, %v3531
      %3550 = vst.msk [vmem:[#allocation2] sm:$0xff] %vm210, %v3534
      %3551 = vst.msk [vmem:[#allocation2 + $0x8] sm:$0xff] %vm210, %v3535
      %3552 = vst.msk [vmem:[#allocation2 + $0x10] sm:$0xff] %vm210, %v3536
      %3553 = vst.msk [vmem:[#allocation2 + $0x18] sm:$0xff] %vm210, %v3537
      %3554 = vst.msk [vmem:[#allocation2 + $0x20] sm:$0xff] %vm210, %v3538
      %3555 = vst.msk [vmem:[#allocation2 + $0x28] sm:$0xff] %vm210, %v3539
      %3556 = vst.msk [vmem:[#allocation2 + $0x30] sm:$0xff] %vm210, %v3540
      %3557 = vst.msk [vmem:[#allocation2 + $0x38] sm:$0xff] %vm210, %v3541
      %3558 = vst.msk [vmem:[#allocation2 + $0x40] sm:$0xff] %vm210, %v3542
      %3559 = vst.msk [vmem:[#allocation2 + $0x48] sm:$0xff] %vm210, %v3543
      %3560 = vst.msk [vmem:[#allocation2 + $0x50] sm:$0xff] %vm210, %v3544
      %3561 = vst.msk [vmem:[#allocation2 + $0x58] sm:$0xff] %vm210, %v3545
      %3562 = vst.msk [vmem:[#allocation2 + $0x60] sm:$0xff] %vm210, %v3546
      %3563 = vst.msk [vmem:[#allocation2 + $0x68] sm:$0xff] %vm210, %v3547
      %3564 = vst.msk [vmem:[#allocation2 + $0x70] sm:$0xff] %vm210, %v3548
      %3565 = vst.msk [vmem:[#allocation2 + $0x78] sm:$0xff] %vm210, %v3549
      %v3566 = vld [vmem:[#allocation2] sm:$0xff]
      %v3567 = vld [vmem:[#allocation2 + $0x8] sm:$0xff]
      %v3568 = vld [vmem:[#allocation2 + $0x10] sm:$0xff]
      %v3569 = vld [vmem:[#allocation2 + $0x18] sm:$0xff]
      %v3570 = vld [vmem:[#allocation2 + $0x20] sm:$0xff]
      %v3571 = vld [vmem:[#allocation2 + $0x28] sm:$0xff]
      %v3572 = vld [vmem:[#allocation2 + $0x30] sm:$0xff]
      %v3573 = vld [vmem:[#allocation2 + $0x38] sm:$0xff]
      %v3574 = vld [vmem:[#allocation2 + $0x40] sm:$0xff]
      %v3575 = vld [vmem:[#allocation2 + $0x48] sm:$0xff]
      %v3576 = vld [vmem:[#allocation2 + $0x50] sm:$0xff]
      %v3577 = vld [vmem:[#allocation2 + $0x58] sm:$0xff]
      %v3578 = vld [vmem:[#allocation2 + $0x60] sm:$0xff]
      %v3579 = vld [vmem:[#allocation2 + $0x68] sm:$0xff]
      %v3580 = vld [vmem:[#allocation2 + $0x70] sm:$0xff]
      %v3581 = vld [vmem:[#allocation2 + $0x78] sm:$0xff]
      %v3582 = vld [vmem:[%s2] sm:$0x1]
      %v3584 = vlaneseq
      %v3585 = vshrl.u32 %v3584, 7
      %v3586 = vsub.s32 0, %v3585
      %v3587 = vrot.slane %v3582, %v3586
      %v3589 = vadd.f32 %v3566, %v3587
      %v3590 = vadd.f32 %v3567, %v3587
      %v3591 = vadd.f32 %v3568, %v3587
      %v3592 = vadd.f32 %v3569, %v3587
      %v3593 = vadd.f32 %v3570, %v3587
      %v3594 = vadd.f32 %v3571, %v3587
      %v3595 = vadd.f32 %v3572, %v3587
      %v3596 = vadd.f32 %v3573, %v3587
      %v3597 = vadd.f32 %v3574, %v3587
      %v3598 = vadd.f32 %v3575, %v3587
      %v3599 = vadd.f32 %v3576, %v3587
      %v3600 = vadd.f32 %v3577, %v3587
      %v3601 = vadd.f32 %v3578, %v3587
      %v3602 = vadd.f32 %v3579, %v3587
      %v3603 = vadd.f32 %v3580, %v3587
      %v3604 = vadd.f32 %v3581, %v3587
      %v3605 = vmax.f32 %v3589, 0.0
      %v3606 = vmax.f32 %v3590, 0.0
      %v3607 = vmax.f32 %v3591, 0.0
      %v3608 = vmax.f32 %v3592, 0.0
      %v3609 = vmax.f32 %v3593, 0.0
      %v3610 = vmax.f32 %v3594, 0.0
      %v3611 = vmax.f32 %v3595, 0.0
      %v3612 = vmax.f32 %v3596, 0.0
      %v3613 = vmax.f32 %v3597, 0.0
      %v3614 = vmax.f32 %v3598, 0.0
      %v3615 = vmax.f32 %v3599, 0.0
      %v3616 = vmax.f32 %v3600, 0.0
      %v3617 = vmax.f32 %v3601, 0.0
      %v3618 = vmax.f32 %v3602, 0.0
      %v3619 = vmax.f32 %v3603, 0.0
      %v3620 = vmax.f32 %v3604, 0.0
      %3621 = vst.msk [vmem:[%s208] sm:$0xff] %vm210, %v3605
      %3622 = vst.msk [vmem:[%s208 + $0x8] sm:$0xff] %vm210, %v3606
      %3623 = vst.msk [vmem:[%s208 + $0x10] sm:$0xff] %vm210, %v3607
      %3624 = vst.msk [vmem:[%s208 + $0x18] sm:$0xff] %vm210, %v3608
      %3625 = vst.msk [vmem:[%s208 + $0x20] sm:$0xff] %vm210, %v3609
      %3626 = vst.msk [vmem:[%s208 + $0x28] sm:$0xff] %vm210, %v3610
      %3627 = vst.msk [vmem:[%s208 + $0x30] sm:$0xff] %vm210, %v3611
      %3628 = vst.msk [vmem:[%s208 + $0x38] sm:$0xff] %vm210, %v3612
      %3629 = vst.msk [vmem:[%s208 + $0x40] sm:$0xff] %vm210, %v3613
      %3630 = vst.msk [vmem:[%s208 + $0x48] sm:$0xff] %vm210, %v3614
      %3631 = vst.msk [vmem:[%s208 + $0x50] sm:$0xff] %vm210, %v3615
      %3632 = vst.msk [vmem:[%s208 + $0x58] sm:$0xff] %vm210, %v3616
      %3633 = vst.msk [vmem:[%s208 + $0x60] sm:$0xff] %vm210, %v3617
      %3634 = vst.msk [vmem:[%s208 + $0x68] sm:$0xff] %vm210, %v3618
      %3635 = vst.msk [vmem:[%s208 + $0x70] sm:$0xff] %vm210, %v3619
      %3636 = vst.msk [vmem:[%s208 + $0x78] sm:$0xff] %vm210, %v3620
      %s3637 = smul.u32 8, %s19
      %p3638 = scmp.lt.s32.totalorder %s18, 1
      %s3639 = scalar_select %p3638, %s18, 1
      %p3640 = scmp.lt.s32.totalorder %s3637, 15
      %s3641 = scalar_select %p3640, %s3637, 15
      %s3642 = smul.addr %s3641, 2
      %s3643 = smul.addr %s3639, 32
      %s3644 = sadd.s32 %s3642, %s3643
      %s3645 = smul.addr %s3644, 8
      %s3646 = scalar_lea.vmem %s3, %s3645
      // Predicated region
      $region33: #{srcnn_forward.4} parent=31 // pred_check
        %p3647 = pneg %p116
      $region34: #{srcnn_forward.4} parent=31 // pred_check_branch
        %3649 = sbr.rel (%p3647) target = $region36
      $region35: #{srcnn_forward.4} parent=31 // pred_region
        %s3650 = smul.u32 8, %s19
      $region36: #{srcnn_forward.4} parent=31 // pred_fallthru
        _
    $region32: #{srcnn_forward.4} parent=5 // pred_fallthru
      _
    %p3651 = scmp.le.s32.totalorder 2, %s9
    // Predicated region
    $region37: #{srcnn_forward.4} parent=5 // pred_check
      %p3652 = pneg %p3651
    $region38: #{srcnn_forward.4} parent=5 // pred_check_branch
      %3654 = sbr.rel (%p3652) target = $region40
    $region39: #{srcnn_forward.4} parent=5 // pred_region
      %s3655 = ssub.s32 %s9, 2
      // Predicated region
      $region41: #{srcnn_forward.4} parent=39 // pred_check
        %p3656 = pneg %p122
      $region42: #{srcnn_forward.4} parent=39 // pred_check_branch
        %3658 = sbr.rel (%p3656) target = $region44
      $region43: #{srcnn_forward.4} parent=39 // pred_region
        %s3659 = smul.u32 8, %s21
        %p3660 = scmp.lt.s32.totalorder %s20, 1
        %s3661 = scalar_select %p3660, %s20, 1
        %p3662 = scmp.lt.s32.totalorder %s3659, 15
        %s3663 = scalar_select %p3662, %s3659, 15
        %s3664 = smul.addr %s3663, 2
        %s3665 = smul.addr %s3661, 32
        %s3666 = sadd.s32 %s3664, %s3665
        %s3667 = smul.addr %s3666, 8
        %s3668 = scalar_lea.vmem %s3, %s3667
      $region44: #{srcnn_forward.4} parent=39 // pred_fallthru
        _
    $region40: #{srcnn_forward.4} parent=5 // pred_fallthru
      _
  $region6: #{srcnn_forward.4} parent=0 // loop_footer
    %s13 = sadd.s32 1, %s9
  $region7: #{srcnn_forward.4} parent=0 // loop_footer_branch
    %8 = sbr.rel target = $region3
  $region8: #{srcnn_forward.4} parent=0 // loop_exit
    _

// kernel: srcnn_forward.5
$region0: #{srcnn_forward.5}
  #allocation0 [shape = 'u32[]', space=smem, size = 0x4, offset = 0x4, fixed_abs, tag = 'smem constant byte address 0x4 - core index']
  #allocation1 [shape = 'u32[144,128]{1,0:T(1,128)}', space=vmem, size = 0x12000, scoped, tag = 'internal scratch']
  #allocation2 [shape = 'f32[1,1,1,1]{3,2,1,0:T(1,128)S(1)}', space=vmem, size = 0x200, scoped, tag = 'scoped memory for srcnn_forward.5']
  %s0 = inlined_call_operand.vmem [shape: f32[2,2,12,20,32], index: 0, kind: input, shape index: {}]
  %s1 = inlined_call_operand.vmem [shape: f32[1,5,5,32], index: 1, kind: input, shape index: {}]
  %s2 = inlined_call_operand.<no memory space> [shape: f32[1,1,1,1], index: 2, kind: input, shape index: {}]
  %s3 = inlined_call_operand.hbm [shape: f32[2,1,16,16], index: 3, kind: output, shape index: {}]
  %s4 = sld [smem:[#allocation0]]
  $region45: #{srcnn_forward.5} parent=0
    _
  %s6 = ssub.s32 1, %s4
  %s7 = scalar_select 0, %s6, %s4
  %v8 = vstv %s2
  %9 = vst [vmem:[#allocation2] sm:$0x1] %v8
  $region1: #{srcnn_forward.5} parent=0
    #allocation3 [shape = 'u8[8192]{0}', space=vmem, size = 0x2000, scoped, tag = 'output window, operand 0']
    #allocation4 [shape = 's32[2]{0}', space=sflag, size = 0x8, scoped, tag = 'scoped memory for srcnn_forward.5']
    %10 = vsyncpa [#allocation4], 0
    %s11 = scalar_lea.sflag [#allocation4], 1
    %12 = vsyncpa %s11, 0
    loop: start=0, step=1, limit=6
    $region2: #{srcnn_forward.5} parent=1 // loop_pre_header
      _
    $region3: #{srcnn_forward.5} parent=1 // loop_header
      %s14 = sphi 0, %s18
      %p15 = scmp.ge.s32.totalorder %s14, 6
      %s21 = sphi 0, %s33
      %s22 = sphi 0, %s29
      %s23 = sphi 0, %s21
      %s24 = sphi 0, %s22
      %s25 = sphi 0, %s23
      %s26 = sphi 0, %s24
      %s38 = sphi 0, %s40
      %s41 = sphi 0, %s38
      %s42 = sphi 0, %s41
      %s58 = sphi 0, %s42
      %s62 = sphi 0, %s62
      %s64 = sphi 0, %s62
      %s65 = sphi 0, %s64
      %s79 = sphi 0, %s65
      %s83 = sphi 0, %s83
      %s85 = sphi 0, %s83
      %s86 = sphi 0, %s85
      %s100 = sphi 0, %s86
      %s108 = sphi 0, %s110
      %s111 = sphi 0, %s108
      %s112 = sphi 0, %s111
      %s128 = sphi 0, %s112
    $region4: #{srcnn_forward.5} parent=1 // loop_header_branch
      %17 = sbr.rel (%p15) target = $region8
    $region5: #{srcnn_forward.5} parent=1 // loop_body
      %s19 = ssub.s32 %s14, 1
      %s20 = ssub.s32 %s14, 2
      %s27 = sadd.s32 1, %s22
      %p28 = scmp.ge.s32.totalorder %s27, 2
      %s29 = scalar_select %p28, 0, %s27
      %s30 = sadd.s32 1, %s21
      %s31 = scalar_select %p28, %s30, %s21
      %p32 = scmp.ge.s32.totalorder %s31, 2
      %s33 = scalar_select %p32, 0, %s31
      %s34 = ssub.s32 %s21, %s33
      %s35 = ssub.s32 %s22, %s29
      %s36 = sor.u32 %s34, %s35
      %p37 = scmp.eq.s32.totalorder %s36, 0
      %s39 = sadd.s32 %s38, 1
      %s40 = scalar_select %p37, %s38, %s39
      %p43 = pneg %p37
      %p44 = scmp.eq.s32.totalorder %s14, 3
      %p45 = por %p43, %p44
      %p46 = scmp.ne.s32.totalorder %s38, %s41
      %p47 = scmp.eq.s32.totalorder %s14, 0
      %p48 = por %p46, %p47
      %p49 = scmp.ne.s32.totalorder %s38, %s41
      %p50 = scmp.eq.s32.totalorder %s19, 3
      %p51 = por %p49, %p50
      %p52 = scmp.ne.s32.totalorder %s41, %s42
      %p53 = scmp.eq.s32.totalorder %s19, 0
      %p54 = por %p52, %p53
      %p55 = scmp.ne.s32.totalorder %s41, %s42
      %p56 = scmp.eq.s32.totalorder %s20, 3
      %p57 = por %p55, %p56
      %p59 = scmp.ne.s32.totalorder %s42, %s58
      %p60 = scmp.eq.s32.totalorder %s20, 0
      %p61 = por %p59, %p60
      %s63 = sadd.s32 %s62, 1
      %p66 = scmp.eq.s32.totalorder %s14, 3
      %p67 = scmp.ne.s32.totalorder %s62, %s64
      %p68 = scmp.eq.s32.totalorder %s14, 0
      %p69 = por %p67, %p68
      %p70 = scmp.ne.s32.totalorder %s62, %s64
      %p71 = scmp.eq.s32.totalorder %s19, 3
      %p72 = por %p70, %p71
      %p73 = scmp.ne.s32.totalorder %s64, %s65
      %p74 = scmp.eq.s32.totalorder %s19, 0
      %p75 = por %p73, %p74
      %p76 = scmp.ne.s32.totalorder %s64, %s65
      %p77 = scmp.eq.s32.totalorder %s20, 3
      %p78 = por %p76, %p77
      %p80 = scmp.ne.s32.totalorder %s65, %s79
      %p81 = scmp.eq.s32.totalorder %s20, 0
      %p82 = por %p80, %p81
      %s84 = sadd.s32 %s83, 1
      %p87 = scmp.eq.s32.totalorder %s14, 3
      %p88 = scmp.ne.s32.totalorder %s83, %s85
      %p89 = scmp.eq.s32.totalorder %s14, 0
      %p90 = por %p88, %p89
      %p91 = scmp.ne.s32.totalorder %s83, %s85
      %p92 = scmp.eq.s32.totalorder %s19, 3
      %p93 = por %p91, %p92
      %p94 = scmp.ne.s32.totalorder %s85, %s86
      %p95 = scmp.eq.s32.totalorder %s19, 0
      %p96 = por %p94, %p95
      %p97 = scmp.ne.s32.totalorder %s85, %s86
      %p98 = scmp.eq.s32.totalorder %s20, 3
      %p99 = por %p97, %p98
      %p101 = scmp.ne.s32.totalorder %s86, %s100
      %p102 = scmp.eq.s32.totalorder %s20, 0
      %p103 = por %p101, %p102
      %s104 = ssub.s32 %s21, %s33
      %s105 = ssub.s32 %s22, %s29
      %s106 = sor.u32 %s104, %s105
      %p107 = scmp.eq.s32.totalorder %s106, 0
      %s109 = sadd.s32 %s108, 1
      %s110 = scalar_select %p107, %s108, %s109
      %p113 = pneg %p107
      %p114 = scmp.eq.s32.totalorder %s14, 3
      %p115 = por %p113, %p114
      %p116 = scmp.ne.s32.totalorder %s108, %s111
      %p117 = scmp.eq.s32.totalorder %s14, 0
      %p118 = por %p116, %p117
      %p119 = scmp.ne.s32.totalorder %s108, %s111
      %p120 = scmp.eq.s32.totalorder %s19, 3
      %p121 = por %p119, %p120
      %p122 = scmp.ne.s32.totalorder %s111, %s112
      %p123 = scmp.eq.s32.totalorder %s19, 0
      %p124 = por %p122, %p123
      %p125 = scmp.ne.s32.totalorder %s111, %s112
      %p126 = scmp.eq.s32.totalorder %s20, 3
      %p127 = por %p125, %p126
      %p129 = scmp.ne.s32.totalorder %s112, %s128
      %p130 = scmp.eq.s32.totalorder %s20, 0
      %p131 = por %p129, %p130
      %p132 = scmp.le.s32.totalorder 1, %s14
      %p133 = scmp.lt.s32.totalorder %s14, 5
      %p134 = pnand %p132, %p133
      %p135 = pneg %p134
      // Predicated region
      $region9: #{srcnn_forward.5} parent=5 // pred_check
        _
      $region10: #{srcnn_forward.5} parent=5 // pred_check_branch
        %137 = sbr.rel (%p134) target = $region12
      $region11: #{srcnn_forward.5} parent=5 // pred_region
        %s138 = ssub.s32 %s14, 1
        // Predicated region
        $region13: #{srcnn_forward.5} parent=11 // pred_check
          %p139 = pneg %p75
        $region14: #{srcnn_forward.5} parent=11 // pred_check_branch
          %141 = sbr.rel (%p139) target = $region16
        $region15: #{srcnn_forward.5} parent=11 // pred_region
          _
        $region16: #{srcnn_forward.5} parent=11 // pred_fallthru
          _
        // Predicated region
        $region17: #{srcnn_forward.5} parent=11 // pred_check
          %p142 = pneg %p96
        $region18: #{srcnn_forward.5} parent=11 // pred_check_branch
          %144 = sbr.rel (%p142) target = $region20
        $region19: #{srcnn_forward.5} parent=11 // pred_region
          _
        $region20: #{srcnn_forward.5} parent=11 // pred_fallthru
          _
      $region12: #{srcnn_forward.5} parent=5 // pred_fallthru
        _
      %p145 = scmp.lt.s32.totalorder %s14, 4
      // Predicated region
      $region21: #{srcnn_forward.5} parent=5 // pred_check
        %p146 = pneg %p145
      $region22: #{srcnn_forward.5} parent=5 // pred_check_branch
        %148 = sbr.rel (%p146) target = $region24
      $region23: #{srcnn_forward.5} parent=5 // pred_region
        // Predicated region
        $region25: #{srcnn_forward.5} parent=23 // pred_check
          %p149 = pneg %p48
        $region26: #{srcnn_forward.5} parent=23 // pred_check_branch
          %151 = sbr.rel (%p149) target = $region28
        $region27: #{srcnn_forward.5} parent=23 // pred_region
          %p152 = scmp.lt.s32.totalorder %s21, 1
          %s153 = scalar_select %p152, %s21, 1
          %p154 = scmp.lt.s32.totalorder %s22, 1
          %s155 = scalar_select %p154, %s22, 1
          %s156 = smul.addr %s155, 36
          %s157 = smul.addr %s153, 72
          %s158 = sadd.s32 %s156, %s157
          %s159 = smul.addr %s158, 8
          %s160 = scalar_lea.vmem %s0, %s159
        $region28: #{srcnn_forward.5} parent=23 // pred_fallthru
          _
      $region24: #{srcnn_forward.5} parent=5 // pred_fallthru
        _
      %p161 = scmp.le.s32.totalorder 1, %s14
      %p162 = scmp.lt.s32.totalorder %s14, 5
      %p163 = pnand %p161, %p162
      %p164 = pneg %p163
      // Predicated region
      $region29: #{srcnn_forward.5} parent=5 // pred_check
        _
      $region30: #{srcnn_forward.5} parent=5 // pred_check_branch
        %166 = sbr.rel (%p163) target = $region32
      $region31: #{srcnn_forward.5} parent=5 // pred_region
        %s167 = ssub.s32 %s14, 1
        %p168 = scmp.lt.s32.totalorder %s23, 1
        %s169 = scalar_select %p168, %s23, 1
        %p170 = scmp.lt.s32.totalorder %s24, 1
        %s171 = scalar_select %p170, %s24, 1
        %s172 = smul.addr %s171, 36
        %s173 = smul.addr %s169, 72
        %s174 = sadd.s32 %s172, %s173
        %s175 = smul.addr %s174, 8
        %s176 = scalar_lea.vmem %s0, %s175
        %p177 = pneg %p54
        %p178 = pneg %p51
        %p179 = pneg %p75
        %p180 = pneg %p72
        %p181 = pneg %p96
        %p182 = pneg %p93
        %p183 = pneg %p124
        %p184 = pneg %p121
        %s185 = sand.u32 %s111, 1
        %s186 = scalar_lea.sflag [#allocation4], %s185
        %s187 = sand.u32 %s111, 1
        %s188 = smul.addr %s187, 8
        %s189 = scalar_lea.vmem [#allocation3], %s188
        %p190 = scmp.lt.s32.totalorder %s23, 1
        %s191 = scalar_select %p190, %s23, 1
        %p192 = scmp.lt.s32.totalorder %s24, 1
        %s193 = scalar_select %p192, %s24, 1
        %s194 = smul.addr %s193, 36
        %s195 = smul.addr %s191, 72
        %s196 = sadd.s32 %s194, %s195
        %s197 = smul.addr %s196, 8
        %s198 = scalar_lea.vmem %s0, %s197
        %v199 = vld [vmem:[%s198] sm:$0xff]
        %v200 = vld [vmem:[%s198 + $0x8] sm:$0xff]
        %v201 = vld [vmem:[%s198 + $0x18] sm:$0xff]
        %v202 = vld [vmem:[%s198 + $0x20] sm:$0xff]
        %v203 = vld [vmem:[%s198 + $0x30] sm:$0xff]
        %v204 = vld [vmem:[%s198 + $0x38] sm:$0xff]
        %v205 = vld [vmem:[%s198 + $0x48] sm:$0xff]
        %v206 = vld [vmem:[%s198 + $0x50] sm:$0xff]
        %v207 = vld [vmem:[%s198 + $0x60] sm:$0xff]
        %v208 = vld [vmem:[%s198 + $0x68] sm:$0xff]
        %v209 = vld [vmem:[%s198 + $0x78] sm:$0xff]
        %v210 = vld [vmem:[%s198 + $0x80] sm:$0xff]
        %v211 = vld [vmem:[%s198 + $0x90] sm:$0xff]
        %v212 = vld [vmem:[%s198 + $0x98] sm:$0xff]
        %v213 = vld [vmem:[%s198 + $0xa8] sm:$0xff]
        %v214 = vld [vmem:[%s198 + $0xb0] sm:$0xff]
        %v215 = vld [vmem:[%s1] sm:$0x1]
        %v216 = vlaneseq
        %v217 = vshrl.u32 %v216, 7
        %v218 = vsub.s32 0, %v217
        %v219 = vrot.slane %v215, %v218
        %v220 = vmul.f32 %v199, %v219
        %v221 = vmul.f32 %v200, %v219
        %v222 = vmul.f32 %v201, %v219
        %v223 = vmul.f32 %v202, %v219
        %v224 = vmul.f32 %v203, %v219
        %v225 = vmul.f32 %v204, %v219
        %v226 = vmul.f32 %v205, %v219
        %v227 = vmul.f32 %v206, %v219
        %v228 = vmul.f32 %v207, %v219
        %v229 = vmul.f32 %v208, %v219
        %v230 = vmul.f32 %v209, %v219
        %v231 = vmul.f32 %v210, %v219
        %v232 = vmul.f32 %v211, %v219
        %v233 = vmul.f32 %v212, %v219
        %v234 = vmul.f32 %v213, %v219
        %v235 = vmul.f32 %v214, %v219
        %vm236 = vcmask 261120
        %v237 = vsel %vm236, %v220, 0.0
        %238 = vadd.xlane.f32.xlu0 %v237
        %v239 = vpop.xlane.xlu0 %238
        %v240 = vsel %vm236, %v221, 0.0
        %241 = vadd.xlane.f32.xlu0 %v240
        %v242 = vpop.xlane.xlu0 %241
        %v243 = vsel %vm236, %v222, 0.0
        %244 = vadd.xlane.f32.xlu0 %v243
        %v245 = vpop.xlane.xlu0 %244
        %v246 = vsel %vm236, %v223, 0.0
        %247 = vadd.xlane.f32.xlu0 %v246
        %v248 = vpop.xlane.xlu0 %247
        %v249 = vsel %vm236, %v224, 0.0
        %250 = vadd.xlane.f32.xlu0 %v249
        %v251 = vpop.xlane.xlu0 %250
        %v252 = vsel %vm236, %v225, 0.0
        %253 = vadd.xlane.f32.xlu0 %v252
        %v254 = vpop.xlane.xlu0 %253
        %v255 = vsel %vm236, %v226, 0.0
        %256 = vadd.xlane.f32.xlu0 %v255
        %v257 = vpop.xlane.xlu0 %256
        %v258 = vsel %vm236, %v227, 0.0
        %259 = vadd.xlane.f32.xlu0 %v258
        %v260 = vpop.xlane.xlu0 %259
        %v261 = vsel %vm236, %v228, 0.0
        %262 = vadd.xlane.f32.xlu0 %v261
        %v263 = vpop.xlane.xlu0 %262
        %v264 = vsel %vm236, %v229, 0.0
        %265 = vadd.xlane.f32.xlu0 %v264
        %v266 = vpop.xlane.xlu0 %265
        %v267 = vsel %vm236, %v230, 0.0
        %268 = vadd.xlane.f32.xlu0 %v267
        %v269 = vpop.xlane.xlu0 %268
        %v270 = vsel %vm236, %v231, 0.0
        %271 = vadd.xlane.f32.xlu0 %v270
        %v272 = vpop.xlane.xlu0 %271
        %v273 = vsel %vm236, %v232, 0.0
        %274 = vadd.xlane.f32.xlu0 %v273
        %v275 = vpop.xlane.xlu0 %274
        %v276 = vsel %vm236, %v233, 0.0
        %277 = vadd.xlane.f32.xlu0 %v276
        %v278 = vpop.xlane.xlu0 %277
        %v279 = vsel %vm236, %v234, 0.0
        %280 = vadd.xlane.f32.xlu0 %v279
        %v281 = vpop.xlane.xlu0 %280
        %v282 = vsel %vm236, %v235, 0.0
        %283 = vadd.xlane.f32.xlu0 %v282
        %v284 = vpop.xlane.xlu0 %283
        %v285 = vadd.f32 %v239, 0.0
        %v286 = vadd.f32 %v242, 0.0
        %v287 = vadd.f32 %v245, 0.0
        %v288 = vadd.f32 %v248, 0.0
        %v289 = vadd.f32 %v251, 0.0
        %v290 = vadd.f32 %v254, 0.0
        %v291 = vadd.f32 %v257, 0.0
        %v292 = vadd.f32 %v260, 0.0
        %v293 = vadd.f32 %v263, 0.0
        %v294 = vadd.f32 %v266, 0.0
        %v295 = vadd.f32 %v269, 0.0
        %v296 = vadd.f32 %v272, 0.0
        %v297 = vadd.f32 %v275, 0.0
        %v298 = vadd.f32 %v278, 0.0
        %v299 = vadd.f32 %v281, 0.0
        %v300 = vadd.f32 %v284, 0.0
        %v301 = vld [vmem:[%s198 + $0x1] sm:$0xff]
        %v302 = vld [vmem:[%s198 + $0x9] sm:$0xff]
        %v303 = vld [vmem:[%s198 + $0x19] sm:$0xff]
        %v304 = vld [vmem:[%s198 + $0x21] sm:$0xff]
        %v305 = vld [vmem:[%s198 + $0x31] sm:$0xff]
        %v306 = vld [vmem:[%s198 + $0x39] sm:$0xff]
        %v307 = vld [vmem:[%s198 + $0x49] sm:$0xff]
        %v308 = vld [vmem:[%s198 + $0x51] sm:$0xff]
        %v309 = vld [vmem:[%s198 + $0x61] sm:$0xff]
        %v310 = vld [vmem:[%s198 + $0x69] sm:$0xff]
        %v311 = vld [vmem:[%s198 + $0x79] sm:$0xff]
        %v312 = vld [vmem:[%s198 + $0x81] sm:$0xff]
        %v313 = vld [vmem:[%s198 + $0x91] sm:$0xff]
        %v314 = vld [vmem:[%s198 + $0x99] sm:$0xff]
        %v315 = vld [vmem:[%s198 + $0xa9] sm:$0xff]
        %v316 = vld [vmem:[%s198 + $0xb1] sm:$0xff]
        %v317 = vld [vmem:[%s1 + $0x1] sm:$0x1]
        %v318 = vlaneseq
        %v319 = vshrl.u32 %v318, 7
        %v320 = vsub.s32 0, %v319
        %v321 = vrot.slane %v317, %v320
        %v322 = vmul.f32 %v301, %v321
        %v323 = vmul.f32 %v302, %v321
        %v324 = vmul.f32 %v303, %v321
        %v325 = vmul.f32 %v304, %v321
        %v326 = vmul.f32 %v305, %v321
        %v327 = vmul.f32 %v306, %v321
        %v328 = vmul.f32 %v307, %v321
        %v329 = vmul.f32 %v308, %v321
        %v330 = vmul.f32 %v309, %v321
        %v331 = vmul.f32 %v310, %v321
        %v332 = vmul.f32 %v311, %v321
        %v333 = vmul.f32 %v312, %v321
        %v334 = vmul.f32 %v313, %v321
        %v335 = vmul.f32 %v314, %v321
        %v336 = vmul.f32 %v315, %v321
        %v337 = vmul.f32 %v316, %v321
        %v338 = vsel %vm236, %v322, 0.0
        %339 = vadd.xlane.f32.xlu0 %v338
        %v340 = vpop.xlane.xlu0 %339
        %v341 = vsel %vm236, %v323, 0.0
        %342 = vadd.xlane.f32.xlu0 %v341
        %v343 = vpop.xlane.xlu0 %342
        %v344 = vsel %vm236, %v324, 0.0
        %345 = vadd.xlane.f32.xlu0 %v344
        %v346 = vpop.xlane.xlu0 %345
        %v347 = vsel %vm236, %v325, 0.0
        %348 = vadd.xlane.f32.xlu0 %v347
        %v349 = vpop.xlane.xlu0 %348
        %v350 = vsel %vm236, %v326, 0.0
        %351 = vadd.xlane.f32.xlu0 %v350
        %v352 = vpop.xlane.xlu0 %351
        %v353 = vsel %vm236, %v327, 0.0
        %354 = vadd.xlane.f32.xlu0 %v353
        %v355 = vpop.xlane.xlu0 %354
        %v356 = vsel %vm236, %v328, 0.0
        %357 = vadd.xlane.f32.xlu0 %v356
        %v358 = vpop.xlane.xlu0 %357
        %v359 = vsel %vm236, %v329, 0.0
        %360 = vadd.xlane.f32.xlu0 %v359
        %v361 = vpop.xlane.xlu0 %360
        %v362 = vsel %vm236, %v330, 0.0
        %363 = vadd.xlane.f32.xlu0 %v362
        %v364 = vpop.xlane.xlu0 %363
        %v365 = vsel %vm236, %v331, 0.0
        %366 = vadd.xlane.f32.xlu0 %v365
        %v367 = vpop.xlane.xlu0 %366
        %v368 = vsel %vm236, %v332, 0.0
        %369 = vadd.xlane.f32.xlu0 %v368
        %v370 = vpop.xlane.xlu0 %369
        %v371 = vsel %vm236, %v333, 0.0
        %372 = vadd.xlane.f32.xlu0 %v371
        %v373 = vpop.xlane.xlu0 %372
        %v374 = vsel %vm236, %v334, 0.0
        %375 = vadd.xlane.f32.xlu0 %v374
        %v376 = vpop.xlane.xlu0 %375
        %v377 = vsel %vm236, %v335, 0.0
        %378 = vadd.xlane.f32.xlu0 %v377
        %v379 = vpop.xlane.xlu0 %378
        %v380 = vsel %vm236, %v336, 0.0
        %381 = vadd.xlane.f32.xlu0 %v380
        %v382 = vpop.xlane.xlu0 %381
        %v383 = vsel %vm236, %v337, 0.0
        %384 = vadd.xlane.f32.xlu0 %v383
        %v385 = vpop.xlane.xlu0 %384
        %v386 = vadd.f32 %v285, %v340
        %v387 = vadd.f32 %v286, %v343
        %v388 = vadd.f32 %v287, %v346
        %v389 = vadd.f32 %v288, %v349
        %v390 = vadd.f32 %v289, %v352
        %v391 = vadd.f32 %v290, %v355
        %v392 = vadd.f32 %v291, %v358
        %v393 = vadd.f32 %v292, %v361
        %v394 = vadd.f32 %v293, %v364
        %v395 = vadd.f32 %v294, %v367
        %v396 = vadd.f32 %v295, %v370
        %v397 = vadd.f32 %v296, %v373
        %v398 = vadd.f32 %v297, %v376
        %v399 = vadd.f32 %v298, %v379
        %v400 = vadd.f32 %v299, %v382
        %v401 = vadd.f32 %v300, %v385
        %v402 = vld [vmem:[%s198 + $0x2] sm:$0xff]
        %v403 = vld [vmem:[%s198 + $0xa] sm:$0xff]
        %v404 = vld [vmem:[%s198 + $0x1a] sm:$0xff]
        %v405 = vld [vmem:[%s198 + $0x22] sm:$0xff]
        %v406 = vld [vmem:[%s198 + $0x32] sm:$0xff]
        %v407 = vld [vmem:[%s198 + $0x3a] sm:$0xff]
        %v408 = vld [vmem:[%s198 + $0x4a] sm:$0xff]
        %v409 = vld [vmem:[%s198 + $0x52] sm:$0xff]
        %v410 = vld [vmem:[%s198 + $0x62] sm:$0xff]
        %v411 = vld [vmem:[%s198 + $0x6a] sm:$0xff]
        %v412 = vld [vmem:[%s198 + $0x7a] sm:$0xff]
        %v413 = vld [vmem:[%s198 + $0x82] sm:$0xff]
        %v414 = vld [vmem:[%s198 + $0x92] sm:$0xff]
        %v415 = vld [vmem:[%s198 + $0x9a] sm:$0xff]
        %v416 = vld [vmem:[%s198 + $0xaa] sm:$0xff]
        %v417 = vld [vmem:[%s198 + $0xb2] sm:$0xff]
        %v418 = vld [vmem:[%s1 + $0x2] sm:$0x1]
        %v419 = vlaneseq
        %v420 = vshrl.u32 %v419, 7
        %v421 = vsub.s32 0, %v420
        %v422 = vrot.slane %v418, %v421
        %v423 = vmul.f32 %v402, %v422
        %v424 = vmul.f32 %v403, %v422
        %v425 = vmul.f32 %v404, %v422
        %v426 = vmul.f32 %v405, %v422
        %v427 = vmul.f32 %v406, %v422
        %v428 = vmul.f32 %v407, %v422
        %v429 = vmul.f32 %v408, %v422
        %v430 = vmul.f32 %v409, %v422
        %v431 = vmul.f32 %v410, %v422
        %v432 = vmul.f32 %v411, %v422
        %v433 = vmul.f32 %v412, %v422
        %v434 = vmul.f32 %v413, %v422
        %v435 = vmul.f32 %v414, %v422
        %v436 = vmul.f32 %v415, %v422
        %v437 = vmul.f32 %v416, %v422
        %v438 = vmul.f32 %v417, %v422
        %v439 = vsel %vm236, %v423, 0.0
        %440 = vadd.xlane.f32.xlu0 %v439
        %v441 = vpop.xlane.xlu0 %440
        %v442 = vsel %vm236, %v424, 0.0
        %443 = vadd.xlane.f32.xlu0 %v442
        %v444 = vpop.xlane.xlu0 %443
        %v445 = vsel %vm236, %v425, 0.0
        %446 = vadd.xlane.f32.xlu0 %v445
        %v447 = vpop.xlane.xlu0 %446
        %v448 = vsel %vm236, %v426, 0.0
        %449 = vadd.xlane.f32.xlu0 %v448
        %v450 = vpop.xlane.xlu0 %449
        %v451 = vsel %vm236, %v427, 0.0
        %452 = vadd.xlane.f32.xlu0 %v451
        %v453 = vpop.xlane.xlu0 %452
        %v454 = vsel %vm236, %v428, 0.0
        %455 = vadd.xlane.f32.xlu0 %v454
        %v456 = vpop.xlane.xlu0 %455
        %v457 = vsel %vm236, %v429, 0.0
        %458 = vadd.xlane.f32.xlu0 %v457
        %v459 = vpop.xlane.xlu0 %458
        %v460 = vsel %vm236, %v430, 0.0
        %461 = vadd.xlane.f32.xlu0 %v460
        %v462 = vpop.xlane.xlu0 %461
        %v463 = vsel %vm236, %v431, 0.0
        %464 = vadd.xlane.f32.xlu0 %v463
        %v465 = vpop.xlane.xlu0 %464
        %v466 = vsel %vm236, %v432, 0.0
        %467 = vadd.xlane.f32.xlu0 %v466
        %v468 = vpop.xlane.xlu0 %467
        %v469 = vsel %vm236, %v433, 0.0
        %470 = vadd.xlane.f32.xlu0 %v469
        %v471 = vpop.xlane.xlu0 %470
        %v472 = vsel %vm236, %v434, 0.0
        %473 = vadd.xlane.f32.xlu0 %v472
        %v474 = vpop.xlane.xlu0 %473
        %v475 = vsel %vm236, %v435, 0.0
        %476 = vadd.xlane.f32.xlu0 %v475
        %v477 = vpop.xlane.xlu0 %476
        %v478 = vsel %vm236, %v436, 0.0
        %479 = vadd.xlane.f32.xlu0 %v478
        %v480 = vpop.xlane.xlu0 %479
        %v481 = vsel %vm236, %v437, 0.0
        %482 = vadd.xlane.f32.xlu0 %v481
        %v483 = vpop.xlane.xlu0 %482
        %v484 = vsel %vm236, %v438, 0.0
        %485 = vadd.xlane.f32.xlu0 %v484
        %v486 = vpop.xlane.xlu0 %485
        %v487 = vadd.f32 %v386, %v441
        %v488 = vadd.f32 %v387, %v444
        %v489 = vadd.f32 %v388, %v447
        %v490 = vadd.f32 %v389, %v450
        %v491 = vadd.f32 %v390, %v453
        %v492 = vadd.f32 %v391, %v456
        %v493 = vadd.f32 %v392, %v459
        %v494 = vadd.f32 %v393, %v462
        %v495 = vadd.f32 %v394, %v465
        %v496 = vadd.f32 %v395, %v468
        %v497 = vadd.f32 %v396, %v471
        %v498 = vadd.f32 %v397, %v474
        %v499 = vadd.f32 %v398, %v477
        %v500 = vadd.f32 %v399, %v480
        %v501 = vadd.f32 %v400, %v483
        %v502 = vadd.f32 %v401, %v486
        %v503 = vld [vmem:[%s198 + $0x3] sm:$0xff]
        %v504 = vld [vmem:[%s198 + $0xb] sm:$0xff]
        %v505 = vld [vmem:[%s198 + $0x1b] sm:$0xff]
        %v506 = vld [vmem:[%s198 + $0x23] sm:$0xff]
        %v507 = vld [vmem:[%s198 + $0x33] sm:$0xff]
        %v508 = vld [vmem:[%s198 + $0x3b] sm:$0xff]
        %v509 = vld [vmem:[%s198 + $0x4b] sm:$0xff]
        %v510 = vld [vmem:[%s198 + $0x53] sm:$0xff]
        %v511 = vld [vmem:[%s198 + $0x63] sm:$0xff]
        %v512 = vld [vmem:[%s198 + $0x6b] sm:$0xff]
        %v513 = vld [vmem:[%s198 + $0x7b] sm:$0xff]
        %v514 = vld [vmem:[%s198 + $0x83] sm:$0xff]
        %v515 = vld [vmem:[%s198 + $0x93] sm:$0xff]
        %v516 = vld [vmem:[%s198 + $0x9b] sm:$0xff]
        %v517 = vld [vmem:[%s198 + $0xab] sm:$0xff]
        %v518 = vld [vmem:[%s198 + $0xb3] sm:$0xff]
        %v519 = vld [vmem:[%s1 + $0x3] sm:$0x1]
        %v520 = vlaneseq
        %v521 = vshrl.u32 %v520, 7
        %v522 = vsub.s32 0, %v521
        %v523 = vrot.slane %v519, %v522
        %v524 = vmul.f32 %v503, %v523
        %v525 = vmul.f32 %v504, %v523
        %v526 = vmul.f32 %v505, %v523
        %v527 = vmul.f32 %v506, %v523
        %v528 = vmul.f32 %v507, %v523
        %v529 = vmul.f32 %v508, %v523
        %v530 = vmul.f32 %v509, %v523
        %v531 = vmul.f32 %v510, %v523
        %v532 = vmul.f32 %v511, %v523
        %v533 = vmul.f32 %v512, %v523
        %v534 = vmul.f32 %v513, %v523
        %v535 = vmul.f32 %v514, %v523
        %v536 = vmul.f32 %v515, %v523
        %v537 = vmul.f32 %v516, %v523
        %v538 = vmul.f32 %v517, %v523
        %v539 = vmul.f32 %v518, %v523
        %v540 = vsel %vm236, %v524, 0.0
        %541 = vadd.xlane.f32.xlu0 %v540
        %v542 = vpop.xlane.xlu0 %541
        %v543 = vsel %vm236, %v525, 0.0
        %544 = vadd.xlane.f32.xlu0 %v543
        %v545 = vpop.xlane.xlu0 %544
        %v546 = vsel %vm236, %v526, 0.0
        %547 = vadd.xlane.f32.xlu0 %v546
        %v548 = vpop.xlane.xlu0 %547
        %v549 = vsel %vm236, %v527, 0.0
        %550 = vadd.xlane.f32.xlu0 %v549
        %v551 = vpop.xlane.xlu0 %550
        %v552 = vsel %vm236, %v528, 0.0
        %553 = vadd.xlane.f32.xlu0 %v552
        %v554 = vpop.xlane.xlu0 %553
        %v555 = vsel %vm236, %v529, 0.0
        %556 = vadd.xlane.f32.xlu0 %v555
        %v557 = vpop.xlane.xlu0 %556
        %v558 = vsel %vm236, %v530, 0.0
        %559 = vadd.xlane.f32.xlu0 %v558
        %v560 = vpop.xlane.xlu0 %559
        %v561 = vsel %vm236, %v531, 0.0
        %562 = vadd.xlane.f32.xlu0 %v561
        %v563 = vpop.xlane.xlu0 %562
        %v564 = vsel %vm236, %v532, 0.0
        %565 = vadd.xlane.f32.xlu0 %v564
        %v566 = vpop.xlane.xlu0 %565
        %v567 = vsel %vm236, %v533, 0.0
        %568 = vadd.xlane.f32.xlu0 %v567
        %v569 = vpop.xlane.xlu0 %568
        %v570 = vsel %vm236, %v534, 0.0
        %571 = vadd.xlane.f32.xlu0 %v570
        %v572 = vpop.xlane.xlu0 %571
        %v573 = vsel %vm236, %v535, 0.0
        %574 = vadd.xlane.f32.xlu0 %v573
        %v575 = vpop.xlane.xlu0 %574
        %v576 = vsel %vm236, %v536, 0.0
        %577 = vadd.xlane.f32.xlu0 %v576
        %v578 = vpop.xlane.xlu0 %577
        %v579 = vsel %vm236, %v537, 0.0
        %580 = vadd.xlane.f32.xlu0 %v579
        %v581 = vpop.xlane.xlu0 %580
        %v582 = vsel %vm236, %v538, 0.0
        %583 = vadd.xlane.f32.xlu0 %v582
        %v584 = vpop.xlane.xlu0 %583
        %v585 = vsel %vm236, %v539, 0.0
        %586 = vadd.xlane.f32.xlu0 %v585
        %v587 = vpop.xlane.xlu0 %586
        %v588 = vadd.f32 %v487, %v542
        %v589 = vadd.f32 %v488, %v545
        %v590 = vadd.f32 %v489, %v548
        %v591 = vadd.f32 %v490, %v551
        %v592 = vadd.f32 %v491, %v554
        %v593 = vadd.f32 %v492, %v557
        %v594 = vadd.f32 %v493, %v560
        %v595 = vadd.f32 %v494, %v563
        %v596 = vadd.f32 %v495, %v566
        %v597 = vadd.f32 %v496, %v569
        %v598 = vadd.f32 %v497, %v572
        %v599 = vadd.f32 %v498, %v575
        %v600 = vadd.f32 %v499, %v578
        %v601 = vadd.f32 %v500, %v581
        %v602 = vadd.f32 %v501, %v584
        %v603 = vadd.f32 %v502, %v587
        %v604 = vld [vmem:[%s198 + $0x4] sm:$0xff]
        %v605 = vld [vmem:[%s198 + $0xc] sm:$0xff]
        %v606 = vld [vmem:[%s198 + $0x1c] sm:$0xff]
        %v607 = vld [vmem:[%s198 + $0x24] sm:$0xff]
        %v608 = vld [vmem:[%s198 + $0x34] sm:$0xff]
        %v609 = vld [vmem:[%s198 + $0x3c] sm:$0xff]
        %v610 = vld [vmem:[%s198 + $0x4c] sm:$0xff]
        %v611 = vld [vmem:[%s198 + $0x54] sm:$0xff]
        %v612 = vld [vmem:[%s198 + $0x64] sm:$0xff]
        %v613 = vld [vmem:[%s198 + $0x6c] sm:$0xff]
        %v614 = vld [vmem:[%s198 + $0x7c] sm:$0xff]
        %v615 = vld [vmem:[%s198 + $0x84] sm:$0xff]
        %v616 = vld [vmem:[%s198 + $0x94] sm:$0xff]
        %v617 = vld [vmem:[%s198 + $0x9c] sm:$0xff]
        %v618 = vld [vmem:[%s198 + $0xac] sm:$0xff]
        %v619 = vld [vmem:[%s198 + $0xb4] sm:$0xff]
        %v620 = vld [vmem:[%s1 + $0x4] sm:$0x1]
        %v621 = vlaneseq
        %v622 = vshrl.u32 %v621, 7
        %v623 = vsub.s32 0, %v622
        %v624 = vrot.slane %v620, %v623
        %v625 = vmul.f32 %v604, %v624
        %v626 = vmul.f32 %v605, %v624
        %v627 = vmul.f32 %v606, %v624
        %v628 = vmul.f32 %v607, %v624
        %v629 = vmul.f32 %v608, %v624
        %v630 = vmul.f32 %v609, %v624
        %v631 = vmul.f32 %v610, %v624
        %v632 = vmul.f32 %v611, %v624
        %v633 = vmul.f32 %v612, %v624
        %v634 = vmul.f32 %v613, %v624
        %v635 = vmul.f32 %v614, %v624
        %v636 = vmul.f32 %v615, %v624
        %v637 = vmul.f32 %v616, %v624
        %v638 = vmul.f32 %v617, %v624
        %v639 = vmul.f32 %v618, %v624
        %v640 = vmul.f32 %v619, %v624
        %v641 = vsel %vm236, %v625, 0.0
        %642 = vadd.xlane.f32.xlu0 %v641
        %v643 = vpop.xlane.xlu0 %642
        %v644 = vsel %vm236, %v626, 0.0
        %645 = vadd.xlane.f32.xlu0 %v644
        %v646 = vpop.xlane.xlu0 %645
        %v647 = vsel %vm236, %v627, 0.0
        %648 = vadd.xlane.f32.xlu0 %v647
        %v649 = vpop.xlane.xlu0 %648
        %v650 = vsel %vm236, %v628, 0.0
        %651 = vadd.xlane.f32.xlu0 %v650
        %v652 = vpop.xlane.xlu0 %651
        %v653 = vsel %vm236, %v629, 0.0
        %654 = vadd.xlane.f32.xlu0 %v653
        %v655 = vpop.xlane.xlu0 %654
        %v656 = vsel %vm236, %v630, 0.0
        %657 = vadd.xlane.f32.xlu0 %v656
        %v658 = vpop.xlane.xlu0 %657
        %v659 = vsel %vm236, %v631, 0.0
        %660 = vadd.xlane.f32.xlu0 %v659
        %v661 = vpop.xlane.xlu0 %660
        %v662 = vsel %vm236, %v632, 0.0
        %663 = vadd.xlane.f32.xlu0 %v662
        %v664 = vpop.xlane.xlu0 %663
        %v665 = vsel %vm236, %v633, 0.0
        %666 = vadd.xlane.f32.xlu0 %v665
        %v667 = vpop.xlane.xlu0 %666
        %v668 = vsel %vm236, %v634, 0.0
        %669 = vadd.xlane.f32.xlu0 %v668
        %v670 = vpop.xlane.xlu0 %669
        %v671 = vsel %vm236, %v635, 0.0
        %672 = vadd.xlane.f32.xlu0 %v671
        %v673 = vpop.xlane.xlu0 %672
        %v674 = vsel %vm236, %v636, 0.0
        %675 = vadd.xlane.f32.xlu0 %v674
        %v676 = vpop.xlane.xlu0 %675
        %v677 = vsel %vm236, %v637, 0.0
        %678 = vadd.xlane.f32.xlu0 %v677
        %v679 = vpop.xlane.xlu0 %678
        %v680 = vsel %vm236, %v638, 0.0
        %681 = vadd.xlane.f32.xlu0 %v680
        %v682 = vpop.xlane.xlu0 %681
        %v683 = vsel %vm236, %v639, 0.0
        %684 = vadd.xlane.f32.xlu0 %v683
        %v685 = vpop.xlane.xlu0 %684
        %v686 = vsel %vm236, %v640, 0.0
        %687 = vadd.xlane.f32.xlu0 %v686
        %v688 = vpop.xlane.xlu0 %687
        %v689 = vadd.f32 %v588, %v643
        %v690 = vadd.f32 %v589, %v646
        %v691 = vadd.f32 %v590, %v649
        %v692 = vadd.f32 %v591, %v652
        %v693 = vadd.f32 %v592, %v655
        %v694 = vadd.f32 %v593, %v658
        %v695 = vadd.f32 %v594, %v661
        %v696 = vadd.f32 %v595, %v664
        %v697 = vadd.f32 %v596, %v667
        %v698 = vadd.f32 %v597, %v670
        %v699 = vadd.f32 %v598, %v673
        %v700 = vadd.f32 %v599, %v676
        %v701 = vadd.f32 %v600, %v679
        %v702 = vadd.f32 %v601, %v682
        %v703 = vadd.f32 %v602, %v685
        %v704 = vadd.f32 %v603, %v688
        %s705 = scalar_lea.vmem %s198, 24
        %v706 = vld [vmem:[%s705] sm:$0xff]
        %v707 = vld [vmem:[%s705 + $0x8] sm:$0xff]
        %v708 = vld [vmem:[%s705 + $0x18] sm:$0xff]
        %v709 = vld [vmem:[%s705 + $0x20] sm:$0xff]
        %v710 = vld [vmem:[%s705 + $0x30] sm:$0xff]
        %v711 = vld [vmem:[%s705 + $0x38] sm:$0xff]
        %v712 = vld [vmem:[%s705 + $0x48] sm:$0xff]
        %v713 = vld [vmem:[%s705 + $0x50] sm:$0xff]
        %v714 = vld [vmem:[%s705 + $0x60] sm:$0xff]
        %v715 = vld [vmem:[%s705 + $0x68] sm:$0xff]
        %v716 = vld [vmem:[%s705 + $0x78] sm:$0xff]
        %v717 = vld [vmem:[%s705 + $0x80] sm:$0xff]
        %v718 = vld [vmem:[%s705 + $0x90] sm:$0xff]
        %v719 = vld [vmem:[%s705 + $0x98] sm:$0xff]
        %v720 = vld [vmem:[%s705 + $0xa8] sm:$0xff]
        %v721 = vld [vmem:[%s705 + $0xb0] sm:$0xff]
        %s722 = scalar_lea.vmem %s1, 8
        %v723 = vld [vmem:[%s722] sm:$0x1]
        %v724 = vlaneseq
        %v725 = vshrl.u32 %v724, 7
        %v726 = vsub.s32 0, %v725
        %v727 = vrot.slane %v723, %v726
        %v728 = vmul.f32 %v706, %v727
        %v729 = vmul.f32 %v707, %v727
        %v730 = vmul.f32 %v708, %v727
        %v731 = vmul.f32 %v709, %v727
        %v732 = vmul.f32 %v710, %v727
        %v733 = vmul.f32 %v711, %v727
        %v734 = vmul.f32 %v712, %v727
        %v735 = vmul.f32 %v713, %v727
        %v736 = vmul.f32 %v714, %v727
        %v737 = vmul.f32 %v715, %v727
        %v738 = vmul.f32 %v716, %v727
        %v739 = vmul.f32 %v717, %v727
        %v740 = vmul.f32 %v718, %v727
        %v741 = vmul.f32 %v719, %v727
        %v742 = vmul.f32 %v720, %v727
        %v743 = vmul.f32 %v721, %v727
        %v744 = vsel %vm236, %v728, 0.0
        %745 = vadd.xlane.f32.xlu0 %v744
        %v746 = vpop.xlane.xlu0 %745
        %v747 = vsel %vm236, %v729, 0.0
        %748 = vadd.xlane.f32.xlu0 %v747
        %v749 = vpop.xlane.xlu0 %748
        %v750 = vsel %vm236, %v730, 0.0
        %751 = vadd.xlane.f32.xlu0 %v750
        %v752 = vpop.xlane.xlu0 %751
        %v753 = vsel %vm236, %v731, 0.0
        %754 = vadd.xlane.f32.xlu0 %v753
        %v755 = vpop.xlane.xlu0 %754
        %v756 = vsel %vm236, %v732, 0.0
        %757 = vadd.xlane.f32.xlu0 %v756
        %v758 = vpop.xlane.xlu0 %757
        %v759 = vsel %vm236, %v733, 0.0
        %760 = vadd.xlane.f32.xlu0 %v759
        %v761 = vpop.xlane.xlu0 %760
        %v762 = vsel %vm236, %v734, 0.0
        %763 = vadd.xlane.f32.xlu0 %v762
        %v764 = vpop.xlane.xlu0 %763
        %v765 = vsel %vm236, %v735, 0.0
        %766 = vadd.xlane.f32.xlu0 %v765
        %v767 = vpop.xlane.xlu0 %766
        %v768 = vsel %vm236, %v736, 0.0
        %769 = vadd.xlane.f32.xlu0 %v768
        %v770 = vpop.xlane.xlu0 %769
        %v771 = vsel %vm236, %v737, 0.0
        %772 = vadd.xlane.f32.xlu0 %v771
        %v773 = vpop.xlane.xlu0 %772
        %v774 = vsel %vm236, %v738, 0.0
        %775 = vadd.xlane.f32.xlu0 %v774
        %v776 = vpop.xlane.xlu0 %775
        %v777 = vsel %vm236, %v739, 0.0
        %778 = vadd.xlane.f32.xlu0 %v777
        %v779 = vpop.xlane.xlu0 %778
        %v780 = vsel %vm236, %v740, 0.0
        %781 = vadd.xlane.f32.xlu0 %v780
        %v782 = vpop.xlane.xlu0 %781
        %v783 = vsel %vm236, %v741, 0.0
        %784 = vadd.xlane.f32.xlu0 %v783
        %v785 = vpop.xlane.xlu0 %784
        %v786 = vsel %vm236, %v742, 0.0
        %787 = vadd.xlane.f32.xlu0 %v786
        %v788 = vpop.xlane.xlu0 %787
        %v789 = vsel %vm236, %v743, 0.0
        %790 = vadd.xlane.f32.xlu0 %v789
        %v791 = vpop.xlane.xlu0 %790
        %v792 = vadd.f32 %v689, %v746
        %v793 = vadd.f32 %v690, %v749
        %v794 = vadd.f32 %v691, %v752
        %v795 = vadd.f32 %v692, %v755
        %v796 = vadd.f32 %v693, %v758
        %v797 = vadd.f32 %v694, %v761
        %v798 = vadd.f32 %v695, %v764
        %v799 = vadd.f32 %v696, %v767
        %v800 = vadd.f32 %v697, %v770
        %v801 = vadd.f32 %v698, %v773
        %v802 = vadd.f32 %v699, %v776
        %v803 = vadd.f32 %v700, %v779
        %v804 = vadd.f32 %v701, %v782
        %v805 = vadd.f32 %v702, %v785
        %v806 = vadd.f32 %v703, %v788
        %v807 = vadd.f32 %v704, %v791
        %v808 = vld [vmem:[%s705 + $0x1] sm:$0xff]
        %v809 = vld [vmem:[%s705 + $0x9] sm:$0xff]
        %v810 = vld [vmem:[%s705 + $0x19] sm:$0xff]
        %v811 = vld [vmem:[%s705 + $0x21] sm:$0xff]
        %v812 = vld [vmem:[%s705 + $0x31] sm:$0xff]
        %v813 = vld [vmem:[%s705 + $0x39] sm:$0xff]
        %v814 = vld [vmem:[%s705 + $0x49] sm:$0xff]
        %v815 = vld [vmem:[%s705 + $0x51] sm:$0xff]
        %v816 = vld [vmem:[%s705 + $0x61] sm:$0xff]
        %v817 = vld [vmem:[%s705 + $0x69] sm:$0xff]
        %v818 = vld [vmem:[%s705 + $0x79] sm:$0xff]
        %v819 = vld [vmem:[%s705 + $0x81] sm:$0xff]
        %v820 = vld [vmem:[%s705 + $0x91] sm:$0xff]
        %v821 = vld [vmem:[%s705 + $0x99] sm:$0xff]
        %v822 = vld [vmem:[%s705 + $0xa9] sm:$0xff]
        %v823 = vld [vmem:[%s705 + $0xb1] sm:$0xff]
        %v824 = vld [vmem:[%s722 + $0x1] sm:$0x1]
        %v825 = vlaneseq
        %v826 = vshrl.u32 %v825, 7
        %v827 = vsub.s32 0, %v826
        %v828 = vrot.slane %v824, %v827
        %v829 = vmul.f32 %v808, %v828
        %v830 = vmul.f32 %v809, %v828
        %v831 = vmul.f32 %v810, %v828
        %v832 = vmul.f32 %v811, %v828
        %v833 = vmul.f32 %v812, %v828
        %v834 = vmul.f32 %v813, %v828
        %v835 = vmul.f32 %v814, %v828
        %v836 = vmul.f32 %v815, %v828
        %v837 = vmul.f32 %v816, %v828
        %v838 = vmul.f32 %v817, %v828
        %v839 = vmul.f32 %v818, %v828
        %v840 = vmul.f32 %v819, %v828
        %v841 = vmul.f32 %v820, %v828
        %v842 = vmul.f32 %v821, %v828
        %v843 = vmul.f32 %v822, %v828
        %v844 = vmul.f32 %v823, %v828
        %v845 = vsel %vm236, %v829, 0.0
        %846 = vadd.xlane.f32.xlu0 %v845
        %v847 = vpop.xlane.xlu0 %846
        %v848 = vsel %vm236, %v830, 0.0
        %849 = vadd.xlane.f32.xlu0 %v848
        %v850 = vpop.xlane.xlu0 %849
        %v851 = vsel %vm236, %v831, 0.0
        %852 = vadd.xlane.f32.xlu0 %v851
        %v853 = vpop.xlane.xlu0 %852
        %v854 = vsel %vm236, %v832, 0.0
        %855 = vadd.xlane.f32.xlu0 %v854
        %v856 = vpop.xlane.xlu0 %855
        %v857 = vsel %vm236, %v833, 0.0
        %858 = vadd.xlane.f32.xlu0 %v857
        %v859 = vpop.xlane.xlu0 %858
        %v860 = vsel %vm236, %v834, 0.0
        %861 = vadd.xlane.f32.xlu0 %v860
        %v862 = vpop.xlane.xlu0 %861
        %v863 = vsel %vm236, %v835, 0.0
        %864 = vadd.xlane.f32.xlu0 %v863
        %v865 = vpop.xlane.xlu0 %864
        %v866 = vsel %vm236, %v836, 0.0
        %867 = vadd.xlane.f32.xlu0 %v866
        %v868 = vpop.xlane.xlu0 %867
        %v869 = vsel %vm236, %v837, 0.0
        %870 = vadd.xlane.f32.xlu0 %v869
        %v871 = vpop.xlane.xlu0 %870
        %v872 = vsel %vm236, %v838, 0.0
        %873 = vadd.xlane.f32.xlu0 %v872
        %v874 = vpop.xlane.xlu0 %873
        %v875 = vsel %vm236, %v839, 0.0
        %876 = vadd.xlane.f32.xlu0 %v875
        %v877 = vpop.xlane.xlu0 %876
        %v878 = vsel %vm236, %v840, 0.0
        %879 = vadd.xlane.f32.xlu0 %v878
        %v880 = vpop.xlane.xlu0 %879
        %v881 = vsel %vm236, %v841, 0.0
        %882 = vadd.xlane.f32.xlu0 %v881
        %v883 = vpop.xlane.xlu0 %882
        %v884 = vsel %vm236, %v842, 0.0
        %885 = vadd.xlane.f32.xlu0 %v884
        %v886 = vpop.xlane.xlu0 %885
        %v887 = vsel %vm236, %v843, 0.0
        %888 = vadd.xlane.f32.xlu0 %v887
        %v889 = vpop.xlane.xlu0 %888
        %v890 = vsel %vm236, %v844, 0.0
        %891 = vadd.xlane.f32.xlu0 %v890
        %v892 = vpop.xlane.xlu0 %891
        %v893 = vadd.f32 %v792, %v847
        %v894 = vadd.f32 %v793, %v850
        %v895 = vadd.f32 %v794, %v853
        %v896 = vadd.f32 %v795, %v856
        %v897 = vadd.f32 %v796, %v859
        %v898 = vadd.f32 %v797, %v862
        %v899 = vadd.f32 %v798, %v865
        %v900 = vadd.f32 %v799, %v868
        %v901 = vadd.f32 %v800, %v871
        %v902 = vadd.f32 %v801, %v874
        %v903 = vadd.f32 %v802, %v877
        %v904 = vadd.f32 %v803, %v880
        %v905 = vadd.f32 %v804, %v883
        %v906 = vadd.f32 %v805, %v886
        %v907 = vadd.f32 %v806, %v889
        %v908 = vadd.f32 %v807, %v892
        %v909 = vld [vmem:[%s705 + $0x2] sm:$0xff]
        %v910 = vld [vmem:[%s705 + $0xa] sm:$0xff]
        %v911 = vld [vmem:[%s705 + $0x1a] sm:$0xff]
        %v912 = vld [vmem:[%s705 + $0x22] sm:$0xff]
        %v913 = vld [vmem:[%s705 + $0x32] sm:$0xff]
        %v914 = vld [vmem:[%s705 + $0x3a] sm:$0xff]
        %v915 = vld [vmem:[%s705 + $0x4a] sm:$0xff]
        %v916 = vld [vmem:[%s705 + $0x52] sm:$0xff]
        %v917 = vld [vmem:[%s705 + $0x62] sm:$0xff]
        %v918 = vld [vmem:[%s705 + $0x6a] sm:$0xff]
        %v919 = vld [vmem:[%s705 + $0x7a] sm:$0xff]
        %v920 = vld [vmem:[%s705 + $0x82] sm:$0xff]
        %v921 = vld [vmem:[%s705 + $0x92] sm:$0xff]
        %v922 = vld [vmem:[%s705 + $0x9a] sm:$0xff]
        %v923 = vld [vmem:[%s705 + $0xaa] sm:$0xff]
        %v924 = vld [vmem:[%s705 + $0xb2] sm:$0xff]
        %v925 = vld [vmem:[%s722 + $0x2] sm:$0x1]
        %v926 = vlaneseq
        %v927 = vshrl.u32 %v926, 7
        %v928 = vsub.s32 0, %v927
        %v929 = vrot.slane %v925, %v928
        %v930 = vmul.f32 %v909, %v929
        %v931 = vmul.f32 %v910, %v929
        %v932 = vmul.f32 %v911, %v929
        %v933 = vmul.f32 %v912, %v929
        %v934 = vmul.f32 %v913, %v929
        %v935 = vmul.f32 %v914, %v929
        %v936 = vmul.f32 %v915, %v929
        %v937 = vmul.f32 %v916, %v929
        %v938 = vmul.f32 %v917, %v929
        %v939 = vmul.f32 %v918, %v929
        %v940 = vmul.f32 %v919, %v929
        %v941 = vmul.f32 %v920, %v929
        %v942 = vmul.f32 %v921, %v929
        %v943 = vmul.f32 %v922, %v929
        %v944 = vmul.f32 %v923, %v929
        %v945 = vmul.f32 %v924, %v929
        %v946 = vsel %vm236, %v930, 0.0
        %947 = vadd.xlane.f32.xlu0 %v946
        %v948 = vpop.xlane.xlu0 %947
        %v949 = vsel %vm236, %v931, 0.0
        %950 = vadd.xlane.f32.xlu0 %v949
        %v951 = vpop.xlane.xlu0 %950
        %v952 = vsel %vm236, %v932, 0.0
        %953 = vadd.xlane.f32.xlu0 %v952
        %v954 = vpop.xlane.xlu0 %953
        %v955 = vsel %vm236, %v933, 0.0
        %956 = vadd.xlane.f32.xlu0 %v955
        %v957 = vpop.xlane.xlu0 %956
        %v958 = vsel %vm236, %v934, 0.0
        %959 = vadd.xlane.f32.xlu0 %v958
        %v960 = vpop.xlane.xlu0 %959
        %v961 = vsel %vm236, %v935, 0.0
        %962 = vadd.xlane.f32.xlu0 %v961
        %v963 = vpop.xlane.xlu0 %962
        %v964 = vsel %vm236, %v936, 0.0
        %965 = vadd.xlane.f32.xlu0 %v964
        %v966 = vpop.xlane.xlu0 %965
        %v967 = vsel %vm236, %v937, 0.0
        %968 = vadd.xlane.f32.xlu0 %v967
        %v969 = vpop.xlane.xlu0 %968
        %v970 = vsel %vm236, %v938, 0.0
        %971 = vadd.xlane.f32.xlu0 %v970
        %v972 = vpop.xlane.xlu0 %971
        %v973 = vsel %vm236, %v939, 0.0
        %974 = vadd.xlane.f32.xlu0 %v973
        %v975 = vpop.xlane.xlu0 %974
        %v976 = vsel %vm236, %v940, 0.0
        %977 = vadd.xlane.f32.xlu0 %v976
        %v978 = vpop.xlane.xlu0 %977
        %v979 = vsel %vm236, %v941, 0.0
        %980 = vadd.xlane.f32.xlu0 %v979
        %v981 = vpop.xlane.xlu0 %980
        %v982 = vsel %vm236, %v942, 0.0
        %983 = vadd.xlane.f32.xlu0 %v982
        %v984 = vpop.xlane.xlu0 %983
        %v985 = vsel %vm236, %v943, 0.0
        %986 = vadd.xlane.f32.xlu0 %v985
        %v987 = vpop.xlane.xlu0 %986
        %v988 = vsel %vm236, %v944, 0.0
        %989 = vadd.xlane.f32.xlu0 %v988
        %v990 = vpop.xlane.xlu0 %989
        %v991 = vsel %vm236, %v945, 0.0
        %992 = vadd.xlane.f32.xlu0 %v991
        %v993 = vpop.xlane.xlu0 %992
        %v994 = vadd.f32 %v893, %v948
        %v995 = vadd.f32 %v894, %v951
        %v996 = vadd.f32 %v895, %v954
        %v997 = vadd.f32 %v896, %v957
        %v998 = vadd.f32 %v897, %v960
        %v999 = vadd.f32 %v898, %v963
        %v1000 = vadd.f32 %v899, %v966
        %v1001 = vadd.f32 %v900, %v969
        %v1002 = vadd.f32 %v901, %v972
        %v1003 = vadd.f32 %v902, %v975
        %v1004 = vadd.f32 %v903, %v978
        %v1005 = vadd.f32 %v904, %v981
        %v1006 = vadd.f32 %v905, %v984
        %v1007 = vadd.f32 %v906, %v987
        %v1008 = vadd.f32 %v907, %v990
        %v1009 = vadd.f32 %v908, %v993
        %v1010 = vld [vmem:[%s705 + $0x3] sm:$0xff]
        %v1011 = vld [vmem:[%s705 + $0xb] sm:$0xff]
        %v1012 = vld [vmem:[%s705 + $0x1b] sm:$0xff]
        %v1013 = vld [vmem:[%s705 + $0x23] sm:$0xff]
        %v1014 = vld [vmem:[%s705 + $0x33] sm:$0xff]
        %v1015 = vld [vmem:[%s705 + $0x3b] sm:$0xff]
        %v1016 = vld [vmem:[%s705 + $0x4b] sm:$0xff]
        %v1017 = vld [vmem:[%s705 + $0x53] sm:$0xff]
        %v1018 = vld [vmem:[%s705 + $0x63] sm:$0xff]
        %v1019 = vld [vmem:[%s705 + $0x6b] sm:$0xff]
        %v1020 = vld [vmem:[%s705 + $0x7b] sm:$0xff]
        %v1021 = vld [vmem:[%s705 + $0x83] sm:$0xff]
        %v1022 = vld [vmem:[%s705 + $0x93] sm:$0xff]
        %v1023 = vld [vmem:[%s705 + $0x9b] sm:$0xff]
        %v1024 = vld [vmem:[%s705 + $0xab] sm:$0xff]
        %v1025 = vld [vmem:[%s705 + $0xb3] sm:$0xff]
        %v1026 = vld [vmem:[%s722 + $0x3] sm:$0x1]
        %v1027 = vlaneseq
        %v1028 = vshrl.u32 %v1027, 7
        %v1029 = vsub.s32 0, %v1028
        %v1030 = vrot.slane %v1026, %v1029
        %v1031 = vmul.f32 %v1010, %v1030
        %v1032 = vmul.f32 %v1011, %v1030
        %v1033 = vmul.f32 %v1012, %v1030
        %v1034 = vmul.f32 %v1013, %v1030
        %v1035 = vmul.f32 %v1014, %v1030
        %v1036 = vmul.f32 %v1015, %v1030
        %v1037 = vmul.f32 %v1016, %v1030
        %v1038 = vmul.f32 %v1017, %v1030
        %v1039 = vmul.f32 %v1018, %v1030
        %v1040 = vmul.f32 %v1019, %v1030
        %v1041 = vmul.f32 %v1020, %v1030
        %v1042 = vmul.f32 %v1021, %v1030
        %v1043 = vmul.f32 %v1022, %v1030
        %v1044 = vmul.f32 %v1023, %v1030
        %v1045 = vmul.f32 %v1024, %v1030
        %v1046 = vmul.f32 %v1025, %v1030
        %v1047 = vsel %vm236, %v1031, 0.0
        %1048 = vadd.xlane.f32.xlu0 %v1047
        %v1049 = vpop.xlane.xlu0 %1048
        %v1050 = vsel %vm236, %v1032, 0.0
        %1051 = vadd.xlane.f32.xlu0 %v1050
        %v1052 = vpop.xlane.xlu0 %1051
        %v1053 = vsel %vm236, %v1033, 0.0
        %1054 = vadd.xlane.f32.xlu0 %v1053
        %v1055 = vpop.xlane.xlu0 %1054
        %v1056 = vsel %vm236, %v1034, 0.0
        %1057 = vadd.xlane.f32.xlu0 %v1056
        %v1058 = vpop.xlane.xlu0 %1057
        %v1059 = vsel %vm236, %v1035, 0.0
        %1060 = vadd.xlane.f32.xlu0 %v1059
        %v1061 = vpop.xlane.xlu0 %1060
        %v1062 = vsel %vm236, %v1036, 0.0
        %1063 = vadd.xlane.f32.xlu0 %v1062
        %v1064 = vpop.xlane.xlu0 %1063
        %v1065 = vsel %vm236, %v1037, 0.0
        %1066 = vadd.xlane.f32.xlu0 %v1065
        %v1067 = vpop.xlane.xlu0 %1066
        %v1068 = vsel %vm236, %v1038, 0.0
        %1069 = vadd.xlane.f32.xlu0 %v1068
        %v1070 = vpop.xlane.xlu0 %1069
        %v1071 = vsel %vm236, %v1039, 0.0
        %1072 = vadd.xlane.f32.xlu0 %v1071
        %v1073 = vpop.xlane.xlu0 %1072
        %v1074 = vsel %vm236, %v1040, 0.0
        %1075 = vadd.xlane.f32.xlu0 %v1074
        %v1076 = vpop.xlane.xlu0 %1075
        %v1077 = vsel %vm236, %v1041, 0.0
        %1078 = vadd.xlane.f32.xlu0 %v1077
        %v1079 = vpop.xlane.xlu0 %1078
        %v1080 = vsel %vm236, %v1042, 0.0
        %1081 = vadd.xlane.f32.xlu0 %v1080
        %v1082 = vpop.xlane.xlu0 %1081
        %v1083 = vsel %vm236, %v1043, 0.0
        %1084 = vadd.xlane.f32.xlu0 %v1083
        %v1085 = vpop.xlane.xlu0 %1084
        %v1086 = vsel %vm236, %v1044, 0.0
        %1087 = vadd.xlane.f32.xlu0 %v1086
        %v1088 = vpop.xlane.xlu0 %1087
        %v1089 = vsel %vm236, %v1045, 0.0
        %1090 = vadd.xlane.f32.xlu0 %v1089
        %v1091 = vpop.xlane.xlu0 %1090
        %v1092 = vsel %vm236, %v1046, 0.0
        %1093 = vadd.xlane.f32.xlu0 %v1092
        %v1094 = vpop.xlane.xlu0 %1093
        %v1095 = vadd.f32 %v994, %v1049
        %v1096 = vadd.f32 %v995, %v1052
        %v1097 = vadd.f32 %v996, %v1055
        %v1098 = vadd.f32 %v997, %v1058
        %v1099 = vadd.f32 %v998, %v1061
        %v1100 = vadd.f32 %v999, %v1064
        %v1101 = vadd.f32 %v1000, %v1067
        %v1102 = vadd.f32 %v1001, %v1070
        %v1103 = vadd.f32 %v1002, %v1073
        %v1104 = vadd.f32 %v1003, %v1076
        %v1105 = vadd.f32 %v1004, %v1079
        %v1106 = vadd.f32 %v1005, %v1082
        %v1107 = vadd.f32 %v1006, %v1085
        %v1108 = vadd.f32 %v1007, %v1088
        %v1109 = vadd.f32 %v1008, %v1091
        %v1110 = vadd.f32 %v1009, %v1094
        %v1111 = vld [vmem:[%s705 + $0x4] sm:$0xff]
        %v1112 = vld [vmem:[%s705 + $0xc] sm:$0xff]
        %v1113 = vld [vmem:[%s705 + $0x1c] sm:$0xff]
        %v1114 = vld [vmem:[%s705 + $0x24] sm:$0xff]
        %v1115 = vld [vmem:[%s705 + $0x34] sm:$0xff]
        %v1116 = vld [vmem:[%s705 + $0x3c] sm:$0xff]
        %v1117 = vld [vmem:[%s705 + $0x4c] sm:$0xff]
        %v1118 = vld [vmem:[%s705 + $0x54] sm:$0xff]
        %v1119 = vld [vmem:[%s705 + $0x64] sm:$0xff]
        %v1120 = vld [vmem:[%s705 + $0x6c] sm:$0xff]
        %v1121 = vld [vmem:[%s705 + $0x7c] sm:$0xff]
        %v1122 = vld [vmem:[%s705 + $0x84] sm:$0xff]
        %v1123 = vld [vmem:[%s705 + $0x94] sm:$0xff]
        %v1124 = vld [vmem:[%s705 + $0x9c] sm:$0xff]
        %v1125 = vld [vmem:[%s705 + $0xac] sm:$0xff]
        %v1126 = vld [vmem:[%s705 + $0xb4] sm:$0xff]
        %v1127 = vld [vmem:[%s722 + $0x4] sm:$0x1]
        %v1128 = vlaneseq
        %v1129 = vshrl.u32 %v1128, 7
        %v1130 = vsub.s32 0, %v1129
        %v1131 = vrot.slane %v1127, %v1130
        %v1132 = vmul.f32 %v1111, %v1131
        %v1133 = vmul.f32 %v1112, %v1131
        %v1134 = vmul.f32 %v1113, %v1131
        %v1135 = vmul.f32 %v1114, %v1131
        %v1136 = vmul.f32 %v1115, %v1131
        %v1137 = vmul.f32 %v1116, %v1131
        %v1138 = vmul.f32 %v1117, %v1131
        %v1139 = vmul.f32 %v1118, %v1131
        %v1140 = vmul.f32 %v1119, %v1131
        %v1141 = vmul.f32 %v1120, %v1131
        %v1142 = vmul.f32 %v1121, %v1131
        %v1143 = vmul.f32 %v1122, %v1131
        %v1144 = vmul.f32 %v1123, %v1131
        %v1145 = vmul.f32 %v1124, %v1131
        %v1146 = vmul.f32 %v1125, %v1131
        %v1147 = vmul.f32 %v1126, %v1131
        %v1148 = vsel %vm236, %v1132, 0.0
        %1149 = vadd.xlane.f32.xlu0 %v1148
        %v1150 = vpop.xlane.xlu0 %1149
        %v1151 = vsel %vm236, %v1133, 0.0
        %1152 = vadd.xlane.f32.xlu0 %v1151
        %v1153 = vpop.xlane.xlu0 %1152
        %v1154 = vsel %vm236, %v1134, 0.0
        %1155 = vadd.xlane.f32.xlu0 %v1154
        %v1156 = vpop.xlane.xlu0 %1155
        %v1157 = vsel %vm236, %v1135, 0.0
        %1158 = vadd.xlane.f32.xlu0 %v1157
        %v1159 = vpop.xlane.xlu0 %1158
        %v1160 = vsel %vm236, %v1136, 0.0
        %1161 = vadd.xlane.f32.xlu0 %v1160
        %v1162 = vpop.xlane.xlu0 %1161
        %v1163 = vsel %vm236, %v1137, 0.0
        %1164 = vadd.xlane.f32.xlu0 %v1163
        %v1165 = vpop.xlane.xlu0 %1164
        %v1166 = vsel %vm236, %v1138, 0.0
        %1167 = vadd.xlane.f32.xlu0 %v1166
        %v1168 = vpop.xlane.xlu0 %1167
        %v1169 = vsel %vm236, %v1139, 0.0
        %1170 = vadd.xlane.f32.xlu0 %v1169
        %v1171 = vpop.xlane.xlu0 %1170
        %v1172 = vsel %vm236, %v1140, 0.0
        %1173 = vadd.xlane.f32.xlu0 %v1172
        %v1174 = vpop.xlane.xlu0 %1173
        %v1175 = vsel %vm236, %v1141, 0.0
        %1176 = vadd.xlane.f32.xlu0 %v1175
        %v1177 = vpop.xlane.xlu0 %1176
        %v1178 = vsel %vm236, %v1142, 0.0
        %1179 = vadd.xlane.f32.xlu0 %v1178
        %v1180 = vpop.xlane.xlu0 %1179
        %v1181 = vsel %vm236, %v1143, 0.0
        %1182 = vadd.xlane.f32.xlu0 %v1181
        %v1183 = vpop.xlane.xlu0 %1182
        %v1184 = vsel %vm236, %v1144, 0.0
        %1185 = vadd.xlane.f32.xlu0 %v1184
        %v1186 = vpop.xlane.xlu0 %1185
        %v1187 = vsel %vm236, %v1145, 0.0
        %1188 = vadd.xlane.f32.xlu0 %v1187
        %v1189 = vpop.xlane.xlu0 %1188
        %v1190 = vsel %vm236, %v1146, 0.0
        %1191 = vadd.xlane.f32.xlu0 %v1190
        %v1192 = vpop.xlane.xlu0 %1191
        %v1193 = vsel %vm236, %v1147, 0.0
        %1194 = vadd.xlane.f32.xlu0 %v1193
        %v1195 = vpop.xlane.xlu0 %1194
        %v1196 = vadd.f32 %v1095, %v1150
        %v1197 = vadd.f32 %v1096, %v1153
        %v1198 = vadd.f32 %v1097, %v1156
        %v1199 = vadd.f32 %v1098, %v1159
        %v1200 = vadd.f32 %v1099, %v1162
        %v1201 = vadd.f32 %v1100, %v1165
        %v1202 = vadd.f32 %v1101, %v1168
        %v1203 = vadd.f32 %v1102, %v1171
        %v1204 = vadd.f32 %v1103, %v1174
        %v1205 = vadd.f32 %v1104, %v1177
        %v1206 = vadd.f32 %v1105, %v1180
        %v1207 = vadd.f32 %v1106, %v1183
        %v1208 = vadd.f32 %v1107, %v1186
        %v1209 = vadd.f32 %v1108, %v1189
        %v1210 = vadd.f32 %v1109, %v1192
        %v1211 = vadd.f32 %v1110, %v1195
        %s1212 = scalar_lea.vmem %s198, 48
        %v1213 = vld [vmem:[%s1212] sm:$0xff]
        %v1214 = vld [vmem:[%s1212 + $0x8] sm:$0xff]
        %v1215 = vld [vmem:[%s1212 + $0x18] sm:$0xff]
        %v1216 = vld [vmem:[%s1212 + $0x20] sm:$0xff]
        %v1217 = vld [vmem:[%s1212 + $0x30] sm:$0xff]
        %v1218 = vld [vmem:[%s1212 + $0x38] sm:$0xff]
        %v1219 = vld [vmem:[%s1212 + $0x48] sm:$0xff]
        %v1220 = vld [vmem:[%s1212 + $0x50] sm:$0xff]
        %v1221 = vld [vmem:[%s1212 + $0x60] sm:$0xff]
        %v1222 = vld [vmem:[%s1212 + $0x68] sm:$0xff]
        %v1223 = vld [vmem:[%s1212 + $0x78] sm:$0xff]
        %v1224 = vld [vmem:[%s1212 + $0x80] sm:$0xff]
        %v1225 = vld [vmem:[%s1212 + $0x90] sm:$0xff]
        %v1226 = vld [vmem:[%s1212 + $0x98] sm:$0xff]
        %v1227 = vld [vmem:[%s1212 + $0xa8] sm:$0xff]
        %v1228 = vld [vmem:[%s1212 + $0xb0] sm:$0xff]
        %s1229 = scalar_lea.vmem %s1, 16
        %v1230 = vld [vmem:[%s1229] sm:$0x1]
        %v1231 = vlaneseq
        %v1232 = vshrl.u32 %v1231, 7
        %v1233 = vsub.s32 0, %v1232
        %v1234 = vrot.slane %v1230, %v1233
        %v1235 = vmul.f32 %v1213, %v1234
        %v1236 = vmul.f32 %v1214, %v1234
        %v1237 = vmul.f32 %v1215, %v1234
        %v1238 = vmul.f32 %v1216, %v1234
        %v1239 = vmul.f32 %v1217, %v1234
        %v1240 = vmul.f32 %v1218, %v1234
        %v1241 = vmul.f32 %v1219, %v1234
        %v1242 = vmul.f32 %v1220, %v1234
        %v1243 = vmul.f32 %v1221, %v1234
        %v1244 = vmul.f32 %v1222, %v1234
        %v1245 = vmul.f32 %v1223, %v1234
        %v1246 = vmul.f32 %v1224, %v1234
        %v1247 = vmul.f32 %v1225, %v1234
        %v1248 = vmul.f32 %v1226, %v1234
        %v1249 = vmul.f32 %v1227, %v1234
        %v1250 = vmul.f32 %v1228, %v1234
        %v1251 = vsel %vm236, %v1235, 0.0
        %1252 = vadd.xlane.f32.xlu0 %v1251
        %v1253 = vpop.xlane.xlu0 %1252
        %v1254 = vsel %vm236, %v1236, 0.0
        %1255 = vadd.xlane.f32.xlu0 %v1254
        %v1256 = vpop.xlane.xlu0 %1255
        %v1257 = vsel %vm236, %v1237, 0.0
        %1258 = vadd.xlane.f32.xlu0 %v1257
        %v1259 = vpop.xlane.xlu0 %1258
        %v1260 = vsel %vm236, %v1238, 0.0
        %1261 = vadd.xlane.f32.xlu0 %v1260
        %v1262 = vpop.xlane.xlu0 %1261
        %v1263 = vsel %vm236, %v1239, 0.0
        %1264 = vadd.xlane.f32.xlu0 %v1263
        %v1265 = vpop.xlane.xlu0 %1264
        %v1266 = vsel %vm236, %v1240, 0.0
        %1267 = vadd.xlane.f32.xlu0 %v1266
        %v1268 = vpop.xlane.xlu0 %1267
        %v1269 = vsel %vm236, %v1241, 0.0
        %1270 = vadd.xlane.f32.xlu0 %v1269
        %v1271 = vpop.xlane.xlu0 %1270
        %v1272 = vsel %vm236, %v1242, 0.0
        %1273 = vadd.xlane.f32.xlu0 %v1272
        %v1274 = vpop.xlane.xlu0 %1273
        %v1275 = vsel %vm236, %v1243, 0.0
        %1276 = vadd.xlane.f32.xlu0 %v1275
        %v1277 = vpop.xlane.xlu0 %1276
        %v1278 = vsel %vm236, %v1244, 0.0
        %1279 = vadd.xlane.f32.xlu0 %v1278
        %v1280 = vpop.xlane.xlu0 %1279
        %v1281 = vsel %vm236, %v1245, 0.0
        %1282 = vadd.xlane.f32.xlu0 %v1281
        %v1283 = vpop.xlane.xlu0 %1282
        %v1284 = vsel %vm236, %v1246, 0.0
        %1285 = vadd.xlane.f32.xlu0 %v1284
        %v1286 = vpop.xlane.xlu0 %1285
        %v1287 = vsel %vm236, %v1247, 0.0
        %1288 = vadd.xlane.f32.xlu0 %v1287
        %v1289 = vpop.xlane.xlu0 %1288
        %v1290 = vsel %vm236, %v1248, 0.0
        %1291 = vadd.xlane.f32.xlu0 %v1290
        %v1292 = vpop.xlane.xlu0 %1291
        %v1293 = vsel %vm236, %v1249, 0.0
        %1294 = vadd.xlane.f32.xlu0 %v1293
        %v1295 = vpop.xlane.xlu0 %1294
        %v1296 = vsel %vm236, %v1250, 0.0
        %1297 = vadd.xlane.f32.xlu0 %v1296
        %v1298 = vpop.xlane.xlu0 %1297
        %v1299 = vadd.f32 %v1196, %v1253
        %v1300 = vadd.f32 %v1197, %v1256
        %v1301 = vadd.f32 %v1198, %v1259
        %v1302 = vadd.f32 %v1199, %v1262
        %v1303 = vadd.f32 %v1200, %v1265
        %v1304 = vadd.f32 %v1201, %v1268
        %v1305 = vadd.f32 %v1202, %v1271
        %v1306 = vadd.f32 %v1203, %v1274
        %v1307 = vadd.f32 %v1204, %v1277
        %v1308 = vadd.f32 %v1205, %v1280
        %v1309 = vadd.f32 %v1206, %v1283
        %v1310 = vadd.f32 %v1207, %v1286
        %v1311 = vadd.f32 %v1208, %v1289
        %v1312 = vadd.f32 %v1209, %v1292
        %v1313 = vadd.f32 %v1210, %v1295
        %v1314 = vadd.f32 %v1211, %v1298
        %v1315 = vld [vmem:[%s1212 + $0x1] sm:$0xff]
        %v1316 = vld [vmem:[%s1212 + $0x9] sm:$0xff]
        %v1317 = vld [vmem:[%s1212 + $0x19] sm:$0xff]
        %v1318 = vld [vmem:[%s1212 + $0x21] sm:$0xff]
        %v1319 = vld [vmem:[%s1212 + $0x31] sm:$0xff]
        %v1320 = vld [vmem:[%s1212 + $0x39] sm:$0xff]
        %v1321 = vld [vmem:[%s1212 + $0x49] sm:$0xff]
        %v1322 = vld [vmem:[%s1212 + $0x51] sm:$0xff]
        %v1323 = vld [vmem:[%s1212 + $0x61] sm:$0xff]
        %v1324 = vld [vmem:[%s1212 + $0x69] sm:$0xff]
        %v1325 = vld [vmem:[%s1212 + $0x79] sm:$0xff]
        %v1326 = vld [vmem:[%s1212 + $0x81] sm:$0xff]
        %v1327 = vld [vmem:[%s1212 + $0x91] sm:$0xff]
        %v1328 = vld [vmem:[%s1212 + $0x99] sm:$0xff]
        %v1329 = vld [vmem:[%s1212 + $0xa9] sm:$0xff]
        %v1330 = vld [vmem:[%s1212 + $0xb1] sm:$0xff]
        %v1331 = vld [vmem:[%s1229 + $0x1] sm:$0x1]
        %v1332 = vlaneseq
        %v1333 = vshrl.u32 %v1332, 7
        %v1334 = vsub.s32 0, %v1333
        %v1335 = vrot.slane %v1331, %v1334
        %v1336 = vmul.f32 %v1315, %v1335
        %v1337 = vmul.f32 %v1316, %v1335
        %v1338 = vmul.f32 %v1317, %v1335
        %v1339 = vmul.f32 %v1318, %v1335
        %v1340 = vmul.f32 %v1319, %v1335
        %v1341 = vmul.f32 %v1320, %v1335
        %v1342 = vmul.f32 %v1321, %v1335
        %v1343 = vmul.f32 %v1322, %v1335
        %v1344 = vmul.f32 %v1323, %v1335
        %v1345 = vmul.f32 %v1324, %v1335
        %v1346 = vmul.f32 %v1325, %v1335
        %v1347 = vmul.f32 %v1326, %v1335
        %v1348 = vmul.f32 %v1327, %v1335
        %v1349 = vmul.f32 %v1328, %v1335
        %v1350 = vmul.f32 %v1329, %v1335
        %v1351 = vmul.f32 %v1330, %v1335
        %v1352 = vsel %vm236, %v1336, 0.0
        %1353 = vadd.xlane.f32.xlu0 %v1352
        %v1354 = vpop.xlane.xlu0 %1353
        %v1355 = vsel %vm236, %v1337, 0.0
        %1356 = vadd.xlane.f32.xlu0 %v1355
        %v1357 = vpop.xlane.xlu0 %1356
        %v1358 = vsel %vm236, %v1338, 0.0
        %1359 = vadd.xlane.f32.xlu0 %v1358
        %v1360 = vpop.xlane.xlu0 %1359
        %v1361 = vsel %vm236, %v1339, 0.0
        %1362 = vadd.xlane.f32.xlu0 %v1361
        %v1363 = vpop.xlane.xlu0 %1362
        %v1364 = vsel %vm236, %v1340, 0.0
        %1365 = vadd.xlane.f32.xlu0 %v1364
        %v1366 = vpop.xlane.xlu0 %1365
        %v1367 = vsel %vm236, %v1341, 0.0
        %1368 = vadd.xlane.f32.xlu0 %v1367
        %v1369 = vpop.xlane.xlu0 %1368
        %v1370 = vsel %vm236, %v1342, 0.0
        %1371 = vadd.xlane.f32.xlu0 %v1370
        %v1372 = vpop.xlane.xlu0 %1371
        %v1373 = vsel %vm236, %v1343, 0.0
        %1374 = vadd.xlane.f32.xlu0 %v1373
        %v1375 = vpop.xlane.xlu0 %1374
        %v1376 = vsel %vm236, %v1344, 0.0
        %1377 = vadd.xlane.f32.xlu0 %v1376
        %v1378 = vpop.xlane.xlu0 %1377
        %v1379 = vsel %vm236, %v1345, 0.0
        %1380 = vadd.xlane.f32.xlu0 %v1379
        %v1381 = vpop.xlane.xlu0 %1380
        %v1382 = vsel %vm236, %v1346, 0.0
        %1383 = vadd.xlane.f32.xlu0 %v1382
        %v1384 = vpop.xlane.xlu0 %1383
        %v1385 = vsel %vm236, %v1347, 0.0
        %1386 = vadd.xlane.f32.xlu0 %v1385
        %v1387 = vpop.xlane.xlu0 %1386
        %v1388 = vsel %vm236, %v1348, 0.0
        %1389 = vadd.xlane.f32.xlu0 %v1388
        %v1390 = vpop.xlane.xlu0 %1389
        %v1391 = vsel %vm236, %v1349, 0.0
        %1392 = vadd.xlane.f32.xlu0 %v1391
        %v1393 = vpop.xlane.xlu0 %1392
        %v1394 = vsel %vm236, %v1350, 0.0
        %1395 = vadd.xlane.f32.xlu0 %v1394
        %v1396 = vpop.xlane.xlu0 %1395
        %v1397 = vsel %vm236, %v1351, 0.0
        %1398 = vadd.xlane.f32.xlu0 %v1397
        %v1399 = vpop.xlane.xlu0 %1398
        %v1400 = vadd.f32 %v1299, %v1354
        %v1401 = vadd.f32 %v1300, %v1357
        %v1402 = vadd.f32 %v1301, %v1360
        %v1403 = vadd.f32 %v1302, %v1363
        %v1404 = vadd.f32 %v1303, %v1366
        %v1405 = vadd.f32 %v1304, %v1369
        %v1406 = vadd.f32 %v1305, %v1372
        %v1407 = vadd.f32 %v1306, %v1375
        %v1408 = vadd.f32 %v1307, %v1378
        %v1409 = vadd.f32 %v1308, %v1381
        %v1410 = vadd.f32 %v1309, %v1384
        %v1411 = vadd.f32 %v1310, %v1387
        %v1412 = vadd.f32 %v1311, %v1390
        %v1413 = vadd.f32 %v1312, %v1393
        %v1414 = vadd.f32 %v1313, %v1396
        %v1415 = vadd.f32 %v1314, %v1399
        %v1416 = vld [vmem:[%s1212 + $0x2] sm:$0xff]
        %v1417 = vld [vmem:[%s1212 + $0xa] sm:$0xff]
        %v1418 = vld [vmem:[%s1212 + $0x1a] sm:$0xff]
        %v1419 = vld [vmem:[%s1212 + $0x22] sm:$0xff]
        %v1420 = vld [vmem:[%s1212 + $0x32] sm:$0xff]
        %v1421 = vld [vmem:[%s1212 + $0x3a] sm:$0xff]
        %v1422 = vld [vmem:[%s1212 + $0x4a] sm:$0xff]
        %v1423 = vld [vmem:[%s1212 + $0x52] sm:$0xff]
        %v1424 = vld [vmem:[%s1212 + $0x62] sm:$0xff]
        %v1425 = vld [vmem:[%s1212 + $0x6a] sm:$0xff]
        %v1426 = vld [vmem:[%s1212 + $0x7a] sm:$0xff]
        %v1427 = vld [vmem:[%s1212 + $0x82] sm:$0xff]
        %v1428 = vld [vmem:[%s1212 + $0x92] sm:$0xff]
        %v1429 = vld [vmem:[%s1212 + $0x9a] sm:$0xff]
        %v1430 = vld [vmem:[%s1212 + $0xaa] sm:$0xff]
        %v1431 = vld [vmem:[%s1212 + $0xb2] sm:$0xff]
        %v1432 = vld [vmem:[%s1229 + $0x2] sm:$0x1]
        %v1433 = vlaneseq
        %v1434 = vshrl.u32 %v1433, 7
        %v1435 = vsub.s32 0, %v1434
        %v1436 = vrot.slane %v1432, %v1435
        %v1437 = vmul.f32 %v1416, %v1436
        %v1438 = vmul.f32 %v1417, %v1436
        %v1439 = vmul.f32 %v1418, %v1436
        %v1440 = vmul.f32 %v1419, %v1436
        %v1441 = vmul.f32 %v1420, %v1436
        %v1442 = vmul.f32 %v1421, %v1436
        %v1443 = vmul.f32 %v1422, %v1436
        %v1444 = vmul.f32 %v1423, %v1436
        %v1445 = vmul.f32 %v1424, %v1436
        %v1446 = vmul.f32 %v1425, %v1436
        %v1447 = vmul.f32 %v1426, %v1436
        %v1448 = vmul.f32 %v1427, %v1436
        %v1449 = vmul.f32 %v1428, %v1436
        %v1450 = vmul.f32 %v1429, %v1436
        %v1451 = vmul.f32 %v1430, %v1436
        %v1452 = vmul.f32 %v1431, %v1436
        %v1453 = vsel %vm236, %v1437, 0.0
        %1454 = vadd.xlane.f32.xlu0 %v1453
        %v1455 = vpop.xlane.xlu0 %1454
        %v1456 = vsel %vm236, %v1438, 0.0
        %1457 = vadd.xlane.f32.xlu0 %v1456
        %v1458 = vpop.xlane.xlu0 %1457
        %v1459 = vsel %vm236, %v1439, 0.0
        %1460 = vadd.xlane.f32.xlu0 %v1459
        %v1461 = vpop.xlane.xlu0 %1460
        %v1462 = vsel %vm236, %v1440, 0.0
        %1463 = vadd.xlane.f32.xlu0 %v1462
        %v1464 = vpop.xlane.xlu0 %1463
        %v1465 = vsel %vm236, %v1441, 0.0
        %1466 = vadd.xlane.f32.xlu0 %v1465
        %v1467 = vpop.xlane.xlu0 %1466
        %v1468 = vsel %vm236, %v1442, 0.0
        %1469 = vadd.xlane.f32.xlu0 %v1468
        %v1470 = vpop.xlane.xlu0 %1469
        %v1471 = vsel %vm236, %v1443, 0.0
        %1472 = vadd.xlane.f32.xlu0 %v1471
        %v1473 = vpop.xlane.xlu0 %1472
        %v1474 = vsel %vm236, %v1444, 0.0
        %1475 = vadd.xlane.f32.xlu0 %v1474
        %v1476 = vpop.xlane.xlu0 %1475
        %v1477 = vsel %vm236, %v1445, 0.0
        %1478 = vadd.xlane.f32.xlu0 %v1477
        %v1479 = vpop.xlane.xlu0 %1478
        %v1480 = vsel %vm236, %v1446, 0.0
        %1481 = vadd.xlane.f32.xlu0 %v1480
        %v1482 = vpop.xlane.xlu0 %1481
        %v1483 = vsel %vm236, %v1447, 0.0
        %1484 = vadd.xlane.f32.xlu0 %v1483
        %v1485 = vpop.xlane.xlu0 %1484
        %v1486 = vsel %vm236, %v1448, 0.0
        %1487 = vadd.xlane.f32.xlu0 %v1486
        %v1488 = vpop.xlane.xlu0 %1487
        %v1489 = vsel %vm236, %v1449, 0.0
        %1490 = vadd.xlane.f32.xlu0 %v1489
        %v1491 = vpop.xlane.xlu0 %1490
        %v1492 = vsel %vm236, %v1450, 0.0
        %1493 = vadd.xlane.f32.xlu0 %v1492
        %v1494 = vpop.xlane.xlu0 %1493
        %v1495 = vsel %vm236, %v1451, 0.0
        %1496 = vadd.xlane.f32.xlu0 %v1495
        %v1497 = vpop.xlane.xlu0 %1496
        %v1498 = vsel %vm236, %v1452, 0.0
        %1499 = vadd.xlane.f32.xlu0 %v1498
        %v1500 = vpop.xlane.xlu0 %1499
        %v1501 = vadd.f32 %v1400, %v1455
        %v1502 = vadd.f32 %v1401, %v1458
        %v1503 = vadd.f32 %v1402, %v1461
        %v1504 = vadd.f32 %v1403, %v1464
        %v1505 = vadd.f32 %v1404, %v1467
        %v1506 = vadd.f32 %v1405, %v1470
        %v1507 = vadd.f32 %v1406, %v1473
        %v1508 = vadd.f32 %v1407, %v1476
        %v1509 = vadd.f32 %v1408, %v1479
        %v1510 = vadd.f32 %v1409, %v1482
        %v1511 = vadd.f32 %v1410, %v1485
        %v1512 = vadd.f32 %v1411, %v1488
        %v1513 = vadd.f32 %v1412, %v1491
        %v1514 = vadd.f32 %v1413, %v1494
        %v1515 = vadd.f32 %v1414, %v1497
        %v1516 = vadd.f32 %v1415, %v1500
        %v1517 = vld [vmem:[%s1212 + $0x3] sm:$0xff]
        %v1518 = vld [vmem:[%s1212 + $0xb] sm:$0xff]
        %v1519 = vld [vmem:[%s1212 + $0x1b] sm:$0xff]
        %v1520 = vld [vmem:[%s1212 + $0x23] sm:$0xff]
        %v1521 = vld [vmem:[%s1212 + $0x33] sm:$0xff]
        %v1522 = vld [vmem:[%s1212 + $0x3b] sm:$0xff]
        %v1523 = vld [vmem:[%s1212 + $0x4b] sm:$0xff]
        %v1524 = vld [vmem:[%s1212 + $0x53] sm:$0xff]
        %v1525 = vld [vmem:[%s1212 + $0x63] sm:$0xff]
        %v1526 = vld [vmem:[%s1212 + $0x6b] sm:$0xff]
        %v1527 = vld [vmem:[%s1212 + $0x7b] sm:$0xff]
        %v1528 = vld [vmem:[%s1212 + $0x83] sm:$0xff]
        %v1529 = vld [vmem:[%s1212 + $0x93] sm:$0xff]
        %v1530 = vld [vmem:[%s1212 + $0x9b] sm:$0xff]
        %v1531 = vld [vmem:[%s1212 + $0xab] sm:$0xff]
        %v1532 = vld [vmem:[%s1212 + $0xb3] sm:$0xff]
        %v1533 = vld [vmem:[%s1229 + $0x3] sm:$0x1]
        %v1534 = vlaneseq
        %v1535 = vshrl.u32 %v1534, 7
        %v1536 = vsub.s32 0, %v1535
        %v1537 = vrot.slane %v1533, %v1536
        %v1538 = vmul.f32 %v1517, %v1537
        %v1539 = vmul.f32 %v1518, %v1537
        %v1540 = vmul.f32 %v1519, %v1537
        %v1541 = vmul.f32 %v1520, %v1537
        %v1542 = vmul.f32 %v1521, %v1537
        %v1543 = vmul.f32 %v1522, %v1537
        %v1544 = vmul.f32 %v1523, %v1537
        %v1545 = vmul.f32 %v1524, %v1537
        %v1546 = vmul.f32 %v1525, %v1537
        %v1547 = vmul.f32 %v1526, %v1537
        %v1548 = vmul.f32 %v1527, %v1537
        %v1549 = vmul.f32 %v1528, %v1537
        %v1550 = vmul.f32 %v1529, %v1537
        %v1551 = vmul.f32 %v1530, %v1537
        %v1552 = vmul.f32 %v1531, %v1537
        %v1553 = vmul.f32 %v1532, %v1537
        %v1554 = vsel %vm236, %v1538, 0.0
        %1555 = vadd.xlane.f32.xlu0 %v1554
        %v1556 = vpop.xlane.xlu0 %1555
        %v1557 = vsel %vm236, %v1539, 0.0
        %1558 = vadd.xlane.f32.xlu0 %v1557
        %v1559 = vpop.xlane.xlu0 %1558
        %v1560 = vsel %vm236, %v1540, 0.0
        %1561 = vadd.xlane.f32.xlu0 %v1560
        %v1562 = vpop.xlane.xlu0 %1561
        %v1563 = vsel %vm236, %v1541, 0.0
        %1564 = vadd.xlane.f32.xlu0 %v1563
        %v1565 = vpop.xlane.xlu0 %1564
        %v1566 = vsel %vm236, %v1542, 0.0
        %1567 = vadd.xlane.f32.xlu0 %v1566
        %v1568 = vpop.xlane.xlu0 %1567
        %v1569 = vsel %vm236, %v1543, 0.0
        %1570 = vadd.xlane.f32.xlu0 %v1569
        %v1571 = vpop.xlane.xlu0 %1570
        %v1572 = vsel %vm236, %v1544, 0.0
        %1573 = vadd.xlane.f32.xlu0 %v1572
        %v1574 = vpop.xlane.xlu0 %1573
        %v1575 = vsel %vm236, %v1545, 0.0
        %1576 = vadd.xlane.f32.xlu0 %v1575
        %v1577 = vpop.xlane.xlu0 %1576
        %v1578 = vsel %vm236, %v1546, 0.0
        %1579 = vadd.xlane.f32.xlu0 %v1578
        %v1580 = vpop.xlane.xlu0 %1579
        %v1581 = vsel %vm236, %v1547, 0.0
        %1582 = vadd.xlane.f32.xlu0 %v1581
        %v1583 = vpop.xlane.xlu0 %1582
        %v1584 = vsel %vm236, %v1548, 0.0
        %1585 = vadd.xlane.f32.xlu0 %v1584
        %v1586 = vpop.xlane.xlu0 %1585
        %v1587 = vsel %vm236, %v1549, 0.0
        %1588 = vadd.xlane.f32.xlu0 %v1587
        %v1589 = vpop.xlane.xlu0 %1588
        %v1590 = vsel %vm236, %v1550, 0.0
        %1591 = vadd.xlane.f32.xlu0 %v1590
        %v1592 = vpop.xlane.xlu0 %1591
        %v1593 = vsel %vm236, %v1551, 0.0
        %1594 = vadd.xlane.f32.xlu0 %v1593
        %v1595 = vpop.xlane.xlu0 %1594
        %v1596 = vsel %vm236, %v1552, 0.0
        %1597 = vadd.xlane.f32.xlu0 %v1596
        %v1598 = vpop.xlane.xlu0 %1597
        %v1599 = vsel %vm236, %v1553, 0.0
        %1600 = vadd.xlane.f32.xlu0 %v1599
        %v1601 = vpop.xlane.xlu0 %1600
        %v1602 = vadd.f32 %v1501, %v1556
        %v1603 = vadd.f32 %v1502, %v1559
        %v1604 = vadd.f32 %v1503, %v1562
        %v1605 = vadd.f32 %v1504, %v1565
        %v1606 = vadd.f32 %v1505, %v1568
        %v1607 = vadd.f32 %v1506, %v1571
        %v1608 = vadd.f32 %v1507, %v1574
        %v1609 = vadd.f32 %v1508, %v1577
        %v1610 = vadd.f32 %v1509, %v1580
        %v1611 = vadd.f32 %v1510, %v1583
        %v1612 = vadd.f32 %v1511, %v1586
        %v1613 = vadd.f32 %v1512, %v1589
        %v1614 = vadd.f32 %v1513, %v1592
        %v1615 = vadd.f32 %v1514, %v1595
        %v1616 = vadd.f32 %v1515, %v1598
        %v1617 = vadd.f32 %v1516, %v1601
        %v1618 = vld [vmem:[%s1212 + $0x4] sm:$0xff]
        %v1619 = vld [vmem:[%s1212 + $0xc] sm:$0xff]
        %v1620 = vld [vmem:[%s1212 + $0x1c] sm:$0xff]
        %v1621 = vld [vmem:[%s1212 + $0x24] sm:$0xff]
        %v1622 = vld [vmem:[%s1212 + $0x34] sm:$0xff]
        %v1623 = vld [vmem:[%s1212 + $0x3c] sm:$0xff]
        %v1624 = vld [vmem:[%s1212 + $0x4c] sm:$0xff]
        %v1625 = vld [vmem:[%s1212 + $0x54] sm:$0xff]
        %v1626 = vld [vmem:[%s1212 + $0x64] sm:$0xff]
        %v1627 = vld [vmem:[%s1212 + $0x6c] sm:$0xff]
        %v1628 = vld [vmem:[%s1212 + $0x7c] sm:$0xff]
        %v1629 = vld [vmem:[%s1212 + $0x84] sm:$0xff]
        %v1630 = vld [vmem:[%s1212 + $0x94] sm:$0xff]
        %v1631 = vld [vmem:[%s1212 + $0x9c] sm:$0xff]
        %v1632 = vld [vmem:[%s1212 + $0xac] sm:$0xff]
        %v1633 = vld [vmem:[%s1212 + $0xb4] sm:$0xff]
        %v1634 = vld [vmem:[%s1229 + $0x4] sm:$0x1]
        %v1635 = vlaneseq
        %v1636 = vshrl.u32 %v1635, 7
        %v1637 = vsub.s32 0, %v1636
        %v1638 = vrot.slane %v1634, %v1637
        %v1639 = vmul.f32 %v1618, %v1638
        %v1640 = vmul.f32 %v1619, %v1638
        %v1641 = vmul.f32 %v1620, %v1638
        %v1642 = vmul.f32 %v1621, %v1638
        %v1643 = vmul.f32 %v1622, %v1638
        %v1644 = vmul.f32 %v1623, %v1638
        %v1645 = vmul.f32 %v1624, %v1638
        %v1646 = vmul.f32 %v1625, %v1638
        %v1647 = vmul.f32 %v1626, %v1638
        %v1648 = vmul.f32 %v1627, %v1638
        %v1649 = vmul.f32 %v1628, %v1638
        %v1650 = vmul.f32 %v1629, %v1638
        %v1651 = vmul.f32 %v1630, %v1638
        %v1652 = vmul.f32 %v1631, %v1638
        %v1653 = vmul.f32 %v1632, %v1638
        %v1654 = vmul.f32 %v1633, %v1638
        %v1655 = vsel %vm236, %v1639, 0.0
        %1656 = vadd.xlane.f32.xlu0 %v1655
        %v1657 = vpop.xlane.xlu0 %1656
        %v1658 = vsel %vm236, %v1640, 0.0
        %1659 = vadd.xlane.f32.xlu0 %v1658
        %v1660 = vpop.xlane.xlu0 %1659
        %v1661 = vsel %vm236, %v1641, 0.0
        %1662 = vadd.xlane.f32.xlu0 %v1661
        %v1663 = vpop.xlane.xlu0 %1662
        %v1664 = vsel %vm236, %v1642, 0.0
        %1665 = vadd.xlane.f32.xlu0 %v1664
        %v1666 = vpop.xlane.xlu0 %1665
        %v1667 = vsel %vm236, %v1643, 0.0
        %1668 = vadd.xlane.f32.xlu0 %v1667
        %v1669 = vpop.xlane.xlu0 %1668
        %v1670 = vsel %vm236, %v1644, 0.0
        %1671 = vadd.xlane.f32.xlu0 %v1670
        %v1672 = vpop.xlane.xlu0 %1671
        %v1673 = vsel %vm236, %v1645, 0.0
        %1674 = vadd.xlane.f32.xlu0 %v1673
        %v1675 = vpop.xlane.xlu0 %1674
        %v1676 = vsel %vm236, %v1646, 0.0
        %1677 = vadd.xlane.f32.xlu0 %v1676
        %v1678 = vpop.xlane.xlu0 %1677
        %v1679 = vsel %vm236, %v1647, 0.0
        %1680 = vadd.xlane.f32.xlu0 %v1679
        %v1681 = vpop.xlane.xlu0 %1680
        %v1682 = vsel %vm236, %v1648, 0.0
        %1683 = vadd.xlane.f32.xlu0 %v1682
        %v1684 = vpop.xlane.xlu0 %1683
        %v1685 = vsel %vm236, %v1649, 0.0
        %1686 = vadd.xlane.f32.xlu0 %v1685
        %v1687 = vpop.xlane.xlu0 %1686
        %v1688 = vsel %vm236, %v1650, 0.0
        %1689 = vadd.xlane.f32.xlu0 %v1688
        %v1690 = vpop.xlane.xlu0 %1689
        %v1691 = vsel %vm236, %v1651, 0.0
        %1692 = vadd.xlane.f32.xlu0 %v1691
        %v1693 = vpop.xlane.xlu0 %1692
        %v1694 = vsel %vm236, %v1652, 0.0
        %1695 = vadd.xlane.f32.xlu0 %v1694
        %v1696 = vpop.xlane.xlu0 %1695
        %v1697 = vsel %vm236, %v1653, 0.0
        %1698 = vadd.xlane.f32.xlu0 %v1697
        %v1699 = vpop.xlane.xlu0 %1698
        %v1700 = vsel %vm236, %v1654, 0.0
        %1701 = vadd.xlane.f32.xlu0 %v1700
        %v1702 = vpop.xlane.xlu0 %1701
        %v1703 = vadd.f32 %v1602, %v1657
        %v1704 = vadd.f32 %v1603, %v1660
        %v1705 = vadd.f32 %v1604, %v1663
        %v1706 = vadd.f32 %v1605, %v1666
        %v1707 = vadd.f32 %v1606, %v1669
        %v1708 = vadd.f32 %v1607, %v1672
        %v1709 = vadd.f32 %v1608, %v1675
        %v1710 = vadd.f32 %v1609, %v1678
        %v1711 = vadd.f32 %v1610, %v1681
        %v1712 = vadd.f32 %v1611, %v1684
        %v1713 = vadd.f32 %v1612, %v1687
        %v1714 = vadd.f32 %v1613, %v1690
        %v1715 = vadd.f32 %v1614, %v1693
        %v1716 = vadd.f32 %v1615, %v1696
        %v1717 = vadd.f32 %v1616, %v1699
        %v1718 = vadd.f32 %v1617, %v1702
        %s1719 = scalar_lea.vmem %s198, 72
        %v1720 = vld [vmem:[%s1719] sm:$0xff]
        %v1721 = vld [vmem:[%s1719 + $0x8] sm:$0xff]
        %v1722 = vld [vmem:[%s1719 + $0x18] sm:$0xff]
        %v1723 = vld [vmem:[%s1719 + $0x20] sm:$0xff]
        %v1724 = vld [vmem:[%s1719 + $0x30] sm:$0xff]
        %v1725 = vld [vmem:[%s1719 + $0x38] sm:$0xff]
        %v1726 = vld [vmem:[%s1719 + $0x48] sm:$0xff]
        %v1727 = vld [vmem:[%s1719 + $0x50] sm:$0xff]
        %v1728 = vld [vmem:[%s1719 + $0x60] sm:$0xff]
        %v1729 = vld [vmem:[%s1719 + $0x68] sm:$0xff]
        %v1730 = vld [vmem:[%s1719 + $0x78] sm:$0xff]
        %v1731 = vld [vmem:[%s1719 + $0x80] sm:$0xff]
        %v1732 = vld [vmem:[%s1719 + $0x90] sm:$0xff]
        %v1733 = vld [vmem:[%s1719 + $0x98] sm:$0xff]
        %v1734 = vld [vmem:[%s1719 + $0xa8] sm:$0xff]
        %v1735 = vld [vmem:[%s1719 + $0xb0] sm:$0xff]
        %s1736 = scalar_lea.vmem %s1, 24
        %v1737 = vld [vmem:[%s1736] sm:$0x1]
        %v1738 = vlaneseq
        %v1739 = vshrl.u32 %v1738, 7
        %v1740 = vsub.s32 0, %v1739
        %v1741 = vrot.slane %v1737, %v1740
        %v1742 = vmul.f32 %v1720, %v1741
        %v1743 = vmul.f32 %v1721, %v1741
        %v1744 = vmul.f32 %v1722, %v1741
        %v1745 = vmul.f32 %v1723, %v1741
        %v1746 = vmul.f32 %v1724, %v1741
        %v1747 = vmul.f32 %v1725, %v1741
        %v1748 = vmul.f32 %v1726, %v1741
        %v1749 = vmul.f32 %v1727, %v1741
        %v1750 = vmul.f32 %v1728, %v1741
        %v1751 = vmul.f32 %v1729, %v1741
        %v1752 = vmul.f32 %v1730, %v1741
        %v1753 = vmul.f32 %v1731, %v1741
        %v1754 = vmul.f32 %v1732, %v1741
        %v1755 = vmul.f32 %v1733, %v1741
        %v1756 = vmul.f32 %v1734, %v1741
        %v1757 = vmul.f32 %v1735, %v1741
        %v1758 = vsel %vm236, %v1742, 0.0
        %1759 = vadd.xlane.f32.xlu0 %v1758
        %v1760 = vpop.xlane.xlu0 %1759
        %v1761 = vsel %vm236, %v1743, 0.0
        %1762 = vadd.xlane.f32.xlu0 %v1761
        %v1763 = vpop.xlane.xlu0 %1762
        %v1764 = vsel %vm236, %v1744, 0.0
        %1765 = vadd.xlane.f32.xlu0 %v1764
        %v1766 = vpop.xlane.xlu0 %1765
        %v1767 = vsel %vm236, %v1745, 0.0
        %1768 = vadd.xlane.f32.xlu0 %v1767
        %v1769 = vpop.xlane.xlu0 %1768
        %v1770 = vsel %vm236, %v1746, 0.0
        %1771 = vadd.xlane.f32.xlu0 %v1770
        %v1772 = vpop.xlane.xlu0 %1771
        %v1773 = vsel %vm236, %v1747, 0.0
        %1774 = vadd.xlane.f32.xlu0 %v1773
        %v1775 = vpop.xlane.xlu0 %1774
        %v1776 = vsel %vm236, %v1748, 0.0
        %1777 = vadd.xlane.f32.xlu0 %v1776
        %v1778 = vpop.xlane.xlu0 %1777
        %v1779 = vsel %vm236, %v1749, 0.0
        %1780 = vadd.xlane.f32.xlu0 %v1779
        %v1781 = vpop.xlane.xlu0 %1780
        %v1782 = vsel %vm236, %v1750, 0.0
        %1783 = vadd.xlane.f32.xlu0 %v1782
        %v1784 = vpop.xlane.xlu0 %1783
        %v1785 = vsel %vm236, %v1751, 0.0
        %1786 = vadd.xlane.f32.xlu0 %v1785
        %v1787 = vpop.xlane.xlu0 %1786
        %v1788 = vsel %vm236, %v1752, 0.0
        %1789 = vadd.xlane.f32.xlu0 %v1788
        %v1790 = vpop.xlane.xlu0 %1789
        %v1791 = vsel %vm236, %v1753, 0.0
        %1792 = vadd.xlane.f32.xlu0 %v1791
        %v1793 = vpop.xlane.xlu0 %1792
        %v1794 = vsel %vm236, %v1754, 0.0
        %1795 = vadd.xlane.f32.xlu0 %v1794
        %v1796 = vpop.xlane.xlu0 %1795
        %v1797 = vsel %vm236, %v1755, 0.0
        %1798 = vadd.xlane.f32.xlu0 %v1797
        %v1799 = vpop.xlane.xlu0 %1798
        %v1800 = vsel %vm236, %v1756, 0.0
        %1801 = vadd.xlane.f32.xlu0 %v1800
        %v1802 = vpop.xlane.xlu0 %1801
        %v1803 = vsel %vm236, %v1757, 0.0
        %1804 = vadd.xlane.f32.xlu0 %v1803
        %v1805 = vpop.xlane.xlu0 %1804
        %v1806 = vadd.f32 %v1703, %v1760
        %v1807 = vadd.f32 %v1704, %v1763
        %v1808 = vadd.f32 %v1705, %v1766
        %v1809 = vadd.f32 %v1706, %v1769
        %v1810 = vadd.f32 %v1707, %v1772
        %v1811 = vadd.f32 %v1708, %v1775
        %v1812 = vadd.f32 %v1709, %v1778
        %v1813 = vadd.f32 %v1710, %v1781
        %v1814 = vadd.f32 %v1711, %v1784
        %v1815 = vadd.f32 %v1712, %v1787
        %v1816 = vadd.f32 %v1713, %v1790
        %v1817 = vadd.f32 %v1714, %v1793
        %v1818 = vadd.f32 %v1715, %v1796
        %v1819 = vadd.f32 %v1716, %v1799
        %v1820 = vadd.f32 %v1717, %v1802
        %v1821 = vadd.f32 %v1718, %v1805
        %v1822 = vld [vmem:[%s1719 + $0x1] sm:$0xff]
        %v1823 = vld [vmem:[%s1719 + $0x9] sm:$0xff]
        %v1824 = vld [vmem:[%s1719 + $0x19] sm:$0xff]
        %v1825 = vld [vmem:[%s1719 + $0x21] sm:$0xff]
        %v1826 = vld [vmem:[%s1719 + $0x31] sm:$0xff]
        %v1827 = vld [vmem:[%s1719 + $0x39] sm:$0xff]
        %v1828 = vld [vmem:[%s1719 + $0x49] sm:$0xff]
        %v1829 = vld [vmem:[%s1719 + $0x51] sm:$0xff]
        %v1830 = vld [vmem:[%s1719 + $0x61] sm:$0xff]
        %v1831 = vld [vmem:[%s1719 + $0x69] sm:$0xff]
        %v1832 = vld [vmem:[%s1719 + $0x79] sm:$0xff]
        %v1833 = vld [vmem:[%s1719 + $0x81] sm:$0xff]
        %v1834 = vld [vmem:[%s1719 + $0x91] sm:$0xff]
        %v1835 = vld [vmem:[%s1719 + $0x99] sm:$0xff]
        %v1836 = vld [vmem:[%s1719 + $0xa9] sm:$0xff]
        %v1837 = vld [vmem:[%s1719 + $0xb1] sm:$0xff]
        %v1838 = vld [vmem:[%s1736 + $0x1] sm:$0x1]
        %v1839 = vlaneseq
        %v1840 = vshrl.u32 %v1839, 7
        %v1841 = vsub.s32 0, %v1840
        %v1842 = vrot.slane %v1838, %v1841
        %v1843 = vmul.f32 %v1822, %v1842
        %v1844 = vmul.f32 %v1823, %v1842
        %v1845 = vmul.f32 %v1824, %v1842
        %v1846 = vmul.f32 %v1825, %v1842
        %v1847 = vmul.f32 %v1826, %v1842
        %v1848 = vmul.f32 %v1827, %v1842
        %v1849 = vmul.f32 %v1828, %v1842
        %v1850 = vmul.f32 %v1829, %v1842
        %v1851 = vmul.f32 %v1830, %v1842
        %v1852 = vmul.f32 %v1831, %v1842
        %v1853 = vmul.f32 %v1832, %v1842
        %v1854 = vmul.f32 %v1833, %v1842
        %v1855 = vmul.f32 %v1834, %v1842
        %v1856 = vmul.f32 %v1835, %v1842
        %v1857 = vmul.f32 %v1836, %v1842
        %v1858 = vmul.f32 %v1837, %v1842
        %v1859 = vsel %vm236, %v1843, 0.0
        %1860 = vadd.xlane.f32.xlu0 %v1859
        %v1861 = vpop.xlane.xlu0 %1860
        %v1862 = vsel %vm236, %v1844, 0.0
        %1863 = vadd.xlane.f32.xlu0 %v1862
        %v1864 = vpop.xlane.xlu0 %1863
        %v1865 = vsel %vm236, %v1845, 0.0
        %1866 = vadd.xlane.f32.xlu0 %v1865
        %v1867 = vpop.xlane.xlu0 %1866
        %v1868 = vsel %vm236, %v1846, 0.0
        %1869 = vadd.xlane.f32.xlu0 %v1868
        %v1870 = vpop.xlane.xlu0 %1869
        %v1871 = vsel %vm236, %v1847, 0.0
        %1872 = vadd.xlane.f32.xlu0 %v1871
        %v1873 = vpop.xlane.xlu0 %1872
        %v1874 = vsel %vm236, %v1848, 0.0
        %1875 = vadd.xlane.f32.xlu0 %v1874
        %v1876 = vpop.xlane.xlu0 %1875
        %v1877 = vsel %vm236, %v1849, 0.0
        %1878 = vadd.xlane.f32.xlu0 %v1877
        %v1879 = vpop.xlane.xlu0 %1878
        %v1880 = vsel %vm236, %v1850, 0.0
        %1881 = vadd.xlane.f32.xlu0 %v1880
        %v1882 = vpop.xlane.xlu0 %1881
        %v1883 = vsel %vm236, %v1851, 0.0
        %1884 = vadd.xlane.f32.xlu0 %v1883
        %v1885 = vpop.xlane.xlu0 %1884
        %v1886 = vsel %vm236, %v1852, 0.0
        %1887 = vadd.xlane.f32.xlu0 %v1886
        %v1888 = vpop.xlane.xlu0 %1887
        %v1889 = vsel %vm236, %v1853, 0.0
        %1890 = vadd.xlane.f32.xlu0 %v1889
        %v1891 = vpop.xlane.xlu0 %1890
        %v1892 = vsel %vm236, %v1854, 0.0
        %1893 = vadd.xlane.f32.xlu0 %v1892
        %v1894 = vpop.xlane.xlu0 %1893
        %v1895 = vsel %vm236, %v1855, 0.0
        %1896 = vadd.xlane.f32.xlu0 %v1895
        %v1897 = vpop.xlane.xlu0 %1896
        %v1898 = vsel %vm236, %v1856, 0.0
        %1899 = vadd.xlane.f32.xlu0 %v1898
        %v1900 = vpop.xlane.xlu0 %1899
        %v1901 = vsel %vm236, %v1857, 0.0
        %1902 = vadd.xlane.f32.xlu0 %v1901
        %v1903 = vpop.xlane.xlu0 %1902
        %v1904 = vsel %vm236, %v1858, 0.0
        %1905 = vadd.xlane.f32.xlu0 %v1904
        %v1906 = vpop.xlane.xlu0 %1905
        %v1907 = vadd.f32 %v1806, %v1861
        %v1908 = vadd.f32 %v1807, %v1864
        %v1909 = vadd.f32 %v1808, %v1867
        %v1910 = vadd.f32 %v1809, %v1870
        %v1911 = vadd.f32 %v1810, %v1873
        %v1912 = vadd.f32 %v1811, %v1876
        %v1913 = vadd.f32 %v1812, %v1879
        %v1914 = vadd.f32 %v1813, %v1882
        %v1915 = vadd.f32 %v1814, %v1885
        %v1916 = vadd.f32 %v1815, %v1888
        %v1917 = vadd.f32 %v1816, %v1891
        %v1918 = vadd.f32 %v1817, %v1894
        %v1919 = vadd.f32 %v1818, %v1897
        %v1920 = vadd.f32 %v1819, %v1900
        %v1921 = vadd.f32 %v1820, %v1903
        %v1922 = vadd.f32 %v1821, %v1906
        %v1923 = vld [vmem:[%s1719 + $0x2] sm:$0xff]
        %v1924 = vld [vmem:[%s1719 + $0xa] sm:$0xff]
        %v1925 = vld [vmem:[%s1719 + $0x1a] sm:$0xff]
        %v1926 = vld [vmem:[%s1719 + $0x22] sm:$0xff]
        %v1927 = vld [vmem:[%s1719 + $0x32] sm:$0xff]
        %v1928 = vld [vmem:[%s1719 + $0x3a] sm:$0xff]
        %v1929 = vld [vmem:[%s1719 + $0x4a] sm:$0xff]
        %v1930 = vld [vmem:[%s1719 + $0x52] sm:$0xff]
        %v1931 = vld [vmem:[%s1719 + $0x62] sm:$0xff]
        %v1932 = vld [vmem:[%s1719 + $0x6a] sm:$0xff]
        %v1933 = vld [vmem:[%s1719 + $0x7a] sm:$0xff]
        %v1934 = vld [vmem:[%s1719 + $0x82] sm:$0xff]
        %v1935 = vld [vmem:[%s1719 + $0x92] sm:$0xff]
        %v1936 = vld [vmem:[%s1719 + $0x9a] sm:$0xff]
        %v1937 = vld [vmem:[%s1719 + $0xaa] sm:$0xff]
        %v1938 = vld [vmem:[%s1719 + $0xb2] sm:$0xff]
        %v1939 = vld [vmem:[%s1736 + $0x2] sm:$0x1]
        %v1940 = vlaneseq
        %v1941 = vshrl.u32 %v1940, 7
        %v1942 = vsub.s32 0, %v1941
        %v1943 = vrot.slane %v1939, %v1942
        %v1944 = vmul.f32 %v1923, %v1943
        %v1945 = vmul.f32 %v1924, %v1943
        %v1946 = vmul.f32 %v1925, %v1943
        %v1947 = vmul.f32 %v1926, %v1943
        %v1948 = vmul.f32 %v1927, %v1943
        %v1949 = vmul.f32 %v1928, %v1943
        %v1950 = vmul.f32 %v1929, %v1943
        %v1951 = vmul.f32 %v1930, %v1943
        %v1952 = vmul.f32 %v1931, %v1943
        %v1953 = vmul.f32 %v1932, %v1943
        %v1954 = vmul.f32 %v1933, %v1943
        %v1955 = vmul.f32 %v1934, %v1943
        %v1956 = vmul.f32 %v1935, %v1943
        %v1957 = vmul.f32 %v1936, %v1943
        %v1958 = vmul.f32 %v1937, %v1943
        %v1959 = vmul.f32 %v1938, %v1943
        %v1960 = vsel %vm236, %v1944, 0.0
        %1961 = vadd.xlane.f32.xlu0 %v1960
        %v1962 = vpop.xlane.xlu0 %1961
        %v1963 = vsel %vm236, %v1945, 0.0
        %1964 = vadd.xlane.f32.xlu0 %v1963
        %v1965 = vpop.xlane.xlu0 %1964
        %v1966 = vsel %vm236, %v1946, 0.0
        %1967 = vadd.xlane.f32.xlu0 %v1966
        %v1968 = vpop.xlane.xlu0 %1967
        %v1969 = vsel %vm236, %v1947, 0.0
        %1970 = vadd.xlane.f32.xlu0 %v1969
        %v1971 = vpop.xlane.xlu0 %1970
        %v1972 = vsel %vm236, %v1948, 0.0
        %1973 = vadd.xlane.f32.xlu0 %v1972
        %v1974 = vpop.xlane.xlu0 %1973
        %v1975 = vsel %vm236, %v1949, 0.0
        %1976 = vadd.xlane.f32.xlu0 %v1975
        %v1977 = vpop.xlane.xlu0 %1976
        %v1978 = vsel %vm236, %v1950, 0.0
        %1979 = vadd.xlane.f32.xlu0 %v1978
        %v1980 = vpop.xlane.xlu0 %1979
        %v1981 = vsel %vm236, %v1951, 0.0
        %1982 = vadd.xlane.f32.xlu0 %v1981
        %v1983 = vpop.xlane.xlu0 %1982
        %v1984 = vsel %vm236, %v1952, 0.0
        %1985 = vadd.xlane.f32.xlu0 %v1984
        %v1986 = vpop.xlane.xlu0 %1985
        %v1987 = vsel %vm236, %v1953, 0.0
        %1988 = vadd.xlane.f32.xlu0 %v1987
        %v1989 = vpop.xlane.xlu0 %1988
        %v1990 = vsel %vm236, %v1954, 0.0
        %1991 = vadd.xlane.f32.xlu0 %v1990
        %v1992 = vpop.xlane.xlu0 %1991
        %v1993 = vsel %vm236, %v1955, 0.0
        %1994 = vadd.xlane.f32.xlu0 %v1993
        %v1995 = vpop.xlane.xlu0 %1994
        %v1996 = vsel %vm236, %v1956, 0.0
        %1997 = vadd.xlane.f32.xlu0 %v1996
        %v1998 = vpop.xlane.xlu0 %1997
        %v1999 = vsel %vm236, %v1957, 0.0
        %2000 = vadd.xlane.f32.xlu0 %v1999
        %v2001 = vpop.xlane.xlu0 %2000
        %v2002 = vsel %vm236, %v1958, 0.0
        %2003 = vadd.xlane.f32.xlu0 %v2002
        %v2004 = vpop.xlane.xlu0 %2003
        %v2005 = vsel %vm236, %v1959, 0.0
        %2006 = vadd.xlane.f32.xlu0 %v2005
        %v2007 = vpop.xlane.xlu0 %2006
        %v2008 = vadd.f32 %v1907, %v1962
        %v2009 = vadd.f32 %v1908, %v1965
        %v2010 = vadd.f32 %v1909, %v1968
        %v2011 = vadd.f32 %v1910, %v1971
        %v2012 = vadd.f32 %v1911, %v1974
        %v2013 = vadd.f32 %v1912, %v1977
        %v2014 = vadd.f32 %v1913, %v1980
        %v2015 = vadd.f32 %v1914, %v1983
        %v2016 = vadd.f32 %v1915, %v1986
        %v2017 = vadd.f32 %v1916, %v1989
        %v2018 = vadd.f32 %v1917, %v1992
        %v2019 = vadd.f32 %v1918, %v1995
        %v2020 = vadd.f32 %v1919, %v1998
        %v2021 = vadd.f32 %v1920, %v2001
        %v2022 = vadd.f32 %v1921, %v2004
        %v2023 = vadd.f32 %v1922, %v2007
        %v2024 = vld [vmem:[%s1719 + $0x3] sm:$0xff]
        %v2025 = vld [vmem:[%s1719 + $0xb] sm:$0xff]
        %v2026 = vld [vmem:[%s1719 + $0x1b] sm:$0xff]
        %v2027 = vld [vmem:[%s1719 + $0x23] sm:$0xff]
        %v2028 = vld [vmem:[%s1719 + $0x33] sm:$0xff]
        %v2029 = vld [vmem:[%s1719 + $0x3b] sm:$0xff]
        %v2030 = vld [vmem:[%s1719 + $0x4b] sm:$0xff]
        %v2031 = vld [vmem:[%s1719 + $0x53] sm:$0xff]
        %v2032 = vld [vmem:[%s1719 + $0x63] sm:$0xff]
        %v2033 = vld [vmem:[%s1719 + $0x6b] sm:$0xff]
        %v2034 = vld [vmem:[%s1719 + $0x7b] sm:$0xff]
        %v2035 = vld [vmem:[%s1719 + $0x83] sm:$0xff]
        %v2036 = vld [vmem:[%s1719 + $0x93] sm:$0xff]
        %v2037 = vld [vmem:[%s1719 + $0x9b] sm:$0xff]
        %v2038 = vld [vmem:[%s1719 + $0xab] sm:$0xff]
        %v2039 = vld [vmem:[%s1719 + $0xb3] sm:$0xff]
        %v2040 = vld [vmem:[%s1736 + $0x3] sm:$0x1]
        %v2041 = vlaneseq
        %v2042 = vshrl.u32 %v2041, 7
        %v2043 = vsub.s32 0, %v2042
        %v2044 = vrot.slane %v2040, %v2043
        %v2045 = vmul.f32 %v2024, %v2044
        %v2046 = vmul.f32 %v2025, %v2044
        %v2047 = vmul.f32 %v2026, %v2044
        %v2048 = vmul.f32 %v2027, %v2044
        %v2049 = vmul.f32 %v2028, %v2044
        %v2050 = vmul.f32 %v2029, %v2044
        %v2051 = vmul.f32 %v2030, %v2044
        %v2052 = vmul.f32 %v2031, %v2044
        %v2053 = vmul.f32 %v2032, %v2044
        %v2054 = vmul.f32 %v2033, %v2044
        %v2055 = vmul.f32 %v2034, %v2044
        %v2056 = vmul.f32 %v2035, %v2044
        %v2057 = vmul.f32 %v2036, %v2044
        %v2058 = vmul.f32 %v2037, %v2044
        %v2059 = vmul.f32 %v2038, %v2044
        %v2060 = vmul.f32 %v2039, %v2044
        %v2061 = vsel %vm236, %v2045, 0.0
        %2062 = vadd.xlane.f32.xlu0 %v2061
        %v2063 = vpop.xlane.xlu0 %2062
        %v2064 = vsel %vm236, %v2046, 0.0
        %2065 = vadd.xlane.f32.xlu0 %v2064
        %v2066 = vpop.xlane.xlu0 %2065
        %v2067 = vsel %vm236, %v2047, 0.0
        %2068 = vadd.xlane.f32.xlu0 %v2067
        %v2069 = vpop.xlane.xlu0 %2068
        %v2070 = vsel %vm236, %v2048, 0.0
        %2071 = vadd.xlane.f32.xlu0 %v2070
        %v2072 = vpop.xlane.xlu0 %2071
        %v2073 = vsel %vm236, %v2049, 0.0
        %2074 = vadd.xlane.f32.xlu0 %v2073
        %v2075 = vpop.xlane.xlu0 %2074
        %v2076 = vsel %vm236, %v2050, 0.0
        %2077 = vadd.xlane.f32.xlu0 %v2076
        %v2078 = vpop.xlane.xlu0 %2077
        %v2079 = vsel %vm236, %v2051, 0.0
        %2080 = vadd.xlane.f32.xlu0 %v2079
        %v2081 = vpop.xlane.xlu0 %2080
        %v2082 = vsel %vm236, %v2052, 0.0
        %2083 = vadd.xlane.f32.xlu0 %v2082
        %v2084 = vpop.xlane.xlu0 %2083
        %v2085 = vsel %vm236, %v2053, 0.0
        %2086 = vadd.xlane.f32.xlu0 %v2085
        %v2087 = vpop.xlane.xlu0 %2086
        %v2088 = vsel %vm236, %v2054, 0.0
        %2089 = vadd.xlane.f32.xlu0 %v2088
        %v2090 = vpop.xlane.xlu0 %2089
        %v2091 = vsel %vm236, %v2055, 0.0
        %2092 = vadd.xlane.f32.xlu0 %v2091
        %v2093 = vpop.xlane.xlu0 %2092
        %v2094 = vsel %vm236, %v2056, 0.0
        %2095 = vadd.xlane.f32.xlu0 %v2094
        %v2096 = vpop.xlane.xlu0 %2095
        %v2097 = vsel %vm236, %v2057, 0.0
        %2098 = vadd.xlane.f32.xlu0 %v2097
        %v2099 = vpop.xlane.xlu0 %2098
        %v2100 = vsel %vm236, %v2058, 0.0
        %2101 = vadd.xlane.f32.xlu0 %v2100
        %v2102 = vpop.xlane.xlu0 %2101
        %v2103 = vsel %vm236, %v2059, 0.0
        %2104 = vadd.xlane.f32.xlu0 %v2103
        %v2105 = vpop.xlane.xlu0 %2104
        %v2106 = vsel %vm236, %v2060, 0.0
        %2107 = vadd.xlane.f32.xlu0 %v2106
        %v2108 = vpop.xlane.xlu0 %2107
        %v2109 = vadd.f32 %v2008, %v2063
        %v2110 = vadd.f32 %v2009, %v2066
        %v2111 = vadd.f32 %v2010, %v2069
        %v2112 = vadd.f32 %v2011, %v2072
        %v2113 = vadd.f32 %v2012, %v2075
        %v2114 = vadd.f32 %v2013, %v2078
        %v2115 = vadd.f32 %v2014, %v2081
        %v2116 = vadd.f32 %v2015, %v2084
        %v2117 = vadd.f32 %v2016, %v2087
        %v2118 = vadd.f32 %v2017, %v2090
        %v2119 = vadd.f32 %v2018, %v2093
        %v2120 = vadd.f32 %v2019, %v2096
        %v2121 = vadd.f32 %v2020, %v2099
        %v2122 = vadd.f32 %v2021, %v2102
        %v2123 = vadd.f32 %v2022, %v2105
        %v2124 = vadd.f32 %v2023, %v2108
        %v2125 = vld [vmem:[%s1719 + $0x4] sm:$0xff]
        %v2126 = vld [vmem:[%s1719 + $0xc] sm:$0xff]
        %v2127 = vld [vmem:[%s1719 + $0x1c] sm:$0xff]
        %v2128 = vld [vmem:[%s1719 + $0x24] sm:$0xff]
        %v2129 = vld [vmem:[%s1719 + $0x34] sm:$0xff]
        %v2130 = vld [vmem:[%s1719 + $0x3c] sm:$0xff]
        %v2131 = vld [vmem:[%s1719 + $0x4c] sm:$0xff]
        %v2132 = vld [vmem:[%s1719 + $0x54] sm:$0xff]
        %v2133 = vld [vmem:[%s1719 + $0x64] sm:$0xff]
        %v2134 = vld [vmem:[%s1719 + $0x6c] sm:$0xff]
        %v2135 = vld [vmem:[%s1719 + $0x7c] sm:$0xff]
        %v2136 = vld [vmem:[%s1719 + $0x84] sm:$0xff]
        %v2137 = vld [vmem:[%s1719 + $0x94] sm:$0xff]
        %v2138 = vld [vmem:[%s1719 + $0x9c] sm:$0xff]
        %v2139 = vld [vmem:[%s1719 + $0xac] sm:$0xff]
        %v2140 = vld [vmem:[%s1719 + $0xb4] sm:$0xff]
        %v2141 = vld [vmem:[%s1736 + $0x4] sm:$0x1]
        %v2142 = vlaneseq
        %v2143 = vshrl.u32 %v2142, 7
        %v2144 = vsub.s32 0, %v2143
        %v2145 = vrot.slane %v2141, %v2144
        %v2146 = vmul.f32 %v2125, %v2145
        %v2147 = vmul.f32 %v2126, %v2145
        %v2148 = vmul.f32 %v2127, %v2145
        %v2149 = vmul.f32 %v2128, %v2145
        %v2150 = vmul.f32 %v2129, %v2145
        %v2151 = vmul.f32 %v2130, %v2145
        %v2152 = vmul.f32 %v2131, %v2145
        %v2153 = vmul.f32 %v2132, %v2145
        %v2154 = vmul.f32 %v2133, %v2145
        %v2155 = vmul.f32 %v2134, %v2145
        %v2156 = vmul.f32 %v2135, %v2145
        %v2157 = vmul.f32 %v2136, %v2145
        %v2158 = vmul.f32 %v2137, %v2145
        %v2159 = vmul.f32 %v2138, %v2145
        %v2160 = vmul.f32 %v2139, %v2145
        %v2161 = vmul.f32 %v2140, %v2145
        %v2162 = vsel %vm236, %v2146, 0.0
        %2163 = vadd.xlane.f32.xlu0 %v2162
        %v2164 = vpop.xlane.xlu0 %2163
        %v2165 = vsel %vm236, %v2147, 0.0
        %2166 = vadd.xlane.f32.xlu0 %v2165
        %v2167 = vpop.xlane.xlu0 %2166
        %v2168 = vsel %vm236, %v2148, 0.0
        %2169 = vadd.xlane.f32.xlu0 %v2168
        %v2170 = vpop.xlane.xlu0 %2169
        %v2171 = vsel %vm236, %v2149, 0.0
        %2172 = vadd.xlane.f32.xlu0 %v2171
        %v2173 = vpop.xlane.xlu0 %2172
        %v2174 = vsel %vm236, %v2150, 0.0
        %2175 = vadd.xlane.f32.xlu0 %v2174
        %v2176 = vpop.xlane.xlu0 %2175
        %v2177 = vsel %vm236, %v2151, 0.0
        %2178 = vadd.xlane.f32.xlu0 %v2177
        %v2179 = vpop.xlane.xlu0 %2178
        %v2180 = vsel %vm236, %v2152, 0.0
        %2181 = vadd.xlane.f32.xlu0 %v2180
        %v2182 = vpop.xlane.xlu0 %2181
        %v2183 = vsel %vm236, %v2153, 0.0
        %2184 = vadd.xlane.f32.xlu0 %v2183
        %v2185 = vpop.xlane.xlu0 %2184
        %v2186 = vsel %vm236, %v2154, 0.0
        %2187 = vadd.xlane.f32.xlu0 %v2186
        %v2188 = vpop.xlane.xlu0 %2187
        %v2189 = vsel %vm236, %v2155, 0.0
        %2190 = vadd.xlane.f32.xlu0 %v2189
        %v2191 = vpop.xlane.xlu0 %2190
        %v2192 = vsel %vm236, %v2156, 0.0
        %2193 = vadd.xlane.f32.xlu0 %v2192
        %v2194 = vpop.xlane.xlu0 %2193
        %v2195 = vsel %vm236, %v2157, 0.0
        %2196 = vadd.xlane.f32.xlu0 %v2195
        %v2197 = vpop.xlane.xlu0 %2196
        %v2198 = vsel %vm236, %v2158, 0.0
        %2199 = vadd.xlane.f32.xlu0 %v2198
        %v2200 = vpop.xlane.xlu0 %2199
        %v2201 = vsel %vm236, %v2159, 0.0
        %2202 = vadd.xlane.f32.xlu0 %v2201
        %v2203 = vpop.xlane.xlu0 %2202
        %v2204 = vsel %vm236, %v2160, 0.0
        %2205 = vadd.xlane.f32.xlu0 %v2204
        %v2206 = vpop.xlane.xlu0 %2205
        %v2207 = vsel %vm236, %v2161, 0.0
        %2208 = vadd.xlane.f32.xlu0 %v2207
        %v2209 = vpop.xlane.xlu0 %2208
        %v2210 = vadd.f32 %v2109, %v2164
        %v2211 = vadd.f32 %v2110, %v2167
        %v2212 = vadd.f32 %v2111, %v2170
        %v2213 = vadd.f32 %v2112, %v2173
        %v2214 = vadd.f32 %v2113, %v2176
        %v2215 = vadd.f32 %v2114, %v2179
        %v2216 = vadd.f32 %v2115, %v2182
        %v2217 = vadd.f32 %v2116, %v2185
        %v2218 = vadd.f32 %v2117, %v2188
        %v2219 = vadd.f32 %v2118, %v2191
        %v2220 = vadd.f32 %v2119, %v2194
        %v2221 = vadd.f32 %v2120, %v2197
        %v2222 = vadd.f32 %v2121, %v2200
        %v2223 = vadd.f32 %v2122, %v2203
        %v2224 = vadd.f32 %v2123, %v2206
        %v2225 = vadd.f32 %v2124, %v2209
        %s2226 = scalar_lea.vmem %s198, 96
        %v2227 = vld [vmem:[%s2226] sm:$0xff]
        %v2228 = vld [vmem:[%s2226 + $0x8] sm:$0xff]
        %v2229 = vld [vmem:[%s2226 + $0x18] sm:$0xff]
        %v2230 = vld [vmem:[%s2226 + $0x20] sm:$0xff]
        %v2231 = vld [vmem:[%s2226 + $0x30] sm:$0xff]
        %v2232 = vld [vmem:[%s2226 + $0x38] sm:$0xff]
        %v2233 = vld [vmem:[%s2226 + $0x48] sm:$0xff]
        %v2234 = vld [vmem:[%s2226 + $0x50] sm:$0xff]
        %v2235 = vld [vmem:[%s2226 + $0x60] sm:$0xff]
        %v2236 = vld [vmem:[%s2226 + $0x68] sm:$0xff]
        %v2237 = vld [vmem:[%s2226 + $0x78] sm:$0xff]
        %v2238 = vld [vmem:[%s2226 + $0x80] sm:$0xff]
        %v2239 = vld [vmem:[%s2226 + $0x90] sm:$0xff]
        %v2240 = vld [vmem:[%s2226 + $0x98] sm:$0xff]
        %v2241 = vld [vmem:[%s2226 + $0xa8] sm:$0xff]
        %v2242 = vld [vmem:[%s2226 + $0xb0] sm:$0xff]
        %s2243 = scalar_lea.vmem %s1, 32
        %v2244 = vld [vmem:[%s2243] sm:$0x1]
        %v2245 = vlaneseq
        %v2246 = vshrl.u32 %v2245, 7
        %v2247 = vsub.s32 0, %v2246
        %v2248 = vrot.slane %v2244, %v2247
        %v2249 = vmul.f32 %v2227, %v2248
        %v2250 = vmul.f32 %v2228, %v2248
        %v2251 = vmul.f32 %v2229, %v2248
        %v2252 = vmul.f32 %v2230, %v2248
        %v2253 = vmul.f32 %v2231, %v2248
        %v2254 = vmul.f32 %v2232, %v2248
        %v2255 = vmul.f32 %v2233, %v2248
        %v2256 = vmul.f32 %v2234, %v2248
        %v2257 = vmul.f32 %v2235, %v2248
        %v2258 = vmul.f32 %v2236, %v2248
        %v2259 = vmul.f32 %v2237, %v2248
        %v2260 = vmul.f32 %v2238, %v2248
        %v2261 = vmul.f32 %v2239, %v2248
        %v2262 = vmul.f32 %v2240, %v2248
        %v2263 = vmul.f32 %v2241, %v2248
        %v2264 = vmul.f32 %v2242, %v2248
        %v2265 = vsel %vm236, %v2249, 0.0
        %2266 = vadd.xlane.f32.xlu0 %v2265
        %v2267 = vpop.xlane.xlu0 %2266
        %v2268 = vsel %vm236, %v2250, 0.0
        %2269 = vadd.xlane.f32.xlu0 %v2268
        %v2270 = vpop.xlane.xlu0 %2269
        %v2271 = vsel %vm236, %v2251, 0.0
        %2272 = vadd.xlane.f32.xlu0 %v2271
        %v2273 = vpop.xlane.xlu0 %2272
        %v2274 = vsel %vm236, %v2252, 0.0
        %2275 = vadd.xlane.f32.xlu0 %v2274
        %v2276 = vpop.xlane.xlu0 %2275
        %v2277 = vsel %vm236, %v2253, 0.0
        %2278 = vadd.xlane.f32.xlu0 %v2277
        %v2279 = vpop.xlane.xlu0 %2278
        %v2280 = vsel %vm236, %v2254, 0.0
        %2281 = vadd.xlane.f32.xlu0 %v2280
        %v2282 = vpop.xlane.xlu0 %2281
        %v2283 = vsel %vm236, %v2255, 0.0
        %2284 = vadd.xlane.f32.xlu0 %v2283
        %v2285 = vpop.xlane.xlu0 %2284
        %v2286 = vsel %vm236, %v2256, 0.0
        %2287 = vadd.xlane.f32.xlu0 %v2286
        %v2288 = vpop.xlane.xlu0 %2287
        %v2289 = vsel %vm236, %v2257, 0.0
        %2290 = vadd.xlane.f32.xlu0 %v2289
        %v2291 = vpop.xlane.xlu0 %2290
        %v2292 = vsel %vm236, %v2258, 0.0
        %2293 = vadd.xlane.f32.xlu0 %v2292
        %v2294 = vpop.xlane.xlu0 %2293
        %v2295 = vsel %vm236, %v2259, 0.0
        %2296 = vadd.xlane.f32.xlu0 %v2295
        %v2297 = vpop.xlane.xlu0 %2296
        %v2298 = vsel %vm236, %v2260, 0.0
        %2299 = vadd.xlane.f32.xlu0 %v2298
        %v2300 = vpop.xlane.xlu0 %2299
        %v2301 = vsel %vm236, %v2261, 0.0
        %2302 = vadd.xlane.f32.xlu0 %v2301
        %v2303 = vpop.xlane.xlu0 %2302
        %v2304 = vsel %vm236, %v2262, 0.0
        %2305 = vadd.xlane.f32.xlu0 %v2304
        %v2306 = vpop.xlane.xlu0 %2305
        %v2307 = vsel %vm236, %v2263, 0.0
        %2308 = vadd.xlane.f32.xlu0 %v2307
        %v2309 = vpop.xlane.xlu0 %2308
        %v2310 = vsel %vm236, %v2264, 0.0
        %2311 = vadd.xlane.f32.xlu0 %v2310
        %v2312 = vpop.xlane.xlu0 %2311
        %v2313 = vadd.f32 %v2210, %v2267
        %v2314 = vadd.f32 %v2211, %v2270
        %v2315 = vadd.f32 %v2212, %v2273
        %v2316 = vadd.f32 %v2213, %v2276
        %v2317 = vadd.f32 %v2214, %v2279
        %v2318 = vadd.f32 %v2215, %v2282
        %v2319 = vadd.f32 %v2216, %v2285
        %v2320 = vadd.f32 %v2217, %v2288
        %v2321 = vadd.f32 %v2218, %v2291
        %v2322 = vadd.f32 %v2219, %v2294
        %v2323 = vadd.f32 %v2220, %v2297
        %v2324 = vadd.f32 %v2221, %v2300
        %v2325 = vadd.f32 %v2222, %v2303
        %v2326 = vadd.f32 %v2223, %v2306
        %v2327 = vadd.f32 %v2224, %v2309
        %v2328 = vadd.f32 %v2225, %v2312
        %v2329 = vld [vmem:[%s2226 + $0x1] sm:$0xff]
        %v2330 = vld [vmem:[%s2226 + $0x9] sm:$0xff]
        %v2331 = vld [vmem:[%s2226 + $0x19] sm:$0xff]
        %v2332 = vld [vmem:[%s2226 + $0x21] sm:$0xff]
        %v2333 = vld [vmem:[%s2226 + $0x31] sm:$0xff]
        %v2334 = vld [vmem:[%s2226 + $0x39] sm:$0xff]
        %v2335 = vld [vmem:[%s2226 + $0x49] sm:$0xff]
        %v2336 = vld [vmem:[%s2226 + $0x51] sm:$0xff]
        %v2337 = vld [vmem:[%s2226 + $0x61] sm:$0xff]
        %v2338 = vld [vmem:[%s2226 + $0x69] sm:$0xff]
        %v2339 = vld [vmem:[%s2226 + $0x79] sm:$0xff]
        %v2340 = vld [vmem:[%s2226 + $0x81] sm:$0xff]
        %v2341 = vld [vmem:[%s2226 + $0x91] sm:$0xff]
        %v2342 = vld [vmem:[%s2226 + $0x99] sm:$0xff]
        %v2343 = vld [vmem:[%s2226 + $0xa9] sm:$0xff]
        %v2344 = vld [vmem:[%s2226 + $0xb1] sm:$0xff]
        %v2345 = vld [vmem:[%s2243 + $0x1] sm:$0x1]
        %v2346 = vlaneseq
        %v2347 = vshrl.u32 %v2346, 7
        %v2348 = vsub.s32 0, %v2347
        %v2349 = vrot.slane %v2345, %v2348
        %v2350 = vmul.f32 %v2329, %v2349
        %v2351 = vmul.f32 %v2330, %v2349
        %v2352 = vmul.f32 %v2331, %v2349
        %v2353 = vmul.f32 %v2332, %v2349
        %v2354 = vmul.f32 %v2333, %v2349
        %v2355 = vmul.f32 %v2334, %v2349
        %v2356 = vmul.f32 %v2335, %v2349
        %v2357 = vmul.f32 %v2336, %v2349
        %v2358 = vmul.f32 %v2337, %v2349
        %v2359 = vmul.f32 %v2338, %v2349
        %v2360 = vmul.f32 %v2339, %v2349
        %v2361 = vmul.f32 %v2340, %v2349
        %v2362 = vmul.f32 %v2341, %v2349
        %v2363 = vmul.f32 %v2342, %v2349
        %v2364 = vmul.f32 %v2343, %v2349
        %v2365 = vmul.f32 %v2344, %v2349
        %v2366 = vsel %vm236, %v2350, 0.0
        %2367 = vadd.xlane.f32.xlu0 %v2366
        %v2368 = vpop.xlane.xlu0 %2367
        %v2369 = vsel %vm236, %v2351, 0.0
        %2370 = vadd.xlane.f32.xlu0 %v2369
        %v2371 = vpop.xlane.xlu0 %2370
        %v2372 = vsel %vm236, %v2352, 0.0
        %2373 = vadd.xlane.f32.xlu0 %v2372
        %v2374 = vpop.xlane.xlu0 %2373
        %v2375 = vsel %vm236, %v2353, 0.0
        %2376 = vadd.xlane.f32.xlu0 %v2375
        %v2377 = vpop.xlane.xlu0 %2376
        %v2378 = vsel %vm236, %v2354, 0.0
        %2379 = vadd.xlane.f32.xlu0 %v2378
        %v2380 = vpop.xlane.xlu0 %2379
        %v2381 = vsel %vm236, %v2355, 0.0
        %2382 = vadd.xlane.f32.xlu0 %v2381
        %v2383 = vpop.xlane.xlu0 %2382
        %v2384 = vsel %vm236, %v2356, 0.0
        %2385 = vadd.xlane.f32.xlu0 %v2384
        %v2386 = vpop.xlane.xlu0 %2385
        %v2387 = vsel %vm236, %v2357, 0.0
        %2388 = vadd.xlane.f32.xlu0 %v2387
        %v2389 = vpop.xlane.xlu0 %2388
        %v2390 = vsel %vm236, %v2358, 0.0
        %2391 = vadd.xlane.f32.xlu0 %v2390
        %v2392 = vpop.xlane.xlu0 %2391
        %v2393 = vsel %vm236, %v2359, 0.0
        %2394 = vadd.xlane.f32.xlu0 %v2393
        %v2395 = vpop.xlane.xlu0 %2394
        %v2396 = vsel %vm236, %v2360, 0.0
        %2397 = vadd.xlane.f32.xlu0 %v2396
        %v2398 = vpop.xlane.xlu0 %2397
        %v2399 = vsel %vm236, %v2361, 0.0
        %2400 = vadd.xlane.f32.xlu0 %v2399
        %v2401 = vpop.xlane.xlu0 %2400
        %v2402 = vsel %vm236, %v2362, 0.0
        %2403 = vadd.xlane.f32.xlu0 %v2402
        %v2404 = vpop.xlane.xlu0 %2403
        %v2405 = vsel %vm236, %v2363, 0.0
        %2406 = vadd.xlane.f32.xlu0 %v2405
        %v2407 = vpop.xlane.xlu0 %2406
        %v2408 = vsel %vm236, %v2364, 0.0
        %2409 = vadd.xlane.f32.xlu0 %v2408
        %v2410 = vpop.xlane.xlu0 %2409
        %v2411 = vsel %vm236, %v2365, 0.0
        %2412 = vadd.xlane.f32.xlu0 %v2411
        %v2413 = vpop.xlane.xlu0 %2412
        %v2414 = vadd.f32 %v2313, %v2368
        %v2415 = vadd.f32 %v2314, %v2371
        %v2416 = vadd.f32 %v2315, %v2374
        %v2417 = vadd.f32 %v2316, %v2377
        %v2418 = vadd.f32 %v2317, %v2380
        %v2419 = vadd.f32 %v2318, %v2383
        %v2420 = vadd.f32 %v2319, %v2386
        %v2421 = vadd.f32 %v2320, %v2389
        %v2422 = vadd.f32 %v2321, %v2392
        %v2423 = vadd.f32 %v2322, %v2395
        %v2424 = vadd.f32 %v2323, %v2398
        %v2425 = vadd.f32 %v2324, %v2401
        %v2426 = vadd.f32 %v2325, %v2404
        %v2427 = vadd.f32 %v2326, %v2407
        %v2428 = vadd.f32 %v2327, %v2410
        %v2429 = vadd.f32 %v2328, %v2413
        %v2430 = vld [vmem:[%s2226 + $0x2] sm:$0xff]
        %v2431 = vld [vmem:[%s2226 + $0xa] sm:$0xff]
        %v2432 = vld [vmem:[%s2226 + $0x1a] sm:$0xff]
        %v2433 = vld [vmem:[%s2226 + $0x22] sm:$0xff]
        %v2434 = vld [vmem:[%s2226 + $0x32] sm:$0xff]
        %v2435 = vld [vmem:[%s2226 + $0x3a] sm:$0xff]
        %v2436 = vld [vmem:[%s2226 + $0x4a] sm:$0xff]
        %v2437 = vld [vmem:[%s2226 + $0x52] sm:$0xff]
        %v2438 = vld [vmem:[%s2226 + $0x62] sm:$0xff]
        %v2439 = vld [vmem:[%s2226 + $0x6a] sm:$0xff]
        %v2440 = vld [vmem:[%s2226 + $0x7a] sm:$0xff]
        %v2441 = vld [vmem:[%s2226 + $0x82] sm:$0xff]
        %v2442 = vld [vmem:[%s2226 + $0x92] sm:$0xff]
        %v2443 = vld [vmem:[%s2226 + $0x9a] sm:$0xff]
        %v2444 = vld [vmem:[%s2226 + $0xaa] sm:$0xff]
        %v2445 = vld [vmem:[%s2226 + $0xb2] sm:$0xff]
        %v2446 = vld [vmem:[%s2243 + $0x2] sm:$0x1]
        %v2447 = vlaneseq
        %v2448 = vshrl.u32 %v2447, 7
        %v2449 = vsub.s32 0, %v2448
        %v2450 = vrot.slane %v2446, %v2449
        %v2451 = vmul.f32 %v2430, %v2450
        %v2452 = vmul.f32 %v2431, %v2450
        %v2453 = vmul.f32 %v2432, %v2450
        %v2454 = vmul.f32 %v2433, %v2450
        %v2455 = vmul.f32 %v2434, %v2450
        %v2456 = vmul.f32 %v2435, %v2450
        %v2457 = vmul.f32 %v2436, %v2450
        %v2458 = vmul.f32 %v2437, %v2450
        %v2459 = vmul.f32 %v2438, %v2450
        %v2460 = vmul.f32 %v2439, %v2450
        %v2461 = vmul.f32 %v2440, %v2450
        %v2462 = vmul.f32 %v2441, %v2450
        %v2463 = vmul.f32 %v2442, %v2450
        %v2464 = vmul.f32 %v2443, %v2450
        %v2465 = vmul.f32 %v2444, %v2450
        %v2466 = vmul.f32 %v2445, %v2450
        %v2467 = vsel %vm236, %v2451, 0.0
        %2468 = vadd.xlane.f32.xlu0 %v2467
        %v2469 = vpop.xlane.xlu0 %2468
        %v2470 = vsel %vm236, %v2452, 0.0
        %2471 = vadd.xlane.f32.xlu0 %v2470
        %v2472 = vpop.xlane.xlu0 %2471
        %v2473 = vsel %vm236, %v2453, 0.0
        %2474 = vadd.xlane.f32.xlu0 %v2473
        %v2475 = vpop.xlane.xlu0 %2474
        %v2476 = vsel %vm236, %v2454, 0.0
        %2477 = vadd.xlane.f32.xlu0 %v2476
        %v2478 = vpop.xlane.xlu0 %2477
        %v2479 = vsel %vm236, %v2455, 0.0
        %2480 = vadd.xlane.f32.xlu0 %v2479
        %v2481 = vpop.xlane.xlu0 %2480
        %v2482 = vsel %vm236, %v2456, 0.0
        %2483 = vadd.xlane.f32.xlu0 %v2482
        %v2484 = vpop.xlane.xlu0 %2483
        %v2485 = vsel %vm236, %v2457, 0.0
        %2486 = vadd.xlane.f32.xlu0 %v2485
        %v2487 = vpop.xlane.xlu0 %2486
        %v2488 = vsel %vm236, %v2458, 0.0
        %2489 = vadd.xlane.f32.xlu0 %v2488
        %v2490 = vpop.xlane.xlu0 %2489
        %v2491 = vsel %vm236, %v2459, 0.0
        %2492 = vadd.xlane.f32.xlu0 %v2491
        %v2493 = vpop.xlane.xlu0 %2492
        %v2494 = vsel %vm236, %v2460, 0.0
        %2495 = vadd.xlane.f32.xlu0 %v2494
        %v2496 = vpop.xlane.xlu0 %2495
        %v2497 = vsel %vm236, %v2461, 0.0
        %2498 = vadd.xlane.f32.xlu0 %v2497
        %v2499 = vpop.xlane.xlu0 %2498
        %v2500 = vsel %vm236, %v2462, 0.0
        %2501 = vadd.xlane.f32.xlu0 %v2500
        %v2502 = vpop.xlane.xlu0 %2501
        %v2503 = vsel %vm236, %v2463, 0.0
        %2504 = vadd.xlane.f32.xlu0 %v2503
        %v2505 = vpop.xlane.xlu0 %2504
        %v2506 = vsel %vm236, %v2464, 0.0
        %2507 = vadd.xlane.f32.xlu0 %v2506
        %v2508 = vpop.xlane.xlu0 %2507
        %v2509 = vsel %vm236, %v2465, 0.0
        %2510 = vadd.xlane.f32.xlu0 %v2509
        %v2511 = vpop.xlane.xlu0 %2510
        %v2512 = vsel %vm236, %v2466, 0.0
        %2513 = vadd.xlane.f32.xlu0 %v2512
        %v2514 = vpop.xlane.xlu0 %2513
        %v2515 = vadd.f32 %v2414, %v2469
        %v2516 = vadd.f32 %v2415, %v2472
        %v2517 = vadd.f32 %v2416, %v2475
        %v2518 = vadd.f32 %v2417, %v2478
        %v2519 = vadd.f32 %v2418, %v2481
        %v2520 = vadd.f32 %v2419, %v2484
        %v2521 = vadd.f32 %v2420, %v2487
        %v2522 = vadd.f32 %v2421, %v2490
        %v2523 = vadd.f32 %v2422, %v2493
        %v2524 = vadd.f32 %v2423, %v2496
        %v2525 = vadd.f32 %v2424, %v2499
        %v2526 = vadd.f32 %v2425, %v2502
        %v2527 = vadd.f32 %v2426, %v2505
        %v2528 = vadd.f32 %v2427, %v2508
        %v2529 = vadd.f32 %v2428, %v2511
        %v2530 = vadd.f32 %v2429, %v2514
        %v2531 = vld [vmem:[%s2226 + $0x3] sm:$0xff]
        %v2532 = vld [vmem:[%s2226 + $0xb] sm:$0xff]
        %v2533 = vld [vmem:[%s2226 + $0x1b] sm:$0xff]
        %v2534 = vld [vmem:[%s2226 + $0x23] sm:$0xff]
        %v2535 = vld [vmem:[%s2226 + $0x33] sm:$0xff]
        %v2536 = vld [vmem:[%s2226 + $0x3b] sm:$0xff]
        %v2537 = vld [vmem:[%s2226 + $0x4b] sm:$0xff]
        %v2538 = vld [vmem:[%s2226 + $0x53] sm:$0xff]
        %v2539 = vld [vmem:[%s2226 + $0x63] sm:$0xff]
        %v2540 = vld [vmem:[%s2226 + $0x6b] sm:$0xff]
        %v2541 = vld [vmem:[%s2226 + $0x7b] sm:$0xff]
        %v2542 = vld [vmem:[%s2226 + $0x83] sm:$0xff]
        %v2543 = vld [vmem:[%s2226 + $0x93] sm:$0xff]
        %v2544 = vld [vmem:[%s2226 + $0x9b] sm:$0xff]
        %v2545 = vld [vmem:[%s2226 + $0xab] sm:$0xff]
        %v2546 = vld [vmem:[%s2226 + $0xb3] sm:$0xff]
        %v2547 = vld [vmem:[%s2243 + $0x3] sm:$0x1]
        %v2548 = vlaneseq
        %v2549 = vshrl.u32 %v2548, 7
        %v2550 = vsub.s32 0, %v2549
        %v2551 = vrot.slane %v2547, %v2550
        %v2552 = vmul.f32 %v2531, %v2551
        %v2553 = vmul.f32 %v2532, %v2551
        %v2554 = vmul.f32 %v2533, %v2551
        %v2555 = vmul.f32 %v2534, %v2551
        %v2556 = vmul.f32 %v2535, %v2551
        %v2557 = vmul.f32 %v2536, %v2551
        %v2558 = vmul.f32 %v2537, %v2551
        %v2559 = vmul.f32 %v2538, %v2551
        %v2560 = vmul.f32 %v2539, %v2551
        %v2561 = vmul.f32 %v2540, %v2551
        %v2562 = vmul.f32 %v2541, %v2551
        %v2563 = vmul.f32 %v2542, %v2551
        %v2564 = vmul.f32 %v2543, %v2551
        %v2565 = vmul.f32 %v2544, %v2551
        %v2566 = vmul.f32 %v2545, %v2551
        %v2567 = vmul.f32 %v2546, %v2551
        %v2568 = vsel %vm236, %v2552, 0.0
        %2569 = vadd.xlane.f32.xlu0 %v2568
        %v2570 = vpop.xlane.xlu0 %2569
        %v2571 = vsel %vm236, %v2553, 0.0
        %2572 = vadd.xlane.f32.xlu0 %v2571
        %v2573 = vpop.xlane.xlu0 %2572
        %v2574 = vsel %vm236, %v2554, 0.0
        %2575 = vadd.xlane.f32.xlu0 %v2574
        %v2576 = vpop.xlane.xlu0 %2575
        %v2577 = vsel %vm236, %v2555, 0.0
        %2578 = vadd.xlane.f32.xlu0 %v2577
        %v2579 = vpop.xlane.xlu0 %2578
        %v2580 = vsel %vm236, %v2556, 0.0
        %2581 = vadd.xlane.f32.xlu0 %v2580
        %v2582 = vpop.xlane.xlu0 %2581
        %v2583 = vsel %vm236, %v2557, 0.0
        %2584 = vadd.xlane.f32.xlu0 %v2583
        %v2585 = vpop.xlane.xlu0 %2584
        %v2586 = vsel %vm236, %v2558, 0.0
        %2587 = vadd.xlane.f32.xlu0 %v2586
        %v2588 = vpop.xlane.xlu0 %2587
        %v2589 = vsel %vm236, %v2559, 0.0
        %2590 = vadd.xlane.f32.xlu0 %v2589
        %v2591 = vpop.xlane.xlu0 %2590
        %v2592 = vsel %vm236, %v2560, 0.0
        %2593 = vadd.xlane.f32.xlu0 %v2592
        %v2594 = vpop.xlane.xlu0 %2593
        %v2595 = vsel %vm236, %v2561, 0.0
        %2596 = vadd.xlane.f32.xlu0 %v2595
        %v2597 = vpop.xlane.xlu0 %2596
        %v2598 = vsel %vm236, %v2562, 0.0
        %2599 = vadd.xlane.f32.xlu0 %v2598
        %v2600 = vpop.xlane.xlu0 %2599
        %v2601 = vsel %vm236, %v2563, 0.0
        %2602 = vadd.xlane.f32.xlu0 %v2601
        %v2603 = vpop.xlane.xlu0 %2602
        %v2604 = vsel %vm236, %v2564, 0.0
        %2605 = vadd.xlane.f32.xlu0 %v2604
        %v2606 = vpop.xlane.xlu0 %2605
        %v2607 = vsel %vm236, %v2565, 0.0
        %2608 = vadd.xlane.f32.xlu0 %v2607
        %v2609 = vpop.xlane.xlu0 %2608
        %v2610 = vsel %vm236, %v2566, 0.0
        %2611 = vadd.xlane.f32.xlu0 %v2610
        %v2612 = vpop.xlane.xlu0 %2611
        %v2613 = vsel %vm236, %v2567, 0.0
        %2614 = vadd.xlane.f32.xlu0 %v2613
        %v2615 = vpop.xlane.xlu0 %2614
        %v2616 = vadd.f32 %v2515, %v2570
        %v2617 = vadd.f32 %v2516, %v2573
        %v2618 = vadd.f32 %v2517, %v2576
        %v2619 = vadd.f32 %v2518, %v2579
        %v2620 = vadd.f32 %v2519, %v2582
        %v2621 = vadd.f32 %v2520, %v2585
        %v2622 = vadd.f32 %v2521, %v2588
        %v2623 = vadd.f32 %v2522, %v2591
        %v2624 = vadd.f32 %v2523, %v2594
        %v2625 = vadd.f32 %v2524, %v2597
        %v2626 = vadd.f32 %v2525, %v2600
        %v2627 = vadd.f32 %v2526, %v2603
        %v2628 = vadd.f32 %v2527, %v2606
        %v2629 = vadd.f32 %v2528, %v2609
        %v2630 = vadd.f32 %v2529, %v2612
        %v2631 = vadd.f32 %v2530, %v2615
        %v2632 = vld [vmem:[%s2226 + $0x4] sm:$0xff]
        %v2633 = vld [vmem:[%s2226 + $0xc] sm:$0xff]
        %v2634 = vld [vmem:[%s2226 + $0x1c] sm:$0xff]
        %v2635 = vld [vmem:[%s2226 + $0x24] sm:$0xff]
        %v2636 = vld [vmem:[%s2226 + $0x34] sm:$0xff]
        %v2637 = vld [vmem:[%s2226 + $0x3c] sm:$0xff]
        %v2638 = vld [vmem:[%s2226 + $0x4c] sm:$0xff]
        %v2639 = vld [vmem:[%s2226 + $0x54] sm:$0xff]
        %v2640 = vld [vmem:[%s2226 + $0x64] sm:$0xff]
        %v2641 = vld [vmem:[%s2226 + $0x6c] sm:$0xff]
        %v2642 = vld [vmem:[%s2226 + $0x7c] sm:$0xff]
        %v2643 = vld [vmem:[%s2226 + $0x84] sm:$0xff]
        %v2644 = vld [vmem:[%s2226 + $0x94] sm:$0xff]
        %v2645 = vld [vmem:[%s2226 + $0x9c] sm:$0xff]
        %v2646 = vld [vmem:[%s2226 + $0xac] sm:$0xff]
        %v2647 = vld [vmem:[%s2226 + $0xb4] sm:$0xff]
        %v2648 = vld [vmem:[%s2243 + $0x4] sm:$0x1]
        %v2649 = vlaneseq
        %v2650 = vshrl.u32 %v2649, 7
        %v2651 = vsub.s32 0, %v2650
        %v2652 = vrot.slane %v2648, %v2651
        %v2653 = vmul.f32 %v2632, %v2652
        %v2654 = vmul.f32 %v2633, %v2652
        %v2655 = vmul.f32 %v2634, %v2652
        %v2656 = vmul.f32 %v2635, %v2652
        %v2657 = vmul.f32 %v2636, %v2652
        %v2658 = vmul.f32 %v2637, %v2652
        %v2659 = vmul.f32 %v2638, %v2652
        %v2660 = vmul.f32 %v2639, %v2652
        %v2661 = vmul.f32 %v2640, %v2652
        %v2662 = vmul.f32 %v2641, %v2652
        %v2663 = vmul.f32 %v2642, %v2652
        %v2664 = vmul.f32 %v2643, %v2652
        %v2665 = vmul.f32 %v2644, %v2652
        %v2666 = vmul.f32 %v2645, %v2652
        %v2667 = vmul.f32 %v2646, %v2652
        %v2668 = vmul.f32 %v2647, %v2652
        %v2669 = vsel %vm236, %v2653, 0.0
        %2670 = vadd.xlane.f32.xlu0 %v2669
        %v2671 = vpop.xlane.xlu0 %2670
        %v2672 = vsel %vm236, %v2654, 0.0
        %2673 = vadd.xlane.f32.xlu0 %v2672
        %v2674 = vpop.xlane.xlu0 %2673
        %v2675 = vsel %vm236, %v2655, 0.0
        %2676 = vadd.xlane.f32.xlu0 %v2675
        %v2677 = vpop.xlane.xlu0 %2676
        %v2678 = vsel %vm236, %v2656, 0.0
        %2679 = vadd.xlane.f32.xlu0 %v2678
        %v2680 = vpop.xlane.xlu0 %2679
        %v2681 = vsel %vm236, %v2657, 0.0
        %2682 = vadd.xlane.f32.xlu0 %v2681
        %v2683 = vpop.xlane.xlu0 %2682
        %v2684 = vsel %vm236, %v2658, 0.0
        %2685 = vadd.xlane.f32.xlu0 %v2684
        %v2686 = vpop.xlane.xlu0 %2685
        %v2687 = vsel %vm236, %v2659, 0.0
        %2688 = vadd.xlane.f32.xlu0 %v2687
        %v2689 = vpop.xlane.xlu0 %2688
        %v2690 = vsel %vm236, %v2660, 0.0
        %2691 = vadd.xlane.f32.xlu0 %v2690
        %v2692 = vpop.xlane.xlu0 %2691
        %v2693 = vsel %vm236, %v2661, 0.0
        %2694 = vadd.xlane.f32.xlu0 %v2693
        %v2695 = vpop.xlane.xlu0 %2694
        %v2696 = vsel %vm236, %v2662, 0.0
        %2697 = vadd.xlane.f32.xlu0 %v2696
        %v2698 = vpop.xlane.xlu0 %2697
        %v2699 = vsel %vm236, %v2663, 0.0
        %2700 = vadd.xlane.f32.xlu0 %v2699
        %v2701 = vpop.xlane.xlu0 %2700
        %v2702 = vsel %vm236, %v2664, 0.0
        %2703 = vadd.xlane.f32.xlu0 %v2702
        %v2704 = vpop.xlane.xlu0 %2703
        %v2705 = vsel %vm236, %v2665, 0.0
        %2706 = vadd.xlane.f32.xlu0 %v2705
        %v2707 = vpop.xlane.xlu0 %2706
        %v2708 = vsel %vm236, %v2666, 0.0
        %2709 = vadd.xlane.f32.xlu0 %v2708
        %v2710 = vpop.xlane.xlu0 %2709
        %v2711 = vsel %vm236, %v2667, 0.0
        %2712 = vadd.xlane.f32.xlu0 %v2711
        %v2713 = vpop.xlane.xlu0 %2712
        %v2714 = vsel %vm236, %v2668, 0.0
        %2715 = vadd.xlane.f32.xlu0 %v2714
        %v2716 = vpop.xlane.xlu0 %2715
        %v2717 = vadd.f32 %v2616, %v2671
        %v2718 = vadd.f32 %v2617, %v2674
        %v2719 = vadd.f32 %v2618, %v2677
        %v2720 = vadd.f32 %v2619, %v2680
        %v2721 = vadd.f32 %v2620, %v2683
        %v2722 = vadd.f32 %v2621, %v2686
        %v2723 = vadd.f32 %v2622, %v2689
        %v2724 = vadd.f32 %v2623, %v2692
        %v2725 = vadd.f32 %v2624, %v2695
        %v2726 = vadd.f32 %v2625, %v2698
        %v2727 = vadd.f32 %v2626, %v2701
        %v2728 = vadd.f32 %v2627, %v2704
        %v2729 = vadd.f32 %v2628, %v2707
        %v2730 = vadd.f32 %v2629, %v2710
        %v2731 = vadd.f32 %v2630, %v2713
        %v2732 = vadd.f32 %v2631, %v2716
        %v2733 = vld [vmem:[#allocation2] sm:$0x1]
        %v2735 = vlaneseq
        %v2736 = vshrl.u32 %v2735, 7
        %v2737 = vsub.s32 0, %v2736
        %v2738 = vrot.slane %v2733, %v2737
        %2739 = vset.pattern.permute.xlu0 0
        %2740 = vperm.xlu0 %2739, %v2738
        %v2741 = vpop.permute.xlu0 %2740
        %v2743 = vadd.f32 %v2717, %v2741
        %v2744 = vadd.f32 %v2718, %v2741
        %v2745 = vadd.f32 %v2719, %v2741
        %v2746 = vadd.f32 %v2720, %v2741
        %v2747 = vadd.f32 %v2721, %v2741
        %v2748 = vadd.f32 %v2722, %v2741
        %v2749 = vadd.f32 %v2723, %v2741
        %v2750 = vadd.f32 %v2724, %v2741
        %v2751 = vadd.f32 %v2725, %v2741
        %v2752 = vadd.f32 %v2726, %v2741
        %v2753 = vadd.f32 %v2727, %v2741
        %v2754 = vadd.f32 %v2728, %v2741
        %v2755 = vadd.f32 %v2729, %v2741
        %v2756 = vadd.f32 %v2730, %v2741
        %v2757 = vadd.f32 %v2731, %v2741
        %v2758 = vadd.f32 %v2732, %v2741
        %v2775 = vlaneseq
        %v2776 = vand.u32 %v2775, 127
        %v2777 = vlaneseq
        %v2778 = vshrl.u32 %v2777, 7
        %v2779 = vsub.s32 %v2776, %v2778
        %v2780 = vrot.slane %v2743, %v2779
        %v2781 = vadd.s32 %v2776, 4294967288
        %v2782 = vlaneseq
        %v2783 = vshrl.u32 %v2782, 7
        %v2784 = vsub.s32 %v2781, %v2783
        %v2785 = vrot.slane %v2744, %v2784
        %vm2786 = vcmask 130112
        %v2787 = vsel %vm2786, %v2785, %v2780
        %v2788 = vlaneseq
        %v2789 = vshrl.u32 %v2788, 7
        %v2790 = vsub.s32 %v2776, %v2789
        %v2791 = vrot.slane %v2745, %v2790
        %v2792 = vlaneseq
        %v2793 = vshrl.u32 %v2792, 7
        %v2794 = vsub.s32 %v2781, %v2793
        %v2795 = vrot.slane %v2746, %v2794
        %v2796 = vsel %vm2786, %v2795, %v2791
        %v2797 = vlaneseq
        %v2798 = vshrl.u32 %v2797, 7
        %v2799 = vsub.s32 %v2776, %v2798
        %v2800 = vrot.slane %v2747, %v2799
        %v2801 = vlaneseq
        %v2802 = vshrl.u32 %v2801, 7
        %v2803 = vsub.s32 %v2781, %v2802
        %v2804 = vrot.slane %v2748, %v2803
        %v2805 = vsel %vm2786, %v2804, %v2800
        %v2806 = vlaneseq
        %v2807 = vshrl.u32 %v2806, 7
        %v2808 = vsub.s32 %v2776, %v2807
        %v2809 = vrot.slane %v2749, %v2808
        %v2810 = vlaneseq
        %v2811 = vshrl.u32 %v2810, 7
        %v2812 = vsub.s32 %v2781, %v2811
        %v2813 = vrot.slane %v2750, %v2812
        %v2814 = vsel %vm2786, %v2813, %v2809
        %v2815 = vlaneseq
        %v2816 = vshrl.u32 %v2815, 7
        %v2817 = vsub.s32 %v2776, %v2816
        %v2818 = vrot.slane %v2751, %v2817
        %v2819 = vlaneseq
        %v2820 = vshrl.u32 %v2819, 7
        %v2821 = vsub.s32 %v2781, %v2820
        %v2822 = vrot.slane %v2752, %v2821
        %v2823 = vsel %vm2786, %v2822, %v2818
        %v2824 = vlaneseq
        %v2825 = vshrl.u32 %v2824, 7
        %v2826 = vsub.s32 %v2776, %v2825
        %v2827 = vrot.slane %v2753, %v2826
        %v2828 = vlaneseq
        %v2829 = vshrl.u32 %v2828, 7
        %v2830 = vsub.s32 %v2781, %v2829
        %v2831 = vrot.slane %v2754, %v2830
        %v2832 = vsel %vm2786, %v2831, %v2827
        %v2833 = vlaneseq
        %v2834 = vshrl.u32 %v2833, 7
        %v2835 = vsub.s32 %v2776, %v2834
        %v2836 = vrot.slane %v2755, %v2835
        %v2837 = vlaneseq
        %v2838 = vshrl.u32 %v2837, 7
        %v2839 = vsub.s32 %v2781, %v2838
        %v2840 = vrot.slane %v2756, %v2839
        %v2841 = vsel %vm2786, %v2840, %v2836
        %v2842 = vlaneseq
        %v2843 = vshrl.u32 %v2842, 7
        %v2844 = vsub.s32 %v2776, %v2843
        %v2845 = vrot.slane %v2757, %v2844
        %v2846 = vlaneseq
        %v2847 = vshrl.u32 %v2846, 7
        %v2848 = vsub.s32 %v2781, %v2847
        %v2849 = vrot.slane %v2758, %v2848
        %v2850 = vsel %vm2786, %v2849, %v2845
        %vm2851 = vcmask 1041409
        %v2852 = vsel %vm2851, %v2796, %v2787
        %vm2853 = vcmask 1042434
        %v2854 = vsel %vm2853, %v2805, %v2852
        %vm2855 = vcmask 1043459
        %v2856 = vsel %vm2855, %v2814, %v2854
        %vm2857 = vcmask 1044484
        %v2858 = vsel %vm2857, %v2823, %v2856
        %vm2859 = vcmask 1045509
        %v2860 = vsel %vm2859, %v2832, %v2858
        %vm2861 = vcmask 1046534
        %v2862 = vsel %vm2861, %v2841, %v2860
        %vm2863 = vcmask 1047559
        %v2864 = vsel %vm2863, %v2850, %v2862
        %vm2866 = vcmask 130048
        %2867 = vst.msk [vmem:[%s189] sm:$0xff] %vm2866, %v2864
        %s2868 = sand.u32 %s111, 1
        %s2869 = scalar_lea.sflag [#allocation4], %s2868
        %s2870 = sand.u32 %s111, 1
        %s2871 = smul.addr %s2870, 8
        %s2872 = scalar_lea.vmem [#allocation3], %s2871
        // Predicated region
        $region33: #{srcnn_forward.5} parent=31 // pred_check
          %p2873 = pneg %p121
        $region34: #{srcnn_forward.5} parent=31 // pred_check_branch
          %2875 = sbr.rel (%p2873) target = $region36
        $region35: #{srcnn_forward.5} parent=31 // pred_region
          %s2877 = ssub.s32 128, 128
          %2878 = vsyncadd %s2869, %s2877
          %s2879 = smul.addr %s23, 2
          %s2880 = sadd.s32 %s24, %s2879
          %s2881 = smul.addr %s2880, 128
          %s2882 = scalar_lea.hbm %s3, %s2881
          %s2884 = sshll.u32 %s2872, 4
          %s2885 = int_to_ptr.vmem [resolvable:$true] %s2884
          %2887 = dma.vmem_to_hbm [thread:$0]  %s2885, 128, %s2882, %s2869
        $region36: #{srcnn_forward.5} parent=31 // pred_fallthru
          _
      $region32: #{srcnn_forward.5} parent=5 // pred_fallthru
        _
      %p2888 = scmp.le.s32.totalorder 2, %s14
      // Predicated region
      $region37: #{srcnn_forward.5} parent=5 // pred_check
        %p2889 = pneg %p2888
      $region38: #{srcnn_forward.5} parent=5 // pred_check_branch
        %2891 = sbr.rel (%p2889) target = $region40
      $region39: #{srcnn_forward.5} parent=5 // pred_region
        %s2892 = ssub.s32 %s14, 2
        // Predicated region
        $region41: #{srcnn_forward.5} parent=39 // pred_check
          %p2893 = pneg %p127
        $region42: #{srcnn_forward.5} parent=39 // pred_check_branch
          %2895 = sbr.rel (%p2893) target = $region44
        $region43: #{srcnn_forward.5} parent=39 // pred_region
          %s2896 = sand.u32 %s112, 1
          %s2897 = scalar_lea.sflag [#allocation4], %s2896
          %s2898 = sand.u32 %s112, 1
          %s2899 = smul.addr %s2898, 8
          %s2900 = scalar_lea.vmem [#allocation3], %s2899
          %2901 = dma.done %s2897, 128
        $region44: #{srcnn_forward.5} parent=39 // pred_fallthru
          _
      $region40: #{srcnn_forward.5} parent=5 // pred_fallthru
        _
    $region6: #{srcnn_forward.5} parent=1 // loop_footer
      %s18 = sadd.s32 1, %s14
    $region7: #{srcnn_forward.5} parent=1 // loop_footer_branch
      %13 = sbr.rel target = $region3
    $region8: #{srcnn_forward.5} parent=1 // loop_exit
      _
    %2902 = vsyncpa [#allocation4], 1
    %s2903 = scalar_lea.sflag [#allocation4], 1
    %2904 = vsyncpa %s2903, 1

</llo_original>
